<compile_context>
chip_gen: v5e
topology: v5e:2x2
jax: 0.10.0
libtpu: 0.0.40
codegen_flags: <defaults>
</compile_context>

<pallas_src>
import math

import jax
import jax.numpy as jnp
from jax.experimental import pallas as pl
from jax.experimental.pallas import tpu as pltpu

# ----------------------------- configuration -------------------------------
IMAGE_SIZE = (16, 16)
PATCH_SIZE = 8
NUM_CHANNELS = 4          # unused by forward() (patch_embedding not called)
EMBED_DIM = 32
NUM_CODEBOOK = 64
CODEBOOK_DIM = 16
NUM_HEADS = 4
NUM_BLOCKS = 2
BETA = 0.25
LN_EPS = 1e-5

NUM_PATCHES = (IMAGE_SIZE[0] * IMAGE_SIZE[1]) // (PATCH_SIZE ** 2)   # 4
COMPRESSION = 2 ** NUM_BLOCKS                                        # 4
MAX_TOKENS = NUM_PATCHES * COMPRESSION                               # 16
MAX_DIM = EMBED_DIM * COMPRESSION                                    # 128


# ------------------------- in-kernel building blocks ------------------------
def _mm(a, b):
    """f32 x f32 matmul with f32 accumulation."""
    return jax.lax.dot_general(a, b, (((1,), (0,)), ((), ())),
                               preferred_element_type=jnp.float32)


def _mm_t(a, b):
    """a @ b.T without materialising a transpose (operands same dtype)."""
    return jax.lax.dot_general(a, b, (((1,), (1,)), ((), ())),
                               preferred_element_type=jnp.float32)


def _mm_bf16(a_f32, w_bf16):
    """Cast activation to bf16 at the matmul boundary; bf16 MXU, f32 acc."""
    return jax.lax.dot_general(a_f32.astype(jnp.bfloat16), w_bf16,
                               (((1,), (0,)), ((), ())),
                               preferred_element_type=jnp.float32)


def _softmax(s):
    m = jnp.max(s, axis=-1, keepdims=True)
    e = jnp.exp(s - m)
    return e * pl.reciprocal(jnp.sum(e, axis=-1, keepdims=True), approx=True)


def _layer_norm(x, g, b):
    mu = jnp.mean(x, axis=-1, keepdims=True)
    xc = x - mu
    var = jnp.mean(xc * xc, axis=-1, keepdims=True)
    return xc * jax.lax.rsqrt(var + LN_EPS) * g + b


# ------------------------------ fused kernel --------------------------------
def _make_kernel(layout, num_heads):
    stage_layouts = layout["stages"]
    n_stages = len(stage_layouts)
    vec_off = layout["vec"]
    n_code = layout["num_codebook"]
    code_dim = layout["codebook_dim"]

    def kernel(*args):
        x_ref = args[0]
        wide_refs = args[1:1 + n_stages]
        tall_refs = args[1 + n_stages:1 + 2 * n_stages]
        vec_ref, qa_ref, qb_ref = args[1 + 2 * n_stages:4 + 2 * n_stages]
        recon_ref, idx_ref, loss_ref, att_scr = args[4 + 2 * n_stages:]

        def vrow(key):                                   # (1, w) f32 bias/LN row
            off, w = vec_off[key]
            return vec_ref[:, off:off + w]

        def run_block(x, wref, tref, lw, lt, si, bi):
            d = x.shape[-1]
            n = x.shape[0]
            dh = d // num_heads
            bv = lambda name: vrow(f"s{si}_b{bi}_{name}")

            def wseg(name):
                off, w = lw[f"b{bi}_{name}"]
                return wref[:, off:off + w]              # (d, w) bf16

            # ---- multi-head self-attention (pre-norm) ----
            h = _layer_norm(x, bv("ln1_g"), bv("ln1_b"))
            qkv = _mm_bf16(h, wseg("wqkv")) + bv("bqkv")      # (n, 3d) f32
            scale = 1.0 / math.sqrt(dh)
            for hd in range(num_heads):
                q = qkv[:, hd * dh:(hd + 1) * dh]
                k = qkv[:, d + hd * dh:d + (hd + 1) * dh]
                v = qkv[:, 2 * d + hd * dh:2 * d + (hd + 1) * dh]
                p = _softmax(_mm_t(q, k) * scale)             # (n, n) f32
                # write per-head output into scratch at its static lane offset
                att_scr[0:n, hd * dh:(hd + 1) * dh] = _mm(p, v)
            o = att_scr[0:n, 0:d]                             # (n, d) f32
            x = x + _mm_bf16(o, wseg("wo")) + bv("bo")        # single fused out-proj

            # ---- MLP (pre-norm) ----
            h2 = _layer_norm(x, bv("ln2_g"), bv("ln2_b"))
            m = _mm_bf16(h2, wseg("w1")) + bv("b1")
            # TODO(synk): PyTorch nn.GELU default is erf-exact; tanh approx used here.
            m = jax.nn.gelu(m, approximate=True)
            r0, nr = lt[f"b{bi}_w2"]
            m = _mm_bf16(m, tref[r0:r0 + nr, :]) + bv("b2")
            return x + m

        def run_stage(x, si):
            st = stage_layouts[si]
            wref, tref = wide_refs[si], tall_refs[si]
            lw, lt = st["wide"], st["tall"]
            d = st["dim"]
            x = run_block(x, wref, tref, lw, lt, si, 1)
            x = run_block(x, wref, tref, lw, lt, si, 2)
            # PatchModifier: out = softmax(Q x^T * d^-0.5) x  (per batch element)
            r0, nq = lt["queries"]
            qmat = tref[r0:r0 + nq, :]                        # (n_out, d) bf16
            s = _mm_t(qmat, x.astype(jnp.bfloat16)) * (d ** -0.5)
            x = _mm(_softmax(s), x)                           # (n_out, d) f32
            c0, cw = lw["lin_w"]
            x = _mm_bf16(x, wref[:, c0:c0 + cw]) + vrow(f"s{si}_lin_b")
            return x

        x = x_ref[...]                                        # (num_patches, embed_dim)

        # ------------------------------ encode ------------------------------
        for si in range(n_stages // 2):
            x = run_stage(x, si)
        d_latent = x.shape[-1]
        z = _mm(x, qa_ref[n_code:n_code + d_latent, :]) + vrow("pre_quant_b")

        # ----------------------------- quantize -----------------------------
        # torch's transpose/view/permute dance preserves (batch, token) order, so
        # it reduces to a per-token nearest-codebook lookup.  ||z||^2 is dropped
        # (argmin-invariant); all VQ math stays f32 for exact index selection.
        e = qa_ref[0:n_code, :]                               # (K, dc) f32
        cross = _mm_t(z, e)                                   # (m, K)
        e2 = _mm_t(jnp.ones((1, code_dim), jnp.float32), e * e)   # (1, K) = ||e_k||^2
        dist = e2 - 2.0 * cross
        lane = jax.lax.broadcasted_iota(jnp.int32, dist.shape, 1)
        dmin = jnp.min(dist, axis=1, keepdims=True)
        idx_col = jnp.min(jnp.where(dist <= dmin, lane, n_code),
                          axis=1, keepdims=True)              # lowest-index tie-break
        onehot = (lane == idx_col).astype(jnp.float32)        # (m, K)
        zq = _mm(onehot, e)                                   # (m, dc)
        kval = jax.lax.broadcasted_iota(jnp.int32, (1, n_code), 1).astype(jnp.float32)
        idx_ref[...] = _mm_t(kval, onehot).astype(jnp.int32)  # (1, m) lane-major
        diff = zq - z
        # per-batch sum of squared diffs; (1+beta)*mean is finished in the wrapper
        loss_ref[...] = jnp.sum(jnp.sum(diff * diff, axis=1, keepdims=True),
                                axis=0, keepdims=True)

        # ------------------------------ decode ------------------------------
        x = _mm(zq, qb_ref[...]) + vrow("post_quant_b")
        for si in range(n_stages // 2, n_stages):
            x = run_stage(x, si)
        recon_ref[...] = x

    return kernel


# ------------------------------ wrapper --------------------------------------
def vit_vqvae_forward(x, ops, layout):
    b, n, d = x.shape
    c = n * COMPRESSION
    kernel = _make_kernel(layout, NUM_HEADS)

    in_specs = [pl.BlockSpec((None, n, d), lambda i: (i, 0, 0))]
    in_specs += [pl.BlockSpec(op.shape, lambda i: (0, 0)) for op in ops]
    out_specs = (pl.BlockSpec((None, n, d), lambda i: (i, 0, 0)),
                 pl.BlockSpec((None, 1, c), lambda i: (i, 0, 0)),
                 pl.BlockSpec((None, 1, 1), lambda i: (i, 0, 0)))
    out_shape = (jax.ShapeDtypeStruct((b, n, d), jnp.float32),
                 jax.ShapeDtypeStruct((b, 1, c), jnp.int32),
                 jax.ShapeDtypeStruct((b, 1, 1), jnp.float32))

    recon, idx, sqsum = pl.pallas_call(
        kernel,
        grid=(b,),
        in_specs=in_specs,
        out_specs=out_specs,
        out_shape=out_shape,
        scratch_shapes=[pltpu.VMEM((MAX_TOKENS, MAX_DIM), jnp.float32)],
        compiler_params=pltpu.CompilerParams(
            dimension_semantics=("parallel",),
            vmem_limit_bytes=16 * 1024 * 1024),
    )(x, *ops)

    # mean((sg[zq]-z)^2) + beta*mean((zq-sg[z])^2) == (1+beta)*mse in forward
    loss = (1.0 + BETA) * jnp.sum(sqsum) / (b * c * CODEBOOK_DIM)
    return recon, idx.reshape(-1), loss


# ----------------------------- parameter init --------------------------------
def _init_block(key, dim):
    ks = jax.random.split(key, 4)
    nrm = lambda kk, shp: 0.02 * jax.random.normal(kk, shp, jnp.float32)
    return dict(
        ln1_g=jnp.ones((dim,), jnp.float32), ln1_b=jnp.zeros((dim,), jnp.float32),
        # (D_in, 3D_out), columns ordered [Wq | Wk | Wv], heads contiguous within.
        wqkv=nrm(ks[0], (dim, 3 * dim)), bqkv=jnp.zeros((3 * dim,), jnp.float32),
        wo=nrm(ks[1], (dim, dim)), bo=jnp.zeros((dim,), jnp.float32),
        ln2_g=jnp.ones((dim,), jnp.float32), ln2_b=jnp.zeros((dim,), jnp.float32),
        w1=nrm(ks[2], (dim, 4 * dim)), b1=jnp.zeros((4 * dim,), jnp.float32),
        w2=nrm(ks[3], (4 * dim, dim)), b2=jnp.zeros((dim,), jnp.float32),
    )


def _init_stage(key, dim, tokens_out, lin_out):
    k1, k2, k3, k4 = jax.random.split(key, 4)
    return dict(
        block1=_init_block(k1, dim),
        block2=_init_block(k2, dim),
        queries=jax.random.normal(k3, (tokens_out, dim), jnp.float32),
        lin_w=0.02 * jax.random.normal(k4, (dim, lin_out), jnp.float32),
        lin_b=jnp.zeros((lin_out,), jnp.float32),
    )


def init_params(key):
    keys = jax.random.split(key, 2 * NUM_BLOCKS + 3)
    params = {"encoder": [], "decoder": []}

    dim, tokens = EMBED_DIM, NUM_PATCHES
    for i in range(NUM_BLOCKS):                 # encoder: 32->64->128, tokens 4->8->16
        tokens *= 2
        params["encoder"].append(_init_stage(keys[i], dim, tokens, dim * 2))
        dim *= 2

    kq, kpost, kcode = keys[2 * NUM_BLOCKS:2 * NUM_BLOCKS + 3]
    params["pre_quant_w"] = 0.02 * jax.random.normal(kq, (dim, CODEBOOK_DIM), jnp.float32)
    params["pre_quant_b"] = jnp.zeros((CODEBOOK_DIM,), jnp.float32)
    params["codebook"] = jax.random.uniform(
        kcode, (NUM_CODEBOOK, CODEBOOK_DIM), jnp.float32,
        minval=-1.0 / NUM_CODEBOOK, maxval=1.0 / NUM_CODEBOOK)
    params["post_quant_w"] = 0.02 * jax.random.normal(kpost, (CODEBOOK_DIM, dim), jnp.float32)
    params["post_quant_b"] = jnp.zeros((dim,), jnp.float32)

    for i in range(NUM_BLOCKS):                 # decoder: 128->64->32, tokens 16->8->4
        tokens //= 2
        params["decoder"].append(_init_stage(keys[NUM_BLOCKS + i], dim, tokens, dim // 2))
        dim //= 2
    return params


# ----------------------------- weight packing ---------------------------------
def _rup(n, m):
    return ((n + m - 1) // m) * m


def _pack_lanes(items, dtype):
    """Concatenate (rows, w_i) matrices along lanes, each segment 128-aligned."""
    chunks, off, pos = [], {}, 0
    for key, a in items:
        w = a.shape[1]
        wp = _rup(w, 128)
        off[key] = (pos, w)
        chunks.append(jnp.pad(a, ((0, 0), (0, wp - w))).astype(dtype))
        pos += wp
    return jnp.concatenate(chunks, axis=1), off


def _pack_rows(items, dtype):
    """Stack (r_i, cols) matrices along sublanes (rows)."""
    chunks, off, pos = [], {}, 0
    for key, a in items:
        off[key] = (pos, a.shape[0])
        chunks.append(a.astype(dtype))
        pos += a.shape[0]
    return jnp.concatenate(chunks, axis=0), off


def pack_params(params):
    """Pack the logical parameter tree into a handful of contiguous slabs."""
    stage_params = list(params["encoder"]) + list(params["decoder"])
    wides, talls, stage_layouts, vec_items = [], [], [], []

    for si, sp in enumerate(stage_params):
        dim = sp["block1"]["wo"].shape[0]
        wide_items, tall_items = [], []
        for bi, bname in ((1, "block1"), (2, "block2")):
            bp = sp[bname]
            wide_items += [(f"b{bi}_wqkv", bp["wqkv"]),
                           (f"b{bi}_wo", bp["wo"]),
                           (f"b{bi}_w1", bp["w1"])]
            tall_items += [(f"b{bi}_w2", bp["w2"])]
            vec_items += [(f"s{si}_b{bi}_{nm}", bp[nm].reshape(1, -1))
                          for nm in ("ln1_g", "ln1_b", "bqkv", "bo",
                                     "ln2_g", "ln2_b", "b1", "b2")]
        wide_items.append(("lin_w", sp["lin_w"]))
        tall_items.append(("queries", sp["queries"]))
        vec_items.append((f"s{si}_lin_b", sp["lin_b"].reshape(1, -1)))

        wide, wide_off = _pack_lanes(wide_items, jnp.bfloat16)
        tall, tall_off = _pack_rows(tall_items, jnp.bfloat16)
        wides.append(wide)
        talls.append(tall)
        stage_layouts.append({"dim": dim, "wide": wide_off, "tall": tall_off})

    vec_items += [("pre_quant_b", params["pre_quant_b"].reshape(1, -1)),
                  ("post_quant_b", params["post_quant_b"].reshape(1, -1))]
    vec, vec_off = _pack_lanes(vec_items, jnp.float32)

    quant_a = jnp.concatenate([params["codebook"], params["pre_quant_w"]],
                              axis=0).astype(jnp.float32)        # (K + D, dc)
    quant_b = params["post_quant_w"].astype(jnp.float32)          # (dc, D)

    ops = wides + talls + [vec, quant_a, quant_b]                 # 11 operands
    layout = {"stages": stage_layouts, "vec": vec_off,
              "num_codebook": params["codebook"].shape[0],
              "codebook_dim": params["codebook"].shape[1]}
    return ops, layout


# -------------------------------- main ----------------------------------------
if __name__ == "__main__":
    key = jax.random.PRNGKey(0)
    pkey, xkey = jax.random.split(key)
    params = init_params(pkey)
    ops, layout = pack_params(params)

    B = 2
    x = jax.random.normal(xkey, (B, NUM_PATCHES, EMBED_DIM), jnp.float32)

    fwd = jax.jit(lambda xx, oo: vit_vqvae_forward(xx, oo, layout))
    recon, indices, loss = fwd(x, ops)
    jax.block_until_ready((recon, indices, loss))

    assert recon.shape == (B, NUM_PATCHES, EMBED_DIM), recon.shape
    assert indices.shape == (B * NUM_PATCHES * COMPRESSION,), indices.shape
    assert indices.dtype == jnp.int32, indices.dtype
    assert bool(jnp.all((indices >= 0) & (indices < NUM_CODEBOOK))), "index out of range"
    assert bool(jnp.isfinite(loss)), "loss not finite"
    assert bool(jnp.all(jnp.isfinite(recon))), "recon not finite"
    print("KERNEL_OK")
</pallas_src>

<mosaic_0001>
module attributes {stable_mosaic.version = 11 : i64} {
  func.func @kernel(%arg0: i32, %arg1: memref<1x4x32xf32, #tpu.memory_space<vmem>>, %arg2: memref<32x896xbf16, #tpu.memory_space<vmem>>, %arg3: memref<64x1408xbf16, #tpu.memory_space<vmem>>, %arg4: memref<128x2176xbf16, #tpu.memory_space<vmem>>, %arg5: memref<64x1408xbf16, #tpu.memory_space<vmem>>, %arg6: memref<264x32xbf16, #tpu.memory_space<vmem>>, %arg7: memref<528x64xbf16, #tpu.memory_space<vmem>>, %arg8: memref<1032x128xbf16, #tpu.memory_space<vmem>>, %arg9: memref<516x64xbf16, #tpu.memory_space<vmem>>, %arg10: memref<1x11264xf32, #tpu.memory_space<vmem>>, %arg11: memref<192x16xf32, #tpu.memory_space<vmem>>, %arg12: memref<16x128xf32, #tpu.memory_space<vmem>>, %arg13: memref<1x4x32xf32, #tpu.memory_space<vmem>>, %arg14: memref<1x1x16xi32, #tpu.memory_space<vmem>>, %arg15: memref<1x1x1xf32, #tpu.memory_space<vmem>>, %arg16: memref<16x128xf32, #tpu.memory_space<vmem>>) attributes {dimension_semantics = [#tpu.dimension_semantics<parallel>], iteration_bounds = array<i64: 2>, scalar_prefetch = 0 : i64, scratch_operands = 1 : i64, tpu.core_type = #tpu.core_type<tc>, window_params = [{transform_indices = @transform_0, window_bounds = array<i64: 1, 4, 32>}, {pipeline_mode = #tpu.pipeline_mode<synchronous>, transform_indices = @transform_1, window_bounds = array<i64: 32, 896>}, {pipeline_mode = #tpu.pipeline_mode<synchronous>, transform_indices = @transform_2, window_bounds = array<i64: 64, 1408>}, {pipeline_mode = #tpu.pipeline_mode<synchronous>, transform_indices = @transform_3, window_bounds = array<i64: 128, 2176>}, {pipeline_mode = #tpu.pipeline_mode<synchronous>, transform_indices = @transform_4, window_bounds = array<i64: 64, 1408>}, {pipeline_mode = #tpu.pipeline_mode<synchronous>, transform_indices = @transform_5, window_bounds = array<i64: 264, 32>}, {pipeline_mode = #tpu.pipeline_mode<synchronous>, transform_indices = @transform_6, window_bounds = array<i64: 528, 64>}, {pipeline_mode = #tpu.pipeline_mode<synchronous>, transform_indices = @transform_7, window_bounds = array<i64: 1032, 128>}, {pipeline_mode = #tpu.pipeline_mode<synchronous>, transform_indices = @transform_8, window_bounds = array<i64: 516, 64>}, {pipeline_mode = #tpu.pipeline_mode<synchronous>, transform_indices = @transform_9, window_bounds = array<i64: 1, 11264>}, {pipeline_mode = #tpu.pipeline_mode<synchronous>, transform_indices = @transform_10, window_bounds = array<i64: 192, 16>}, {pipeline_mode = #tpu.pipeline_mode<synchronous>, transform_indices = @transform_11, window_bounds = array<i64: 16, 128>}, {transform_indices = @transform_12, window_bounds = array<i64: 1, 4, 32>}, {transform_indices = @transform_13, window_bounds = array<i64: 1, 1, 16>}, {transform_indices = @transform_14, window_bounds = array<i64: 1, 1, 1>}]} {
    %c0 = arith.constant 0 : index
    %c0_0 = arith.constant 0 : index
    %c0_1 = arith.constant 0 : index
    %0 = vector.load %arg1[%c0, %c0_0, %c0_1] : memref<1x4x32xf32, #tpu.memory_space<vmem>>, vector<1x4x32xf32>
    %1 = vector.shape_cast %0 : vector<1x4x32xf32> to vector<4x32xf32>
    %c0_2 = arith.constant 0 : index
    %c0_3 = arith.constant 0 : index
    %2 = vector.load %arg10[%c0_2, %c0_3] : memref<1x11264xf32, #tpu.memory_space<vmem>>, vector<1x32xf32>
    %c0_4 = arith.constant 0 : index
    %c128 = arith.constant 128 : index
    %3 = vector.load %arg10[%c0_4, %c128] : memref<1x11264xf32, #tpu.memory_space<vmem>>, vector<1x32xf32>
    %cst = arith.constant dense<0.000000e+00> : vector<4xf32>
    %4 = vector.multi_reduction <add>, %1, %cst [1] : vector<4x32xf32> to vector<4xf32>
    %5 = vector.shape_cast %4 : vector<4xf32> to vector<4x1xf32>
    %cst_5 = arith.constant 3.200000e+01 : f32
    %6 = vector.broadcast %cst_5 : f32 to vector<4x1xf32>
    %7 = arith.divf %5, %6 : vector<4x1xf32>
    %8 = vector.broadcast %7 : vector<4x1xf32> to vector<4x32xf32>
    %9 = arith.subf %1, %8 : vector<4x32xf32>
    %10 = arith.mulf %9, %9 : vector<4x32xf32>
    %cst_6 = arith.constant dense<0.000000e+00> : vector<4xf32>
    %11 = vector.multi_reduction <add>, %10, %cst_6 [1] : vector<4x32xf32> to vector<4xf32>
    %12 = vector.shape_cast %11 : vector<4xf32> to vector<4x1xf32>
    %cst_7 = arith.constant 3.200000e+01 : f32
    %13 = vector.broadcast %cst_7 : f32 to vector<4x1xf32>
    %14 = arith.divf %12, %13 : vector<4x1xf32>
    %cst_8 = arith.constant 9.99999974E-6 : f32
    %15 = vector.broadcast %cst_8 : f32 to vector<4x1xf32>
    %16 = arith.addf %14, %15 : vector<4x1xf32>
    %17 = math.rsqrt %16 : vector<4x1xf32>
    %18 = vector.broadcast %17 : vector<4x1xf32> to vector<4x32xf32>
    %19 = arith.mulf %9, %18 : vector<4x32xf32>
    %20 = vector.broadcast %2 : vector<1x32xf32> to vector<4x32xf32>
    %21 = arith.mulf %19, %20 : vector<4x32xf32>
    %22 = vector.broadcast %3 : vector<1x32xf32> to vector<4x32xf32>
    %23 = arith.addf %21, %22 : vector<4x32xf32>
    %c0_9 = arith.constant 0 : index
    %c0_10 = arith.constant 0 : index
    %24 = vector.load %arg2[%c0_9, %c0_10] : memref<32x896xbf16, #tpu.memory_space<vmem>>, vector<32x96xbf16>
    %25 = arith.truncf %23 : vector<4x32xf32> to vector<4x32xbf16>
    %cst_11 = arith.constant dense<0.000000e+00> : vector<4x96xf32>
    %26 = tpu.matmul %25, %24, %cst_11 {dimension_numbers = #tpu.dot_dimension_numbers<[1], [0], [0], [1], [0, 0, 1, 1], [], []>} : vector<4x32xbf16>, vector<32x96xbf16>, vector<4x96xf32> -> vector<4x96xf32>
    %c0_12 = arith.constant 0 : index
    %c256 = arith.constant 256 : index
    %27 = vector.load %arg10[%c0_12, %c256] : memref<1x11264xf32, #tpu.memory_space<vmem>>, vector<1x96xf32>
    %28 = vector.broadcast %27 : vector<1x96xf32> to vector<4x96xf32>
    %29 = arith.addf %26, %28 : vector<4x96xf32>
    %30 = vector.extract_strided_slice %29 {offsets = [0, 0], sizes = [4, 8], strides = [1, 1]} : vector<4x96xf32> to vector<4x8xf32>
    %31 = vector.extract_strided_slice %29 {offsets = [0, 32], sizes = [4, 8], strides = [1, 1]} : vector<4x96xf32> to vector<4x8xf32>
    %32 = vector.extract_strided_slice %29 {offsets = [0, 64], sizes = [4, 8], strides = [1, 1]} : vector<4x96xf32> to vector<4x8xf32>
    %cst_13 = arith.constant dense<0.000000e+00> : vector<4x4xf32>
    %33 = tpu.matmul %30, %31, %cst_13 {dimension_numbers = #tpu.dot_dimension_numbers<[1], [1], [0], [0], [0, 0, 1, 0], [], []>} : vector<4x8xf32>, vector<4x8xf32>, vector<4x4xf32> -> vector<4x4xf32>
    %cst_14 = arith.constant 0.353553385 : f32
    %34 = vector.broadcast %cst_14 : f32 to vector<4x4xf32>
    %35 = arith.mulf %33, %34 : vector<4x4xf32>
    %cst_15 = arith.constant dense<0xFF800000> : vector<4xf32>
    %36 = vector.multi_reduction <maximumf>, %35, %cst_15 [1] : vector<4x4xf32> to vector<4xf32>
    %37 = vector.shape_cast %36 : vector<4xf32> to vector<4x1xf32>
    %38 = vector.broadcast %37 : vector<4x1xf32> to vector<4x4xf32>
    %39 = arith.subf %35, %38 : vector<4x4xf32>
    %40 = math.exp %39 : vector<4x4xf32>
    %cst_16 = arith.constant dense<0.000000e+00> : vector<4xf32>
    %41 = vector.multi_reduction <add>, %40, %cst_16 [1] : vector<4x4xf32> to vector<4xf32>
    %42 = vector.shape_cast %41 : vector<4xf32> to vector<4x1xf32>
    %43 = tpu.reciprocal %42 {approx = true} : vector<4x1xf32> -> vector<4x1xf32>
    %44 = vector.broadcast %43 : vector<4x1xf32> to vector<4x4xf32>
    %45 = arith.mulf %40, %44 : vector<4x4xf32>
    %cst_17 = arith.constant dense<0.000000e+00> : vector<4x8xf32>
    %46 = tpu.matmul %45, %32, %cst_17 {dimension_numbers = #tpu.dot_dimension_numbers<[1], [0], [0], [1], [0, 0, 1, 1], [], []>} : vector<4x4xf32>, vector<4x8xf32>, vector<4x8xf32> -> vector<4x8xf32>
    %c0_18 = arith.constant 0 : index
    %c0_19 = arith.constant 0 : index
    %47 = vector.load %arg16[%c0_18, %c0_19] : memref<16x128xf32, #tpu.memory_space<vmem>>, vector<4x8xf32>
    tpu.vector_store %arg16[%c0_18, %c0_19], %46 {strides = array<i32>} : memref<16x128xf32, #tpu.memory_space<vmem>>, vector<4x8xf32>,
    %48 = vector.extract_strided_slice %29 {offsets = [0, 8], sizes = [4, 8], strides = [1, 1]} : vector<4x96xf32> to vector<4x8xf32>
    %49 = vector.extract_strided_slice %29 {offsets = [0, 40], sizes = [4, 8], strides = [1, 1]} : vector<4x96xf32> to vector<4x8xf32>
    %50 = vector.extract_strided_slice %29 {offsets = [0, 72], sizes = [4, 8], strides = [1, 1]} : vector<4x96xf32> to vector<4x8xf32>
    %cst_20 = arith.constant dense<0.000000e+00> : vector<4x4xf32>
    %51 = tpu.matmul %48, %49, %cst_20 {dimension_numbers = #tpu.dot_dimension_numbers<[1], [1], [0], [0], [0, 0, 1, 0], [], []>} : vector<4x8xf32>, vector<4x8xf32>, vector<4x4xf32> -> vector<4x4xf32>
    %cst_21 = arith.constant 0.353553385 : f32
    %52 = vector.broadcast %cst_21 : f32 to vector<4x4xf32>
    %53 = arith.mulf %51, %52 : vector<4x4xf32>
    %cst_22 = arith.constant dense<0xFF800000> : vector<4xf32>
    %54 = vector.multi_reduction <maximumf>, %53, %cst_22 [1] : vector<4x4xf32> to vector<4xf32>
    %55 = vector.shape_cast %54 : vector<4xf32> to vector<4x1xf32>
    %56 = vector.broadcast %55 : vector<4x1xf32> to vector<4x4xf32>
    %57 = arith.subf %53, %56 : vector<4x4xf32>
    %58 = math.exp %57 : vector<4x4xf32>
    %cst_23 = arith.constant dense<0.000000e+00> : vector<4xf32>
    %59 = vector.multi_reduction <add>, %58, %cst_23 [1] : vector<4x4xf32> to vector<4xf32>
    %60 = vector.shape_cast %59 : vector<4xf32> to vector<4x1xf32>
    %61 = tpu.reciprocal %60 {approx = true} : vector<4x1xf32> -> vector<4x1xf32>
    %62 = vector.broadcast %61 : vector<4x1xf32> to vector<4x4xf32>
    %63 = arith.mulf %58, %62 : vector<4x4xf32>
    %cst_24 = arith.constant dense<0.000000e+00> : vector<4x8xf32>
    %64 = tpu.matmul %63, %50, %cst_24 {dimension_numbers = #tpu.dot_dimension_numbers<[1], [0], [0], [1], [0, 0, 1, 1], [], []>} : vector<4x4xf32>, vector<4x8xf32>, vector<4x8xf32> -> vector<4x8xf32>
    %c0_25 = arith.constant 0 : index
    %c8 = arith.constant 8 : index
    %65 = vector.load %arg16[%c0_25, %c8] : memref<16x128xf32, #tpu.memory_space<vmem>>, vector<4x8xf32>
    tpu.vector_store %arg16[%c0_25, %c8], %64 {strides = array<i32>} : memref<16x128xf32, #tpu.memory_space<vmem>>, vector<4x8xf32>,
    %66 = vector.extract_strided_slice %29 {offsets = [0, 16], sizes = [4, 8], strides = [1, 1]} : vector<4x96xf32> to vector<4x8xf32>
    %67 = vector.extract_strided_slice %29 {offsets = [0, 48], sizes = [4, 8], strides = [1, 1]} : vector<4x96xf32> to vector<4x8xf32>
    %68 = vector.extract_strided_slice %29 {offsets = [0, 80], sizes = [4, 8], strides = [1, 1]} : vector<4x96xf32> to vector<4x8xf32>
    %cst_26 = arith.constant dense<0.000000e+00> : vector<4x4xf32>
    %69 = tpu.matmul %66, %67, %cst_26 {dimension_numbers = #tpu.dot_dimension_numbers<[1], [1], [0], [0], [0, 0, 1, 0], [], []>} : vector<4x8xf32>, vector<4x8xf32>, vector<4x4xf32> -> vector<4x4xf32>
    %cst_27 = arith.constant 0.353553385 : f32
    %70 = vector.broadcast %cst_27 : f32 to vector<4x4xf32>
    %71 = arith.mulf %69, %70 : vector<4x4xf32>
    %cst_28 = arith.constant dense<0xFF800000> : vector<4xf32>
    %72 = vector.multi_reduction <maximumf>, %71, %cst_28 [1] : vector<4x4xf32> to vector<4xf32>
    %73 = vector.shape_cast %72 : vector<4xf32> to vector<4x1xf32>
    %74 = vector.broadcast %73 : vector<4x1xf32> to vector<4x4xf32>
    %75 = arith.subf %71, %74 : vector<4x4xf32>
    %76 = math.exp %75 : vector<4x4xf32>
    %cst_29 = arith.constant dense<0.000000e+00> : vector<4xf32>
    %77 = vector.multi_reduction <add>, %76, %cst_29 [1] : vector<4x4xf32> to vector<4xf32>
    %78 = vector.shape_cast %77 : vector<4xf32> to vector<4x1xf32>
    %79 = tpu.reciprocal %78 {approx = true} : vector<4x1xf32> -> vector<4x1xf32>
    %80 = vector.broadcast %79 : vector<4x1xf32> to vector<4x4xf32>
    %81 = arith.mulf %76, %80 : vector<4x4xf32>
    %cst_30 = arith.constant dense<0.000000e+00> : vector<4x8xf32>
    %82 = tpu.matmul %81, %68, %cst_30 {dimension_numbers = #tpu.dot_dimension_numbers<[1], [0], [0], [1], [0, 0, 1, 1], [], []>} : vector<4x4xf32>, vector<4x8xf32>, vector<4x8xf32> -> vector<4x8xf32>
    %c0_31 = arith.constant 0 : index
    %c16 = arith.constant 16 : index
    %83 = vector.load %arg16[%c0_31, %c16] : memref<16x128xf32, #tpu.memory_space<vmem>>, vector<4x8xf32>
    tpu.vector_store %arg16[%c0_31, %c16], %82 {strides = array<i32>} : memref<16x128xf32, #tpu.memory_space<vmem>>, vector<4x8xf32>,
    %84 = vector.extract_strided_slice %29 {offsets = [0, 24], sizes = [4, 8], strides = [1, 1]} : vector<4x96xf32> to vector<4x8xf32>
    %85 = vector.extract_strided_slice %29 {offsets = [0, 56], sizes = [4, 8], strides = [1, 1]} : vector<4x96xf32> to vector<4x8xf32>
    %86 = vector.extract_strided_slice %29 {offsets = [0, 88], sizes = [4, 8], strides = [1, 1]} : vector<4x96xf32> to vector<4x8xf32>
    %cst_32 = arith.constant dense<0.000000e+00> : vector<4x4xf32>
    %87 = tpu.matmul %84, %85, %cst_32 {dimension_numbers = #tpu.dot_dimension_numbers<[1], [1], [0], [0], [0, 0, 1, 0], [], []>} : vector<4x8xf32>, vector<4x8xf32>, vector<4x4xf32> -> vector<4x4xf32>
    %cst_33 = arith.constant 0.353553385 : f32
    %88 = vector.broadcast %cst_33 : f32 to vector<4x4xf32>
    %89 = arith.mulf %87, %88 : vector<4x4xf32>
    %cst_34 = arith.constant dense<0xFF800000> : vector<4xf32>
    %90 = vector.multi_reduction <maximumf>, %89, %cst_34 [1] : vector<4x4xf32> to vector<4xf32>
    %91 = vector.shape_cast %90 : vector<4xf32> to vector<4x1xf32>
    %92 = vector.broadcast %91 : vector<4x1xf32> to vector<4x4xf32>
    %93 = arith.subf %89, %92 : vector<4x4xf32>
    %94 = math.exp %93 : vector<4x4xf32>
    %cst_35 = arith.constant dense<0.000000e+00> : vector<4xf32>
    %95 = vector.multi_reduction <add>, %94, %cst_35 [1] : vector<4x4xf32> to vector<4xf32>
    %96 = vector.shape_cast %95 : vector<4xf32> to vector<4x1xf32>
    %97 = tpu.reciprocal %96 {approx = true} : vector<4x1xf32> -> vector<4x1xf32>
    %98 = vector.broadcast %97 : vector<4x1xf32> to vector<4x4xf32>
    %99 = arith.mulf %94, %98 : vector<4x4xf32>
    %cst_36 = arith.constant dense<0.000000e+00> : vector<4x8xf32>
    %100 = tpu.matmul %99, %86, %cst_36 {dimension_numbers = #tpu.dot_dimension_numbers<[1], [0], [0], [1], [0, 0, 1, 1], [], []>} : vector<4x4xf32>, vector<4x8xf32>, vector<4x8xf32> -> vector<4x8xf32>
    %c0_37 = arith.constant 0 : index
    %c24 = arith.constant 24 : index
    %101 = vector.load %arg16[%c0_37, %c24] : memref<16x128xf32, #tpu.memory_space<vmem>>, vector<4x8xf32>
    tpu.vector_store %arg16[%c0_37, %c24], %100 {strides = array<i32>} : memref<16x128xf32, #tpu.memory_space<vmem>>, vector<4x8xf32>,
    %c0_38 = arith.constant 0 : index
    %c0_39 = arith.constant 0 : index
    %102 = vector.load %arg16[%c0_38, %c0_39] : memref<16x128xf32, #tpu.memory_space<vmem>>, vector<4x32xf32>
    %c0_40 = arith.constant 0 : index
    %c128_41 = arith.constant 128 : index
    %103 = vector.load %arg2[%c0_40, %c128_41] : memref<32x896xbf16, #tpu.memory_space<vmem>>, vector<32x32xbf16>
    %104 = arith.truncf %102 : vector<4x32xf32> to vector<4x32xbf16>
    %cst_42 = arith.constant dense<0.000000e+00> : vector<4x32xf32>
    %105 = tpu.matmul %104, %103, %cst_42 {dimension_numbers = #tpu.dot_dimension_numbers<[1], [0], [0], [1], [0, 0, 1, 1], [], []>} : vector<4x32xbf16>, vector<32x32xbf16>, vector<4x32xf32> -> vector<4x32xf32>
    %106 = arith.addf %1, %105 : vector<4x32xf32>
    %c0_43 = arith.constant 0 : index
    %c384 = arith.constant 384 : index
    %107 = vector.load %arg10[%c0_43, %c384] : memref<1x11264xf32, #tpu.memory_space<vmem>>, vector<1x32xf32>
    %108 = vector.broadcast %107 : vector<1x32xf32> to vector<4x32xf32>
    %109 = arith.addf %106, %108 : vector<4x32xf32>
    %c0_44 = arith.constant 0 : index
    %c512 = arith.constant 512 : index
    %110 = vector.load %arg10[%c0_44, %c512] : memref<1x11264xf32, #tpu.memory_space<vmem>>, vector<1x32xf32>
    %c0_45 = arith.constant 0 : index
    %c640 = arith.constant 640 : index
    %111 = vector.load %arg10[%c0_45, %c640] : memref<1x11264xf32, #tpu.memory_space<vmem>>, vector<1x32xf32>
    %cst_46 = arith.constant dense<0.000000e+00> : vector<4xf32>
    %112 = vector.multi_reduction <add>, %109, %cst_46 [1] : vector<4x32xf32> to vector<4xf32>
    %113 = vector.shape_cast %112 : vector<4xf32> to vector<4x1xf32>
    %cst_47 = arith.constant 3.200000e+01 : f32
    %114 = vector.broadcast %cst_47 : f32 to vector<4x1xf32>
    %115 = arith.divf %113, %114 : vector<4x1xf32>
    %116 = vector.broadcast %115 : vector<4x1xf32> to vector<4x32xf32>
    %117 = arith.subf %109, %116 : vector<4x32xf32>
    %118 = arith.mulf %117, %117 : vector<4x32xf32>
    %cst_48 = arith.constant dense<0.000000e+00> : vector<4xf32>
    %119 = vector.multi_reduction <add>, %118, %cst_48 [1] : vector<4x32xf32> to vector<4xf32>
    %120 = vector.shape_cast %119 : vector<4xf32> to vector<4x1xf32>
    %cst_49 = arith.constant 3.200000e+01 : f32
    %121 = vector.broadcast %cst_49 : f32 to vector<4x1xf32>
    %122 = arith.divf %120, %121 : vector<4x1xf32>
    %cst_50 = arith.constant 9.99999974E-6 : f32
    %123 = vector.broadcast %cst_50 : f32 to vector<4x1xf32>
    %124 = arith.addf %122, %123 : vector<4x1xf32>
    %125 = math.rsqrt %124 : vector<4x1xf32>
    %126 = vector.broadcast %125 : vector<4x1xf32> to vector<4x32xf32>
    %127 = arith.mulf %117, %126 : vector<4x32xf32>
    %128 = vector.broadcast %110 : vector<1x32xf32> to vector<4x32xf32>
    %129 = arith.mulf %127, %128 : vector<4x32xf32>
    %130 = vector.broadcast %111 : vector<1x32xf32> to vector<4x32xf32>
    %131 = arith.addf %129, %130 : vector<4x32xf32>
    %c0_51 = arith.constant 0 : index
    %c256_52 = arith.constant 256 : index
    %132 = vector.load %arg2[%c0_51, %c256_52] : memref<32x896xbf16, #tpu.memory_space<vmem>>, vector<32x128xbf16>
    %133 = arith.truncf %131 : vector<4x32xf32> to vector<4x32xbf16>
    %cst_53 = arith.constant dense<0.000000e+00> : vector<4x128xf32>
    %134 = tpu.matmul %133, %132, %cst_53 {dimension_numbers = #tpu.dot_dimension_numbers<[1], [0], [0], [1], [0, 0, 1, 1], [], []>} : vector<4x32xbf16>, vector<32x128xbf16>, vector<4x128xf32> -> vector<4x128xf32>
    %c0_54 = arith.constant 0 : index
    %c768 = arith.constant 768 : index
    %135 = vector.load %arg10[%c0_54, %c768] : memref<1x11264xf32, #tpu.memory_space<vmem>>, vector<1x128xf32>
    %136 = vector.broadcast %135 : vector<1x128xf32> to vector<4x128xf32>
    %137 = arith.addf %134, %136 : vector<4x128xf32>
    %138 = arith.mulf %137, %137 : vector<4x128xf32>
    %139 = arith.mulf %137, %138 : vector<4x128xf32>
    %cst_55 = arith.constant 4.471500e-02 : f32
    %140 = vector.broadcast %cst_55 : f32 to vector<4x128xf32>
    %141 = arith.mulf %140, %139 : vector<4x128xf32>
    %142 = arith.addf %137, %141 : vector<4x128xf32>
    %cst_56 = arith.constant 0.797884583 : f32
    %143 = vector.broadcast %cst_56 : f32 to vector<4x128xf32>
    %144 = arith.mulf %143, %142 : vector<4x128xf32>
    %145 = math.tanh %144 : vector<4x128xf32>
    %cst_57 = arith.constant 1.000000e+00 : f32
    %146 = vector.broadcast %cst_57 : f32 to vector<4x128xf32>
    %147 = arith.addf %146, %145 : vector<4x128xf32>
    %cst_58 = arith.constant 5.000000e-01 : f32
    %148 = vector.broadcast %cst_58 : f32 to vector<4x128xf32>
    %149 = arith.mulf %148, %147 : vector<4x128xf32>
    %150 = arith.mulf %137, %149 : vector<4x128xf32>
    %c0_59 = arith.constant 0 : index
    %c0_60 = arith.constant 0 : index
    %151 = vector.load %arg6[%c0_59, %c0_60] : memref<264x32xbf16, #tpu.memory_space<vmem>>, vector<128x32xbf16>
    %152 = arith.truncf %150 : vector<4x128xf32> to vector<4x128xbf16>
    %cst_61 = arith.constant dense<0.000000e+00> : vector<4x32xf32>
    %153 = tpu.matmul %152, %151, %cst_61 {dimension_numbers = #tpu.dot_dimension_numbers<[1], [0], [0], [1], [0, 0, 1, 1], [], []>} : vector<4x128xbf16>, vector<128x32xbf16>, vector<4x32xf32> -> vector<4x32xf32>
    %c0_62 = arith.constant 0 : index
    %c896 = arith.constant 896 : index
    %154 = vector.load %arg10[%c0_62, %c896] : memref<1x11264xf32, #tpu.memory_space<vmem>>, vector<1x32xf32>
    %155 = vector.broadcast %154 : vector<1x32xf32> to vector<4x32xf32>
    %156 = arith.addf %153, %155 : vector<4x32xf32>
    %157 = arith.addf %109, %156 : vector<4x32xf32>
    %c0_63 = arith.constant 0 : index
    %c1024 = arith.constant 1024 : index
    %158 = vector.load %arg10[%c0_63, %c1024] : memref<1x11264xf32, #tpu.memory_space<vmem>>, vector<1x32xf32>
    %c0_64 = arith.constant 0 : index
    %c1152 = arith.constant 1152 : index
    %159 = vector.load %arg10[%c0_64, %c1152] : memref<1x11264xf32, #tpu.memory_space<vmem>>, vector<1x32xf32>
    %cst_65 = arith.constant dense<0.000000e+00> : vector<4xf32>
    %160 = vector.multi_reduction <add>, %157, %cst_65 [1] : vector<4x32xf32> to vector<4xf32>
    %161 = vector.shape_cast %160 : vector<4xf32> to vector<4x1xf32>
    %cst_66 = arith.constant 3.200000e+01 : f32
    %162 = vector.broadcast %cst_66 : f32 to vector<4x1xf32>
    %163 = arith.divf %161, %162 : vector<4x1xf32>
    %164 = vector.broadcast %163 : vector<4x1xf32> to vector<4x32xf32>
    %165 = arith.subf %157, %164 : vector<4x32xf32>
    %166 = arith.mulf %165, %165 : vector<4x32xf32>
    %cst_67 = arith.constant dense<0.000000e+00> : vector<4xf32>
    %167 = vector.multi_reduction <add>, %166, %cst_67 [1] : vector<4x32xf32> to vector<4xf32>
    %168 = vector.shape_cast %167 : vector<4xf32> to vector<4x1xf32>
    %cst_68 = arith.constant 3.200000e+01 : f32
    %169 = vector.broadcast %cst_68 : f32 to vector<4x1xf32>
    %170 = arith.divf %168, %169 : vector<4x1xf32>
    %cst_69 = arith.constant 9.99999974E-6 : f32
    %171 = vector.broadcast %cst_69 : f32 to vector<4x1xf32>
    %172 = arith.addf %170, %171 : vector<4x1xf32>
    %173 = math.rsqrt %172 : vector<4x1xf32>
    %174 = vector.broadcast %173 : vector<4x1xf32> to vector<4x32xf32>
    %175 = arith.mulf %165, %174 : vector<4x32xf32>
    %176 = vector.broadcast %158 : vector<1x32xf32> to vector<4x32xf32>
    %177 = arith.mulf %175, %176 : vector<4x32xf32>
    %178 = vector.broadcast %159 : vector<1x32xf32> to vector<4x32xf32>
    %179 = arith.addf %177, %178 : vector<4x32xf32>
    %c0_70 = arith.constant 0 : index
    %c384_71 = arith.constant 384 : index
    %180 = vector.load %arg2[%c0_70, %c384_71] : memref<32x896xbf16, #tpu.memory_space<vmem>>, vector<32x96xbf16>
    %181 = arith.truncf %179 : vector<4x32xf32> to vector<4x32xbf16>
    %cst_72 = arith.constant dense<0.000000e+00> : vector<4x96xf32>
    %182 = tpu.matmul %181, %180, %cst_72 {dimension_numbers = #tpu.dot_dimension_numbers<[1], [0], [0], [1], [0, 0, 1, 1], [], []>} : vector<4x32xbf16>, vector<32x96xbf16>, vector<4x96xf32> -> vector<4x96xf32>
    %c0_73 = arith.constant 0 : index
    %c1280 = arith.constant 1280 : index
    %183 = vector.load %arg10[%c0_73, %c1280] : memref<1x11264xf32, #tpu.memory_space<vmem>>, vector<1x96xf32>
    %184 = vector.broadcast %183 : vector<1x96xf32> to vector<4x96xf32>
    %185 = arith.addf %182, %184 : vector<4x96xf32>
    %186 = vector.extract_strided_slice %185 {offsets = [0, 0], sizes = [4, 8], strides = [1, 1]} : vector<4x96xf32> to vector<4x8xf32>
    %187 = vector.extract_strided_slice %185 {offsets = [0, 32], sizes = [4, 8], strides = [1, 1]} : vector<4x96xf32> to vector<4x8xf32>
    %188 = vector.extract_strided_slice %185 {offsets = [0, 64], sizes = [4, 8], strides = [1, 1]} : vector<4x96xf32> to vector<4x8xf32>
    %cst_74 = arith.constant dense<0.000000e+00> : vector<4x4xf32>
    %189 = tpu.matmul %186, %187, %cst_74 {dimension_numbers = #tpu.dot_dimension_numbers<[1], [1], [0], [0], [0, 0, 1, 0], [], []>} : vector<4x8xf32>, vector<4x8xf32>, vector<4x4xf32> -> vector<4x4xf32>
    %cst_75 = arith.constant 0.353553385 : f32
    %190 = vector.broadcast %cst_75 : f32 to vector<4x4xf32>
    %191 = arith.mulf %189, %190 : vector<4x4xf32>
    %cst_76 = arith.constant dense<0xFF800000> : vector<4xf32>
    %192 = vector.multi_reduction <maximumf>, %191, %cst_76 [1] : vector<4x4xf32> to vector<4xf32>
    %193 = vector.shape_cast %192 : vector<4xf32> to vector<4x1xf32>
    %194 = vector.broadcast %193 : vector<4x1xf32> to vector<4x4xf32>
    %195 = arith.subf %191, %194 : vector<4x4xf32>
    %196 = math.exp %195 : vector<4x4xf32>
    %cst_77 = arith.constant dense<0.000000e+00> : vector<4xf32>
    %197 = vector.multi_reduction <add>, %196, %cst_77 [1] : vector<4x4xf32> to vector<4xf32>
    %198 = vector.shape_cast %197 : vector<4xf32> to vector<4x1xf32>
    %199 = tpu.reciprocal %198 {approx = true} : vector<4x1xf32> -> vector<4x1xf32>
    %200 = vector.broadcast %199 : vector<4x1xf32> to vector<4x4xf32>
    %201 = arith.mulf %196, %200 : vector<4x4xf32>
    %cst_78 = arith.constant dense<0.000000e+00> : vector<4x8xf32>
    %202 = tpu.matmul %201, %188, %cst_78 {dimension_numbers = #tpu.dot_dimension_numbers<[1], [0], [0], [1], [0, 0, 1, 1], [], []>} : vector<4x4xf32>, vector<4x8xf32>, vector<4x8xf32> -> vector<4x8xf32>
    %c0_79 = arith.constant 0 : index
    %c0_80 = arith.constant 0 : index
    %203 = vector.load %arg16[%c0_79, %c0_80] : memref<16x128xf32, #tpu.memory_space<vmem>>, vector<4x8xf32>
    tpu.vector_store %arg16[%c0_79, %c0_80], %202 {strides = array<i32>} : memref<16x128xf32, #tpu.memory_space<vmem>>, vector<4x8xf32>,
    %204 = vector.extract_strided_slice %185 {offsets = [0, 8], sizes = [4, 8], strides = [1, 1]} : vector<4x96xf32> to vector<4x8xf32>
    %205 = vector.extract_strided_slice %185 {offsets = [0, 40], sizes = [4, 8], strides = [1, 1]} : vector<4x96xf32> to vector<4x8xf32>
    %206 = vector.extract_strided_slice %185 {offsets = [0, 72], sizes = [4, 8], strides = [1, 1]} : vector<4x96xf32> to vector<4x8xf32>
    %cst_81 = arith.constant dense<0.000000e+00> : vector<4x4xf32>
    %207 = tpu.matmul %204, %205, %cst_81 {dimension_numbers = #tpu.dot_dimension_numbers<[1], [1], [0], [0], [0, 0, 1, 0], [], []>} : vector<4x8xf32>, vector<4x8xf32>, vector<4x4xf32> -> vector<4x4xf32>
    %cst_82 = arith.constant 0.353553385 : f32
    %208 = vector.broadcast %cst_82 : f32 to vector<4x4xf32>
    %209 = arith.mulf %207, %208 : vector<4x4xf32>
    %cst_83 = arith.constant dense<0xFF800000> : vector<4xf32>
    %210 = vector.multi_reduction <maximumf>, %209, %cst_83 [1] : vector<4x4xf32> to vector<4xf32>
    %211 = vector.shape_cast %210 : vector<4xf32> to vector<4x1xf32>
    %212 = vector.broadcast %211 : vector<4x1xf32> to vector<4x4xf32>
    %213 = arith.subf %209, %212 : vector<4x4xf32>
    %214 = math.exp %213 : vector<4x4xf32>
    %cst_84 = arith.constant dense<0.000000e+00> : vector<4xf32>
    %215 = vector.multi_reduction <add>, %214, %cst_84 [1] : vector<4x4xf32> to vector<4xf32>
    %216 = vector.shape_cast %215 : vector<4xf32> to vector<4x1xf32>
    %217 = tpu.reciprocal %216 {approx = true} : vector<4x1xf32> -> vector<4x1xf32>
    %218 = vector.broadcast %217 : vector<4x1xf32> to vector<4x4xf32>
    %219 = arith.mulf %214, %218 : vector<4x4xf32>
    %cst_85 = arith.constant dense<0.000000e+00> : vector<4x8xf32>
    %220 = tpu.matmul %219, %206, %cst_85 {dimension_numbers = #tpu.dot_dimension_numbers<[1], [0], [0], [1], [0, 0, 1, 1], [], []>} : vector<4x4xf32>, vector<4x8xf32>, vector<4x8xf32> -> vector<4x8xf32>
    %c0_86 = arith.constant 0 : index
    %c8_87 = arith.constant 8 : index
    %221 = vector.load %arg16[%c0_86, %c8_87] : memref<16x128xf32, #tpu.memory_space<vmem>>, vector<4x8xf32>
    tpu.vector_store %arg16[%c0_86, %c8_87], %220 {strides = array<i32>} : memref<16x128xf32, #tpu.memory_space<vmem>>, vector<4x8xf32>,
    %222 = vector.extract_strided_slice %185 {offsets = [0, 16], sizes = [4, 8], strides = [1, 1]} : vector<4x96xf32> to vector<4x8xf32>
    %223 = vector.extract_strided_slice %185 {offsets = [0, 48], sizes = [4, 8], strides = [1, 1]} : vector<4x96xf32> to vector<4x8xf32>
    %224 = vector.extract_strided_slice %185 {offsets = [0, 80], sizes = [4, 8], strides = [1, 1]} : vector<4x96xf32> to vector<4x8xf32>
    %cst_88 = arith.constant dense<0.000000e+00> : vector<4x4xf32>
    %225 = tpu.matmul %222, %223, %cst_88 {dimension_numbers = #tpu.dot_dimension_numbers<[1], [1], [0], [0], [0, 0, 1, 0], [], []>} : vector<4x8xf32>, vector<4x8xf32>, vector<4x4xf32> -> vector<4x4xf32>
    %cst_89 = arith.constant 0.353553385 : f32
    %226 = vector.broadcast %cst_89 : f32 to vector<4x4xf32>
    %227 = arith.mulf %225, %226 : vector<4x4xf32>
    %cst_90 = arith.constant dense<0xFF800000> : vector<4xf32>
    %228 = vector.multi_reduction <maximumf>, %227, %cst_90 [1] : vector<4x4xf32> to vector<4xf32>
    %229 = vector.shape_cast %228 : vector<4xf32> to vector<4x1xf32>
    %230 = vector.broadcast %229 : vector<4x1xf32> to vector<4x4xf32>
    %231 = arith.subf %227, %230 : vector<4x4xf32>
    %232 = math.exp %231 : vector<4x4xf32>
    %cst_91 = arith.constant dense<0.000000e+00> : vector<4xf32>
    %233 = vector.multi_reduction <add>, %232, %cst_91 [1] : vector<4x4xf32> to vector<4xf32>
    %234 = vector.shape_cast %233 : vector<4xf32> to vector<4x1xf32>
    %235 = tpu.reciprocal %234 {approx = true} : vector<4x1xf32> -> vector<4x1xf32>
    %236 = vector.broadcast %235 : vector<4x1xf32> to vector<4x4xf32>
    %237 = arith.mulf %232, %236 : vector<4x4xf32>
    %cst_92 = arith.constant dense<0.000000e+00> : vector<4x8xf32>
    %238 = tpu.matmul %237, %224, %cst_92 {dimension_numbers = #tpu.dot_dimension_numbers<[1], [0], [0], [1], [0, 0, 1, 1], [], []>} : vector<4x4xf32>, vector<4x8xf32>, vector<4x8xf32> -> vector<4x8xf32>
    %c0_93 = arith.constant 0 : index
    %c16_94 = arith.constant 16 : index
    %239 = vector.load %arg16[%c0_93, %c16_94] : memref<16x128xf32, #tpu.memory_space<vmem>>, vector<4x8xf32>
    tpu.vector_store %arg16[%c0_93, %c16_94], %238 {strides = array<i32>} : memref<16x128xf32, #tpu.memory_space<vmem>>, vector<4x8xf32>,
    %240 = vector.extract_strided_slice %185 {offsets = [0, 24], sizes = [4, 8], strides = [1, 1]} : vector<4x96xf32> to vector<4x8xf32>
    %241 = vector.extract_strided_slice %185 {offsets = [0, 56], sizes = [4, 8], strides = [1, 1]} : vector<4x96xf32> to vector<4x8xf32>
    %242 = vector.extract_strided_slice %185 {offsets = [0, 88], sizes = [4, 8], strides = [1, 1]} : vector<4x96xf32> to vector<4x8xf32>
    %cst_95 = arith.constant dense<0.000000e+00> : vector<4x4xf32>
    %243 = tpu.matmul %240, %241, %cst_95 {dimension_numbers = #tpu.dot_dimension_numbers<[1], [1], [0], [0], [0, 0, 1, 0], [], []>} : vector<4x8xf32>, vector<4x8xf32>, vector<4x4xf32> -> vector<4x4xf32>
    %cst_96 = arith.constant 0.353553385 : f32
    %244 = vector.broadcast %cst_96 : f32 to vector<4x4xf32>
    %245 = arith.mulf %243, %244 : vector<4x4xf32>
    %cst_97 = arith.constant dense<0xFF800000> : vector<4xf32>
    %246 = vector.multi_reduction <maximumf>, %245, %cst_97 [1] : vector<4x4xf32> to vector<4xf32>
    %247 = vector.shape_cast %246 : vector<4xf32> to vector<4x1xf32>
    %248 = vector.broadcast %247 : vector<4x1xf32> to vector<4x4xf32>
    %249 = arith.subf %245, %248 : vector<4x4xf32>
    %250 = math.exp %249 : vector<4x4xf32>
    %cst_98 = arith.constant dense<0.000000e+00> : vector<4xf32>
    %251 = vector.multi_reduction <add>, %250, %cst_98 [1] : vector<4x4xf32> to vector<4xf32>
    %252 = vector.shape_cast %251 : vector<4xf32> to vector<4x1xf32>
    %253 = tpu.reciprocal %252 {approx = true} : vector<4x1xf32> -> vector<4x1xf32>
    %254 = vector.broadcast %253 : vector<4x1xf32> to vector<4x4xf32>
    %255 = arith.mulf %250, %254 : vector<4x4xf32>
    %cst_99 = arith.constant dense<0.000000e+00> : vector<4x8xf32>
    %256 = tpu.matmul %255, %242, %cst_99 {dimension_numbers = #tpu.dot_dimension_numbers<[1], [0], [0], [1], [0, 0, 1, 1], [], []>} : vector<4x4xf32>, vector<4x8xf32>, vector<4x8xf32> -> vector<4x8xf32>
    %c0_100 = arith.constant 0 : index
    %c24_101 = arith.constant 24 : index
    %257 = vector.load %arg16[%c0_100, %c24_101] : memref<16x128xf32, #tpu.memory_space<vmem>>, vector<4x8xf32>
    tpu.vector_store %arg16[%c0_100, %c24_101], %256 {strides = array<i32>} : memref<16x128xf32, #tpu.memory_space<vmem>>, vector<4x8xf32>,
    %c0_102 = arith.constant 0 : index
    %c0_103 = arith.constant 0 : index
    %258 = vector.load %arg16[%c0_102, %c0_103] : memref<16x128xf32, #tpu.memory_space<vmem>>, vector<4x32xf32>
    %c0_104 = arith.constant 0 : index
    %c512_105 = arith.constant 512 : index
    %259 = vector.load %arg2[%c0_104, %c512_105] : memref<32x896xbf16, #tpu.memory_space<vmem>>, vector<32x32xbf16>
    %260 = arith.truncf %258 : vector<4x32xf32> to vector<4x32xbf16>
    %cst_106 = arith.constant dense<0.000000e+00> : vector<4x32xf32>
    %261 = tpu.matmul %260, %259, %cst_106 {dimension_numbers = #tpu.dot_dimension_numbers<[1], [0], [0], [1], [0, 0, 1, 1], [], []>} : vector<4x32xbf16>, vector<32x32xbf16>, vector<4x32xf32> -> vector<4x32xf32>
    %262 = arith.addf %157, %261 : vector<4x32xf32>
    %c0_107 = arith.constant 0 : index
    %c1408 = arith.constant 1408 : index
    %263 = vector.load %arg10[%c0_107, %c1408] : memref<1x11264xf32, #tpu.memory_space<vmem>>, vector<1x32xf32>
    %264 = vector.broadcast %263 : vector<1x32xf32> to vector<4x32xf32>
    %265 = arith.addf %262, %264 : vector<4x32xf32>
    %c0_108 = arith.constant 0 : index
    %c1536 = arith.constant 1536 : index
    %266 = vector.load %arg10[%c0_108, %c1536] : memref<1x11264xf32, #tpu.memory_space<vmem>>, vector<1x32xf32>
    %c0_109 = arith.constant 0 : index
    %c1664 = arith.constant 1664 : index
    %267 = vector.load %arg10[%c0_109, %c1664] : memref<1x11264xf32, #tpu.memory_space<vmem>>, vector<1x32xf32>
    %cst_110 = arith.constant dense<0.000000e+00> : vector<4xf32>
    %268 = vector.multi_reduction <add>, %265, %cst_110 [1] : vector<4x32xf32> to vector<4xf32>
    %269 = vector.shape_cast %268 : vector<4xf32> to vector<4x1xf32>
    %cst_111 = arith.constant 3.200000e+01 : f32
    %270 = vector.broadcast %cst_111 : f32 to vector<4x1xf32>
    %271 = arith.divf %269, %270 : vector<4x1xf32>
    %272 = vector.broadcast %271 : vector<4x1xf32> to vector<4x32xf32>
    %273 = arith.subf %265, %272 : vector<4x32xf32>
    %274 = arith.mulf %273, %273 : vector<4x32xf32>
    %cst_112 = arith.constant dense<0.000000e+00> : vector<4xf32>
    %275 = vector.multi_reduction <add>, %274, %cst_112 [1] : vector<4x32xf32> to vector<4xf32>
    %276 = vector.shape_cast %275 : vector<4xf32> to vector<4x1xf32>
    %cst_113 = arith.constant 3.200000e+01 : f32
    %277 = vector.broadcast %cst_113 : f32 to vector<4x1xf32>
    %278 = arith.divf %276, %277 : vector<4x1xf32>
    %cst_114 = arith.constant 9.99999974E-6 : f32
    %279 = vector.broadcast %cst_114 : f32 to vector<4x1xf32>
    %280 = arith.addf %278, %279 : vector<4x1xf32>
    %281 = math.rsqrt %280 : vector<4x1xf32>
    %282 = vector.broadcast %281 : vector<4x1xf32> to vector<4x32xf32>
    %283 = arith.mulf %273, %282 : vector<4x32xf32>
    %284 = vector.broadcast %266 : vector<1x32xf32> to vector<4x32xf32>
    %285 = arith.mulf %283, %284 : vector<4x32xf32>
    %286 = vector.broadcast %267 : vector<1x32xf32> to vector<4x32xf32>
    %287 = arith.addf %285, %286 : vector<4x32xf32>
    %c0_115 = arith.constant 0 : index
    %c640_116 = arith.constant 640 : index
    %288 = vector.load %arg2[%c0_115, %c640_116] : memref<32x896xbf16, #tpu.memory_space<vmem>>, vector<32x128xbf16>
    %289 = arith.truncf %287 : vector<4x32xf32> to vector<4x32xbf16>
    %cst_117 = arith.constant dense<0.000000e+00> : vector<4x128xf32>
    %290 = tpu.matmul %289, %288, %cst_117 {dimension_numbers = #tpu.dot_dimension_numbers<[1], [0], [0], [1], [0, 0, 1, 1], [], []>} : vector<4x32xbf16>, vector<32x128xbf16>, vector<4x128xf32> -> vector<4x128xf32>
    %c0_118 = arith.constant 0 : index
    %c1792 = arith.constant 1792 : index
    %291 = vector.load %arg10[%c0_118, %c1792] : memref<1x11264xf32, #tpu.memory_space<vmem>>, vector<1x128xf32>
    %292 = vector.broadcast %291 : vector<1x128xf32> to vector<4x128xf32>
    %293 = arith.addf %290, %292 : vector<4x128xf32>
    %294 = arith.mulf %293, %293 : vector<4x128xf32>
    %295 = arith.mulf %293, %294 : vector<4x128xf32>
    %cst_119 = arith.constant 4.471500e-02 : f32
    %296 = vector.broadcast %cst_119 : f32 to vector<4x128xf32>
    %297 = arith.mulf %296, %295 : vector<4x128xf32>
    %298 = arith.addf %293, %297 : vector<4x128xf32>
    %cst_120 = arith.constant 0.797884583 : f32
    %299 = vector.broadcast %cst_120 : f32 to vector<4x128xf32>
    %300 = arith.mulf %299, %298 : vector<4x128xf32>
    %301 = math.tanh %300 : vector<4x128xf32>
    %cst_121 = arith.constant 1.000000e+00 : f32
    %302 = vector.broadcast %cst_121 : f32 to vector<4x128xf32>
    %303 = arith.addf %302, %301 : vector<4x128xf32>
    %cst_122 = arith.constant 5.000000e-01 : f32
    %304 = vector.broadcast %cst_122 : f32 to vector<4x128xf32>
    %305 = arith.mulf %304, %303 : vector<4x128xf32>
    %306 = arith.mulf %293, %305 : vector<4x128xf32>
    %c128_123 = arith.constant 128 : index
    %c0_124 = arith.constant 0 : index
    %307 = vector.load %arg6[%c128_123, %c0_124] : memref<264x32xbf16, #tpu.memory_space<vmem>>, vector<128x32xbf16>
    %308 = arith.truncf %306 : vector<4x128xf32> to vector<4x128xbf16>
    %cst_125 = arith.constant dense<0.000000e+00> : vector<4x32xf32>
    %309 = tpu.matmul %308, %307, %cst_125 {dimension_numbers = #tpu.dot_dimension_numbers<[1], [0], [0], [1], [0, 0, 1, 1], [], []>} : vector<4x128xbf16>, vector<128x32xbf16>, vector<4x32xf32> -> vector<4x32xf32>
    %c0_126 = arith.constant 0 : index
    %c1920 = arith.constant 1920 : index
    %310 = vector.load %arg10[%c0_126, %c1920] : memref<1x11264xf32, #tpu.memory_space<vmem>>, vector<1x32xf32>
    %311 = vector.broadcast %310 : vector<1x32xf32> to vector<4x32xf32>
    %312 = arith.addf %309, %311 : vector<4x32xf32>
    %313 = arith.addf %265, %312 : vector<4x32xf32>
    %c256_127 = arith.constant 256 : index
    %c0_128 = arith.constant 0 : index
    %314 = vector.load %arg6[%c256_127, %c0_128] : memref<264x32xbf16, #tpu.memory_space<vmem>>, vector<8x32xbf16>
    %315 = arith.truncf %313 : vector<4x32xf32> to vector<4x32xbf16>
    %cst_129 = arith.constant dense<0.000000e+00> : vector<8x4xf32>
    %316 = tpu.matmul %314, %315, %cst_129 {dimension_numbers = #tpu.dot_dimension_numbers<[1], [1], [0], [0], [0, 0, 1, 0], [], []>} : vector<8x32xbf16>, vector<4x32xbf16>, vector<8x4xf32> -> vector<8x4xf32>
    %cst_130 = arith.constant 0.176776692 : f32
    %317 = vector.broadcast %cst_130 : f32 to vector<8x4xf32>
    %318 = arith.mulf %316, %317 : vector<8x4xf32>
    %cst_131 = arith.constant dense<0xFF800000> : vector<8xf32>
    %319 = vector.multi_reduction <maximumf>, %318, %cst_131 [1] : vector<8x4xf32> to vector<8xf32>
    %320 = vector.shape_cast %319 : vector<8xf32> to vector<8x1xf32>
    %321 = vector.broadcast %320 : vector<8x1xf32> to vector<8x4xf32>
    %322 = arith.subf %318, %321 : vector<8x4xf32>
    %323 = math.exp %322 : vector<8x4xf32>
    %cst_132 = arith.constant dense<0.000000e+00> : vector<8xf32>
    %324 = vector.multi_reduction <add>, %323, %cst_132 [1] : vector<8x4xf32> to vector<8xf32>
    %325 = vector.shape_cast %324 : vector<8xf32> to vector<8x1xf32>
    %326 = tpu.reciprocal %325 {approx = true} : vector<8x1xf32> -> vector<8x1xf32>
    %327 = vector.broadcast %326 : vector<8x1xf32> to vector<8x4xf32>
    %328 = arith.mulf %323, %327 : vector<8x4xf32>
    %cst_133 = arith.constant dense<0.000000e+00> : vector<8x32xf32>
    %329 = tpu.matmul %328, %313, %cst_133 {dimension_numbers = #tpu.dot_dimension_numbers<[1], [0], [0], [1], [0, 0, 1, 1], [], []>} : vector<8x4xf32>, vector<4x32xf32>, vector<8x32xf32> -> vector<8x32xf32>
    %c0_134 = arith.constant 0 : index
    %c768_135 = arith.constant 768 : index
    %330 = vector.load %arg2[%c0_134, %c768_135] : memref<32x896xbf16, #tpu.memory_space<vmem>>, vector<32x64xbf16>
    %331 = arith.truncf %329 : vector<8x32xf32> to vector<8x32xbf16>
    %cst_136 = arith.constant dense<0.000000e+00> : vector<8x64xf32>
    %332 = tpu.matmul %331, %330, %cst_136 {dimension_numbers = #tpu.dot_dimension_numbers<[1], [0], [0], [1], [0, 0, 1, 1], [], []>} : vector<8x32xbf16>, vector<32x64xbf16>, vector<8x64xf32> -> vector<8x64xf32>
    %c0_137 = arith.constant 0 : index
    %c2048 = arith.constant 2048 : index
    %333 = vector.load %arg10[%c0_137, %c2048] : memref<1x11264xf32, #tpu.memory_space<vmem>>, vector<1x64xf32>
    %334 = vector.broadcast %333 : vector<1x64xf32> to vector<8x64xf32>
    %335 = arith.addf %332, %334 : vector<8x64xf32>
    %c0_138 = arith.constant 0 : index
    %c2176 = arith.constant 2176 : index
    %336 = vector.load %arg10[%c0_138, %c2176] : memref<1x11264xf32, #tpu.memory_space<vmem>>, vector<1x64xf32>
    %c0_139 = arith.constant 0 : index
    %c2304 = arith.constant 2304 : index
    %337 = vector.load %arg10[%c0_139, %c2304] : memref<1x11264xf32, #tpu.memory_space<vmem>>, vector<1x64xf32>
    %cst_140 = arith.constant dense<0.000000e+00> : vector<8xf32>
    %338 = vector.multi_reduction <add>, %335, %cst_140 [1] : vector<8x64xf32> to vector<8xf32>
    %339 = vector.shape_cast %338 : vector<8xf32> to vector<8x1xf32>
    %cst_141 = arith.constant 6.400000e+01 : f32
    %340 = vector.broadcast %cst_141 : f32 to vector<8x1xf32>
    %341 = arith.divf %339, %340 : vector<8x1xf32>
    %342 = vector.broadcast %341 : vector<8x1xf32> to vector<8x64xf32>
    %343 = arith.subf %335, %342 : vector<8x64xf32>
    %344 = arith.mulf %343, %343 : vector<8x64xf32>
    %cst_142 = arith.constant dense<0.000000e+00> : vector<8xf32>
    %345 = vector.multi_reduction <add>, %344, %cst_142 [1] : vector<8x64xf32> to vector<8xf32>
    %346 = vector.shape_cast %345 : vector<8xf32> to vector<8x1xf32>
    %cst_143 = arith.constant 6.400000e+01 : f32
    %347 = vector.broadcast %cst_143 : f32 to vector<8x1xf32>
    %348 = arith.divf %346, %347 : vector<8x1xf32>
    %cst_144 = arith.constant 9.99999974E-6 : f32
    %349 = vector.broadcast %cst_144 : f32 to vector<8x1xf32>
    %350 = arith.addf %348, %349 : vector<8x1xf32>
    %351 = math.rsqrt %350 : vector<8x1xf32>
    %352 = vector.broadcast %351 : vector<8x1xf32> to vector<8x64xf32>
    %353 = arith.mulf %343, %352 : vector<8x64xf32>
    %354 = vector.broadcast %336 : vector<1x64xf32> to vector<8x64xf32>
    %355 = arith.mulf %353, %354 : vector<8x64xf32>
    %356 = vector.broadcast %337 : vector<1x64xf32> to vector<8x64xf32>
    %357 = arith.addf %355, %356 : vector<8x64xf32>
    %c0_145 = arith.constant 0 : index
    %c0_146 = arith.constant 0 : index
    %358 = vector.load %arg3[%c0_145, %c0_146] : memref<64x1408xbf16, #tpu.memory_space<vmem>>, vector<64x192xbf16>
    %359 = arith.truncf %357 : vector<8x64xf32> to vector<8x64xbf16>
    %cst_147 = arith.constant dense<0.000000e+00> : vector<8x192xf32>
    %360 = tpu.matmul %359, %358, %cst_147 {dimension_numbers = #tpu.dot_dimension_numbers<[1], [0], [0], [1], [0, 0, 1, 1], [], []>} : vector<8x64xbf16>, vector<64x192xbf16>, vector<8x192xf32> -> vector<8x192xf32>
    %c0_148 = arith.constant 0 : index
    %c2432 = arith.constant 2432 : index
    %361 = vector.load %arg10[%c0_148, %c2432] : memref<1x11264xf32, #tpu.memory_space<vmem>>, vector<1x192xf32>
    %362 = vector.broadcast %361 : vector<1x192xf32> to vector<8x192xf32>
    %363 = arith.addf %360, %362 : vector<8x192xf32>
    %364 = vector.extract_strided_slice %363 {offsets = [0, 0], sizes = [8, 16], strides = [1, 1]} : vector<8x192xf32> to vector<8x16xf32>
    %365 = vector.extract_strided_slice %363 {offsets = [0, 64], sizes = [8, 16], strides = [1, 1]} : vector<8x192xf32> to vector<8x16xf32>
    %366 = vector.extract_strided_slice %363 {offsets = [0, 128], sizes = [8, 16], strides = [1, 1]} : vector<8x192xf32> to vector<8x16xf32>
    %cst_149 = arith.constant dense<0.000000e+00> : vector<8x8xf32>
    %367 = tpu.matmul %364, %365, %cst_149 {dimension_numbers = #tpu.dot_dimension_numbers<[1], [1], [0], [0], [0, 0, 1, 0], [], []>} : vector<8x16xf32>, vector<8x16xf32>, vector<8x8xf32> -> vector<8x8xf32>
    %cst_150 = arith.constant 2.500000e-01 : f32
    %368 = vector.broadcast %cst_150 : f32 to vector<8x8xf32>
    %369 = arith.mulf %367, %368 : vector<8x8xf32>
    %cst_151 = arith.constant dense<0xFF800000> : vector<8xf32>
    %370 = vector.multi_reduction <maximumf>, %369, %cst_151 [1] : vector<8x8xf32> to vector<8xf32>
    %371 = vector.shape_cast %370 : vector<8xf32> to vector<8x1xf32>
    %372 = vector.broadcast %371 : vector<8x1xf32> to vector<8x8xf32>
    %373 = arith.subf %369, %372 : vector<8x8xf32>
    %374 = math.exp %373 : vector<8x8xf32>
    %cst_152 = arith.constant dense<0.000000e+00> : vector<8xf32>
    %375 = vector.multi_reduction <add>, %374, %cst_152 [1] : vector<8x8xf32> to vector<8xf32>
    %376 = vector.shape_cast %375 : vector<8xf32> to vector<8x1xf32>
    %377 = tpu.reciprocal %376 {approx = true} : vector<8x1xf32> -> vector<8x1xf32>
    %378 = vector.broadcast %377 : vector<8x1xf32> to vector<8x8xf32>
    %379 = arith.mulf %374, %378 : vector<8x8xf32>
    %cst_153 = arith.constant dense<0.000000e+00> : vector<8x16xf32>
    %380 = tpu.matmul %379, %366, %cst_153 {dimension_numbers = #tpu.dot_dimension_numbers<[1], [0], [0], [1], [0, 0, 1, 1], [], []>} : vector<8x8xf32>, vector<8x16xf32>, vector<8x16xf32> -> vector<8x16xf32>
    %c0_154 = arith.constant 0 : index
    %c0_155 = arith.constant 0 : index
    %381 = vector.load %arg16[%c0_154, %c0_155] : memref<16x128xf32, #tpu.memory_space<vmem>>, vector<8x16xf32>
    tpu.vector_store %arg16[%c0_154, %c0_155], %380 {strides = array<i32>} : memref<16x128xf32, #tpu.memory_space<vmem>>, vector<8x16xf32>,
    %382 = vector.extract_strided_slice %363 {offsets = [0, 16], sizes = [8, 16], strides = [1, 1]} : vector<8x192xf32> to vector<8x16xf32>
    %383 = vector.extract_strided_slice %363 {offsets = [0, 80], sizes = [8, 16], strides = [1, 1]} : vector<8x192xf32> to vector<8x16xf32>
    %384 = vector.extract_strided_slice %363 {offsets = [0, 144], sizes = [8, 16], strides = [1, 1]} : vector<8x192xf32> to vector<8x16xf32>
    %cst_156 = arith.constant dense<0.000000e+00> : vector<8x8xf32>
    %385 = tpu.matmul %382, %383, %cst_156 {dimension_numbers = #tpu.dot_dimension_numbers<[1], [1], [0], [0], [0, 0, 1, 0], [], []>} : vector<8x16xf32>, vector<8x16xf32>, vector<8x8xf32> -> vector<8x8xf32>
    %cst_157 = arith.constant 2.500000e-01 : f32
    %386 = vector.broadcast %cst_157 : f32 to vector<8x8xf32>
    %387 = arith.mulf %385, %386 : vector<8x8xf32>
    %cst_158 = arith.constant dense<0xFF800000> : vector<8xf32>
    %388 = vector.multi_reduction <maximumf>, %387, %cst_158 [1] : vector<8x8xf32> to vector<8xf32>
    %389 = vector.shape_cast %388 : vector<8xf32> to vector<8x1xf32>
    %390 = vector.broadcast %389 : vector<8x1xf32> to vector<8x8xf32>
    %391 = arith.subf %387, %390 : vector<8x8xf32>
    %392 = math.exp %391 : vector<8x8xf32>
    %cst_159 = arith.constant dense<0.000000e+00> : vector<8xf32>
    %393 = vector.multi_reduction <add>, %392, %cst_159 [1] : vector<8x8xf32> to vector<8xf32>
    %394 = vector.shape_cast %393 : vector<8xf32> to vector<8x1xf32>
    %395 = tpu.reciprocal %394 {approx = true} : vector<8x1xf32> -> vector<8x1xf32>
    %396 = vector.broadcast %395 : vector<8x1xf32> to vector<8x8xf32>
    %397 = arith.mulf %392, %396 : vector<8x8xf32>
    %cst_160 = arith.constant dense<0.000000e+00> : vector<8x16xf32>
    %398 = tpu.matmul %397, %384, %cst_160 {dimension_numbers = #tpu.dot_dimension_numbers<[1], [0], [0], [1], [0, 0, 1, 1], [], []>} : vector<8x8xf32>, vector<8x16xf32>, vector<8x16xf32> -> vector<8x16xf32>
    %c0_161 = arith.constant 0 : index
    %c16_162 = arith.constant 16 : index
    %399 = vector.load %arg16[%c0_161, %c16_162] : memref<16x128xf32, #tpu.memory_space<vmem>>, vector<8x16xf32>
    tpu.vector_store %arg16[%c0_161, %c16_162], %398 {strides = array<i32>} : memref<16x128xf32, #tpu.memory_space<vmem>>, vector<8x16xf32>,
    %400 = vector.extract_strided_slice %363 {offsets = [0, 32], sizes = [8, 16], strides = [1, 1]} : vector<8x192xf32> to vector<8x16xf32>
    %401 = vector.extract_strided_slice %363 {offsets = [0, 96], sizes = [8, 16], strides = [1, 1]} : vector<8x192xf32> to vector<8x16xf32>
    %402 = vector.extract_strided_slice %363 {offsets = [0, 160], sizes = [8, 16], strides = [1, 1]} : vector<8x192xf32> to vector<8x16xf32>
    %cst_163 = arith.constant dense<0.000000e+00> : vector<8x8xf32>
    %403 = tpu.matmul %400, %401, %cst_163 {dimension_numbers = #tpu.dot_dimension_numbers<[1], [1], [0], [0], [0, 0, 1, 0], [], []>} : vector<8x16xf32>, vector<8x16xf32>, vector<8x8xf32> -> vector<8x8xf32>
    %cst_164 = arith.constant 2.500000e-01 : f32
    %404 = vector.broadcast %cst_164 : f32 to vector<8x8xf32>
    %405 = arith.mulf %403, %404 : vector<8x8xf32>
    %cst_165 = arith.constant dense<0xFF800000> : vector<8xf32>
    %406 = vector.multi_reduction <maximumf>, %405, %cst_165 [1] : vector<8x8xf32> to vector<8xf32>
    %407 = vector.shape_cast %406 : vector<8xf32> to vector<8x1xf32>
    %408 = vector.broadcast %407 : vector<8x1xf32> to vector<8x8xf32>
    %409 = arith.subf %405, %408 : vector<8x8xf32>
    %410 = math.exp %409 : vector<8x8xf32>
    %cst_166 = arith.constant dense<0.000000e+00> : vector<8xf32>
    %411 = vector.multi_reduction <add>, %410, %cst_166 [1] : vector<8x8xf32> to vector<8xf32>
    %412 = vector.shape_cast %411 : vector<8xf32> to vector<8x1xf32>
    %413 = tpu.reciprocal %412 {approx = true} : vector<8x1xf32> -> vector<8x1xf32>
    %414 = vector.broadcast %413 : vector<8x1xf32> to vector<8x8xf32>
    %415 = arith.mulf %410, %414 : vector<8x8xf32>
    %cst_167 = arith.constant dense<0.000000e+00> : vector<8x16xf32>
    %416 = tpu.matmul %415, %402, %cst_167 {dimension_numbers = #tpu.dot_dimension_numbers<[1], [0], [0], [1], [0, 0, 1, 1], [], []>} : vector<8x8xf32>, vector<8x16xf32>, vector<8x16xf32> -> vector<8x16xf32>
    %c0_168 = arith.constant 0 : index
    %c32 = arith.constant 32 : index
    %417 = vector.load %arg16[%c0_168, %c32] : memref<16x128xf32, #tpu.memory_space<vmem>>, vector<8x16xf32>
    tpu.vector_store %arg16[%c0_168, %c32], %416 {strides = array<i32>} : memref<16x128xf32, #tpu.memory_space<vmem>>, vector<8x16xf32>,
    %418 = vector.extract_strided_slice %363 {offsets = [0, 48], sizes = [8, 16], strides = [1, 1]} : vector<8x192xf32> to vector<8x16xf32>
    %419 = vector.extract_strided_slice %363 {offsets = [0, 112], sizes = [8, 16], strides = [1, 1]} : vector<8x192xf32> to vector<8x16xf32>
    %420 = vector.extract_strided_slice %363 {offsets = [0, 176], sizes = [8, 16], strides = [1, 1]} : vector<8x192xf32> to vector<8x16xf32>
    %cst_169 = arith.constant dense<0.000000e+00> : vector<8x8xf32>
    %421 = tpu.matmul %418, %419, %cst_169 {dimension_numbers = #tpu.dot_dimension_numbers<[1], [1], [0], [0], [0, 0, 1, 0], [], []>} : vector<8x16xf32>, vector<8x16xf32>, vector<8x8xf32> -> vector<8x8xf32>
    %cst_170 = arith.constant 2.500000e-01 : f32
    %422 = vector.broadcast %cst_170 : f32 to vector<8x8xf32>
    %423 = arith.mulf %421, %422 : vector<8x8xf32>
    %cst_171 = arith.constant dense<0xFF800000> : vector<8xf32>
    %424 = vector.multi_reduction <maximumf>, %423, %cst_171 [1] : vector<8x8xf32> to vector<8xf32>
    %425 = vector.shape_cast %424 : vector<8xf32> to vector<8x1xf32>
    %426 = vector.broadcast %425 : vector<8x1xf32> to vector<8x8xf32>
    %427 = arith.subf %423, %426 : vector<8x8xf32>
    %428 = math.exp %427 : vector<8x8xf32>
    %cst_172 = arith.constant dense<0.000000e+00> : vector<8xf32>
    %429 = vector.multi_reduction <add>, %428, %cst_172 [1] : vector<8x8xf32> to vector<8xf32>
    %430 = vector.shape_cast %429 : vector<8xf32> to vector<8x1xf32>
    %431 = tpu.reciprocal %430 {approx = true} : vector<8x1xf32> -> vector<8x1xf32>
    %432 = vector.broadcast %431 : vector<8x1xf32> to vector<8x8xf32>
    %433 = arith.mulf %428, %432 : vector<8x8xf32>
    %cst_173 = arith.constant dense<0.000000e+00> : vector<8x16xf32>
    %434 = tpu.matmul %433, %420, %cst_173 {dimension_numbers = #tpu.dot_dimension_numbers<[1], [0], [0], [1], [0, 0, 1, 1], [], []>} : vector<8x8xf32>, vector<8x16xf32>, vector<8x16xf32> -> vector<8x16xf32>
    %c0_174 = arith.constant 0 : index
    %c48 = arith.constant 48 : index
    %435 = vector.load %arg16[%c0_174, %c48] : memref<16x128xf32, #tpu.memory_space<vmem>>, vector<8x16xf32>
    tpu.vector_store %arg16[%c0_174, %c48], %434 {strides = array<i32>} : memref<16x128xf32, #tpu.memory_space<vmem>>, vector<8x16xf32>,
    %c0_175 = arith.constant 0 : index
    %c0_176 = arith.constant 0 : index
    %436 = vector.load %arg16[%c0_175, %c0_176] : memref<16x128xf32, #tpu.memory_space<vmem>>, vector<8x64xf32>
    %c0_177 = arith.constant 0 : index
    %c256_178 = arith.constant 256 : index
    %437 = vector.load %arg3[%c0_177, %c256_178] : memref<64x1408xbf16, #tpu.memory_space<vmem>>, vector<64x64xbf16>
    %438 = arith.truncf %436 : vector<8x64xf32> to vector<8x64xbf16>
    %cst_179 = arith.constant dense<0.000000e+00> : vector<8x64xf32>
    %439 = tpu.matmul %438, %437, %cst_179 {dimension_numbers = #tpu.dot_dimension_numbers<[1], [0], [0], [1], [0, 0, 1, 1], [], []>} : vector<8x64xbf16>, vector<64x64xbf16>, vector<8x64xf32> -> vector<8x64xf32>
    %440 = arith.addf %335, %439 : vector<8x64xf32>
    %c0_180 = arith.constant 0 : index
    %c2688 = arith.constant 2688 : index
    %441 = vector.load %arg10[%c0_180, %c2688] : memref<1x11264xf32, #tpu.memory_space<vmem>>, vector<1x64xf32>
    %442 = vector.broadcast %441 : vector<1x64xf32> to vector<8x64xf32>
    %443 = arith.addf %440, %442 : vector<8x64xf32>
    %c0_181 = arith.constant 0 : index
    %c2816 = arith.constant 2816 : index
    %444 = vector.load %arg10[%c0_181, %c2816] : memref<1x11264xf32, #tpu.memory_space<vmem>>, vector<1x64xf32>
    %c0_182 = arith.constant 0 : index
    %c2944 = arith.constant 2944 : index
    %445 = vector.load %arg10[%c0_182, %c2944] : memref<1x11264xf32, #tpu.memory_space<vmem>>, vector<1x64xf32>
    %cst_183 = arith.constant dense<0.000000e+00> : vector<8xf32>
    %446 = vector.multi_reduction <add>, %443, %cst_183 [1] : vector<8x64xf32> to vector<8xf32>
    %447 = vector.shape_cast %446 : vector<8xf32> to vector<8x1xf32>
    %cst_184 = arith.constant 6.400000e+01 : f32
    %448 = vector.broadcast %cst_184 : f32 to vector<8x1xf32>
    %449 = arith.divf %447, %448 : vector<8x1xf32>
    %450 = vector.broadcast %449 : vector<8x1xf32> to vector<8x64xf32>
    %451 = arith.subf %443, %450 : vector<8x64xf32>
    %452 = arith.mulf %451, %451 : vector<8x64xf32>
    %cst_185 = arith.constant dense<0.000000e+00> : vector<8xf32>
    %453 = vector.multi_reduction <add>, %452, %cst_185 [1] : vector<8x64xf32> to vector<8xf32>
    %454 = vector.shape_cast %453 : vector<8xf32> to vector<8x1xf32>
    %cst_186 = arith.constant 6.400000e+01 : f32
    %455 = vector.broadcast %cst_186 : f32 to vector<8x1xf32>
    %456 = arith.divf %454, %455 : vector<8x1xf32>
    %cst_187 = arith.constant 9.99999974E-6 : f32
    %457 = vector.broadcast %cst_187 : f32 to vector<8x1xf32>
    %458 = arith.addf %456, %457 : vector<8x1xf32>
    %459 = math.rsqrt %458 : vector<8x1xf32>
    %460 = vector.broadcast %459 : vector<8x1xf32> to vector<8x64xf32>
    %461 = arith.mulf %451, %460 : vector<8x64xf32>
    %462 = vector.broadcast %444 : vector<1x64xf32> to vector<8x64xf32>
    %463 = arith.mulf %461, %462 : vector<8x64xf32>
    %464 = vector.broadcast %445 : vector<1x64xf32> to vector<8x64xf32>
    %465 = arith.addf %463, %464 : vector<8x64xf32>
    %c0_188 = arith.constant 0 : index
    %c384_189 = arith.constant 384 : index
    %466 = vector.load %arg3[%c0_188, %c384_189] : memref<64x1408xbf16, #tpu.memory_space<vmem>>, vector<64x256xbf16>
    %467 = arith.truncf %465 : vector<8x64xf32> to vector<8x64xbf16>
    %cst_190 = arith.constant dense<0.000000e+00> : vector<8x256xf32>
    %468 = tpu.matmul %467, %466, %cst_190 {dimension_numbers = #tpu.dot_dimension_numbers<[1], [0], [0], [1], [0, 0, 1, 1], [], []>} : vector<8x64xbf16>, vector<64x256xbf16>, vector<8x256xf32> -> vector<8x256xf32>
    %c0_191 = arith.constant 0 : index
    %c3072 = arith.constant 3072 : index
    %469 = vector.load %arg10[%c0_191, %c3072] : memref<1x11264xf32, #tpu.memory_space<vmem>>, vector<1x256xf32>
    %470 = vector.broadcast %469 : vector<1x256xf32> to vector<8x256xf32>
    %471 = arith.addf %468, %470 : vector<8x256xf32>
    %472 = arith.mulf %471, %471 : vector<8x256xf32>
    %473 = arith.mulf %471, %472 : vector<8x256xf32>
    %cst_192 = arith.constant 4.471500e-02 : f32
    %474 = vector.broadcast %cst_192 : f32 to vector<8x256xf32>
    %475 = arith.mulf %474, %473 : vector<8x256xf32>
    %476 = arith.addf %471, %475 : vector<8x256xf32>
    %cst_193 = arith.constant 0.797884583 : f32
    %477 = vector.broadcast %cst_193 : f32 to vector<8x256xf32>
    %478 = arith.mulf %477, %476 : vector<8x256xf32>
    %479 = math.tanh %478 : vector<8x256xf32>
    %cst_194 = arith.constant 1.000000e+00 : f32
    %480 = vector.broadcast %cst_194 : f32 to vector<8x256xf32>
    %481 = arith.addf %480, %479 : vector<8x256xf32>
    %cst_195 = arith.constant 5.000000e-01 : f32
    %482 = vector.broadcast %cst_195 : f32 to vector<8x256xf32>
    %483 = arith.mulf %482, %481 : vector<8x256xf32>
    %484 = arith.mulf %471, %483 : vector<8x256xf32>
    %c0_196 = arith.constant 0 : index
    %c0_197 = arith.constant 0 : index
    %485 = vector.load %arg7[%c0_196, %c0_197] : memref<528x64xbf16, #tpu.memory_space<vmem>>, vector<256x64xbf16>
    %486 = arith.truncf %484 : vector<8x256xf32> to vector<8x256xbf16>
    %cst_198 = arith.constant dense<0.000000e+00> : vector<8x64xf32>
    %487 = tpu.matmul %486, %485, %cst_198 {dimension_numbers = #tpu.dot_dimension_numbers<[1], [0], [0], [1], [0, 0, 1, 1], [], []>} : vector<8x256xbf16>, vector<256x64xbf16>, vector<8x64xf32> -> vector<8x64xf32>
    %c0_199 = arith.constant 0 : index
    %c3328 = arith.constant 3328 : index
    %488 = vector.load %arg10[%c0_199, %c3328] : memref<1x11264xf32, #tpu.memory_space<vmem>>, vector<1x64xf32>
    %489 = vector.broadcast %488 : vector<1x64xf32> to vector<8x64xf32>
    %490 = arith.addf %487, %489 : vector<8x64xf32>
    %491 = arith.addf %443, %490 : vector<8x64xf32>
    %c0_200 = arith.constant 0 : index
    %c3456 = arith.constant 3456 : index
    %492 = vector.load %arg10[%c0_200, %c3456] : memref<1x11264xf32, #tpu.memory_space<vmem>>, vector<1x64xf32>
    %c0_201 = arith.constant 0 : index
    %c3584 = arith.constant 3584 : index
    %493 = vector.load %arg10[%c0_201, %c3584] : memref<1x11264xf32, #tpu.memory_space<vmem>>, vector<1x64xf32>
    %cst_202 = arith.constant dense<0.000000e+00> : vector<8xf32>
    %494 = vector.multi_reduction <add>, %491, %cst_202 [1] : vector<8x64xf32> to vector<8xf32>
    %495 = vector.shape_cast %494 : vector<8xf32> to vector<8x1xf32>
    %cst_203 = arith.constant 6.400000e+01 : f32
    %496 = vector.broadcast %cst_203 : f32 to vector<8x1xf32>
    %497 = arith.divf %495, %496 : vector<8x1xf32>
    %498 = vector.broadcast %497 : vector<8x1xf32> to vector<8x64xf32>
    %499 = arith.subf %491, %498 : vector<8x64xf32>
    %500 = arith.mulf %499, %499 : vector<8x64xf32>
    %cst_204 = arith.constant dense<0.000000e+00> : vector<8xf32>
    %501 = vector.multi_reduction <add>, %500, %cst_204 [1] : vector<8x64xf32> to vector<8xf32>
    %502 = vector.shape_cast %501 : vector<8xf32> to vector<8x1xf32>
    %cst_205 = arith.constant 6.400000e+01 : f32
    %503 = vector.broadcast %cst_205 : f32 to vector<8x1xf32>
    %504 = arith.divf %502, %503 : vector<8x1xf32>
    %cst_206 = arith.constant 9.99999974E-6 : f32
    %505 = vector.broadcast %cst_206 : f32 to vector<8x1xf32>
    %506 = arith.addf %504, %505 : vector<8x1xf32>
    %507 = math.rsqrt %506 : vector<8x1xf32>
    %508 = vector.broadcast %507 : vector<8x1xf32> to vector<8x64xf32>
    %509 = arith.mulf %499, %508 : vector<8x64xf32>
    %510 = vector.broadcast %492 : vector<1x64xf32> to vector<8x64xf32>
    %511 = arith.mulf %509, %510 : vector<8x64xf32>
    %512 = vector.broadcast %493 : vector<1x64xf32> to vector<8x64xf32>
    %513 = arith.addf %511, %512 : vector<8x64xf32>
    %c0_207 = arith.constant 0 : index
    %c640_208 = arith.constant 640 : index
    %514 = vector.load %arg3[%c0_207, %c640_208] : memref<64x1408xbf16, #tpu.memory_space<vmem>>, vector<64x192xbf16>
    %515 = arith.truncf %513 : vector<8x64xf32> to vector<8x64xbf16>
    %cst_209 = arith.constant dense<0.000000e+00> : vector<8x192xf32>
    %516 = tpu.matmul %515, %514, %cst_209 {dimension_numbers = #tpu.dot_dimension_numbers<[1], [0], [0], [1], [0, 0, 1, 1], [], []>} : vector<8x64xbf16>, vector<64x192xbf16>, vector<8x192xf32> -> vector<8x192xf32>
    %c0_210 = arith.constant 0 : index
    %c3712 = arith.constant 3712 : index
    %517 = vector.load %arg10[%c0_210, %c3712] : memref<1x11264xf32, #tpu.memory_space<vmem>>, vector<1x192xf32>
    %518 = vector.broadcast %517 : vector<1x192xf32> to vector<8x192xf32>
    %519 = arith.addf %516, %518 : vector<8x192xf32>
    %520 = vector.extract_strided_slice %519 {offsets = [0, 0], sizes = [8, 16], strides = [1, 1]} : vector<8x192xf32> to vector<8x16xf32>
    %521 = vector.extract_strided_slice %519 {offsets = [0, 64], sizes = [8, 16], strides = [1, 1]} : vector<8x192xf32> to vector<8x16xf32>
    %522 = vector.extract_strided_slice %519 {offsets = [0, 128], sizes = [8, 16], strides = [1, 1]} : vector<8x192xf32> to vector<8x16xf32>
    %cst_211 = arith.constant dense<0.000000e+00> : vector<8x8xf32>
    %523 = tpu.matmul %520, %521, %cst_211 {dimension_numbers = #tpu.dot_dimension_numbers<[1], [1], [0], [0], [0, 0, 1, 0], [], []>} : vector<8x16xf32>, vector<8x16xf32>, vector<8x8xf32> -> vector<8x8xf32>
    %cst_212 = arith.constant 2.500000e-01 : f32
    %524 = vector.broadcast %cst_212 : f32 to vector<8x8xf32>
    %525 = arith.mulf %523, %524 : vector<8x8xf32>
    %cst_213 = arith.constant dense<0xFF800000> : vector<8xf32>
    %526 = vector.multi_reduction <maximumf>, %525, %cst_213 [1] : vector<8x8xf32> to vector<8xf32>
    %527 = vector.shape_cast %526 : vector<8xf32> to vector<8x1xf32>
    %528 = vector.broadcast %527 : vector<8x1xf32> to vector<8x8xf32>
    %529 = arith.subf %525, %528 : vector<8x8xf32>
    %530 = math.exp %529 : vector<8x8xf32>
    %cst_214 = arith.constant dense<0.000000e+00> : vector<8xf32>
    %531 = vector.multi_reduction <add>, %530, %cst_214 [1] : vector<8x8xf32> to vector<8xf32>
    %532 = vector.shape_cast %531 : vector<8xf32> to vector<8x1xf32>
    %533 = tpu.reciprocal %532 {approx = true} : vector<8x1xf32> -> vector<8x1xf32>
    %534 = vector.broadcast %533 : vector<8x1xf32> to vector<8x8xf32>
    %535 = arith.mulf %530, %534 : vector<8x8xf32>
    %cst_215 = arith.constant dense<0.000000e+00> : vector<8x16xf32>
    %536 = tpu.matmul %535, %522, %cst_215 {dimension_numbers = #tpu.dot_dimension_numbers<[1], [0], [0], [1], [0, 0, 1, 1], [], []>} : vector<8x8xf32>, vector<8x16xf32>, vector<8x16xf32> -> vector<8x16xf32>
    %c0_216 = arith.constant 0 : index
    %c0_217 = arith.constant 0 : index
    %537 = vector.load %arg16[%c0_216, %c0_217] : memref<16x128xf32, #tpu.memory_space<vmem>>, vector<8x16xf32>
    tpu.vector_store %arg16[%c0_216, %c0_217], %536 {strides = array<i32>} : memref<16x128xf32, #tpu.memory_space<vmem>>, vector<8x16xf32>,
    %538 = vector.extract_strided_slice %519 {offsets = [0, 16], sizes = [8, 16], strides = [1, 1]} : vector<8x192xf32> to vector<8x16xf32>
    %539 = vector.extract_strided_slice %519 {offsets = [0, 80], sizes = [8, 16], strides = [1, 1]} : vector<8x192xf32> to vector<8x16xf32>
    %540 = vector.extract_strided_slice %519 {offsets = [0, 144], sizes = [8, 16], strides = [1, 1]} : vector<8x192xf32> to vector<8x16xf32>
    %cst_218 = arith.constant dense<0.000000e+00> : vector<8x8xf32>
    %541 = tpu.matmul %538, %539, %cst_218 {dimension_numbers = #tpu.dot_dimension_numbers<[1], [1], [0], [0], [0, 0, 1, 0], [], []>} : vector<8x16xf32>, vector<8x16xf32>, vector<8x8xf32> -> vector<8x8xf32>
    %cst_219 = arith.constant 2.500000e-01 : f32
    %542 = vector.broadcast %cst_219 : f32 to vector<8x8xf32>
    %543 = arith.mulf %541, %542 : vector<8x8xf32>
    %cst_220 = arith.constant dense<0xFF800000> : vector<8xf32>
    %544 = vector.multi_reduction <maximumf>, %543, %cst_220 [1] : vector<8x8xf32> to vector<8xf32>
    %545 = vector.shape_cast %544 : vector<8xf32> to vector<8x1xf32>
    %546 = vector.broadcast %545 : vector<8x1xf32> to vector<8x8xf32>
    %547 = arith.subf %543, %546 : vector<8x8xf32>
    %548 = math.exp %547 : vector<8x8xf32>
    %cst_221 = arith.constant dense<0.000000e+00> : vector<8xf32>
    %549 = vector.multi_reduction <add>, %548, %cst_221 [1] : vector<8x8xf32> to vector<8xf32>
    %550 = vector.shape_cast %549 : vector<8xf32> to vector<8x1xf32>
    %551 = tpu.reciprocal %550 {approx = true} : vector<8x1xf32> -> vector<8x1xf32>
    %552 = vector.broadcast %551 : vector<8x1xf32> to vector<8x8xf32>
    %553 = arith.mulf %548, %552 : vector<8x8xf32>
    %cst_222 = arith.constant dense<0.000000e+00> : vector<8x16xf32>
    %554 = tpu.matmul %553, %540, %cst_222 {dimension_numbers = #tpu.dot_dimension_numbers<[1], [0], [0], [1], [0, 0, 1, 1], [], []>} : vector<8x8xf32>, vector<8x16xf32>, vector<8x16xf32> -> vector<8x16xf32>
    %c0_223 = arith.constant 0 : index
    %c16_224 = arith.constant 16 : index
    %555 = vector.load %arg16[%c0_223, %c16_224] : memref<16x128xf32, #tpu.memory_space<vmem>>, vector<8x16xf32>
    tpu.vector_store %arg16[%c0_223, %c16_224], %554 {strides = array<i32>} : memref<16x128xf32, #tpu.memory_space<vmem>>, vector<8x16xf32>,
    %556 = vector.extract_strided_slice %519 {offsets = [0, 32], sizes = [8, 16], strides = [1, 1]} : vector<8x192xf32> to vector<8x16xf32>
    %557 = vector.extract_strided_slice %519 {offsets = [0, 96], sizes = [8, 16], strides = [1, 1]} : vector<8x192xf32> to vector<8x16xf32>
    %558 = vector.extract_strided_slice %519 {offsets = [0, 160], sizes = [8, 16], strides = [1, 1]} : vector<8x192xf32> to vector<8x16xf32>
    %cst_225 = arith.constant dense<0.000000e+00> : vector<8x8xf32>
    %559 = tpu.matmul %556, %557, %cst_225 {dimension_numbers = #tpu.dot_dimension_numbers<[1], [1], [0], [0], [0, 0, 1, 0], [], []>} : vector<8x16xf32>, vector<8x16xf32>, vector<8x8xf32> -> vector<8x8xf32>
    %cst_226 = arith.constant 2.500000e-01 : f32
    %560 = vector.broadcast %cst_226 : f32 to vector<8x8xf32>
    %561 = arith.mulf %559, %560 : vector<8x8xf32>
    %cst_227 = arith.constant dense<0xFF800000> : vector<8xf32>
    %562 = vector.multi_reduction <maximumf>, %561, %cst_227 [1] : vector<8x8xf32> to vector<8xf32>
    %563 = vector.shape_cast %562 : vector<8xf32> to vector<8x1xf32>
    %564 = vector.broadcast %563 : vector<8x1xf32> to vector<8x8xf32>
    %565 = arith.subf %561, %564 : vector<8x8xf32>
    %566 = math.exp %565 : vector<8x8xf32>
    %cst_228 = arith.constant dense<0.000000e+00> : vector<8xf32>
    %567 = vector.multi_reduction <add>, %566, %cst_228 [1] : vector<8x8xf32> to vector<8xf32>
    %568 = vector.shape_cast %567 : vector<8xf32> to vector<8x1xf32>
    %569 = tpu.reciprocal %568 {approx = true} : vector<8x1xf32> -> vector<8x1xf32>
    %570 = vector.broadcast %569 : vector<8x1xf32> to vector<8x8xf32>
    %571 = arith.mulf %566, %570 : vector<8x8xf32>
    %cst_229 = arith.constant dense<0.000000e+00> : vector<8x16xf32>
    %572 = tpu.matmul %571, %558, %cst_229 {dimension_numbers = #tpu.dot_dimension_numbers<[1], [0], [0], [1], [0, 0, 1, 1], [], []>} : vector<8x8xf32>, vector<8x16xf32>, vector<8x16xf32> -> vector<8x16xf32>
    %c0_230 = arith.constant 0 : index
    %c32_231 = arith.constant 32 : index
    %573 = vector.load %arg16[%c0_230, %c32_231] : memref<16x128xf32, #tpu.memory_space<vmem>>, vector<8x16xf32>
    tpu.vector_store %arg16[%c0_230, %c32_231], %572 {strides = array<i32>} : memref<16x128xf32, #tpu.memory_space<vmem>>, vector<8x16xf32>,
    %574 = vector.extract_strided_slice %519 {offsets = [0, 48], sizes = [8, 16], strides = [1, 1]} : vector<8x192xf32> to vector<8x16xf32>
    %575 = vector.extract_strided_slice %519 {offsets = [0, 112], sizes = [8, 16], strides = [1, 1]} : vector<8x192xf32> to vector<8x16xf32>
    %576 = vector.extract_strided_slice %519 {offsets = [0, 176], sizes = [8, 16], strides = [1, 1]} : vector<8x192xf32> to vector<8x16xf32>
    %cst_232 = arith.constant dense<0.000000e+00> : vector<8x8xf32>
    %577 = tpu.matmul %574, %575, %cst_232 {dimension_numbers = #tpu.dot_dimension_numbers<[1], [1], [0], [0], [0, 0, 1, 0], [], []>} : vector<8x16xf32>, vector<8x16xf32>, vector<8x8xf32> -> vector<8x8xf32>
    %cst_233 = arith.constant 2.500000e-01 : f32
    %578 = vector.broadcast %cst_233 : f32 to vector<8x8xf32>
    %579 = arith.mulf %577, %578 : vector<8x8xf32>
    %cst_234 = arith.constant dense<0xFF800000> : vector<8xf32>
    %580 = vector.multi_reduction <maximumf>, %579, %cst_234 [1] : vector<8x8xf32> to vector<8xf32>
    %581 = vector.shape_cast %580 : vector<8xf32> to vector<8x1xf32>
    %582 = vector.broadcast %581 : vector<8x1xf32> to vector<8x8xf32>
    %583 = arith.subf %579, %582 : vector<8x8xf32>
    %584 = math.exp %583 : vector<8x8xf32>
    %cst_235 = arith.constant dense<0.000000e+00> : vector<8xf32>
    %585 = vector.multi_reduction <add>, %584, %cst_235 [1] : vector<8x8xf32> to vector<8xf32>
    %586 = vector.shape_cast %585 : vector<8xf32> to vector<8x1xf32>
    %587 = tpu.reciprocal %586 {approx = true} : vector<8x1xf32> -> vector<8x1xf32>
    %588 = vector.broadcast %587 : vector<8x1xf32> to vector<8x8xf32>
    %589 = arith.mulf %584, %588 : vector<8x8xf32>
    %cst_236 = arith.constant dense<0.000000e+00> : vector<8x16xf32>
    %590 = tpu.matmul %589, %576, %cst_236 {dimension_numbers = #tpu.dot_dimension_numbers<[1], [0], [0], [1], [0, 0, 1, 1], [], []>} : vector<8x8xf32>, vector<8x16xf32>, vector<8x16xf32> -> vector<8x16xf32>
    %c0_237 = arith.constant 0 : index
    %c48_238 = arith.constant 48 : index
    %591 = vector.load %arg16[%c0_237, %c48_238] : memref<16x128xf32, #tpu.memory_space<vmem>>, vector<8x16xf32>
    tpu.vector_store %arg16[%c0_237, %c48_238], %590 {strides = array<i32>} : memref<16x128xf32, #tpu.memory_space<vmem>>, vector<8x16xf32>,
    %c0_239 = arith.constant 0 : index
    %c0_240 = arith.constant 0 : index
    %592 = vector.load %arg16[%c0_239, %c0_240] : memref<16x128xf32, #tpu.memory_space<vmem>>, vector<8x64xf32>
    %c0_241 = arith.constant 0 : index
    %c896_242 = arith.constant 896 : index
    %593 = vector.load %arg3[%c0_241, %c896_242] : memref<64x1408xbf16, #tpu.memory_space<vmem>>, vector<64x64xbf16>
    %594 = arith.truncf %592 : vector<8x64xf32> to vector<8x64xbf16>
    %cst_243 = arith.constant dense<0.000000e+00> : vector<8x64xf32>
    %595 = tpu.matmul %594, %593, %cst_243 {dimension_numbers = #tpu.dot_dimension_numbers<[1], [0], [0], [1], [0, 0, 1, 1], [], []>} : vector<8x64xbf16>, vector<64x64xbf16>, vector<8x64xf32> -> vector<8x64xf32>
    %596 = arith.addf %491, %595 : vector<8x64xf32>
    %c0_244 = arith.constant 0 : index
    %c3968 = arith.constant 3968 : index
    %597 = vector.load %arg10[%c0_244, %c3968] : memref<1x11264xf32, #tpu.memory_space<vmem>>, vector<1x64xf32>
    %598 = vector.broadcast %597 : vector<1x64xf32> to vector<8x64xf32>
    %599 = arith.addf %596, %598 : vector<8x64xf32>
    %c0_245 = arith.constant 0 : index
    %c4096 = arith.constant 4096 : index
    %600 = vector.load %arg10[%c0_245, %c4096] : memref<1x11264xf32, #tpu.memory_space<vmem>>, vector<1x64xf32>
    %c0_246 = arith.constant 0 : index
    %c4224 = arith.constant 4224 : index
    %601 = vector.load %arg10[%c0_246, %c4224] : memref<1x11264xf32, #tpu.memory_space<vmem>>, vector<1x64xf32>
    %cst_247 = arith.constant dense<0.000000e+00> : vector<8xf32>
    %602 = vector.multi_reduction <add>, %599, %cst_247 [1] : vector<8x64xf32> to vector<8xf32>
    %603 = vector.shape_cast %602 : vector<8xf32> to vector<8x1xf32>
    %cst_248 = arith.constant 6.400000e+01 : f32
    %604 = vector.broadcast %cst_248 : f32 to vector<8x1xf32>
    %605 = arith.divf %603, %604 : vector<8x1xf32>
    %606 = vector.broadcast %605 : vector<8x1xf32> to vector<8x64xf32>
    %607 = arith.subf %599, %606 : vector<8x64xf32>
    %608 = arith.mulf %607, %607 : vector<8x64xf32>
    %cst_249 = arith.constant dense<0.000000e+00> : vector<8xf32>
    %609 = vector.multi_reduction <add>, %608, %cst_249 [1] : vector<8x64xf32> to vector<8xf32>
    %610 = vector.shape_cast %609 : vector<8xf32> to vector<8x1xf32>
    %cst_250 = arith.constant 6.400000e+01 : f32
    %611 = vector.broadcast %cst_250 : f32 to vector<8x1xf32>
    %612 = arith.divf %610, %611 : vector<8x1xf32>
    %cst_251 = arith.constant 9.99999974E-6 : f32
    %613 = vector.broadcast %cst_251 : f32 to vector<8x1xf32>
    %614 = arith.addf %612, %613 : vector<8x1xf32>
    %615 = math.rsqrt %614 : vector<8x1xf32>
    %616 = vector.broadcast %615 : vector<8x1xf32> to vector<8x64xf32>
    %617 = arith.mulf %607, %616 : vector<8x64xf32>
    %618 = vector.broadcast %600 : vector<1x64xf32> to vector<8x64xf32>
    %619 = arith.mulf %617, %618 : vector<8x64xf32>
    %620 = vector.broadcast %601 : vector<1x64xf32> to vector<8x64xf32>
    %621 = arith.addf %619, %620 : vector<8x64xf32>
    %c0_252 = arith.constant 0 : index
    %c1024_253 = arith.constant 1024 : index
    %622 = vector.load %arg3[%c0_252, %c1024_253] : memref<64x1408xbf16, #tpu.memory_space<vmem>>, vector<64x256xbf16>
    %623 = arith.truncf %621 : vector<8x64xf32> to vector<8x64xbf16>
    %cst_254 = arith.constant dense<0.000000e+00> : vector<8x256xf32>
    %624 = tpu.matmul %623, %622, %cst_254 {dimension_numbers = #tpu.dot_dimension_numbers<[1], [0], [0], [1], [0, 0, 1, 1], [], []>} : vector<8x64xbf16>, vector<64x256xbf16>, vector<8x256xf32> -> vector<8x256xf32>
    %c0_255 = arith.constant 0 : index
    %c4352 = arith.constant 4352 : index
    %625 = vector.load %arg10[%c0_255, %c4352] : memref<1x11264xf32, #tpu.memory_space<vmem>>, vector<1x256xf32>
    %626 = vector.broadcast %625 : vector<1x256xf32> to vector<8x256xf32>
    %627 = arith.addf %624, %626 : vector<8x256xf32>
    %628 = arith.mulf %627, %627 : vector<8x256xf32>
    %629 = arith.mulf %627, %628 : vector<8x256xf32>
    %cst_256 = arith.constant 4.471500e-02 : f32
    %630 = vector.broadcast %cst_256 : f32 to vector<8x256xf32>
    %631 = arith.mulf %630, %629 : vector<8x256xf32>
    %632 = arith.addf %627, %631 : vector<8x256xf32>
    %cst_257 = arith.constant 0.797884583 : f32
    %633 = vector.broadcast %cst_257 : f32 to vector<8x256xf32>
    %634 = arith.mulf %633, %632 : vector<8x256xf32>
    %635 = math.tanh %634 : vector<8x256xf32>
    %cst_258 = arith.constant 1.000000e+00 : f32
    %636 = vector.broadcast %cst_258 : f32 to vector<8x256xf32>
    %637 = arith.addf %636, %635 : vector<8x256xf32>
    %cst_259 = arith.constant 5.000000e-01 : f32
    %638 = vector.broadcast %cst_259 : f32 to vector<8x256xf32>
    %639 = arith.mulf %638, %637 : vector<8x256xf32>
    %640 = arith.mulf %627, %639 : vector<8x256xf32>
    %c256_260 = arith.constant 256 : index
    %c0_261 = arith.constant 0 : index
    %641 = vector.load %arg7[%c256_260, %c0_261] : memref<528x64xbf16, #tpu.memory_space<vmem>>, vector<256x64xbf16>
    %642 = arith.truncf %640 : vector<8x256xf32> to vector<8x256xbf16>
    %cst_262 = arith.constant dense<0.000000e+00> : vector<8x64xf32>
    %643 = tpu.matmul %642, %641, %cst_262 {dimension_numbers = #tpu.dot_dimension_numbers<[1], [0], [0], [1], [0, 0, 1, 1], [], []>} : vector<8x256xbf16>, vector<256x64xbf16>, vector<8x64xf32> -> vector<8x64xf32>
    %c0_263 = arith.constant 0 : index
    %c4608 = arith.constant 4608 : index
    %644 = vector.load %arg10[%c0_263, %c4608] : memref<1x11264xf32, #tpu.memory_space<vmem>>, vector<1x64xf32>
    %645 = vector.broadcast %644 : vector<1x64xf32> to vector<8x64xf32>
    %646 = arith.addf %643, %645 : vector<8x64xf32>
    %647 = arith.addf %599, %646 : vector<8x64xf32>
    %c512_264 = arith.constant 512 : index
    %c0_265 = arith.constant 0 : index
    %648 = vector.load %arg7[%c512_264, %c0_265] : memref<528x64xbf16, #tpu.memory_space<vmem>>, vector<16x64xbf16>
    %649 = arith.truncf %647 : vector<8x64xf32> to vector<8x64xbf16>
    %cst_266 = arith.constant dense<0.000000e+00> : vector<16x8xf32>
    %650 = tpu.matmul %648, %649, %cst_266 {dimension_numbers = #tpu.dot_dimension_numbers<[1], [1], [0], [0], [0, 0, 1, 0], [], []>} : vector<16x64xbf16>, vector<8x64xbf16>, vector<16x8xf32> -> vector<16x8xf32>
    %cst_267 = arith.constant 1.250000e-01 : f32
    %651 = vector.broadcast %cst_267 : f32 to vector<16x8xf32>
    %652 = arith.mulf %650, %651 : vector<16x8xf32>
    %cst_268 = arith.constant dense<0xFF800000> : vector<16xf32>
    %653 = vector.multi_reduction <maximumf>, %652, %cst_268 [1] : vector<16x8xf32> to vector<16xf32>
    %654 = vector.shape_cast %653 : vector<16xf32> to vector<16x1xf32>
    %655 = vector.broadcast %654 : vector<16x1xf32> to vector<16x8xf32>
    %656 = arith.subf %652, %655 : vector<16x8xf32>
    %657 = math.exp %656 : vector<16x8xf32>
    %cst_269 = arith.constant dense<0.000000e+00> : vector<16xf32>
    %658 = vector.multi_reduction <add>, %657, %cst_269 [1] : vector<16x8xf32> to vector<16xf32>
    %659 = vector.shape_cast %658 : vector<16xf32> to vector<16x1xf32>
    %660 = tpu.reciprocal %659 {approx = true} : vector<16x1xf32> -> vector<16x1xf32>
    %661 = vector.broadcast %660 : vector<16x1xf32> to vector<16x8xf32>
    %662 = arith.mulf %657, %661 : vector<16x8xf32>
    %cst_270 = arith.constant dense<0.000000e+00> : vector<16x64xf32>
    %663 = tpu.matmul %662, %647, %cst_270 {dimension_numbers = #tpu.dot_dimension_numbers<[1], [0], [0], [1], [0, 0, 1, 1], [], []>} : vector<16x8xf32>, vector<8x64xf32>, vector<16x64xf32> -> vector<16x64xf32>
    %c0_271 = arith.constant 0 : index
    %c1280_272 = arith.constant 1280 : index
    %664 = vector.load %arg3[%c0_271, %c1280_272] : memref<64x1408xbf16, #tpu.memory_space<vmem>>, vector<64x128xbf16>
    %665 = arith.truncf %663 : vector<16x64xf32> to vector<16x64xbf16>
    %cst_273 = arith.constant dense<0.000000e+00> : vector<16x128xf32>
    %666 = tpu.matmul %665, %664, %cst_273 {dimension_numbers = #tpu.dot_dimension_numbers<[1], [0], [0], [1], [0, 0, 1, 1], [], []>} : vector<16x64xbf16>, vector<64x128xbf16>, vector<16x128xf32> -> vector<16x128xf32>
    %c0_274 = arith.constant 0 : index
    %c4736 = arith.constant 4736 : index
    %667 = vector.load %arg10[%c0_274, %c4736] : memref<1x11264xf32, #tpu.memory_space<vmem>>, vector<1x128xf32>
    %668 = vector.broadcast %667 : vector<1x128xf32> to vector<16x128xf32>
    %669 = arith.addf %666, %668 : vector<16x128xf32>
    %c64 = arith.constant 64 : index
    %c0_275 = arith.constant 0 : index
    %670 = vector.load %arg11[%c64, %c0_275] : memref<192x16xf32, #tpu.memory_space<vmem>>, vector<128x16xf32>
    %cst_276 = arith.constant dense<0.000000e+00> : vector<16x16xf32>
    %671 = tpu.matmul %669, %670, %cst_276 {dimension_numbers = #tpu.dot_dimension_numbers<[1], [0], [0], [1], [0, 0, 1, 1], [], []>} : vector<16x128xf32>, vector<128x16xf32>, vector<16x16xf32> -> vector<16x16xf32>
    %c0_277 = arith.constant 0 : index
    %c11008 = arith.constant 11008 : index
    %672 = vector.load %arg10[%c0_277, %c11008] : memref<1x11264xf32, #tpu.memory_space<vmem>>, vector<1x16xf32>
    %673 = vector.broadcast %672 : vector<1x16xf32> to vector<16x16xf32>
    %674 = arith.addf %671, %673 : vector<16x16xf32>
    %c0_278 = arith.constant 0 : index
    %c0_279 = arith.constant 0 : index
    %675 = vector.load %arg11[%c0_278, %c0_279] : memref<192x16xf32, #tpu.memory_space<vmem>>, vector<64x16xf32>
    %cst_280 = arith.constant dense<0.000000e+00> : vector<16x64xf32>
    %676 = tpu.matmul %674, %675, %cst_280 {dimension_numbers = #tpu.dot_dimension_numbers<[1], [1], [0], [0], [0, 0, 1, 0], [], []>} : vector<16x16xf32>, vector<64x16xf32>, vector<16x64xf32> -> vector<16x64xf32>
    %cst_281 = arith.constant 1.000000e+00 : f32
    %677 = vector.broadcast %cst_281 : f32 to vector<1x16xf32>
    %678 = arith.mulf %675, %675 : vector<64x16xf32>
    %cst_282 = arith.constant dense<0.000000e+00> : vector<1x64xf32>
    %679 = tpu.matmul %677, %678, %cst_282 {dimension_numbers = #tpu.dot_dimension_numbers<[1], [1], [0], [0], [0, 0, 1, 0], [], []>} : vector<1x16xf32>, vector<64x16xf32>, vector<1x64xf32> -> vector<1x64xf32>
    %cst_283 = arith.constant 2.000000e+00 : f32
    %680 = vector.broadcast %cst_283 : f32 to vector<16x64xf32>
    %681 = arith.mulf %680, %676 : vector<16x64xf32>
    %682 = vector.broadcast %679 : vector<1x64xf32> to vector<16x64xf32>
    %683 = arith.subf %682, %681 : vector<16x64xf32>
    %684 = tpu.iota {dimensions = array<i32: 1>} : vector<16x64xi32>
    %cst_284 = arith.constant dense<0x7F800000> : vector<16xf32>
    %685 = vector.multi_reduction <minimumf>, %683, %cst_284 [1] : vector<16x64xf32> to vector<16xf32>
    %686 = vector.shape_cast %685 : vector<16xf32> to vector<16x1xf32>
    %687 = vector.broadcast %686 : vector<16x1xf32> to vector<16x64xf32>
    %688 = arith.cmpf ole, %683, %687 : vector<16x64xf32>
    %c64_i32 = arith.constant 64 : i32
    %689 = vector.broadcast %c64_i32 : i32 to vector<16x64xi32>
    %690 = arith.select %688, %684, %689 : vector<16x64xi1>, vector<16x64xi32>
    %cst_285 = arith.constant dense<2147483647> : vector<16xi32>
    %691 = vector.multi_reduction <minsi>, %690, %cst_285 [1] : vector<16x64xi32> to vector<16xi32>
    %692 = vector.shape_cast %691 : vector<16xi32> to vector<16x1xi32>
    %693 = vector.broadcast %692 : vector<16x1xi32> to vector<16x64xi32>
    %694 = arith.cmpi eq, %684, %693 : vector<16x64xi32>
    %695 = arith.extui %694 : vector<16x64xi1> to vector<16x64xi32>
    %696 = arith.sitofp %695 : vector<16x64xi32> to vector<16x64xf32>
    %cst_286 = arith.constant dense<0.000000e+00> : vector<16x16xf32>
    %697 = tpu.matmul %696, %675, %cst_286 {dimension_numbers = #tpu.dot_dimension_numbers<[1], [0], [0], [1], [0, 0, 1, 1], [], []>} : vector<16x64xf32>, vector<64x16xf32>, vector<16x16xf32> -> vector<16x16xf32>
    %698 = tpu.iota {dimensions = array<i32: 1>} : vector<1x64xi32>
    %699 = arith.sitofp %698 : vector<1x64xi32> to vector<1x64xf32>
    %cst_287 = arith.constant dense<0.000000e+00> : vector<1x16xf32>
    %700 = tpu.matmul %699, %696, %cst_287 {dimension_numbers = #tpu.dot_dimension_numbers<[1], [1], [0], [0], [0, 0, 1, 0], [], []>} : vector<1x64xf32>, vector<16x64xf32>, vector<1x16xf32> -> vector<1x16xf32>
    %701 = arith.fptosi %700 : vector<1x16xf32> to vector<1x16xi32>
    %c0_288 = arith.constant 0 : index
    %c0_289 = arith.constant 0 : index
    %c0_290 = arith.constant 0 : index
    %702 = vector.load %arg14[%c0_288, %c0_289, %c0_290] : memref<1x1x16xi32, #tpu.memory_space<vmem>>, vector<1x1x16xi32>
    %703 = vector.shape_cast %702 : vector<1x1x16xi32> to vector<1x16xi32>
    %704 = vector.shape_cast %701 : vector<1x16xi32> to vector<1x1x16xi32>
    tpu.vector_store %arg14[%c0_288, %c0_289, %c0_290], %704 {strides = array<i32>} : memref<1x1x16xi32, #tpu.memory_space<vmem>>, vector<1x1x16xi32>,
    %705 = arith.subf %697, %674 : vector<16x16xf32>
    %706 = arith.mulf %705, %705 : vector<16x16xf32>
    %cst_291 = arith.constant dense<0.000000e+00> : vector<16xf32>
    %707 = vector.multi_reduction <add>, %706, %cst_291 [1] : vector<16x16xf32> to vector<16xf32>
    %708 = vector.shape_cast %707 : vector<16xf32> to vector<16x1xf32>
    %cst_292 = arith.constant dense<0.000000e+00> : vector<1xf32>
    %709 = vector.multi_reduction <add>, %708, %cst_292 [0] : vector<16x1xf32> to vector<1xf32>
    %710 = vector.shape_cast %709 : vector<1xf32> to vector<1x1xf32>
    %c0_293 = arith.constant 0 : index
    %c0_294 = arith.constant 0 : index
    %c0_295 = arith.constant 0 : index
    %711 = vector.load %arg15[%c0_293, %c0_294, %c0_295] : memref<1x1x1xf32, #tpu.memory_space<vmem>>, vector<1x1x1xf32>
    %712 = vector.shape_cast %711 : vector<1x1x1xf32> to vector<1x1xf32>
    %713 = vector.shape_cast %710 : vector<1x1xf32> to vector<1x1x1xf32>
    tpu.vector_store %arg15[%c0_293, %c0_294, %c0_295], %713 {strides = array<i32>} : memref<1x1x1xf32, #tpu.memory_space<vmem>>, vector<1x1x1xf32>,
    %c0_296 = arith.constant 0 : index
    %c0_297 = arith.constant 0 : index
    %714 = vector.load %arg12[%c0_296, %c0_297] : memref<16x128xf32, #tpu.memory_space<vmem>>, vector<16x128xf32>
    %cst_298 = arith.constant dense<0.000000e+00> : vector<16x128xf32>
    %715 = tpu.matmul %697, %714, %cst_298 {dimension_numbers = #tpu.dot_dimension_numbers<[1], [0], [0], [1], [0, 0, 1, 1], [], []>} : vector<16x16xf32>, vector<16x128xf32>, vector<16x128xf32> -> vector<16x128xf32>
    %c0_299 = arith.constant 0 : index
    %c11136 = arith.constant 11136 : index
    %716 = vector.load %arg10[%c0_299, %c11136] : memref<1x11264xf32, #tpu.memory_space<vmem>>, vector<1x128xf32>
    %717 = vector.broadcast %716 : vector<1x128xf32> to vector<16x128xf32>
    %718 = arith.addf %715, %717 : vector<16x128xf32>
    %c0_300 = arith.constant 0 : index
    %c4864 = arith.constant 4864 : index
    %719 = vector.load %arg10[%c0_300, %c4864] : memref<1x11264xf32, #tpu.memory_space<vmem>>, vector<1x128xf32>
    %c0_301 = arith.constant 0 : index
    %c4992 = arith.constant 4992 : index
    %720 = vector.load %arg10[%c0_301, %c4992] : memref<1x11264xf32, #tpu.memory_space<vmem>>, vector<1x128xf32>
    %cst_302 = arith.constant dense<0.000000e+00> : vector<16xf32>
    %721 = vector.multi_reduction <add>, %718, %cst_302 [1] : vector<16x128xf32> to vector<16xf32>
    %722 = vector.shape_cast %721 : vector<16xf32> to vector<16x1xf32>
    %cst_303 = arith.constant 1.280000e+02 : f32
    %723 = vector.broadcast %cst_303 : f32 to vector<16x1xf32>
    %724 = arith.divf %722, %723 : vector<16x1xf32>
    %725 = vector.broadcast %724 : vector<16x1xf32> to vector<16x128xf32>
    %726 = arith.subf %718, %725 : vector<16x128xf32>
    %727 = arith.mulf %726, %726 : vector<16x128xf32>
    %cst_304 = arith.constant dense<0.000000e+00> : vector<16xf32>
    %728 = vector.multi_reduction <add>, %727, %cst_304 [1] : vector<16x128xf32> to vector<16xf32>
    %729 = vector.shape_cast %728 : vector<16xf32> to vector<16x1xf32>
    %cst_305 = arith.constant 1.280000e+02 : f32
    %730 = vector.broadcast %cst_305 : f32 to vector<16x1xf32>
    %731 = arith.divf %729, %730 : vector<16x1xf32>
    %cst_306 = arith.constant 9.99999974E-6 : f32
    %732 = vector.broadcast %cst_306 : f32 to vector<16x1xf32>
    %733 = arith.addf %731, %732 : vector<16x1xf32>
    %734 = math.rsqrt %733 : vector<16x1xf32>
    %735 = vector.broadcast %734 : vector<16x1xf32> to vector<16x128xf32>
    %736 = arith.mulf %726, %735 : vector<16x128xf32>
    %737 = vector.broadcast %719 : vector<1x128xf32> to vector<16x128xf32>
    %738 = arith.mulf %736, %737 : vector<16x128xf32>
    %739 = vector.broadcast %720 : vector<1x128xf32> to vector<16x128xf32>
    %740 = arith.addf %738, %739 : vector<16x128xf32>
    %c0_307 = arith.constant 0 : index
    %c0_308 = arith.constant 0 : index
    %741 = vector.load %arg4[%c0_307, %c0_308] : memref<128x2176xbf16, #tpu.memory_space<vmem>>, vector<128x384xbf16>
    %742 = arith.truncf %740 : vector<16x128xf32> to vector<16x128xbf16>
    %cst_309 = arith.constant dense<0.000000e+00> : vector<16x384xf32>
    %743 = tpu.matmul %742, %741, %cst_309 {dimension_numbers = #tpu.dot_dimension_numbers<[1], [0], [0], [1], [0, 0, 1, 1], [], []>} : vector<16x128xbf16>, vector<128x384xbf16>, vector<16x384xf32> -> vector<16x384xf32>
    %c0_310 = arith.constant 0 : index
    %c5120 = arith.constant 5120 : index
    %744 = vector.load %arg10[%c0_310, %c5120] : memref<1x11264xf32, #tpu.memory_space<vmem>>, vector<1x384xf32>
    %745 = vector.broadcast %744 : vector<1x384xf32> to vector<16x384xf32>
    %746 = arith.addf %743, %745 : vector<16x384xf32>
    %747 = vector.extract_strided_slice %746 {offsets = [0, 0], sizes = [16, 32], strides = [1, 1]} : vector<16x384xf32> to vector<16x32xf32>
    %748 = vector.extract_strided_slice %746 {offsets = [0, 128], sizes = [16, 32], strides = [1, 1]} : vector<16x384xf32> to vector<16x32xf32>
    %749 = vector.extract_strided_slice %746 {offsets = [0, 256], sizes = [16, 32], strides = [1, 1]} : vector<16x384xf32> to vector<16x32xf32>
    %cst_311 = arith.constant dense<0.000000e+00> : vector<16x16xf32>
    %750 = tpu.matmul %747, %748, %cst_311 {dimension_numbers = #tpu.dot_dimension_numbers<[1], [1], [0], [0], [0, 0, 1, 0], [], []>} : vector<16x32xf32>, vector<16x32xf32>, vector<16x16xf32> -> vector<16x16xf32>
    %cst_312 = arith.constant 0.176776692 : f32
    %751 = vector.broadcast %cst_312 : f32 to vector<16x16xf32>
    %752 = arith.mulf %750, %751 : vector<16x16xf32>
    %cst_313 = arith.constant dense<0xFF800000> : vector<16xf32>
    %753 = vector.multi_reduction <maximumf>, %752, %cst_313 [1] : vector<16x16xf32> to vector<16xf32>
    %754 = vector.shape_cast %753 : vector<16xf32> to vector<16x1xf32>
    %755 = vector.broadcast %754 : vector<16x1xf32> to vector<16x16xf32>
    %756 = arith.subf %752, %755 : vector<16x16xf32>
    %757 = math.exp %756 : vector<16x16xf32>
    %cst_314 = arith.constant dense<0.000000e+00> : vector<16xf32>
    %758 = vector.multi_reduction <add>, %757, %cst_314 [1] : vector<16x16xf32> to vector<16xf32>
    %759 = vector.shape_cast %758 : vector<16xf32> to vector<16x1xf32>
    %760 = tpu.reciprocal %759 {approx = true} : vector<16x1xf32> -> vector<16x1xf32>
    %761 = vector.broadcast %760 : vector<16x1xf32> to vector<16x16xf32>
    %762 = arith.mulf %757, %761 : vector<16x16xf32>
    %cst_315 = arith.constant dense<0.000000e+00> : vector<16x32xf32>
    %763 = tpu.matmul %762, %749, %cst_315 {dimension_numbers = #tpu.dot_dimension_numbers<[1], [0], [0], [1], [0, 0, 1, 1], [], []>} : vector<16x16xf32>, vector<16x32xf32>, vector<16x32xf32> -> vector<16x32xf32>
    %c0_316 = arith.constant 0 : index
    %c0_317 = arith.constant 0 : index
    %764 = vector.load %arg16[%c0_316, %c0_317] : memref<16x128xf32, #tpu.memory_space<vmem>>, vector<16x32xf32>
    tpu.vector_store %arg16[%c0_316, %c0_317], %763 {strides = array<i32>} : memref<16x128xf32, #tpu.memory_space<vmem>>, vector<16x32xf32>,
    %765 = vector.extract_strided_slice %746 {offsets = [0, 32], sizes = [16, 32], strides = [1, 1]} : vector<16x384xf32> to vector<16x32xf32>
    %766 = vector.extract_strided_slice %746 {offsets = [0, 160], sizes = [16, 32], strides = [1, 1]} : vector<16x384xf32> to vector<16x32xf32>
    %767 = vector.extract_strided_slice %746 {offsets = [0, 288], sizes = [16, 32], strides = [1, 1]} : vector<16x384xf32> to vector<16x32xf32>
    %cst_318 = arith.constant dense<0.000000e+00> : vector<16x16xf32>
    %768 = tpu.matmul %765, %766, %cst_318 {dimension_numbers = #tpu.dot_dimension_numbers<[1], [1], [0], [0], [0, 0, 1, 0], [], []>} : vector<16x32xf32>, vector<16x32xf32>, vector<16x16xf32> -> vector<16x16xf32>
    %cst_319 = arith.constant 0.176776692 : f32
    %769 = vector.broadcast %cst_319 : f32 to vector<16x16xf32>
    %770 = arith.mulf %768, %769 : vector<16x16xf32>
    %cst_320 = arith.constant dense<0xFF800000> : vector<16xf32>
    %771 = vector.multi_reduction <maximumf>, %770, %cst_320 [1] : vector<16x16xf32> to vector<16xf32>
    %772 = vector.shape_cast %771 : vector<16xf32> to vector<16x1xf32>
    %773 = vector.broadcast %772 : vector<16x1xf32> to vector<16x16xf32>
    %774 = arith.subf %770, %773 : vector<16x16xf32>
    %775 = math.exp %774 : vector<16x16xf32>
    %cst_321 = arith.constant dense<0.000000e+00> : vector<16xf32>
    %776 = vector.multi_reduction <add>, %775, %cst_321 [1] : vector<16x16xf32> to vector<16xf32>
    %777 = vector.shape_cast %776 : vector<16xf32> to vector<16x1xf32>
    %778 = tpu.reciprocal %777 {approx = true} : vector<16x1xf32> -> vector<16x1xf32>
    %779 = vector.broadcast %778 : vector<16x1xf32> to vector<16x16xf32>
    %780 = arith.mulf %775, %779 : vector<16x16xf32>
    %cst_322 = arith.constant dense<0.000000e+00> : vector<16x32xf32>
    %781 = tpu.matmul %780, %767, %cst_322 {dimension_numbers = #tpu.dot_dimension_numbers<[1], [0], [0], [1], [0, 0, 1, 1], [], []>} : vector<16x16xf32>, vector<16x32xf32>, vector<16x32xf32> -> vector<16x32xf32>
    %c0_323 = arith.constant 0 : index
    %c32_324 = arith.constant 32 : index
    %782 = vector.load %arg16[%c0_323, %c32_324] : memref<16x128xf32, #tpu.memory_space<vmem>>, vector<16x32xf32>
    tpu.vector_store %arg16[%c0_323, %c32_324], %781 {strides = array<i32>} : memref<16x128xf32, #tpu.memory_space<vmem>>, vector<16x32xf32>,
    %783 = vector.extract_strided_slice %746 {offsets = [0, 64], sizes = [16, 32], strides = [1, 1]} : vector<16x384xf32> to vector<16x32xf32>
    %784 = vector.extract_strided_slice %746 {offsets = [0, 192], sizes = [16, 32], strides = [1, 1]} : vector<16x384xf32> to vector<16x32xf32>
    %785 = vector.extract_strided_slice %746 {offsets = [0, 320], sizes = [16, 32], strides = [1, 1]} : vector<16x384xf32> to vector<16x32xf32>
    %cst_325 = arith.constant dense<0.000000e+00> : vector<16x16xf32>
    %786 = tpu.matmul %783, %784, %cst_325 {dimension_numbers = #tpu.dot_dimension_numbers<[1], [1], [0], [0], [0, 0, 1, 0], [], []>} : vector<16x32xf32>, vector<16x32xf32>, vector<16x16xf32> -> vector<16x16xf32>
    %cst_326 = arith.constant 0.176776692 : f32
    %787 = vector.broadcast %cst_326 : f32 to vector<16x16xf32>
    %788 = arith.mulf %786, %787 : vector<16x16xf32>
    %cst_327 = arith.constant dense<0xFF800000> : vector<16xf32>
    %789 = vector.multi_reduction <maximumf>, %788, %cst_327 [1] : vector<16x16xf32> to vector<16xf32>
    %790 = vector.shape_cast %789 : vector<16xf32> to vector<16x1xf32>
    %791 = vector.broadcast %790 : vector<16x1xf32> to vector<16x16xf32>
    %792 = arith.subf %788, %791 : vector<16x16xf32>
    %793 = math.exp %792 : vector<16x16xf32>
    %cst_328 = arith.constant dense<0.000000e+00> : vector<16xf32>
    %794 = vector.multi_reduction <add>, %793, %cst_328 [1] : vector<16x16xf32> to vector<16xf32>
    %795 = vector.shape_cast %794 : vector<16xf32> to vector<16x1xf32>
    %796 = tpu.reciprocal %795 {approx = true} : vector<16x1xf32> -> vector<16x1xf32>
    %797 = vector.broadcast %796 : vector<16x1xf32> to vector<16x16xf32>
    %798 = arith.mulf %793, %797 : vector<16x16xf32>
    %cst_329 = arith.constant dense<0.000000e+00> : vector<16x32xf32>
    %799 = tpu.matmul %798, %785, %cst_329 {dimension_numbers = #tpu.dot_dimension_numbers<[1], [0], [0], [1], [0, 0, 1, 1], [], []>} : vector<16x16xf32>, vector<16x32xf32>, vector<16x32xf32> -> vector<16x32xf32>
    %c0_330 = arith.constant 0 : index
    %c64_331 = arith.constant 64 : index
    %800 = vector.load %arg16[%c0_330, %c64_331] : memref<16x128xf32, #tpu.memory_space<vmem>>, vector<16x32xf32>
    tpu.vector_store %arg16[%c0_330, %c64_331], %799 {strides = array<i32>} : memref<16x128xf32, #tpu.memory_space<vmem>>, vector<16x32xf32>,
    %801 = vector.extract_strided_slice %746 {offsets = [0, 96], sizes = [16, 32], strides = [1, 1]} : vector<16x384xf32> to vector<16x32xf32>
    %802 = vector.extract_strided_slice %746 {offsets = [0, 224], sizes = [16, 32], strides = [1, 1]} : vector<16x384xf32> to vector<16x32xf32>
    %803 = vector.extract_strided_slice %746 {offsets = [0, 352], sizes = [16, 32], strides = [1, 1]} : vector<16x384xf32> to vector<16x32xf32>
    %cst_332 = arith.constant dense<0.000000e+00> : vector<16x16xf32>
    %804 = tpu.matmul %801, %802, %cst_332 {dimension_numbers = #tpu.dot_dimension_numbers<[1], [1], [0], [0], [0, 0, 1, 0], [], []>} : vector<16x32xf32>, vector<16x32xf32>, vector<16x16xf32> -> vector<16x16xf32>
    %cst_333 = arith.constant 0.176776692 : f32
    %805 = vector.broadcast %cst_333 : f32 to vector<16x16xf32>
    %806 = arith.mulf %804, %805 : vector<16x16xf32>
    %cst_334 = arith.constant dense<0xFF800000> : vector<16xf32>
    %807 = vector.multi_reduction <maximumf>, %806, %cst_334 [1] : vector<16x16xf32> to vector<16xf32>
    %808 = vector.shape_cast %807 : vector<16xf32> to vector<16x1xf32>
    %809 = vector.broadcast %808 : vector<16x1xf32> to vector<16x16xf32>
    %810 = arith.subf %806, %809 : vector<16x16xf32>
    %811 = math.exp %810 : vector<16x16xf32>
    %cst_335 = arith.constant dense<0.000000e+00> : vector<16xf32>
    %812 = vector.multi_reduction <add>, %811, %cst_335 [1] : vector<16x16xf32> to vector<16xf32>
    %813 = vector.shape_cast %812 : vector<16xf32> to vector<16x1xf32>
    %814 = tpu.reciprocal %813 {approx = true} : vector<16x1xf32> -> vector<16x1xf32>
    %815 = vector.broadcast %814 : vector<16x1xf32> to vector<16x16xf32>
    %816 = arith.mulf %811, %815 : vector<16x16xf32>
    %cst_336 = arith.constant dense<0.000000e+00> : vector<16x32xf32>
    %817 = tpu.matmul %816, %803, %cst_336 {dimension_numbers = #tpu.dot_dimension_numbers<[1], [0], [0], [1], [0, 0, 1, 1], [], []>} : vector<16x16xf32>, vector<16x32xf32>, vector<16x32xf32> -> vector<16x32xf32>
    %c0_337 = arith.constant 0 : index
    %c96 = arith.constant 96 : index
    %818 = vector.load %arg16[%c0_337, %c96] : memref<16x128xf32, #tpu.memory_space<vmem>>, vector<16x32xf32>
    tpu.vector_store %arg16[%c0_337, %c96], %817 {strides = array<i32>} : memref<16x128xf32, #tpu.memory_space<vmem>>, vector<16x32xf32>,
    %c0_338 = arith.constant 0 : index
    %c0_339 = arith.constant 0 : index
    %819 = vector.load %arg16[%c0_338, %c0_339] : memref<16x128xf32, #tpu.memory_space<vmem>>, vector<16x128xf32>
    %c0_340 = arith.constant 0 : index
    %c384_341 = arith.constant 384 : index
    %820 = vector.load %arg4[%c0_340, %c384_341] : memref<128x2176xbf16, #tpu.memory_space<vmem>>, vector<128x128xbf16>
    %821 = arith.truncf %819 : vector<16x128xf32> to vector<16x128xbf16>
    %cst_342 = arith.constant dense<0.000000e+00> : vector<16x128xf32>
    %822 = tpu.matmul %821, %820, %cst_342 {dimension_numbers = #tpu.dot_dimension_numbers<[1], [0], [0], [1], [0, 0, 1, 1], [], []>} : vector<16x128xbf16>, vector<128x128xbf16>, vector<16x128xf32> -> vector<16x128xf32>
    %823 = arith.addf %718, %822 : vector<16x128xf32>
    %c0_343 = arith.constant 0 : index
    %c5504 = arith.constant 5504 : index
    %824 = vector.load %arg10[%c0_343, %c5504] : memref<1x11264xf32, #tpu.memory_space<vmem>>, vector<1x128xf32>
    %825 = vector.broadcast %824 : vector<1x128xf32> to vector<16x128xf32>
    %826 = arith.addf %823, %825 : vector<16x128xf32>
    %c0_344 = arith.constant 0 : index
    %c5632 = arith.constant 5632 : index
    %827 = vector.load %arg10[%c0_344, %c5632] : memref<1x11264xf32, #tpu.memory_space<vmem>>, vector<1x128xf32>
    %c0_345 = arith.constant 0 : index
    %c5760 = arith.constant 5760 : index
    %828 = vector.load %arg10[%c0_345, %c5760] : memref<1x11264xf32, #tpu.memory_space<vmem>>, vector<1x128xf32>
    %cst_346 = arith.constant dense<0.000000e+00> : vector<16xf32>
    %829 = vector.multi_reduction <add>, %826, %cst_346 [1] : vector<16x128xf32> to vector<16xf32>
    %830 = vector.shape_cast %829 : vector<16xf32> to vector<16x1xf32>
    %cst_347 = arith.constant 1.280000e+02 : f32
    %831 = vector.broadcast %cst_347 : f32 to vector<16x1xf32>
    %832 = arith.divf %830, %831 : vector<16x1xf32>
    %833 = vector.broadcast %832 : vector<16x1xf32> to vector<16x128xf32>
    %834 = arith.subf %826, %833 : vector<16x128xf32>
    %835 = arith.mulf %834, %834 : vector<16x128xf32>
    %cst_348 = arith.constant dense<0.000000e+00> : vector<16xf32>
    %836 = vector.multi_reduction <add>, %835, %cst_348 [1] : vector<16x128xf32> to vector<16xf32>
    %837 = vector.shape_cast %836 : vector<16xf32> to vector<16x1xf32>
    %cst_349 = arith.constant 1.280000e+02 : f32
    %838 = vector.broadcast %cst_349 : f32 to vector<16x1xf32>
    %839 = arith.divf %837, %838 : vector<16x1xf32>
    %cst_350 = arith.constant 9.99999974E-6 : f32
    %840 = vector.broadcast %cst_350 : f32 to vector<16x1xf32>
    %841 = arith.addf %839, %840 : vector<16x1xf32>
    %842 = math.rsqrt %841 : vector<16x1xf32>
    %843 = vector.broadcast %842 : vector<16x1xf32> to vector<16x128xf32>
    %844 = arith.mulf %834, %843 : vector<16x128xf32>
    %845 = vector.broadcast %827 : vector<1x128xf32> to vector<16x128xf32>
    %846 = arith.mulf %844, %845 : vector<16x128xf32>
    %847 = vector.broadcast %828 : vector<1x128xf32> to vector<16x128xf32>
    %848 = arith.addf %846, %847 : vector<16x128xf32>
    %c0_351 = arith.constant 0 : index
    %c512_352 = arith.constant 512 : index
    %849 = vector.load %arg4[%c0_351, %c512_352] : memref<128x2176xbf16, #tpu.memory_space<vmem>>, vector<128x512xbf16>
    %850 = arith.truncf %848 : vector<16x128xf32> to vector<16x128xbf16>
    %cst_353 = arith.constant dense<0.000000e+00> : vector<16x512xf32>
    %851 = tpu.matmul %850, %849, %cst_353 {dimension_numbers = #tpu.dot_dimension_numbers<[1], [0], [0], [1], [0, 0, 1, 1], [], []>} : vector<16x128xbf16>, vector<128x512xbf16>, vector<16x512xf32> -> vector<16x512xf32>
    %c0_354 = arith.constant 0 : index
    %c5888 = arith.constant 5888 : index
    %852 = vector.load %arg10[%c0_354, %c5888] : memref<1x11264xf32, #tpu.memory_space<vmem>>, vector<1x512xf32>
    %853 = vector.broadcast %852 : vector<1x512xf32> to vector<16x512xf32>
    %854 = arith.addf %851, %853 : vector<16x512xf32>
    %855 = arith.mulf %854, %854 : vector<16x512xf32>
    %856 = arith.mulf %854, %855 : vector<16x512xf32>
    %cst_355 = arith.constant 4.471500e-02 : f32
    %857 = vector.broadcast %cst_355 : f32 to vector<16x512xf32>
    %858 = arith.mulf %857, %856 : vector<16x512xf32>
    %859 = arith.addf %854, %858 : vector<16x512xf32>
    %cst_356 = arith.constant 0.797884583 : f32
    %860 = vector.broadcast %cst_356 : f32 to vector<16x512xf32>
    %861 = arith.mulf %860, %859 : vector<16x512xf32>
    %862 = math.tanh %861 : vector<16x512xf32>
    %cst_357 = arith.constant 1.000000e+00 : f32
    %863 = vector.broadcast %cst_357 : f32 to vector<16x512xf32>
    %864 = arith.addf %863, %862 : vector<16x512xf32>
    %cst_358 = arith.constant 5.000000e-01 : f32
    %865 = vector.broadcast %cst_358 : f32 to vector<16x512xf32>
    %866 = arith.mulf %865, %864 : vector<16x512xf32>
    %867 = arith.mulf %854, %866 : vector<16x512xf32>
    %c0_359 = arith.constant 0 : index
    %c0_360 = arith.constant 0 : index
    %868 = vector.load %arg8[%c0_359, %c0_360] : memref<1032x128xbf16, #tpu.memory_space<vmem>>, vector<512x128xbf16>
    %869 = arith.truncf %867 : vector<16x512xf32> to vector<16x512xbf16>
    %cst_361 = arith.constant dense<0.000000e+00> : vector<16x128xf32>
    %870 = tpu.matmul %869, %868, %cst_361 {dimension_numbers = #tpu.dot_dimension_numbers<[1], [0], [0], [1], [0, 0, 1, 1], [], []>} : vector<16x512xbf16>, vector<512x128xbf16>, vector<16x128xf32> -> vector<16x128xf32>
    %c0_362 = arith.constant 0 : index
    %c6400 = arith.constant 6400 : index
    %871 = vector.load %arg10[%c0_362, %c6400] : memref<1x11264xf32, #tpu.memory_space<vmem>>, vector<1x128xf32>
    %872 = vector.broadcast %871 : vector<1x128xf32> to vector<16x128xf32>
    %873 = arith.addf %870, %872 : vector<16x128xf32>
    %874 = arith.addf %826, %873 : vector<16x128xf32>
    %c0_363 = arith.constant 0 : index
    %c6528 = arith.constant 6528 : index
    %875 = vector.load %arg10[%c0_363, %c6528] : memref<1x11264xf32, #tpu.memory_space<vmem>>, vector<1x128xf32>
    %c0_364 = arith.constant 0 : index
    %c6656 = arith.constant 6656 : index
    %876 = vector.load %arg10[%c0_364, %c6656] : memref<1x11264xf32, #tpu.memory_space<vmem>>, vector<1x128xf32>
    %cst_365 = arith.constant dense<0.000000e+00> : vector<16xf32>
    %877 = vector.multi_reduction <add>, %874, %cst_365 [1] : vector<16x128xf32> to vector<16xf32>
    %878 = vector.shape_cast %877 : vector<16xf32> to vector<16x1xf32>
    %cst_366 = arith.constant 1.280000e+02 : f32
    %879 = vector.broadcast %cst_366 : f32 to vector<16x1xf32>
    %880 = arith.divf %878, %879 : vector<16x1xf32>
    %881 = vector.broadcast %880 : vector<16x1xf32> to vector<16x128xf32>
    %882 = arith.subf %874, %881 : vector<16x128xf32>
    %883 = arith.mulf %882, %882 : vector<16x128xf32>
    %cst_367 = arith.constant dense<0.000000e+00> : vector<16xf32>
    %884 = vector.multi_reduction <add>, %883, %cst_367 [1] : vector<16x128xf32> to vector<16xf32>
    %885 = vector.shape_cast %884 : vector<16xf32> to vector<16x1xf32>
    %cst_368 = arith.constant 1.280000e+02 : f32
    %886 = vector.broadcast %cst_368 : f32 to vector<16x1xf32>
    %887 = arith.divf %885, %886 : vector<16x1xf32>
    %cst_369 = arith.constant 9.99999974E-6 : f32
    %888 = vector.broadcast %cst_369 : f32 to vector<16x1xf32>
    %889 = arith.addf %887, %888 : vector<16x1xf32>
    %890 = math.rsqrt %889 : vector<16x1xf32>
    %891 = vector.broadcast %890 : vector<16x1xf32> to vector<16x128xf32>
    %892 = arith.mulf %882, %891 : vector<16x128xf32>
    %893 = vector.broadcast %875 : vector<1x128xf32> to vector<16x128xf32>
    %894 = arith.mulf %892, %893 : vector<16x128xf32>
    %895 = vector.broadcast %876 : vector<1x128xf32> to vector<16x128xf32>
    %896 = arith.addf %894, %895 : vector<16x128xf32>
    %c0_370 = arith.constant 0 : index
    %c1024_371 = arith.constant 1024 : index
    %897 = vector.load %arg4[%c0_370, %c1024_371] : memref<128x2176xbf16, #tpu.memory_space<vmem>>, vector<128x384xbf16>
    %898 = arith.truncf %896 : vector<16x128xf32> to vector<16x128xbf16>
    %cst_372 = arith.constant dense<0.000000e+00> : vector<16x384xf32>
    %899 = tpu.matmul %898, %897, %cst_372 {dimension_numbers = #tpu.dot_dimension_numbers<[1], [0], [0], [1], [0, 0, 1, 1], [], []>} : vector<16x128xbf16>, vector<128x384xbf16>, vector<16x384xf32> -> vector<16x384xf32>
    %c0_373 = arith.constant 0 : index
    %c6784 = arith.constant 6784 : index
    %900 = vector.load %arg10[%c0_373, %c6784] : memref<1x11264xf32, #tpu.memory_space<vmem>>, vector<1x384xf32>
    %901 = vector.broadcast %900 : vector<1x384xf32> to vector<16x384xf32>
    %902 = arith.addf %899, %901 : vector<16x384xf32>
    %903 = vector.extract_strided_slice %902 {offsets = [0, 0], sizes = [16, 32], strides = [1, 1]} : vector<16x384xf32> to vector<16x32xf32>
    %904 = vector.extract_strided_slice %902 {offsets = [0, 128], sizes = [16, 32], strides = [1, 1]} : vector<16x384xf32> to vector<16x32xf32>
    %905 = vector.extract_strided_slice %902 {offsets = [0, 256], sizes = [16, 32], strides = [1, 1]} : vector<16x384xf32> to vector<16x32xf32>
    %cst_374 = arith.constant dense<0.000000e+00> : vector<16x16xf32>
    %906 = tpu.matmul %903, %904, %cst_374 {dimension_numbers = #tpu.dot_dimension_numbers<[1], [1], [0], [0], [0, 0, 1, 0], [], []>} : vector<16x32xf32>, vector<16x32xf32>, vector<16x16xf32> -> vector<16x16xf32>
    %cst_375 = arith.constant 0.176776692 : f32
    %907 = vector.broadcast %cst_375 : f32 to vector<16x16xf32>
    %908 = arith.mulf %906, %907 : vector<16x16xf32>
    %cst_376 = arith.constant dense<0xFF800000> : vector<16xf32>
    %909 = vector.multi_reduction <maximumf>, %908, %cst_376 [1] : vector<16x16xf32> to vector<16xf32>
    %910 = vector.shape_cast %909 : vector<16xf32> to vector<16x1xf32>
    %911 = vector.broadcast %910 : vector<16x1xf32> to vector<16x16xf32>
    %912 = arith.subf %908, %911 : vector<16x16xf32>
    %913 = math.exp %912 : vector<16x16xf32>
    %cst_377 = arith.constant dense<0.000000e+00> : vector<16xf32>
    %914 = vector.multi_reduction <add>, %913, %cst_377 [1] : vector<16x16xf32> to vector<16xf32>
    %915 = vector.shape_cast %914 : vector<16xf32> to vector<16x1xf32>
    %916 = tpu.reciprocal %915 {approx = true} : vector<16x1xf32> -> vector<16x1xf32>
    %917 = vector.broadcast %916 : vector<16x1xf32> to vector<16x16xf32>
    %918 = arith.mulf %913, %917 : vector<16x16xf32>
    %cst_378 = arith.constant dense<0.000000e+00> : vector<16x32xf32>
    %919 = tpu.matmul %918, %905, %cst_378 {dimension_numbers = #tpu.dot_dimension_numbers<[1], [0], [0], [1], [0, 0, 1, 1], [], []>} : vector<16x16xf32>, vector<16x32xf32>, vector<16x32xf32> -> vector<16x32xf32>
    %c0_379 = arith.constant 0 : index
    %c0_380 = arith.constant 0 : index
    %920 = vector.load %arg16[%c0_379, %c0_380] : memref<16x128xf32, #tpu.memory_space<vmem>>, vector<16x32xf32>
    tpu.vector_store %arg16[%c0_379, %c0_380], %919 {strides = array<i32>} : memref<16x128xf32, #tpu.memory_space<vmem>>, vector<16x32xf32>,
    %921 = vector.extract_strided_slice %902 {offsets = [0, 32], sizes = [16, 32], strides = [1, 1]} : vector<16x384xf32> to vector<16x32xf32>
    %922 = vector.extract_strided_slice %902 {offsets = [0, 160], sizes = [16, 32], strides = [1, 1]} : vector<16x384xf32> to vector<16x32xf32>
    %923 = vector.extract_strided_slice %902 {offsets = [0, 288], sizes = [16, 32], strides = [1, 1]} : vector<16x384xf32> to vector<16x32xf32>
    %cst_381 = arith.constant dense<0.000000e+00> : vector<16x16xf32>
    %924 = tpu.matmul %921, %922, %cst_381 {dimension_numbers = #tpu.dot_dimension_numbers<[1], [1], [0], [0], [0, 0, 1, 0], [], []>} : vector<16x32xf32>, vector<16x32xf32>, vector<16x16xf32> -> vector<16x16xf32>
    %cst_382 = arith.constant 0.176776692 : f32
    %925 = vector.broadcast %cst_382 : f32 to vector<16x16xf32>
    %926 = arith.mulf %924, %925 : vector<16x16xf32>
    %cst_383 = arith.constant dense<0xFF800000> : vector<16xf32>
    %927 = vector.multi_reduction <maximumf>, %926, %cst_383 [1] : vector<16x16xf32> to vector<16xf32>
    %928 = vector.shape_cast %927 : vector<16xf32> to vector<16x1xf32>
    %929 = vector.broadcast %928 : vector<16x1xf32> to vector<16x16xf32>
    %930 = arith.subf %926, %929 : vector<16x16xf32>
    %931 = math.exp %930 : vector<16x16xf32>
    %cst_384 = arith.constant dense<0.000000e+00> : vector<16xf32>
    %932 = vector.multi_reduction <add>, %931, %cst_384 [1] : vector<16x16xf32> to vector<16xf32>
    %933 = vector.shape_cast %932 : vector<16xf32> to vector<16x1xf32>
    %934 = tpu.reciprocal %933 {approx = true} : vector<16x1xf32> -> vector<16x1xf32>
    %935 = vector.broadcast %934 : vector<16x1xf32> to vector<16x16xf32>
    %936 = arith.mulf %931, %935 : vector<16x16xf32>
    %cst_385 = arith.constant dense<0.000000e+00> : vector<16x32xf32>
    %937 = tpu.matmul %936, %923, %cst_385 {dimension_numbers = #tpu.dot_dimension_numbers<[1], [0], [0], [1], [0, 0, 1, 1], [], []>} : vector<16x16xf32>, vector<16x32xf32>, vector<16x32xf32> -> vector<16x32xf32>
    %c0_386 = arith.constant 0 : index
    %c32_387 = arith.constant 32 : index
    %938 = vector.load %arg16[%c0_386, %c32_387] : memref<16x128xf32, #tpu.memory_space<vmem>>, vector<16x32xf32>
    tpu.vector_store %arg16[%c0_386, %c32_387], %937 {strides = array<i32>} : memref<16x128xf32, #tpu.memory_space<vmem>>, vector<16x32xf32>,
    %939 = vector.extract_strided_slice %902 {offsets = [0, 64], sizes = [16, 32], strides = [1, 1]} : vector<16x384xf32> to vector<16x32xf32>
    %940 = vector.extract_strided_slice %902 {offsets = [0, 192], sizes = [16, 32], strides = [1, 1]} : vector<16x384xf32> to vector<16x32xf32>
    %941 = vector.extract_strided_slice %902 {offsets = [0, 320], sizes = [16, 32], strides = [1, 1]} : vector<16x384xf32> to vector<16x32xf32>
    %cst_388 = arith.constant dense<0.000000e+00> : vector<16x16xf32>
    %942 = tpu.matmul %939, %940, %cst_388 {dimension_numbers = #tpu.dot_dimension_numbers<[1], [1], [0], [0], [0, 0, 1, 0], [], []>} : vector<16x32xf32>, vector<16x32xf32>, vector<16x16xf32> -> vector<16x16xf32>
    %cst_389 = arith.constant 0.176776692 : f32
    %943 = vector.broadcast %cst_389 : f32 to vector<16x16xf32>
    %944 = arith.mulf %942, %943 : vector<16x16xf32>
    %cst_390 = arith.constant dense<0xFF800000> : vector<16xf32>
    %945 = vector.multi_reduction <maximumf>, %944, %cst_390 [1] : vector<16x16xf32> to vector<16xf32>
    %946 = vector.shape_cast %945 : vector<16xf32> to vector<16x1xf32>
    %947 = vector.broadcast %946 : vector<16x1xf32> to vector<16x16xf32>
    %948 = arith.subf %944, %947 : vector<16x16xf32>
    %949 = math.exp %948 : vector<16x16xf32>
    %cst_391 = arith.constant dense<0.000000e+00> : vector<16xf32>
    %950 = vector.multi_reduction <add>, %949, %cst_391 [1] : vector<16x16xf32> to vector<16xf32>
    %951 = vector.shape_cast %950 : vector<16xf32> to vector<16x1xf32>
    %952 = tpu.reciprocal %951 {approx = true} : vector<16x1xf32> -> vector<16x1xf32>
    %953 = vector.broadcast %952 : vector<16x1xf32> to vector<16x16xf32>
    %954 = arith.mulf %949, %953 : vector<16x16xf32>
    %cst_392 = arith.constant dense<0.000000e+00> : vector<16x32xf32>
    %955 = tpu.matmul %954, %941, %cst_392 {dimension_numbers = #tpu.dot_dimension_numbers<[1], [0], [0], [1], [0, 0, 1, 1], [], []>} : vector<16x16xf32>, vector<16x32xf32>, vector<16x32xf32> -> vector<16x32xf32>
    %c0_393 = arith.constant 0 : index
    %c64_394 = arith.constant 64 : index
    %956 = vector.load %arg16[%c0_393, %c64_394] : memref<16x128xf32, #tpu.memory_space<vmem>>, vector<16x32xf32>
    tpu.vector_store %arg16[%c0_393, %c64_394], %955 {strides = array<i32>} : memref<16x128xf32, #tpu.memory_space<vmem>>, vector<16x32xf32>,
    %957 = vector.extract_strided_slice %902 {offsets = [0, 96], sizes = [16, 32], strides = [1, 1]} : vector<16x384xf32> to vector<16x32xf32>
    %958 = vector.extract_strided_slice %902 {offsets = [0, 224], sizes = [16, 32], strides = [1, 1]} : vector<16x384xf32> to vector<16x32xf32>
    %959 = vector.extract_strided_slice %902 {offsets = [0, 352], sizes = [16, 32], strides = [1, 1]} : vector<16x384xf32> to vector<16x32xf32>
    %cst_395 = arith.constant dense<0.000000e+00> : vector<16x16xf32>
    %960 = tpu.matmul %957, %958, %cst_395 {dimension_numbers = #tpu.dot_dimension_numbers<[1], [1], [0], [0], [0, 0, 1, 0], [], []>} : vector<16x32xf32>, vector<16x32xf32>, vector<16x16xf32> -> vector<16x16xf32>
    %cst_396 = arith.constant 0.176776692 : f32
    %961 = vector.broadcast %cst_396 : f32 to vector<16x16xf32>
    %962 = arith.mulf %960, %961 : vector<16x16xf32>
    %cst_397 = arith.constant dense<0xFF800000> : vector<16xf32>
    %963 = vector.multi_reduction <maximumf>, %962, %cst_397 [1] : vector<16x16xf32> to vector<16xf32>
    %964 = vector.shape_cast %963 : vector<16xf32> to vector<16x1xf32>
    %965 = vector.broadcast %964 : vector<16x1xf32> to vector<16x16xf32>
    %966 = arith.subf %962, %965 : vector<16x16xf32>
    %967 = math.exp %966 : vector<16x16xf32>
    %cst_398 = arith.constant dense<0.000000e+00> : vector<16xf32>
    %968 = vector.multi_reduction <add>, %967, %cst_398 [1] : vector<16x16xf32> to vector<16xf32>
    %969 = vector.shape_cast %968 : vector<16xf32> to vector<16x1xf32>
    %970 = tpu.reciprocal %969 {approx = true} : vector<16x1xf32> -> vector<16x1xf32>
    %971 = vector.broadcast %970 : vector<16x1xf32> to vector<16x16xf32>
    %972 = arith.mulf %967, %971 : vector<16x16xf32>
    %cst_399 = arith.constant dense<0.000000e+00> : vector<16x32xf32>
    %973 = tpu.matmul %972, %959, %cst_399 {dimension_numbers = #tpu.dot_dimension_numbers<[1], [0], [0], [1], [0, 0, 1, 1], [], []>} : vector<16x16xf32>, vector<16x32xf32>, vector<16x32xf32> -> vector<16x32xf32>
    %c0_400 = arith.constant 0 : index
    %c96_401 = arith.constant 96 : index
    %974 = vector.load %arg16[%c0_400, %c96_401] : memref<16x128xf32, #tpu.memory_space<vmem>>, vector<16x32xf32>
    tpu.vector_store %arg16[%c0_400, %c96_401], %973 {strides = array<i32>} : memref<16x128xf32, #tpu.memory_space<vmem>>, vector<16x32xf32>,
    %c0_402 = arith.constant 0 : index
    %c0_403 = arith.constant 0 : index
    %975 = vector.load %arg16[%c0_402, %c0_403] : memref<16x128xf32, #tpu.memory_space<vmem>>, vector<16x128xf32>
    %c0_404 = arith.constant 0 : index
    %c1408_405 = arith.constant 1408 : index
    %976 = vector.load %arg4[%c0_404, %c1408_405] : memref<128x2176xbf16, #tpu.memory_space<vmem>>, vector<128x128xbf16>
    %977 = arith.truncf %975 : vector<16x128xf32> to vector<16x128xbf16>
    %cst_406 = arith.constant dense<0.000000e+00> : vector<16x128xf32>
    %978 = tpu.matmul %977, %976, %cst_406 {dimension_numbers = #tpu.dot_dimension_numbers<[1], [0], [0], [1], [0, 0, 1, 1], [], []>} : vector<16x128xbf16>, vector<128x128xbf16>, vector<16x128xf32> -> vector<16x128xf32>
    %979 = arith.addf %874, %978 : vector<16x128xf32>
    %c0_407 = arith.constant 0 : index
    %c7168 = arith.constant 7168 : index
    %980 = vector.load %arg10[%c0_407, %c7168] : memref<1x11264xf32, #tpu.memory_space<vmem>>, vector<1x128xf32>
    %981 = vector.broadcast %980 : vector<1x128xf32> to vector<16x128xf32>
    %982 = arith.addf %979, %981 : vector<16x128xf32>
    %c0_408 = arith.constant 0 : index
    %c7296 = arith.constant 7296 : index
    %983 = vector.load %arg10[%c0_408, %c7296] : memref<1x11264xf32, #tpu.memory_space<vmem>>, vector<1x128xf32>
    %c0_409 = arith.constant 0 : index
    %c7424 = arith.constant 7424 : index
    %984 = vector.load %arg10[%c0_409, %c7424] : memref<1x11264xf32, #tpu.memory_space<vmem>>, vector<1x128xf32>
    %cst_410 = arith.constant dense<0.000000e+00> : vector<16xf32>
    %985 = vector.multi_reduction <add>, %982, %cst_410 [1] : vector<16x128xf32> to vector<16xf32>
    %986 = vector.shape_cast %985 : vector<16xf32> to vector<16x1xf32>
    %cst_411 = arith.constant 1.280000e+02 : f32
    %987 = vector.broadcast %cst_411 : f32 to vector<16x1xf32>
    %988 = arith.divf %986, %987 : vector<16x1xf32>
    %989 = vector.broadcast %988 : vector<16x1xf32> to vector<16x128xf32>
    %990 = arith.subf %982, %989 : vector<16x128xf32>
    %991 = arith.mulf %990, %990 : vector<16x128xf32>
    %cst_412 = arith.constant dense<0.000000e+00> : vector<16xf32>
    %992 = vector.multi_reduction <add>, %991, %cst_412 [1] : vector<16x128xf32> to vector<16xf32>
    %993 = vector.shape_cast %992 : vector<16xf32> to vector<16x1xf32>
    %cst_413 = arith.constant 1.280000e+02 : f32
    %994 = vector.broadcast %cst_413 : f32 to vector<16x1xf32>
    %995 = arith.divf %993, %994 : vector<16x1xf32>
    %cst_414 = arith.constant 9.99999974E-6 : f32
    %996 = vector.broadcast %cst_414 : f32 to vector<16x1xf32>
    %997 = arith.addf %995, %996 : vector<16x1xf32>
    %998 = math.rsqrt %997 : vector<16x1xf32>
    %999 = vector.broadcast %998 : vector<16x1xf32> to vector<16x128xf32>
    %1000 = arith.mulf %990, %999 : vector<16x128xf32>
    %1001 = vector.broadcast %983 : vector<1x128xf32> to vector<16x128xf32>
    %1002 = arith.mulf %1000, %1001 : vector<16x128xf32>
    %1003 = vector.broadcast %984 : vector<1x128xf32> to vector<16x128xf32>
    %1004 = arith.addf %1002, %1003 : vector<16x128xf32>
    %c0_415 = arith.constant 0 : index
    %c1536_416 = arith.constant 1536 : index
    %1005 = vector.load %arg4[%c0_415, %c1536_416] : memref<128x2176xbf16, #tpu.memory_space<vmem>>, vector<128x512xbf16>
    %1006 = arith.truncf %1004 : vector<16x128xf32> to vector<16x128xbf16>
    %cst_417 = arith.constant dense<0.000000e+00> : vector<16x512xf32>
    %1007 = tpu.matmul %1006, %1005, %cst_417 {dimension_numbers = #tpu.dot_dimension_numbers<[1], [0], [0], [1], [0, 0, 1, 1], [], []>} : vector<16x128xbf16>, vector<128x512xbf16>, vector<16x512xf32> -> vector<16x512xf32>
    %c0_418 = arith.constant 0 : index
    %c7552 = arith.constant 7552 : index
    %1008 = vector.load %arg10[%c0_418, %c7552] : memref<1x11264xf32, #tpu.memory_space<vmem>>, vector<1x512xf32>
    %1009 = vector.broadcast %1008 : vector<1x512xf32> to vector<16x512xf32>
    %1010 = arith.addf %1007, %1009 : vector<16x512xf32>
    %1011 = arith.mulf %1010, %1010 : vector<16x512xf32>
    %1012 = arith.mulf %1010, %1011 : vector<16x512xf32>
    %cst_419 = arith.constant 4.471500e-02 : f32
    %1013 = vector.broadcast %cst_419 : f32 to vector<16x512xf32>
    %1014 = arith.mulf %1013, %1012 : vector<16x512xf32>
    %1015 = arith.addf %1010, %1014 : vector<16x512xf32>
    %cst_420 = arith.constant 0.797884583 : f32
    %1016 = vector.broadcast %cst_420 : f32 to vector<16x512xf32>
    %1017 = arith.mulf %1016, %1015 : vector<16x512xf32>
    %1018 = math.tanh %1017 : vector<16x512xf32>
    %cst_421 = arith.constant 1.000000e+00 : f32
    %1019 = vector.broadcast %cst_421 : f32 to vector<16x512xf32>
    %1020 = arith.addf %1019, %1018 : vector<16x512xf32>
    %cst_422 = arith.constant 5.000000e-01 : f32
    %1021 = vector.broadcast %cst_422 : f32 to vector<16x512xf32>
    %1022 = arith.mulf %1021, %1020 : vector<16x512xf32>
    %1023 = arith.mulf %1010, %1022 : vector<16x512xf32>
    %c512_423 = arith.constant 512 : index
    %c0_424 = arith.constant 0 : index
    %1024 = vector.load %arg8[%c512_423, %c0_424] : memref<1032x128xbf16, #tpu.memory_space<vmem>>, vector<512x128xbf16>
    %1025 = arith.truncf %1023 : vector<16x512xf32> to vector<16x512xbf16>
    %cst_425 = arith.constant dense<0.000000e+00> : vector<16x128xf32>
    %1026 = tpu.matmul %1025, %1024, %cst_425 {dimension_numbers = #tpu.dot_dimension_numbers<[1], [0], [0], [1], [0, 0, 1, 1], [], []>} : vector<16x512xbf16>, vector<512x128xbf16>, vector<16x128xf32> -> vector<16x128xf32>
    %c0_426 = arith.constant 0 : index
    %c8064 = arith.constant 8064 : index
    %1027 = vector.load %arg10[%c0_426, %c8064] : memref<1x11264xf32, #tpu.memory_space<vmem>>, vector<1x128xf32>
    %1028 = vector.broadcast %1027 : vector<1x128xf32> to vector<16x128xf32>
    %1029 = arith.addf %1026, %1028 : vector<16x128xf32>
    %1030 = arith.addf %982, %1029 : vector<16x128xf32>
    %c1024_427 = arith.constant 1024 : index
    %c0_428 = arith.constant 0 : index
    %1031 = vector.load %arg8[%c1024_427, %c0_428] : memref<1032x128xbf16, #tpu.memory_space<vmem>>, vector<8x128xbf16>
    %1032 = arith.truncf %1030 : vector<16x128xf32> to vector<16x128xbf16>
    %cst_429 = arith.constant dense<0.000000e+00> : vector<8x16xf32>
    %1033 = tpu.matmul %1031, %1032, %cst_429 {dimension_numbers = #tpu.dot_dimension_numbers<[1], [1], [0], [0], [0, 0, 1, 0], [], []>} : vector<8x128xbf16>, vector<16x128xbf16>, vector<8x16xf32> -> vector<8x16xf32>
    %cst_430 = arith.constant 0.0883883461 : f32
    %1034 = vector.broadcast %cst_430 : f32 to vector<8x16xf32>
    %1035 = arith.mulf %1033, %1034 : vector<8x16xf32>
    %cst_431 = arith.constant dense<0xFF800000> : vector<8xf32>
    %1036 = vector.multi_reduction <maximumf>, %1035, %cst_431 [1] : vector<8x16xf32> to vector<8xf32>
    %1037 = vector.shape_cast %1036 : vector<8xf32> to vector<8x1xf32>
    %1038 = vector.broadcast %1037 : vector<8x1xf32> to vector<8x16xf32>
    %1039 = arith.subf %1035, %1038 : vector<8x16xf32>
    %1040 = math.exp %1039 : vector<8x16xf32>
    %cst_432 = arith.constant dense<0.000000e+00> : vector<8xf32>
    %1041 = vector.multi_reduction <add>, %1040, %cst_432 [1] : vector<8x16xf32> to vector<8xf32>
    %1042 = vector.shape_cast %1041 : vector<8xf32> to vector<8x1xf32>
    %1043 = tpu.reciprocal %1042 {approx = true} : vector<8x1xf32> -> vector<8x1xf32>
    %1044 = vector.broadcast %1043 : vector<8x1xf32> to vector<8x16xf32>
    %1045 = arith.mulf %1040, %1044 : vector<8x16xf32>
    %cst_433 = arith.constant dense<0.000000e+00> : vector<8x128xf32>
    %1046 = tpu.matmul %1045, %1030, %cst_433 {dimension_numbers = #tpu.dot_dimension_numbers<[1], [0], [0], [1], [0, 0, 1, 1], [], []>} : vector<8x16xf32>, vector<16x128xf32>, vector<8x128xf32> -> vector<8x128xf32>
    %c0_434 = arith.constant 0 : index
    %c2048_435 = arith.constant 2048 : index
    %1047 = vector.load %arg4[%c0_434, %c2048_435] : memref<128x2176xbf16, #tpu.memory_space<vmem>>, vector<128x64xbf16>
    %1048 = arith.truncf %1046 : vector<8x128xf32> to vector<8x128xbf16>
    %cst_436 = arith.constant dense<0.000000e+00> : vector<8x64xf32>
    %1049 = tpu.matmul %1048, %1047, %cst_436 {dimension_numbers = #tpu.dot_dimension_numbers<[1], [0], [0], [1], [0, 0, 1, 1], [], []>} : vector<8x128xbf16>, vector<128x64xbf16>, vector<8x64xf32> -> vector<8x64xf32>
    %c0_437 = arith.constant 0 : index
    %c8192 = arith.constant 8192 : index
    %1050 = vector.load %arg10[%c0_437, %c8192] : memref<1x11264xf32, #tpu.memory_space<vmem>>, vector<1x64xf32>
    %1051 = vector.broadcast %1050 : vector<1x64xf32> to vector<8x64xf32>
    %1052 = arith.addf %1049, %1051 : vector<8x64xf32>
    %c0_438 = arith.constant 0 : index
    %c8320 = arith.constant 8320 : index
    %1053 = vector.load %arg10[%c0_438, %c8320] : memref<1x11264xf32, #tpu.memory_space<vmem>>, vector<1x64xf32>
    %c0_439 = arith.constant 0 : index
    %c8448 = arith.constant 8448 : index
    %1054 = vector.load %arg10[%c0_439, %c8448] : memref<1x11264xf32, #tpu.memory_space<vmem>>, vector<1x64xf32>
    %cst_440 = arith.constant dense<0.000000e+00> : vector<8xf32>
    %1055 = vector.multi_reduction <add>, %1052, %cst_440 [1] : vector<8x64xf32> to vector<8xf32>
    %1056 = vector.shape_cast %1055 : vector<8xf32> to vector<8x1xf32>
    %cst_441 = arith.constant 6.400000e+01 : f32
    %1057 = vector.broadcast %cst_441 : f32 to vector<8x1xf32>
    %1058 = arith.divf %1056, %1057 : vector<8x1xf32>
    %1059 = vector.broadcast %1058 : vector<8x1xf32> to vector<8x64xf32>
    %1060 = arith.subf %1052, %1059 : vector<8x64xf32>
    %1061 = arith.mulf %1060, %1060 : vector<8x64xf32>
    %cst_442 = arith.constant dense<0.000000e+00> : vector<8xf32>
    %1062 = vector.multi_reduction <add>, %1061, %cst_442 [1] : vector<8x64xf32> to vector<8xf32>
    %1063 = vector.shape_cast %1062 : vector<8xf32> to vector<8x1xf32>
    %cst_443 = arith.constant 6.400000e+01 : f32
    %1064 = vector.broadcast %cst_443 : f32 to vector<8x1xf32>
    %1065 = arith.divf %1063, %1064 : vector<8x1xf32>
    %cst_444 = arith.constant 9.99999974E-6 : f32
    %1066 = vector.broadcast %cst_444 : f32 to vector<8x1xf32>
    %1067 = arith.addf %1065, %1066 : vector<8x1xf32>
    %1068 = math.rsqrt %1067 : vector<8x1xf32>
    %1069 = vector.broadcast %1068 : vector<8x1xf32> to vector<8x64xf32>
    %1070 = arith.mulf %1060, %1069 : vector<8x64xf32>
    %1071 = vector.broadcast %1053 : vector<1x64xf32> to vector<8x64xf32>
    %1072 = arith.mulf %1070, %1071 : vector<8x64xf32>
    %1073 = vector.broadcast %1054 : vector<1x64xf32> to vector<8x64xf32>
    %1074 = arith.addf %1072, %1073 : vector<8x64xf32>
    %c0_445 = arith.constant 0 : index
    %c0_446 = arith.constant 0 : index
    %1075 = vector.load %arg5[%c0_445, %c0_446] : memref<64x1408xbf16, #tpu.memory_space<vmem>>, vector<64x192xbf16>
    %1076 = arith.truncf %1074 : vector<8x64xf32> to vector<8x64xbf16>
    %cst_447 = arith.constant dense<0.000000e+00> : vector<8x192xf32>
    %1077 = tpu.matmul %1076, %1075, %cst_447 {dimension_numbers = #tpu.dot_dimension_numbers<[1], [0], [0], [1], [0, 0, 1, 1], [], []>} : vector<8x64xbf16>, vector<64x192xbf16>, vector<8x192xf32> -> vector<8x192xf32>
    %c0_448 = arith.constant 0 : index
    %c8576 = arith.constant 8576 : index
    %1078 = vector.load %arg10[%c0_448, %c8576] : memref<1x11264xf32, #tpu.memory_space<vmem>>, vector<1x192xf32>
    %1079 = vector.broadcast %1078 : vector<1x192xf32> to vector<8x192xf32>
    %1080 = arith.addf %1077, %1079 : vector<8x192xf32>
    %1081 = vector.extract_strided_slice %1080 {offsets = [0, 0], sizes = [8, 16], strides = [1, 1]} : vector<8x192xf32> to vector<8x16xf32>
    %1082 = vector.extract_strided_slice %1080 {offsets = [0, 64], sizes = [8, 16], strides = [1, 1]} : vector<8x192xf32> to vector<8x16xf32>
    %1083 = vector.extract_strided_slice %1080 {offsets = [0, 128], sizes = [8, 16], strides = [1, 1]} : vector<8x192xf32> to vector<8x16xf32>
    %cst_449 = arith.constant dense<0.000000e+00> : vector<8x8xf32>
    %1084 = tpu.matmul %1081, %1082, %cst_449 {dimension_numbers = #tpu.dot_dimension_numbers<[1], [1], [0], [0], [0, 0, 1, 0], [], []>} : vector<8x16xf32>, vector<8x16xf32>, vector<8x8xf32> -> vector<8x8xf32>
    %cst_450 = arith.constant 2.500000e-01 : f32
    %1085 = vector.broadcast %cst_450 : f32 to vector<8x8xf32>
    %1086 = arith.mulf %1084, %1085 : vector<8x8xf32>
    %cst_451 = arith.constant dense<0xFF800000> : vector<8xf32>
    %1087 = vector.multi_reduction <maximumf>, %1086, %cst_451 [1] : vector<8x8xf32> to vector<8xf32>
    %1088 = vector.shape_cast %1087 : vector<8xf32> to vector<8x1xf32>
    %1089 = vector.broadcast %1088 : vector<8x1xf32> to vector<8x8xf32>
    %1090 = arith.subf %1086, %1089 : vector<8x8xf32>
    %1091 = math.exp %1090 : vector<8x8xf32>
    %cst_452 = arith.constant dense<0.000000e+00> : vector<8xf32>
    %1092 = vector.multi_reduction <add>, %1091, %cst_452 [1] : vector<8x8xf32> to vector<8xf32>
    %1093 = vector.shape_cast %1092 : vector<8xf32> to vector<8x1xf32>
    %1094 = tpu.reciprocal %1093 {approx = true} : vector<8x1xf32> -> vector<8x1xf32>
    %1095 = vector.broadcast %1094 : vector<8x1xf32> to vector<8x8xf32>
    %1096 = arith.mulf %1091, %1095 : vector<8x8xf32>
    %cst_453 = arith.constant dense<0.000000e+00> : vector<8x16xf32>
    %1097 = tpu.matmul %1096, %1083, %cst_453 {dimension_numbers = #tpu.dot_dimension_numbers<[1], [0], [0], [1], [0, 0, 1, 1], [], []>} : vector<8x8xf32>, vector<8x16xf32>, vector<8x16xf32> -> vector<8x16xf32>
    %c0_454 = arith.constant 0 : index
    %c0_455 = arith.constant 0 : index
    %1098 = vector.load %arg16[%c0_454, %c0_455] : memref<16x128xf32, #tpu.memory_space<vmem>>, vector<8x16xf32>
    tpu.vector_store %arg16[%c0_454, %c0_455], %1097 {strides = array<i32>} : memref<16x128xf32, #tpu.memory_space<vmem>>, vector<8x16xf32>,
    %1099 = vector.extract_strided_slice %1080 {offsets = [0, 16], sizes = [8, 16], strides = [1, 1]} : vector<8x192xf32> to vector<8x16xf32>
    %1100 = vector.extract_strided_slice %1080 {offsets = [0, 80], sizes = [8, 16], strides = [1, 1]} : vector<8x192xf32> to vector<8x16xf32>
    %1101 = vector.extract_strided_slice %1080 {offsets = [0, 144], sizes = [8, 16], strides = [1, 1]} : vector<8x192xf32> to vector<8x16xf32>
    %cst_456 = arith.constant dense<0.000000e+00> : vector<8x8xf32>
    %1102 = tpu.matmul %1099, %1100, %cst_456 {dimension_numbers = #tpu.dot_dimension_numbers<[1], [1], [0], [0], [0, 0, 1, 0], [], []>} : vector<8x16xf32>, vector<8x16xf32>, vector<8x8xf32> -> vector<8x8xf32>
    %cst_457 = arith.constant 2.500000e-01 : f32
    %1103 = vector.broadcast %cst_457 : f32 to vector<8x8xf32>
    %1104 = arith.mulf %1102, %1103 : vector<8x8xf32>
    %cst_458 = arith.constant dense<0xFF800000> : vector<8xf32>
    %1105 = vector.multi_reduction <maximumf>, %1104, %cst_458 [1] : vector<8x8xf32> to vector<8xf32>
    %1106 = vector.shape_cast %1105 : vector<8xf32> to vector<8x1xf32>
    %1107 = vector.broadcast %1106 : vector<8x1xf32> to vector<8x8xf32>
    %1108 = arith.subf %1104, %1107 : vector<8x8xf32>
    %1109 = math.exp %1108 : vector<8x8xf32>
    %cst_459 = arith.constant dense<0.000000e+00> : vector<8xf32>
    %1110 = vector.multi_reduction <add>, %1109, %cst_459 [1] : vector<8x8xf32> to vector<8xf32>
    %1111 = vector.shape_cast %1110 : vector<8xf32> to vector<8x1xf32>
    %1112 = tpu.reciprocal %1111 {approx = true} : vector<8x1xf32> -> vector<8x1xf32>
    %1113 = vector.broadcast %1112 : vector<8x1xf32> to vector<8x8xf32>
    %1114 = arith.mulf %1109, %1113 : vector<8x8xf32>
    %cst_460 = arith.constant dense<0.000000e+00> : vector<8x16xf32>
    %1115 = tpu.matmul %1114, %1101, %cst_460 {dimension_numbers = #tpu.dot_dimension_numbers<[1], [0], [0], [1], [0, 0, 1, 1], [], []>} : vector<8x8xf32>, vector<8x16xf32>, vector<8x16xf32> -> vector<8x16xf32>
    %c0_461 = arith.constant 0 : index
    %c16_462 = arith.constant 16 : index
    %1116 = vector.load %arg16[%c0_461, %c16_462] : memref<16x128xf32, #tpu.memory_space<vmem>>, vector<8x16xf32>
    tpu.vector_store %arg16[%c0_461, %c16_462], %1115 {strides = array<i32>} : memref<16x128xf32, #tpu.memory_space<vmem>>, vector<8x16xf32>,
    %1117 = vector.extract_strided_slice %1080 {offsets = [0, 32], sizes = [8, 16], strides = [1, 1]} : vector<8x192xf32> to vector<8x16xf32>
    %1118 = vector.extract_strided_slice %1080 {offsets = [0, 96], sizes = [8, 16], strides = [1, 1]} : vector<8x192xf32> to vector<8x16xf32>
    %1119 = vector.extract_strided_slice %1080 {offsets = [0, 160], sizes = [8, 16], strides = [1, 1]} : vector<8x192xf32> to vector<8x16xf32>
    %cst_463 = arith.constant dense<0.000000e+00> : vector<8x8xf32>
    %1120 = tpu.matmul %1117, %1118, %cst_463 {dimension_numbers = #tpu.dot_dimension_numbers<[1], [1], [0], [0], [0, 0, 1, 0], [], []>} : vector<8x16xf32>, vector<8x16xf32>, vector<8x8xf32> -> vector<8x8xf32>
    %cst_464 = arith.constant 2.500000e-01 : f32
    %1121 = vector.broadcast %cst_464 : f32 to vector<8x8xf32>
    %1122 = arith.mulf %1120, %1121 : vector<8x8xf32>
    %cst_465 = arith.constant dense<0xFF800000> : vector<8xf32>
    %1123 = vector.multi_reduction <maximumf>, %1122, %cst_465 [1] : vector<8x8xf32> to vector<8xf32>
    %1124 = vector.shape_cast %1123 : vector<8xf32> to vector<8x1xf32>
    %1125 = vector.broadcast %1124 : vector<8x1xf32> to vector<8x8xf32>
    %1126 = arith.subf %1122, %1125 : vector<8x8xf32>
    %1127 = math.exp %1126 : vector<8x8xf32>
    %cst_466 = arith.constant dense<0.000000e+00> : vector<8xf32>
    %1128 = vector.multi_reduction <add>, %1127, %cst_466 [1] : vector<8x8xf32> to vector<8xf32>
    %1129 = vector.shape_cast %1128 : vector<8xf32> to vector<8x1xf32>
    %1130 = tpu.reciprocal %1129 {approx = true} : vector<8x1xf32> -> vector<8x1xf32>
    %1131 = vector.broadcast %1130 : vector<8x1xf32> to vector<8x8xf32>
    %1132 = arith.mulf %1127, %1131 : vector<8x8xf32>
    %cst_467 = arith.constant dense<0.000000e+00> : vector<8x16xf32>
    %1133 = tpu.matmul %1132, %1119, %cst_467 {dimension_numbers = #tpu.dot_dimension_numbers<[1], [0], [0], [1], [0, 0, 1, 1], [], []>} : vector<8x8xf32>, vector<8x16xf32>, vector<8x16xf32> -> vector<8x16xf32>
    %c0_468 = arith.constant 0 : index
    %c32_469 = arith.constant 32 : index
    %1134 = vector.load %arg16[%c0_468, %c32_469] : memref<16x128xf32, #tpu.memory_space<vmem>>, vector<8x16xf32>
    tpu.vector_store %arg16[%c0_468, %c32_469], %1133 {strides = array<i32>} : memref<16x128xf32, #tpu.memory_space<vmem>>, vector<8x16xf32>,
    %1135 = vector.extract_strided_slice %1080 {offsets = [0, 48], sizes = [8, 16], strides = [1, 1]} : vector<8x192xf32> to vector<8x16xf32>
    %1136 = vector.extract_strided_slice %1080 {offsets = [0, 112], sizes = [8, 16], strides = [1, 1]} : vector<8x192xf32> to vector<8x16xf32>
    %1137 = vector.extract_strided_slice %1080 {offsets = [0, 176], sizes = [8, 16], strides = [1, 1]} : vector<8x192xf32> to vector<8x16xf32>
    %cst_470 = arith.constant dense<0.000000e+00> : vector<8x8xf32>
    %1138 = tpu.matmul %1135, %1136, %cst_470 {dimension_numbers = #tpu.dot_dimension_numbers<[1], [1], [0], [0], [0, 0, 1, 0], [], []>} : vector<8x16xf32>, vector<8x16xf32>, vector<8x8xf32> -> vector<8x8xf32>
    %cst_471 = arith.constant 2.500000e-01 : f32
    %1139 = vector.broadcast %cst_471 : f32 to vector<8x8xf32>
    %1140 = arith.mulf %1138, %1139 : vector<8x8xf32>
    %cst_472 = arith.constant dense<0xFF800000> : vector<8xf32>
    %1141 = vector.multi_reduction <maximumf>, %1140, %cst_472 [1] : vector<8x8xf32> to vector<8xf32>
    %1142 = vector.shape_cast %1141 : vector<8xf32> to vector<8x1xf32>
    %1143 = vector.broadcast %1142 : vector<8x1xf32> to vector<8x8xf32>
    %1144 = arith.subf %1140, %1143 : vector<8x8xf32>
    %1145 = math.exp %1144 : vector<8x8xf32>
    %cst_473 = arith.constant dense<0.000000e+00> : vector<8xf32>
    %1146 = vector.multi_reduction <add>, %1145, %cst_473 [1] : vector<8x8xf32> to vector<8xf32>
    %1147 = vector.shape_cast %1146 : vector<8xf32> to vector<8x1xf32>
    %1148 = tpu.reciprocal %1147 {approx = true} : vector<8x1xf32> -> vector<8x1xf32>
    %1149 = vector.broadcast %1148 : vector<8x1xf32> to vector<8x8xf32>
    %1150 = arith.mulf %1145, %1149 : vector<8x8xf32>
    %cst_474 = arith.constant dense<0.000000e+00> : vector<8x16xf32>
    %1151 = tpu.matmul %1150, %1137, %cst_474 {dimension_numbers = #tpu.dot_dimension_numbers<[1], [0], [0], [1], [0, 0, 1, 1], [], []>} : vector<8x8xf32>, vector<8x16xf32>, vector<8x16xf32> -> vector<8x16xf32>
    %c0_475 = arith.constant 0 : index
    %c48_476 = arith.constant 48 : index
    %1152 = vector.load %arg16[%c0_475, %c48_476] : memref<16x128xf32, #tpu.memory_space<vmem>>, vector<8x16xf32>
    tpu.vector_store %arg16[%c0_475, %c48_476], %1151 {strides = array<i32>} : memref<16x128xf32, #tpu.memory_space<vmem>>, vector<8x16xf32>,
    %c0_477 = arith.constant 0 : index
    %c0_478 = arith.constant 0 : index
    %1153 = vector.load %arg16[%c0_477, %c0_478] : memref<16x128xf32, #tpu.memory_space<vmem>>, vector<8x64xf32>
    %c0_479 = arith.constant 0 : index
    %c256_480 = arith.constant 256 : index
    %1154 = vector.load %arg5[%c0_479, %c256_480] : memref<64x1408xbf16, #tpu.memory_space<vmem>>, vector<64x64xbf16>
    %1155 = arith.truncf %1153 : vector<8x64xf32> to vector<8x64xbf16>
    %cst_481 = arith.constant dense<0.000000e+00> : vector<8x64xf32>
    %1156 = tpu.matmul %1155, %1154, %cst_481 {dimension_numbers = #tpu.dot_dimension_numbers<[1], [0], [0], [1], [0, 0, 1, 1], [], []>} : vector<8x64xbf16>, vector<64x64xbf16>, vector<8x64xf32> -> vector<8x64xf32>
    %1157 = arith.addf %1052, %1156 : vector<8x64xf32>
    %c0_482 = arith.constant 0 : index
    %c8832 = arith.constant 8832 : index
    %1158 = vector.load %arg10[%c0_482, %c8832] : memref<1x11264xf32, #tpu.memory_space<vmem>>, vector<1x64xf32>
    %1159 = vector.broadcast %1158 : vector<1x64xf32> to vector<8x64xf32>
    %1160 = arith.addf %1157, %1159 : vector<8x64xf32>
    %c0_483 = arith.constant 0 : index
    %c8960 = arith.constant 8960 : index
    %1161 = vector.load %arg10[%c0_483, %c8960] : memref<1x11264xf32, #tpu.memory_space<vmem>>, vector<1x64xf32>
    %c0_484 = arith.constant 0 : index
    %c9088 = arith.constant 9088 : index
    %1162 = vector.load %arg10[%c0_484, %c9088] : memref<1x11264xf32, #tpu.memory_space<vmem>>, vector<1x64xf32>
    %cst_485 = arith.constant dense<0.000000e+00> : vector<8xf32>
    %1163 = vector.multi_reduction <add>, %1160, %cst_485 [1] : vector<8x64xf32> to vector<8xf32>
    %1164 = vector.shape_cast %1163 : vector<8xf32> to vector<8x1xf32>
    %cst_486 = arith.constant 6.400000e+01 : f32
    %1165 = vector.broadcast %cst_486 : f32 to vector<8x1xf32>
    %1166 = arith.divf %1164, %1165 : vector<8x1xf32>
    %1167 = vector.broadcast %1166 : vector<8x1xf32> to vector<8x64xf32>
    %1168 = arith.subf %1160, %1167 : vector<8x64xf32>
    %1169 = arith.mulf %1168, %1168 : vector<8x64xf32>
    %cst_487 = arith.constant dense<0.000000e+00> : vector<8xf32>
    %1170 = vector.multi_reduction <add>, %1169, %cst_487 [1] : vector<8x64xf32> to vector<8xf32>
    %1171 = vector.shape_cast %1170 : vector<8xf32> to vector<8x1xf32>
    %cst_488 = arith.constant 6.400000e+01 : f32
    %1172 = vector.broadcast %cst_488 : f32 to vector<8x1xf32>
    %1173 = arith.divf %1171, %1172 : vector<8x1xf32>
    %cst_489 = arith.constant 9.99999974E-6 : f32
    %1174 = vector.broadcast %cst_489 : f32 to vector<8x1xf32>
    %1175 = arith.addf %1173, %1174 : vector<8x1xf32>
    %1176 = math.rsqrt %1175 : vector<8x1xf32>
    %1177 = vector.broadcast %1176 : vector<8x1xf32> to vector<8x64xf32>
    %1178 = arith.mulf %1168, %1177 : vector<8x64xf32>
    %1179 = vector.broadcast %1161 : vector<1x64xf32> to vector<8x64xf32>
    %1180 = arith.mulf %1178, %1179 : vector<8x64xf32>
    %1181 = vector.broadcast %1162 : vector<1x64xf32> to vector<8x64xf32>
    %1182 = arith.addf %1180, %1181 : vector<8x64xf32>
    %c0_490 = arith.constant 0 : index
    %c384_491 = arith.constant 384 : index
    %1183 = vector.load %arg5[%c0_490, %c384_491] : memref<64x1408xbf16, #tpu.memory_space<vmem>>, vector<64x256xbf16>
    %1184 = arith.truncf %1182 : vector<8x64xf32> to vector<8x64xbf16>
    %cst_492 = arith.constant dense<0.000000e+00> : vector<8x256xf32>
    %1185 = tpu.matmul %1184, %1183, %cst_492 {dimension_numbers = #tpu.dot_dimension_numbers<[1], [0], [0], [1], [0, 0, 1, 1], [], []>} : vector<8x64xbf16>, vector<64x256xbf16>, vector<8x256xf32> -> vector<8x256xf32>
    %c0_493 = arith.constant 0 : index
    %c9216 = arith.constant 9216 : index
    %1186 = vector.load %arg10[%c0_493, %c9216] : memref<1x11264xf32, #tpu.memory_space<vmem>>, vector<1x256xf32>
    %1187 = vector.broadcast %1186 : vector<1x256xf32> to vector<8x256xf32>
    %1188 = arith.addf %1185, %1187 : vector<8x256xf32>
    %1189 = arith.mulf %1188, %1188 : vector<8x256xf32>
    %1190 = arith.mulf %1188, %1189 : vector<8x256xf32>
    %cst_494 = arith.constant 4.471500e-02 : f32
    %1191 = vector.broadcast %cst_494 : f32 to vector<8x256xf32>
    %1192 = arith.mulf %1191, %1190 : vector<8x256xf32>
    %1193 = arith.addf %1188, %1192 : vector<8x256xf32>
    %cst_495 = arith.constant 0.797884583 : f32
    %1194 = vector.broadcast %cst_495 : f32 to vector<8x256xf32>
    %1195 = arith.mulf %1194, %1193 : vector<8x256xf32>
    %1196 = math.tanh %1195 : vector<8x256xf32>
    %cst_496 = arith.constant 1.000000e+00 : f32
    %1197 = vector.broadcast %cst_496 : f32 to vector<8x256xf32>
    %1198 = arith.addf %1197, %1196 : vector<8x256xf32>
    %cst_497 = arith.constant 5.000000e-01 : f32
    %1199 = vector.broadcast %cst_497 : f32 to vector<8x256xf32>
    %1200 = arith.mulf %1199, %1198 : vector<8x256xf32>
    %1201 = arith.mulf %1188, %1200 : vector<8x256xf32>
    %c0_498 = arith.constant 0 : index
    %c0_499 = arith.constant 0 : index
    %1202 = vector.load %arg9[%c0_498, %c0_499] : memref<516x64xbf16, #tpu.memory_space<vmem>>, vector<256x64xbf16>
    %1203 = arith.truncf %1201 : vector<8x256xf32> to vector<8x256xbf16>
    %cst_500 = arith.constant dense<0.000000e+00> : vector<8x64xf32>
    %1204 = tpu.matmul %1203, %1202, %cst_500 {dimension_numbers = #tpu.dot_dimension_numbers<[1], [0], [0], [1], [0, 0, 1, 1], [], []>} : vector<8x256xbf16>, vector<256x64xbf16>, vector<8x64xf32> -> vector<8x64xf32>
    %c0_501 = arith.constant 0 : index
    %c9472 = arith.constant 9472 : index
    %1205 = vector.load %arg10[%c0_501, %c9472] : memref<1x11264xf32, #tpu.memory_space<vmem>>, vector<1x64xf32>
    %1206 = vector.broadcast %1205 : vector<1x64xf32> to vector<8x64xf32>
    %1207 = arith.addf %1204, %1206 : vector<8x64xf32>
    %1208 = arith.addf %1160, %1207 : vector<8x64xf32>
    %c0_502 = arith.constant 0 : index
    %c9600 = arith.constant 9600 : index
    %1209 = vector.load %arg10[%c0_502, %c9600] : memref<1x11264xf32, #tpu.memory_space<vmem>>, vector<1x64xf32>
    %c0_503 = arith.constant 0 : index
    %c9728 = arith.constant 9728 : index
    %1210 = vector.load %arg10[%c0_503, %c9728] : memref<1x11264xf32, #tpu.memory_space<vmem>>, vector<1x64xf32>
    %cst_504 = arith.constant dense<0.000000e+00> : vector<8xf32>
    %1211 = vector.multi_reduction <add>, %1208, %cst_504 [1] : vector<8x64xf32> to vector<8xf32>
    %1212 = vector.shape_cast %1211 : vector<8xf32> to vector<8x1xf32>
    %cst_505 = arith.constant 6.400000e+01 : f32
    %1213 = vector.broadcast %cst_505 : f32 to vector<8x1xf32>
    %1214 = arith.divf %1212, %1213 : vector<8x1xf32>
    %1215 = vector.broadcast %1214 : vector<8x1xf32> to vector<8x64xf32>
    %1216 = arith.subf %1208, %1215 : vector<8x64xf32>
    %1217 = arith.mulf %1216, %1216 : vector<8x64xf32>
    %cst_506 = arith.constant dense<0.000000e+00> : vector<8xf32>
    %1218 = vector.multi_reduction <add>, %1217, %cst_506 [1] : vector<8x64xf32> to vector<8xf32>
    %1219 = vector.shape_cast %1218 : vector<8xf32> to vector<8x1xf32>
    %cst_507 = arith.constant 6.400000e+01 : f32
    %1220 = vector.broadcast %cst_507 : f32 to vector<8x1xf32>
    %1221 = arith.divf %1219, %1220 : vector<8x1xf32>
    %cst_508 = arith.constant 9.99999974E-6 : f32
    %1222 = vector.broadcast %cst_508 : f32 to vector<8x1xf32>
    %1223 = arith.addf %1221, %1222 : vector<8x1xf32>
    %1224 = math.rsqrt %1223 : vector<8x1xf32>
    %1225 = vector.broadcast %1224 : vector<8x1xf32> to vector<8x64xf32>
    %1226 = arith.mulf %1216, %1225 : vector<8x64xf32>
    %1227 = vector.broadcast %1209 : vector<1x64xf32> to vector<8x64xf32>
    %1228 = arith.mulf %1226, %1227 : vector<8x64xf32>
    %1229 = vector.broadcast %1210 : vector<1x64xf32> to vector<8x64xf32>
    %1230 = arith.addf %1228, %1229 : vector<8x64xf32>
    %c0_509 = arith.constant 0 : index
    %c640_510 = arith.constant 640 : index
    %1231 = vector.load %arg5[%c0_509, %c640_510] : memref<64x1408xbf16, #tpu.memory_space<vmem>>, vector<64x192xbf16>
    %1232 = arith.truncf %1230 : vector<8x64xf32> to vector<8x64xbf16>
    %cst_511 = arith.constant dense<0.000000e+00> : vector<8x192xf32>
    %1233 = tpu.matmul %1232, %1231, %cst_511 {dimension_numbers = #tpu.dot_dimension_numbers<[1], [0], [0], [1], [0, 0, 1, 1], [], []>} : vector<8x64xbf16>, vector<64x192xbf16>, vector<8x192xf32> -> vector<8x192xf32>
    %c0_512 = arith.constant 0 : index
    %c9856 = arith.constant 9856 : index
    %1234 = vector.load %arg10[%c0_512, %c9856] : memref<1x11264xf32, #tpu.memory_space<vmem>>, vector<1x192xf32>
    %1235 = vector.broadcast %1234 : vector<1x192xf32> to vector<8x192xf32>
    %1236 = arith.addf %1233, %1235 : vector<8x192xf32>
    %1237 = vector.extract_strided_slice %1236 {offsets = [0, 0], sizes = [8, 16], strides = [1, 1]} : vector<8x192xf32> to vector<8x16xf32>
    %1238 = vector.extract_strided_slice %1236 {offsets = [0, 64], sizes = [8, 16], strides = [1, 1]} : vector<8x192xf32> to vector<8x16xf32>
    %1239 = vector.extract_strided_slice %1236 {offsets = [0, 128], sizes = [8, 16], strides = [1, 1]} : vector<8x192xf32> to vector<8x16xf32>
    %cst_513 = arith.constant dense<0.000000e+00> : vector<8x8xf32>
    %1240 = tpu.matmul %1237, %1238, %cst_513 {dimension_numbers = #tpu.dot_dimension_numbers<[1], [1], [0], [0], [0, 0, 1, 0], [], []>} : vector<8x16xf32>, vector<8x16xf32>, vector<8x8xf32> -> vector<8x8xf32>
    %cst_514 = arith.constant 2.500000e-01 : f32
    %1241 = vector.broadcast %cst_514 : f32 to vector<8x8xf32>
    %1242 = arith.mulf %1240, %1241 : vector<8x8xf32>
    %cst_515 = arith.constant dense<0xFF800000> : vector<8xf32>
    %1243 = vector.multi_reduction <maximumf>, %1242, %cst_515 [1] : vector<8x8xf32> to vector<8xf32>
    %1244 = vector.shape_cast %1243 : vector<8xf32> to vector<8x1xf32>
    %1245 = vector.broadcast %1244 : vector<8x1xf32> to vector<8x8xf32>
    %1246 = arith.subf %1242, %1245 : vector<8x8xf32>
    %1247 = math.exp %1246 : vector<8x8xf32>
    %cst_516 = arith.constant dense<0.000000e+00> : vector<8xf32>
    %1248 = vector.multi_reduction <add>, %1247, %cst_516 [1] : vector<8x8xf32> to vector<8xf32>
    %1249 = vector.shape_cast %1248 : vector<8xf32> to vector<8x1xf32>
    %1250 = tpu.reciprocal %1249 {approx = true} : vector<8x1xf32> -> vector<8x1xf32>
    %1251 = vector.broadcast %1250 : vector<8x1xf32> to vector<8x8xf32>
    %1252 = arith.mulf %1247, %1251 : vector<8x8xf32>
    %cst_517 = arith.constant dense<0.000000e+00> : vector<8x16xf32>
    %1253 = tpu.matmul %1252, %1239, %cst_517 {dimension_numbers = #tpu.dot_dimension_numbers<[1], [0], [0], [1], [0, 0, 1, 1], [], []>} : vector<8x8xf32>, vector<8x16xf32>, vector<8x16xf32> -> vector<8x16xf32>
    %c0_518 = arith.constant 0 : index
    %c0_519 = arith.constant 0 : index
    %1254 = vector.load %arg16[%c0_518, %c0_519] : memref<16x128xf32, #tpu.memory_space<vmem>>, vector<8x16xf32>
    tpu.vector_store %arg16[%c0_518, %c0_519], %1253 {strides = array<i32>} : memref<16x128xf32, #tpu.memory_space<vmem>>, vector<8x16xf32>,
    %1255 = vector.extract_strided_slice %1236 {offsets = [0, 16], sizes = [8, 16], strides = [1, 1]} : vector<8x192xf32> to vector<8x16xf32>
    %1256 = vector.extract_strided_slice %1236 {offsets = [0, 80], sizes = [8, 16], strides = [1, 1]} : vector<8x192xf32> to vector<8x16xf32>
    %1257 = vector.extract_strided_slice %1236 {offsets = [0, 144], sizes = [8, 16], strides = [1, 1]} : vector<8x192xf32> to vector<8x16xf32>
    %cst_520 = arith.constant dense<0.000000e+00> : vector<8x8xf32>
    %1258 = tpu.matmul %1255, %1256, %cst_520 {dimension_numbers = #tpu.dot_dimension_numbers<[1], [1], [0], [0], [0, 0, 1, 0], [], []>} : vector<8x16xf32>, vector<8x16xf32>, vector<8x8xf32> -> vector<8x8xf32>
    %cst_521 = arith.constant 2.500000e-01 : f32
    %1259 = vector.broadcast %cst_521 : f32 to vector<8x8xf32>
    %1260 = arith.mulf %1258, %1259 : vector<8x8xf32>
    %cst_522 = arith.constant dense<0xFF800000> : vector<8xf32>
    %1261 = vector.multi_reduction <maximumf>, %1260, %cst_522 [1] : vector<8x8xf32> to vector<8xf32>
    %1262 = vector.shape_cast %1261 : vector<8xf32> to vector<8x1xf32>
    %1263 = vector.broadcast %1262 : vector<8x1xf32> to vector<8x8xf32>
    %1264 = arith.subf %1260, %1263 : vector<8x8xf32>
    %1265 = math.exp %1264 : vector<8x8xf32>
    %cst_523 = arith.constant dense<0.000000e+00> : vector<8xf32>
    %1266 = vector.multi_reduction <add>, %1265, %cst_523 [1] : vector<8x8xf32> to vector<8xf32>
    %1267 = vector.shape_cast %1266 : vector<8xf32> to vector<8x1xf32>
    %1268 = tpu.reciprocal %1267 {approx = true} : vector<8x1xf32> -> vector<8x1xf32>
    %1269 = vector.broadcast %1268 : vector<8x1xf32> to vector<8x8xf32>
    %1270 = arith.mulf %1265, %1269 : vector<8x8xf32>
    %cst_524 = arith.constant dense<0.000000e+00> : vector<8x16xf32>
    %1271 = tpu.matmul %1270, %1257, %cst_524 {dimension_numbers = #tpu.dot_dimension_numbers<[1], [0], [0], [1], [0, 0, 1, 1], [], []>} : vector<8x8xf32>, vector<8x16xf32>, vector<8x16xf32> -> vector<8x16xf32>
    %c0_525 = arith.constant 0 : index
    %c16_526 = arith.constant 16 : index
    %1272 = vector.load %arg16[%c0_525, %c16_526] : memref<16x128xf32, #tpu.memory_space<vmem>>, vector<8x16xf32>
    tpu.vector_store %arg16[%c0_525, %c16_526], %1271 {strides = array<i32>} : memref<16x128xf32, #tpu.memory_space<vmem>>, vector<8x16xf32>,
    %1273 = vector.extract_strided_slice %1236 {offsets = [0, 32], sizes = [8, 16], strides = [1, 1]} : vector<8x192xf32> to vector<8x16xf32>
    %1274 = vector.extract_strided_slice %1236 {offsets = [0, 96], sizes = [8, 16], strides = [1, 1]} : vector<8x192xf32> to vector<8x16xf32>
    %1275 = vector.extract_strided_slice %1236 {offsets = [0, 160], sizes = [8, 16], strides = [1, 1]} : vector<8x192xf32> to vector<8x16xf32>
    %cst_527 = arith.constant dense<0.000000e+00> : vector<8x8xf32>
    %1276 = tpu.matmul %1273, %1274, %cst_527 {dimension_numbers = #tpu.dot_dimension_numbers<[1], [1], [0], [0], [0, 0, 1, 0], [], []>} : vector<8x16xf32>, vector<8x16xf32>, vector<8x8xf32> -> vector<8x8xf32>
    %cst_528 = arith.constant 2.500000e-01 : f32
    %1277 = vector.broadcast %cst_528 : f32 to vector<8x8xf32>
    %1278 = arith.mulf %1276, %1277 : vector<8x8xf32>
    %cst_529 = arith.constant dense<0xFF800000> : vector<8xf32>
    %1279 = vector.multi_reduction <maximumf>, %1278, %cst_529 [1] : vector<8x8xf32> to vector<8xf32>
    %1280 = vector.shape_cast %1279 : vector<8xf32> to vector<8x1xf32>
    %1281 = vector.broadcast %1280 : vector<8x1xf32> to vector<8x8xf32>
    %1282 = arith.subf %1278, %1281 : vector<8x8xf32>
    %1283 = math.exp %1282 : vector<8x8xf32>
    %cst_530 = arith.constant dense<0.000000e+00> : vector<8xf32>
    %1284 = vector.multi_reduction <add>, %1283, %cst_530 [1] : vector<8x8xf32> to vector<8xf32>
    %1285 = vector.shape_cast %1284 : vector<8xf32> to vector<8x1xf32>
    %1286 = tpu.reciprocal %1285 {approx = true} : vector<8x1xf32> -> vector<8x1xf32>
    %1287 = vector.broadcast %1286 : vector<8x1xf32> to vector<8x8xf32>
    %1288 = arith.mulf %1283, %1287 : vector<8x8xf32>
    %cst_531 = arith.constant dense<0.000000e+00> : vector<8x16xf32>
    %1289 = tpu.matmul %1288, %1275, %cst_531 {dimension_numbers = #tpu.dot_dimension_numbers<[1], [0], [0], [1], [0, 0, 1, 1], [], []>} : vector<8x8xf32>, vector<8x16xf32>, vector<8x16xf32> -> vector<8x16xf32>
    %c0_532 = arith.constant 0 : index
    %c32_533 = arith.constant 32 : index
    %1290 = vector.load %arg16[%c0_532, %c32_533] : memref<16x128xf32, #tpu.memory_space<vmem>>, vector<8x16xf32>
    tpu.vector_store %arg16[%c0_532, %c32_533], %1289 {strides = array<i32>} : memref<16x128xf32, #tpu.memory_space<vmem>>, vector<8x16xf32>,
    %1291 = vector.extract_strided_slice %1236 {offsets = [0, 48], sizes = [8, 16], strides = [1, 1]} : vector<8x192xf32> to vector<8x16xf32>
    %1292 = vector.extract_strided_slice %1236 {offsets = [0, 112], sizes = [8, 16], strides = [1, 1]} : vector<8x192xf32> to vector<8x16xf32>
    %1293 = vector.extract_strided_slice %1236 {offsets = [0, 176], sizes = [8, 16], strides = [1, 1]} : vector<8x192xf32> to vector<8x16xf32>
    %cst_534 = arith.constant dense<0.000000e+00> : vector<8x8xf32>
    %1294 = tpu.matmul %1291, %1292, %cst_534 {dimension_numbers = #tpu.dot_dimension_numbers<[1], [1], [0], [0], [0, 0, 1, 0], [], []>} : vector<8x16xf32>, vector<8x16xf32>, vector<8x8xf32> -> vector<8x8xf32>
    %cst_535 = arith.constant 2.500000e-01 : f32
    %1295 = vector.broadcast %cst_535 : f32 to vector<8x8xf32>
    %1296 = arith.mulf %1294, %1295 : vector<8x8xf32>
    %cst_536 = arith.constant dense<0xFF800000> : vector<8xf32>
    %1297 = vector.multi_reduction <maximumf>, %1296, %cst_536 [1] : vector<8x8xf32> to vector<8xf32>
    %1298 = vector.shape_cast %1297 : vector<8xf32> to vector<8x1xf32>
    %1299 = vector.broadcast %1298 : vector<8x1xf32> to vector<8x8xf32>
    %1300 = arith.subf %1296, %1299 : vector<8x8xf32>
    %1301 = math.exp %1300 : vector<8x8xf32>
    %cst_537 = arith.constant dense<0.000000e+00> : vector<8xf32>
    %1302 = vector.multi_reduction <add>, %1301, %cst_537 [1] : vector<8x8xf32> to vector<8xf32>
    %1303 = vector.shape_cast %1302 : vector<8xf32> to vector<8x1xf32>
    %1304 = tpu.reciprocal %1303 {approx = true} : vector<8x1xf32> -> vector<8x1xf32>
    %1305 = vector.broadcast %1304 : vector<8x1xf32> to vector<8x8xf32>
    %1306 = arith.mulf %1301, %1305 : vector<8x8xf32>
    %cst_538 = arith.constant dense<0.000000e+00> : vector<8x16xf32>
    %1307 = tpu.matmul %1306, %1293, %cst_538 {dimension_numbers = #tpu.dot_dimension_numbers<[1], [0], [0], [1], [0, 0, 1, 1], [], []>} : vector<8x8xf32>, vector<8x16xf32>, vector<8x16xf32> -> vector<8x16xf32>
    %c0_539 = arith.constant 0 : index
    %c48_540 = arith.constant 48 : index
    %1308 = vector.load %arg16[%c0_539, %c48_540] : memref<16x128xf32, #tpu.memory_space<vmem>>, vector<8x16xf32>
    tpu.vector_store %arg16[%c0_539, %c48_540], %1307 {strides = array<i32>} : memref<16x128xf32, #tpu.memory_space<vmem>>, vector<8x16xf32>,
    %c0_541 = arith.constant 0 : index
    %c0_542 = arith.constant 0 : index
    %1309 = vector.load %arg16[%c0_541, %c0_542] : memref<16x128xf32, #tpu.memory_space<vmem>>, vector<8x64xf32>
    %c0_543 = arith.constant 0 : index
    %c896_544 = arith.constant 896 : index
    %1310 = vector.load %arg5[%c0_543, %c896_544] : memref<64x1408xbf16, #tpu.memory_space<vmem>>, vector<64x64xbf16>
    %1311 = arith.truncf %1309 : vector<8x64xf32> to vector<8x64xbf16>
    %cst_545 = arith.constant dense<0.000000e+00> : vector<8x64xf32>
    %1312 = tpu.matmul %1311, %1310, %cst_545 {dimension_numbers = #tpu.dot_dimension_numbers<[1], [0], [0], [1], [0, 0, 1, 1], [], []>} : vector<8x64xbf16>, vector<64x64xbf16>, vector<8x64xf32> -> vector<8x64xf32>
    %1313 = arith.addf %1208, %1312 : vector<8x64xf32>
    %c0_546 = arith.constant 0 : index
    %c10112 = arith.constant 10112 : index
    %1314 = vector.load %arg10[%c0_546, %c10112] : memref<1x11264xf32, #tpu.memory_space<vmem>>, vector<1x64xf32>
    %1315 = vector.broadcast %1314 : vector<1x64xf32> to vector<8x64xf32>
    %1316 = arith.addf %1313, %1315 : vector<8x64xf32>
    %c0_547 = arith.constant 0 : index
    %c10240 = arith.constant 10240 : index
    %1317 = vector.load %arg10[%c0_547, %c10240] : memref<1x11264xf32, #tpu.memory_space<vmem>>, vector<1x64xf32>
    %c0_548 = arith.constant 0 : index
    %c10368 = arith.constant 10368 : index
    %1318 = vector.load %arg10[%c0_548, %c10368] : memref<1x11264xf32, #tpu.memory_space<vmem>>, vector<1x64xf32>
    %cst_549 = arith.constant dense<0.000000e+00> : vector<8xf32>
    %1319 = vector.multi_reduction <add>, %1316, %cst_549 [1] : vector<8x64xf32> to vector<8xf32>
    %1320 = vector.shape_cast %1319 : vector<8xf32> to vector<8x1xf32>
    %cst_550 = arith.constant 6.400000e+01 : f32
    %1321 = vector.broadcast %cst_550 : f32 to vector<8x1xf32>
    %1322 = arith.divf %1320, %1321 : vector<8x1xf32>
    %1323 = vector.broadcast %1322 : vector<8x1xf32> to vector<8x64xf32>
    %1324 = arith.subf %1316, %1323 : vector<8x64xf32>
    %1325 = arith.mulf %1324, %1324 : vector<8x64xf32>
    %cst_551 = arith.constant dense<0.000000e+00> : vector<8xf32>
    %1326 = vector.multi_reduction <add>, %1325, %cst_551 [1] : vector<8x64xf32> to vector<8xf32>
    %1327 = vector.shape_cast %1326 : vector<8xf32> to vector<8x1xf32>
    %cst_552 = arith.constant 6.400000e+01 : f32
    %1328 = vector.broadcast %cst_552 : f32 to vector<8x1xf32>
    %1329 = arith.divf %1327, %1328 : vector<8x1xf32>
    %cst_553 = arith.constant 9.99999974E-6 : f32
    %1330 = vector.broadcast %cst_553 : f32 to vector<8x1xf32>
    %1331 = arith.addf %1329, %1330 : vector<8x1xf32>
    %1332 = math.rsqrt %1331 : vector<8x1xf32>
    %1333 = vector.broadcast %1332 : vector<8x1xf32> to vector<8x64xf32>
    %1334 = arith.mulf %1324, %1333 : vector<8x64xf32>
    %1335 = vector.broadcast %1317 : vector<1x64xf32> to vector<8x64xf32>
    %1336 = arith.mulf %1334, %1335 : vector<8x64xf32>
    %1337 = vector.broadcast %1318 : vector<1x64xf32> to vector<8x64xf32>
    %1338 = arith.addf %1336, %1337 : vector<8x64xf32>
    %c0_554 = arith.constant 0 : index
    %c1024_555 = arith.constant 1024 : index
    %1339 = vector.load %arg5[%c0_554, %c1024_555] : memref<64x1408xbf16, #tpu.memory_space<vmem>>, vector<64x256xbf16>
    %1340 = arith.truncf %1338 : vector<8x64xf32> to vector<8x64xbf16>
    %cst_556 = arith.constant dense<0.000000e+00> : vector<8x256xf32>
    %1341 = tpu.matmul %1340, %1339, %cst_556 {dimension_numbers = #tpu.dot_dimension_numbers<[1], [0], [0], [1], [0, 0, 1, 1], [], []>} : vector<8x64xbf16>, vector<64x256xbf16>, vector<8x256xf32> -> vector<8x256xf32>
    %c0_557 = arith.constant 0 : index
    %c10496 = arith.constant 10496 : index
    %1342 = vector.load %arg10[%c0_557, %c10496] : memref<1x11264xf32, #tpu.memory_space<vmem>>, vector<1x256xf32>
    %1343 = vector.broadcast %1342 : vector<1x256xf32> to vector<8x256xf32>
    %1344 = arith.addf %1341, %1343 : vector<8x256xf32>
    %1345 = arith.mulf %1344, %1344 : vector<8x256xf32>
    %1346 = arith.mulf %1344, %1345 : vector<8x256xf32>
    %cst_558 = arith.constant 4.471500e-02 : f32
    %1347 = vector.broadcast %cst_558 : f32 to vector<8x256xf32>
    %1348 = arith.mulf %1347, %1346 : vector<8x256xf32>
    %1349 = arith.addf %1344, %1348 : vector<8x256xf32>
    %cst_559 = arith.constant 0.797884583 : f32
    %1350 = vector.broadcast %cst_559 : f32 to vector<8x256xf32>
    %1351 = arith.mulf %1350, %1349 : vector<8x256xf32>
    %1352 = math.tanh %1351 : vector<8x256xf32>
    %cst_560 = arith.constant 1.000000e+00 : f32
    %1353 = vector.broadcast %cst_560 : f32 to vector<8x256xf32>
    %1354 = arith.addf %1353, %1352 : vector<8x256xf32>
    %cst_561 = arith.constant 5.000000e-01 : f32
    %1355 = vector.broadcast %cst_561 : f32 to vector<8x256xf32>
    %1356 = arith.mulf %1355, %1354 : vector<8x256xf32>
    %1357 = arith.mulf %1344, %1356 : vector<8x256xf32>
    %c256_562 = arith.constant 256 : index
    %c0_563 = arith.constant 0 : index
    %1358 = vector.load %arg9[%c256_562, %c0_563] : memref<516x64xbf16, #tpu.memory_space<vmem>>, vector<256x64xbf16>
    %1359 = arith.truncf %1357 : vector<8x256xf32> to vector<8x256xbf16>
    %cst_564 = arith.constant dense<0.000000e+00> : vector<8x64xf32>
    %1360 = tpu.matmul %1359, %1358, %cst_564 {dimension_numbers = #tpu.dot_dimension_numbers<[1], [0], [0], [1], [0, 0, 1, 1], [], []>} : vector<8x256xbf16>, vector<256x64xbf16>, vector<8x64xf32> -> vector<8x64xf32>
    %c0_565 = arith.constant 0 : index
    %c10752 = arith.constant 10752 : index
    %1361 = vector.load %arg10[%c0_565, %c10752] : memref<1x11264xf32, #tpu.memory_space<vmem>>, vector<1x64xf32>
    %1362 = vector.broadcast %1361 : vector<1x64xf32> to vector<8x64xf32>
    %1363 = arith.addf %1360, %1362 : vector<8x64xf32>
    %1364 = arith.addf %1316, %1363 : vector<8x64xf32>
    %c512_566 = arith.constant 512 : index
    %c0_567 = arith.constant 0 : index
    %1365 = vector.load %arg9[%c512_566, %c0_567] : memref<516x64xbf16, #tpu.memory_space<vmem>>, vector<4x64xbf16>
    %1366 = arith.truncf %1364 : vector<8x64xf32> to vector<8x64xbf16>
    %cst_568 = arith.constant dense<0.000000e+00> : vector<4x8xf32>
    %1367 = tpu.matmul %1365, %1366, %cst_568 {dimension_numbers = #tpu.dot_dimension_numbers<[1], [1], [0], [0], [0, 0, 1, 0], [], []>} : vector<4x64xbf16>, vector<8x64xbf16>, vector<4x8xf32> -> vector<4x8xf32>
    %cst_569 = arith.constant 1.250000e-01 : f32
    %1368 = vector.broadcast %cst_569 : f32 to vector<4x8xf32>
    %1369 = arith.mulf %1367, %1368 : vector<4x8xf32>
    %cst_570 = arith.constant dense<0xFF800000> : vector<4xf32>
    %1370 = vector.multi_reduction <maximumf>, %1369, %cst_570 [1] : vector<4x8xf32> to vector<4xf32>
    %1371 = vector.shape_cast %1370 : vector<4xf32> to vector<4x1xf32>
    %1372 = vector.broadcast %1371 : vector<4x1xf32> to vector<4x8xf32>
    %1373 = arith.subf %1369, %1372 : vector<4x8xf32>
    %1374 = math.exp %1373 : vector<4x8xf32>
    %cst_571 = arith.constant dense<0.000000e+00> : vector<4xf32>
    %1375 = vector.multi_reduction <add>, %1374, %cst_571 [1] : vector<4x8xf32> to vector<4xf32>
    %1376 = vector.shape_cast %1375 : vector<4xf32> to vector<4x1xf32>
    %1377 = tpu.reciprocal %1376 {approx = true} : vector<4x1xf32> -> vector<4x1xf32>
    %1378 = vector.broadcast %1377 : vector<4x1xf32> to vector<4x8xf32>
    %1379 = arith.mulf %1374, %1378 : vector<4x8xf32>
    %cst_572 = arith.constant dense<0.000000e+00> : vector<4x64xf32>
    %1380 = tpu.matmul %1379, %1364, %cst_572 {dimension_numbers = #tpu.dot_dimension_numbers<[1], [0], [0], [1], [0, 0, 1, 1], [], []>} : vector<4x8xf32>, vector<8x64xf32>, vector<4x64xf32> -> vector<4x64xf32>
    %c0_573 = arith.constant 0 : index
    %c1280_574 = arith.constant 1280 : index
    %1381 = vector.load %arg5[%c0_573, %c1280_574] : memref<64x1408xbf16, #tpu.memory_space<vmem>>, vector<64x32xbf16>
    %1382 = arith.truncf %1380 : vector<4x64xf32> to vector<4x64xbf16>
    %cst_575 = arith.constant dense<0.000000e+00> : vector<4x32xf32>
    %1383 = tpu.matmul %1382, %1381, %cst_575 {dimension_numbers = #tpu.dot_dimension_numbers<[1], [0], [0], [1], [0, 0, 1, 1], [], []>} : vector<4x64xbf16>, vector<64x32xbf16>, vector<4x32xf32> -> vector<4x32xf32>
    %c0_576 = arith.constant 0 : index
    %c10880 = arith.constant 10880 : index
    %1384 = vector.load %arg10[%c0_576, %c10880] : memref<1x11264xf32, #tpu.memory_space<vmem>>, vector<1x32xf32>
    %1385 = vector.broadcast %1384 : vector<1x32xf32> to vector<4x32xf32>
    %1386 = arith.addf %1383, %1385 : vector<4x32xf32>
    %c0_577 = arith.constant 0 : index
    %c0_578 = arith.constant 0 : index
    %c0_579 = arith.constant 0 : index
    %1387 = vector.load %arg13[%c0_577, %c0_578, %c0_579] : memref<1x4x32xf32, #tpu.memory_space<vmem>>, vector<1x4x32xf32>
    %1388 = vector.shape_cast %1387 : vector<1x4x32xf32> to vector<4x32xf32>
    %1389 = vector.shape_cast %1386 : vector<4x32xf32> to vector<1x4x32xf32>
    tpu.vector_store %arg13[%c0_577, %c0_578, %c0_579], %1389 {strides = array<i32>} : memref<1x4x32xf32, #tpu.memory_space<vmem>>, vector<1x4x32xf32>,
    return
  }
  func.func @transform_0(%arg0: i32) -> (i32, i32, i32) {
    %c0_i32 = arith.constant 0 : i32
    %c0_i32_0 = arith.constant 0 : i32
    %c0_i32_1 = arith.constant 0 : i32
    return %arg0, %c0_i32, %c0_i32_0 : i32, i32, i32
  }
  func.func @transform_1(%arg0: i32) -> (i32, i32) {
    %c0_i32 = arith.constant 0 : i32
    %c0_i32_0 = arith.constant 0 : i32
    %c0_i32_1 = arith.constant 0 : i32
    return %c0_i32, %c0_i32_0 : i32, i32
  }
  func.func @transform_2(%arg0: i32) -> (i32, i32) {
    %c0_i32 = arith.constant 0 : i32
    %c0_i32_0 = arith.constant 0 : i32
    %c0_i32_1 = arith.constant 0 : i32
    return %c0_i32, %c0_i32_0 : i32, i32
  }
  func.func @transform_3(%arg0: i32) -> (i32, i32) {
    %c0_i32 = arith.constant 0 : i32
    %c0_i32_0 = arith.constant 0 : i32
    %c0_i32_1 = arith.constant 0 : i32
    return %c0_i32, %c0_i32_0 : i32, i32
  }
  func.func @transform_4(%arg0: i32) -> (i32, i32) {
    %c0_i32 = arith.constant 0 : i32
    %c0_i32_0 = arith.constant 0 : i32
    %c0_i32_1 = arith.constant 0 : i32
    return %c0_i32, %c0_i32_0 : i32, i32
  }
  func.func @transform_5(%arg0: i32) -> (i32, i32) {
    %c0_i32 = arith.constant 0 : i32
    %c0_i32_0 = arith.constant 0 : i32
    %c0_i32_1 = arith.constant 0 : i32
    return %c0_i32, %c0_i32_0 : i32, i32
  }
  func.func @transform_6(%arg0: i32) -> (i32, i32) {
    %c0_i32 = arith.constant 0 : i32
    %c0_i32_0 = arith.constant 0 : i32
    %c0_i32_1 = arith.constant 0 : i32
    return %c0_i32, %c0_i32_0 : i32, i32
  }
  func.func @transform_7(%arg0: i32) -> (i32, i32) {
    %c0_i32 = arith.constant 0 : i32
    %c0_i32_0 = arith.constant 0 : i32
    %c0_i32_1 = arith.constant 0 : i32
    return %c0_i32, %c0_i32_0 : i32, i32
  }
  func.func @transform_8(%arg0: i32) -> (i32, i32) {
    %c0_i32 = arith.constant 0 : i32
    %c0_i32_0 = arith.constant 0 : i32
    %c0_i32_1 = arith.constant 0 : i32
    return %c0_i32, %c0_i32_0 : i32, i32
  }
  func.func @transform_9(%arg0: i32) -> (i32, i32) {
    %c0_i32 = arith.constant 0 : i32
    %c0_i32_0 = arith.constant 0 : i32
    %c0_i32_1 = arith.constant 0 : i32
    return %c0_i32, %c0_i32_0 : i32, i32
  }
  func.func @transform_10(%arg0: i32) -> (i32, i32) {
    %c0_i32 = arith.constant 0 : i32
    %c0_i32_0 = arith.constant 0 : i32
    %c0_i32_1 = arith.constant 0 : i32
    return %c0_i32, %c0_i32_0 : i32, i32
  }
  func.func @transform_11(%arg0: i32) -> (i32, i32) {
    %c0_i32 = arith.constant 0 : i32
    %c0_i32_0 = arith.constant 0 : i32
    %c0_i32_1 = arith.constant 0 : i32
    return %c0_i32, %c0_i32_0 : i32, i32
  }
  func.func @transform_12(%arg0: i32) -> (i32, i32, i32) {
    %c0_i32 = arith.constant 0 : i32
    %c0_i32_0 = arith.constant 0 : i32
    %c0_i32_1 = arith.constant 0 : i32
    return %arg0, %c0_i32, %c0_i32_0 : i32, i32, i32
  }
  func.func @transform_13(%arg0: i32) -> (i32, i32, i32) {
    %c0_i32 = arith.constant 0 : i32
    %c0_i32_0 = arith.constant 0 : i32
    %c0_i32_1 = arith.constant 0 : i32
    return %arg0, %c0_i32, %c0_i32_0 : i32, i32, i32
  }
  func.func @transform_14(%arg0: i32) -> (i32, i32, i32) {
    %c0_i32 = arith.constant 0 : i32
    %c0_i32_0 = arith.constant 0 : i32
    %c0_i32_1 = arith.constant 0 : i32
    return %arg0, %c0_i32, %c0_i32_0 : i32, i32, i32
  }
}

</mosaic_0001>

<llo_original>
// kernel: _lambda_.1
$region0: #{_lambda_.1}
  #allocation0 [shape = 'u32[]', space=smem, size = 0x4, offset = 0x4, fixed_abs, tag = 'smem constant byte address 0x4 - core index']
  #allocation1 [shape = 'u32[72,128]{1,0:T(1,128)}', space=vmem, size = 0x9000, scoped, tag = 'internal scratch']
  #allocation2 [shape = 'f32[16,128]{1,0:T(8,128)}', space=vmem, size = 0x2000, scoped, tag = 'scratch operand']
  %s0 = inlined_call_operand.vmem [shape: f32[2,4,32], index: 0, kind: input, shape index: {}]
  %s1 = inlined_call_operand.vmem [shape: bf16[32,896], index: 1, kind: input, shape index: {}]
  %s2 = inlined_call_operand.hbm [shape: bf16[64,1408], index: 2, kind: input, shape index: {}]
  %s3 = inlined_call_operand.hbm [shape: bf16[128,2176], index: 3, kind: input, shape index: {}]
  %s4 = inlined_call_operand.hbm [shape: bf16[64,1408], index: 4, kind: input, shape index: {}]
  %s5 = inlined_call_operand.vmem [shape: bf16[264,32], index: 5, kind: input, shape index: {}]
  %s6 = inlined_call_operand.vmem [shape: bf16[528,64], index: 6, kind: input, shape index: {}]
  %s7 = inlined_call_operand.vmem [shape: bf16[1032,128], index: 7, kind: input, shape index: {}]
  %s8 = inlined_call_operand.vmem [shape: bf16[516,64], index: 8, kind: input, shape index: {}]
  %s9 = inlined_call_operand.vmem [shape: f32[1,11264], index: 9, kind: input, shape index: {}]
  %s10 = inlined_call_operand.vmem [shape: f32[192,16], index: 10, kind: input, shape index: {}]
  %s11 = inlined_call_operand.vmem [shape: f32[16,128], index: 11, kind: input, shape index: {}]
  %s12 = inlined_call_operand.hbm [shape: f32[2,4,32], index: 12, kind: output, shape index: {0}]
  %s13 = inlined_call_operand.vmem [shape: s32[2,1,16], index: 13, kind: output, shape index: {1}]
  %s14 = inlined_call_operand.vmem [shape: f32[2,1,1], index: 14, kind: output, shape index: {2}]
  %15 = xla_tuple %s12, %s13, %s14
  %s16 = sld [smem:[#allocation0]]
  $region109: #{_lambda_.1} parent=0
    _
  %s18 = ssub.s32 1, %s16
  %s19 = scalar_select 0, %s18, %s16
  $region1: #{_lambda_.1} parent=0
    #allocation3 [shape = 'u8[180224]{0}', space=vmem, size = 0x2c000, scoped, tag = 'input window, operand 2, single buffered']
    #allocation4 [shape = 's32[2]{0}', space=sflag, size = 0x8, scoped, tag = 'scoped memory for _lambda_.1']
    #allocation5 [shape = 's32[2]{0}', space=sflag, size = 0x8, scoped, tag = 'scoped memory for _lambda_.1']
    #allocation6 [shape = 'u8[557056]{0}', space=vmem, size = 0x88000, scoped, tag = 'input window, operand 3, single buffered']
    #allocation7 [shape = 's32[1]{0}', space=sflag, size = 0x4, scoped, tag = 'scoped memory for _lambda_.1']
    #allocation8 [shape = 'u8[180224]{0}', space=vmem, size = 0x2c000, scoped, tag = 'input window, operand 4, single buffered']
    #allocation9 [shape = 'u8[4096]{0}', space=vmem, size = 0x1000, scoped, tag = 'output window, operand 0']
    %20 = vsyncpa [#allocation4], 0
    %21 = vsyncpa [#allocation7], 0
    %22 = vsyncpa [#allocation5], 0
    %s23 = scalar_lea.sflag [#allocation5], 1
    %24 = vsyncpa %s23, 0
    loop: start=0, step=1, limit=4
    $region2: #{_lambda_.1} parent=1 // loop_pre_header
      _
    $region3: #{_lambda_.1} parent=1 // loop_header
      %s26 = sphi 0, %s30
      %p27 = scmp.ge.s32.totalorder %s26, 4
      %s36 = sphi 0, %s38
      %s39 = sphi 0, %s36
      %s40 = sphi 0, %s39
      %s56 = sphi 0, %s40
      %s60 = sphi 0, %s60
      %s62 = sphi 0, %s60
      %s63 = sphi 0, %s62
      %s77 = sphi 0, %s63
      %s81 = sphi 0, %s81
      %s83 = sphi 0, %s81
      %s84 = sphi 0, %s83
      %s98 = sphi 0, %s84
      %s102 = sphi 0, %s102
      %s104 = sphi 0, %s102
      %s105 = sphi 0, %s104
      %s119 = sphi 0, %s105
      %s123 = sphi 0, %s123
      %s125 = sphi 0, %s123
      %s126 = sphi 0, %s125
      %s140 = sphi 0, %s126
      %s144 = sphi 0, %s144
      %s146 = sphi 0, %s144
      %s147 = sphi 0, %s146
      %s161 = sphi 0, %s147
      %s165 = sphi 0, %s165
      %s167 = sphi 0, %s165
      %s168 = sphi 0, %s167
      %s182 = sphi 0, %s168
      %s186 = sphi 0, %s186
      %s188 = sphi 0, %s186
      %s189 = sphi 0, %s188
      %s203 = sphi 0, %s189
      %s207 = sphi 0, %s207
      %s209 = sphi 0, %s207
      %s210 = sphi 0, %s209
      %s224 = sphi 0, %s210
      %s228 = sphi 0, %s228
      %s230 = sphi 0, %s228
      %s231 = sphi 0, %s230
      %s245 = sphi 0, %s231
      %s249 = sphi 0, %s249
      %s251 = sphi 0, %s249
      %s252 = sphi 0, %s251
      %s266 = sphi 0, %s252
      %s270 = sphi 0, %s270
      %s272 = sphi 0, %s270
      %s273 = sphi 0, %s272
      %s287 = sphi 0, %s273
      %s293 = sphi 0, %s295
      %s296 = sphi 0, %s293
      %s297 = sphi 0, %s296
      %s313 = sphi 0, %s297
      %s319 = sphi 0, %s321
      %s322 = sphi 0, %s319
      %s323 = sphi 0, %s322
      %s339 = sphi 0, %s323
      %s345 = sphi 0, %s347
      %s348 = sphi 0, %s345
      %s349 = sphi 0, %s348
      %s365 = sphi 0, %s349
    $region4: #{_lambda_.1} parent=1 // loop_header_branch
      %29 = sbr.rel (%p27) target = $region8
    $region5: #{_lambda_.1} parent=1 // loop_body
      %s31 = ssub.s32 %s26, 1
      %s32 = ssub.s32 %s26, 2
      %s33 = sadd.s32 %s26, 1
      %s34 = ssub.s32 %s26, %s33
      %p35 = scmp.eq.s32.totalorder %s34, 0
      %s37 = sadd.s32 %s36, 1
      %s38 = scalar_select %p35, %s36, %s37
      %p41 = pneg %p35
      %p42 = scmp.eq.s32.totalorder %s26, 1
      %p43 = por %p41, %p42
      %p44 = scmp.ne.s32.totalorder %s36, %s39
      %p45 = scmp.eq.s32.totalorder %s26, 0
      %p46 = por %p44, %p45
      %p47 = scmp.ne.s32.totalorder %s36, %s39
      %p48 = scmp.eq.s32.totalorder %s31, 1
      %p49 = por %p47, %p48
      %p50 = scmp.ne.s32.totalorder %s39, %s40
      %p51 = scmp.eq.s32.totalorder %s31, 0
      %p52 = por %p50, %p51
      %p53 = scmp.ne.s32.totalorder %s39, %s40
      %p54 = scmp.eq.s32.totalorder %s32, 1
      %p55 = por %p53, %p54
      %p57 = scmp.ne.s32.totalorder %s40, %s56
      %p58 = scmp.eq.s32.totalorder %s32, 0
      %p59 = por %p57, %p58
      %s61 = sadd.s32 %s60, 1
      %p64 = scmp.eq.s32.totalorder %s26, 1
      %p65 = scmp.ne.s32.totalorder %s60, %s62
      %p66 = scmp.eq.s32.totalorder %s26, 0
      %p67 = por %p65, %p66
      %p68 = scmp.ne.s32.totalorder %s60, %s62
      %p69 = scmp.eq.s32.totalorder %s31, 1
      %p70 = por %p68, %p69
      %p71 = scmp.ne.s32.totalorder %s62, %s63
      %p72 = scmp.eq.s32.totalorder %s31, 0
      %p73 = por %p71, %p72
      %p74 = scmp.ne.s32.totalorder %s62, %s63
      %p75 = scmp.eq.s32.totalorder %s32, 1
      %p76 = por %p74, %p75
      %p78 = scmp.ne.s32.totalorder %s63, %s77
      %p79 = scmp.eq.s32.totalorder %s32, 0
      %p80 = por %p78, %p79
      %s82 = sadd.s32 %s81, 1
      %p85 = scmp.eq.s32.totalorder %s26, 1
      %p86 = scmp.ne.s32.totalorder %s81, %s83
      %p87 = scmp.eq.s32.totalorder %s26, 0
      %p88 = por %p86, %p87
      %p89 = scmp.ne.s32.totalorder %s81, %s83
      %p90 = scmp.eq.s32.totalorder %s31, 1
      %p91 = por %p89, %p90
      %p92 = scmp.ne.s32.totalorder %s83, %s84
      %p93 = scmp.eq.s32.totalorder %s31, 0
      %p94 = por %p92, %p93
      %p95 = scmp.ne.s32.totalorder %s83, %s84
      %p96 = scmp.eq.s32.totalorder %s32, 1
      %p97 = por %p95, %p96
      %p99 = scmp.ne.s32.totalorder %s84, %s98
      %p100 = scmp.eq.s32.totalorder %s32, 0
      %p101 = por %p99, %p100
      %s103 = sadd.s32 %s102, 1
      %p106 = scmp.eq.s32.totalorder %s26, 1
      %p107 = scmp.ne.s32.totalorder %s102, %s104
      %p108 = scmp.eq.s32.totalorder %s26, 0
      %p109 = por %p107, %p108
      %p110 = scmp.ne.s32.totalorder %s102, %s104
      %p111 = scmp.eq.s32.totalorder %s31, 1
      %p112 = por %p110, %p111
      %p113 = scmp.ne.s32.totalorder %s104, %s105
      %p114 = scmp.eq.s32.totalorder %s31, 0
      %p115 = por %p113, %p114
      %p116 = scmp.ne.s32.totalorder %s104, %s105
      %p117 = scmp.eq.s32.totalorder %s32, 1
      %p118 = por %p116, %p117
      %p120 = scmp.ne.s32.totalorder %s105, %s119
      %p121 = scmp.eq.s32.totalorder %s32, 0
      %p122 = por %p120, %p121
      %s124 = sadd.s32 %s123, 1
      %p127 = scmp.eq.s32.totalorder %s26, 1
      %p128 = scmp.ne.s32.totalorder %s123, %s125
      %p129 = scmp.eq.s32.totalorder %s26, 0
      %p130 = por %p128, %p129
      %p131 = scmp.ne.s32.totalorder %s123, %s125
      %p132 = scmp.eq.s32.totalorder %s31, 1
      %p133 = por %p131, %p132
      %p134 = scmp.ne.s32.totalorder %s125, %s126
      %p135 = scmp.eq.s32.totalorder %s31, 0
      %p136 = por %p134, %p135
      %p137 = scmp.ne.s32.totalorder %s125, %s126
      %p138 = scmp.eq.s32.totalorder %s32, 1
      %p139 = por %p137, %p138
      %p141 = scmp.ne.s32.totalorder %s126, %s140
      %p142 = scmp.eq.s32.totalorder %s32, 0
      %p143 = por %p141, %p142
      %s145 = sadd.s32 %s144, 1
      %p148 = scmp.eq.s32.totalorder %s26, 1
      %p149 = scmp.ne.s32.totalorder %s144, %s146
      %p150 = scmp.eq.s32.totalorder %s26, 0
      %p151 = por %p149, %p150
      %p152 = scmp.ne.s32.totalorder %s144, %s146
      %p153 = scmp.eq.s32.totalorder %s31, 1
      %p154 = por %p152, %p153
      %p155 = scmp.ne.s32.totalorder %s146, %s147
      %p156 = scmp.eq.s32.totalorder %s31, 0
      %p157 = por %p155, %p156
      %p158 = scmp.ne.s32.totalorder %s146, %s147
      %p159 = scmp.eq.s32.totalorder %s32, 1
      %p160 = por %p158, %p159
      %p162 = scmp.ne.s32.totalorder %s147, %s161
      %p163 = scmp.eq.s32.totalorder %s32, 0
      %p164 = por %p162, %p163
      %s166 = sadd.s32 %s165, 1
      %p169 = scmp.eq.s32.totalorder %s26, 1
      %p170 = scmp.ne.s32.totalorder %s165, %s167
      %p171 = scmp.eq.s32.totalorder %s26, 0
      %p172 = por %p170, %p171
      %p173 = scmp.ne.s32.totalorder %s165, %s167
      %p174 = scmp.eq.s32.totalorder %s31, 1
      %p175 = por %p173, %p174
      %p176 = scmp.ne.s32.totalorder %s167, %s168
      %p177 = scmp.eq.s32.totalorder %s31, 0
      %p178 = por %p176, %p177
      %p179 = scmp.ne.s32.totalorder %s167, %s168
      %p180 = scmp.eq.s32.totalorder %s32, 1
      %p181 = por %p179, %p180
      %p183 = scmp.ne.s32.totalorder %s168, %s182
      %p184 = scmp.eq.s32.totalorder %s32, 0
      %p185 = por %p183, %p184
      %s187 = sadd.s32 %s186, 1
      %p190 = scmp.eq.s32.totalorder %s26, 1
      %p191 = scmp.ne.s32.totalorder %s186, %s188
      %p192 = scmp.eq.s32.totalorder %s26, 0
      %p193 = por %p191, %p192
      %p194 = scmp.ne.s32.totalorder %s186, %s188
      %p195 = scmp.eq.s32.totalorder %s31, 1
      %p196 = por %p194, %p195
      %p197 = scmp.ne.s32.totalorder %s188, %s189
      %p198 = scmp.eq.s32.totalorder %s31, 0
      %p199 = por %p197, %p198
      %p200 = scmp.ne.s32.totalorder %s188, %s189
      %p201 = scmp.eq.s32.totalorder %s32, 1
      %p202 = por %p200, %p201
      %p204 = scmp.ne.s32.totalorder %s189, %s203
      %p205 = scmp.eq.s32.totalorder %s32, 0
      %p206 = por %p204, %p205
      %s208 = sadd.s32 %s207, 1
      %p211 = scmp.eq.s32.totalorder %s26, 1
      %p212 = scmp.ne.s32.totalorder %s207, %s209
      %p213 = scmp.eq.s32.totalorder %s26, 0
      %p214 = por %p212, %p213
      %p215 = scmp.ne.s32.totalorder %s207, %s209
      %p216 = scmp.eq.s32.totalorder %s31, 1
      %p217 = por %p215, %p216
      %p218 = scmp.ne.s32.totalorder %s209, %s210
      %p219 = scmp.eq.s32.totalorder %s31, 0
      %p220 = por %p218, %p219
      %p221 = scmp.ne.s32.totalorder %s209, %s210
      %p222 = scmp.eq.s32.totalorder %s32, 1
      %p223 = por %p221, %p222
      %p225 = scmp.ne.s32.totalorder %s210, %s224
      %p226 = scmp.eq.s32.totalorder %s32, 0
      %p227 = por %p225, %p226
      %s229 = sadd.s32 %s228, 1
      %p232 = scmp.eq.s32.totalorder %s26, 1
      %p233 = scmp.ne.s32.totalorder %s228, %s230
      %p234 = scmp.eq.s32.totalorder %s26, 0
      %p235 = por %p233, %p234
      %p236 = scmp.ne.s32.totalorder %s228, %s230
      %p237 = scmp.eq.s32.totalorder %s31, 1
      %p238 = por %p236, %p237
      %p239 = scmp.ne.s32.totalorder %s230, %s231
      %p240 = scmp.eq.s32.totalorder %s31, 0
      %p241 = por %p239, %p240
      %p242 = scmp.ne.s32.totalorder %s230, %s231
      %p243 = scmp.eq.s32.totalorder %s32, 1
      %p244 = por %p242, %p243
      %p246 = scmp.ne.s32.totalorder %s231, %s245
      %p247 = scmp.eq.s32.totalorder %s32, 0
      %p248 = por %p246, %p247
      %s250 = sadd.s32 %s249, 1
      %p253 = scmp.eq.s32.totalorder %s26, 1
      %p254 = scmp.ne.s32.totalorder %s249, %s251
      %p255 = scmp.eq.s32.totalorder %s26, 0
      %p256 = por %p254, %p255
      %p257 = scmp.ne.s32.totalorder %s249, %s251
      %p258 = scmp.eq.s32.totalorder %s31, 1
      %p259 = por %p257, %p258
      %p260 = scmp.ne.s32.totalorder %s251, %s252
      %p261 = scmp.eq.s32.totalorder %s31, 0
      %p262 = por %p260, %p261
      %p263 = scmp.ne.s32.totalorder %s251, %s252
      %p264 = scmp.eq.s32.totalorder %s32, 1
      %p265 = por %p263, %p264
      %p267 = scmp.ne.s32.totalorder %s252, %s266
      %p268 = scmp.eq.s32.totalorder %s32, 0
      %p269 = por %p267, %p268
      %s271 = sadd.s32 %s270, 1
      %p274 = scmp.eq.s32.totalorder %s26, 1
      %p275 = scmp.ne.s32.totalorder %s270, %s272
      %p276 = scmp.eq.s32.totalorder %s26, 0
      %p277 = por %p275, %p276
      %p278 = scmp.ne.s32.totalorder %s270, %s272
      %p279 = scmp.eq.s32.totalorder %s31, 1
      %p280 = por %p278, %p279
      %p281 = scmp.ne.s32.totalorder %s272, %s273
      %p282 = scmp.eq.s32.totalorder %s31, 0
      %p283 = por %p281, %p282
      %p284 = scmp.ne.s32.totalorder %s272, %s273
      %p285 = scmp.eq.s32.totalorder %s32, 1
      %p286 = por %p284, %p285
      %p288 = scmp.ne.s32.totalorder %s273, %s287
      %p289 = scmp.eq.s32.totalorder %s32, 0
      %p290 = por %p288, %p289
      %s291 = ssub.s32 %s26, %s33
      %p292 = scmp.eq.s32.totalorder %s291, 0
      %s294 = sadd.s32 %s293, 1
      %s295 = scalar_select %p292, %s293, %s294
      %p298 = pneg %p292
      %p299 = scmp.eq.s32.totalorder %s26, 1
      %p300 = por %p298, %p299
      %p301 = scmp.ne.s32.totalorder %s293, %s296
      %p302 = scmp.eq.s32.totalorder %s26, 0
      %p303 = por %p301, %p302
      %p304 = scmp.ne.s32.totalorder %s293, %s296
      %p305 = scmp.eq.s32.totalorder %s31, 1
      %p306 = por %p304, %p305
      %p307 = scmp.ne.s32.totalorder %s296, %s297
      %p308 = scmp.eq.s32.totalorder %s31, 0
      %p309 = por %p307, %p308
      %p310 = scmp.ne.s32.totalorder %s296, %s297
      %p311 = scmp.eq.s32.totalorder %s32, 1
      %p312 = por %p310, %p311
      %p314 = scmp.ne.s32.totalorder %s297, %s313
      %p315 = scmp.eq.s32.totalorder %s32, 0
      %p316 = por %p314, %p315
      %s317 = ssub.s32 %s26, %s33
      %p318 = scmp.eq.s32.totalorder %s317, 0
      %s320 = sadd.s32 %s319, 1
      %s321 = scalar_select %p318, %s319, %s320
      %p324 = pneg %p318
      %p325 = scmp.eq.s32.totalorder %s26, 1
      %p326 = por %p324, %p325
      %p327 = scmp.ne.s32.totalorder %s319, %s322
      %p328 = scmp.eq.s32.totalorder %s26, 0
      %p329 = por %p327, %p328
      %p330 = scmp.ne.s32.totalorder %s319, %s322
      %p331 = scmp.eq.s32.totalorder %s31, 1
      %p332 = por %p330, %p331
      %p333 = scmp.ne.s32.totalorder %s322, %s323
      %p334 = scmp.eq.s32.totalorder %s31, 0
      %p335 = por %p333, %p334
      %p336 = scmp.ne.s32.totalorder %s322, %s323
      %p337 = scmp.eq.s32.totalorder %s32, 1
      %p338 = por %p336, %p337
      %p340 = scmp.ne.s32.totalorder %s323, %s339
      %p341 = scmp.eq.s32.totalorder %s32, 0
      %p342 = por %p340, %p341
      %s343 = ssub.s32 %s26, %s33
      %p344 = scmp.eq.s32.totalorder %s343, 0
      %s346 = sadd.s32 %s345, 1
      %s347 = scalar_select %p344, %s345, %s346
      %p350 = pneg %p344
      %p351 = scmp.eq.s32.totalorder %s26, 1
      %p352 = por %p350, %p351
      %p353 = scmp.ne.s32.totalorder %s345, %s348
      %p354 = scmp.eq.s32.totalorder %s26, 0
      %p355 = por %p353, %p354
      %p356 = scmp.ne.s32.totalorder %s345, %s348
      %p357 = scmp.eq.s32.totalorder %s31, 1
      %p358 = por %p356, %p357
      %p359 = scmp.ne.s32.totalorder %s348, %s349
      %p360 = scmp.eq.s32.totalorder %s31, 0
      %p361 = por %p359, %p360
      %p362 = scmp.ne.s32.totalorder %s348, %s349
      %p363 = scmp.eq.s32.totalorder %s32, 1
      %p364 = por %p362, %p363
      %p366 = scmp.ne.s32.totalorder %s349, %s365
      %p367 = scmp.eq.s32.totalorder %s32, 0
      %p368 = por %p366, %p367
      %p369 = scmp.le.s32.totalorder 1, %s26
      %p370 = scmp.lt.s32.totalorder %s26, 3
      %p371 = pnand %p369, %p370
      %p372 = pneg %p371
      // Predicated region
      $region9: #{_lambda_.1} parent=5 // pred_check
        _
      $region10: #{_lambda_.1} parent=5 // pred_check_branch
        %374 = sbr.rel (%p371) target = $region12
      $region11: #{_lambda_.1} parent=5 // pred_region
        %s375 = ssub.s32 %s26, 1
        // Predicated region
        $region13: #{_lambda_.1} parent=11 // pred_check
          %p376 = pneg %p73
        $region14: #{_lambda_.1} parent=11 // pred_check_branch
          %378 = sbr.rel (%p376) target = $region16
        $region15: #{_lambda_.1} parent=11 // pred_region
          _
        $region16: #{_lambda_.1} parent=11 // pred_fallthru
          _
        // Predicated region
        $region17: #{_lambda_.1} parent=11 // pred_check
          %p379 = pneg %p94
        $region18: #{_lambda_.1} parent=11 // pred_check_branch
          %381 = sbr.rel (%p379) target = $region20
        $region19: #{_lambda_.1} parent=11 // pred_region
          %383 = vsyncadd [#allocation4], 0
          %s384 = sshll.u32 %s2, 4
          %s385 = int_to_ptr.hbm [resolvable:$true] %s384
          %s386 = sshll.u32 [#allocation3], 4
          %s387 = int_to_ptr.vmem [resolvable:$true] %s386
          %392 = dma.hbm_to_vmem [thread:$0]  %s385, 5632, %s387, [#allocation4], 704, 704, 44
        $region20: #{_lambda_.1} parent=11 // pred_fallthru
          _
        // Predicated region
        $region21: #{_lambda_.1} parent=11 // pred_check
          %p393 = pneg %p115
        $region22: #{_lambda_.1} parent=11 // pred_check_branch
          %395 = sbr.rel (%p393) target = $region24
        $region23: #{_lambda_.1} parent=11 // pred_region
          %397 = vsyncadd [#allocation7], 0
          %s398 = sshll.u32 %s3, 4
          %s399 = int_to_ptr.hbm [resolvable:$true] %s398
          %s400 = sshll.u32 [#allocation6], 4
          %s401 = int_to_ptr.vmem [resolvable:$true] %s400
          %406 = dma.hbm_to_vmem [thread:$0]  %s399, 17408, %s401, [#allocation7], 1088, 1088, 68
        $region24: #{_lambda_.1} parent=11 // pred_fallthru
          _
        // Predicated region
        $region25: #{_lambda_.1} parent=11 // pred_check
          %p407 = pneg %p136
        $region26: #{_lambda_.1} parent=11 // pred_check_branch
          %409 = sbr.rel (%p407) target = $region28
        $region27: #{_lambda_.1} parent=11 // pred_region
          %411 = vsyncadd [#allocation7], 0
          %s412 = sshll.u32 %s4, 4
          %s413 = int_to_ptr.hbm [resolvable:$true] %s412
          %s414 = sshll.u32 [#allocation8], 4
          %s415 = int_to_ptr.vmem [resolvable:$true] %s414
          %420 = dma.hbm_to_vmem [thread:$0]  %s413, 5632, %s415, [#allocation7], 704, 704, 44
        $region28: #{_lambda_.1} parent=11 // pred_fallthru
          _
        // Predicated region
        $region29: #{_lambda_.1} parent=11 // pred_check
          %p421 = pneg %p157
        $region30: #{_lambda_.1} parent=11 // pred_check_branch
          %423 = sbr.rel (%p421) target = $region32
        $region31: #{_lambda_.1} parent=11 // pred_region
          _
        $region32: #{_lambda_.1} parent=11 // pred_fallthru
          _
        // Predicated region
        $region33: #{_lambda_.1} parent=11 // pred_check
          %p424 = pneg %p178
        $region34: #{_lambda_.1} parent=11 // pred_check_branch
          %426 = sbr.rel (%p424) target = $region36
        $region35: #{_lambda_.1} parent=11 // pred_region
          _
        $region36: #{_lambda_.1} parent=11 // pred_fallthru
          _
        // Predicated region
        $region37: #{_lambda_.1} parent=11 // pred_check
          %p427 = pneg %p199
        $region38: #{_lambda_.1} parent=11 // pred_check_branch
          %429 = sbr.rel (%p427) target = $region40
        $region39: #{_lambda_.1} parent=11 // pred_region
          _
        $region40: #{_lambda_.1} parent=11 // pred_fallthru
          _
        // Predicated region
        $region41: #{_lambda_.1} parent=11 // pred_check
          %p430 = pneg %p220
        $region42: #{_lambda_.1} parent=11 // pred_check_branch
          %432 = sbr.rel (%p430) target = $region44
        $region43: #{_lambda_.1} parent=11 // pred_region
          _
        $region44: #{_lambda_.1} parent=11 // pred_fallthru
          _
        // Predicated region
        $region45: #{_lambda_.1} parent=11 // pred_check
          %p433 = pneg %p241
        $region46: #{_lambda_.1} parent=11 // pred_check_branch
          %435 = sbr.rel (%p433) target = $region48
        $region47: #{_lambda_.1} parent=11 // pred_region
          _
        $region48: #{_lambda_.1} parent=11 // pred_fallthru
          _
        // Predicated region
        $region49: #{_lambda_.1} parent=11 // pred_check
          %p436 = pneg %p262
        $region50: #{_lambda_.1} parent=11 // pred_check_branch
          %438 = sbr.rel (%p436) target = $region52
        $region51: #{_lambda_.1} parent=11 // pred_region
          _
        $region52: #{_lambda_.1} parent=11 // pred_fallthru
          _
        // Predicated region
        $region53: #{_lambda_.1} parent=11 // pred_check
          %p439 = pneg %p283
        $region54: #{_lambda_.1} parent=11 // pred_check_branch
          %441 = sbr.rel (%p439) target = $region56
        $region55: #{_lambda_.1} parent=11 // pred_region
          _
        $region56: #{_lambda_.1} parent=11 // pred_fallthru
          _
      $region12: #{_lambda_.1} parent=5 // pred_fallthru
        _
      %p442 = scmp.lt.s32.totalorder %s26, 2
      // Predicated region
      $region57: #{_lambda_.1} parent=5 // pred_check
        %p443 = pneg %p442
      $region58: #{_lambda_.1} parent=5 // pred_check_branch
        %445 = sbr.rel (%p443) target = $region60
      $region59: #{_lambda_.1} parent=5 // pred_region
        // Predicated region
        $region61: #{_lambda_.1} parent=59 // pred_check
          %p446 = pneg %p46
        $region62: #{_lambda_.1} parent=59 // pred_check_branch
          %448 = sbr.rel (%p446) target = $region64
        $region63: #{_lambda_.1} parent=59 // pred_region
          %p449 = scmp.lt.s32.totalorder %s26, 1
          %s450 = scalar_select %p449, %s26, 1
          %s451 = smul.addr %s450, 4
          %s452 = scalar_lea.vmem %s0, %s451
        $region64: #{_lambda_.1} parent=59 // pred_fallthru
          _
      $region60: #{_lambda_.1} parent=5 // pred_fallthru
        _
      %p453 = scmp.le.s32.totalorder 1, %s26
      %p454 = scmp.lt.s32.totalorder %s26, 3
      %p455 = pnand %p453, %p454
      %p456 = pneg %p455
      // Predicated region
      $region65: #{_lambda_.1} parent=5 // pred_check
        _
      $region66: #{_lambda_.1} parent=5 // pred_check_branch
        %458 = sbr.rel (%p455) target = $region68
      $region67: #{_lambda_.1} parent=5 // pred_region
        %s459 = ssub.s32 %s26, 1
        // Predicated region
        $region69: #{_lambda_.1} parent=67 // pred_check
          %p460 = pneg %p94
        $region70: #{_lambda_.1} parent=67 // pred_check_branch
          %462 = sbr.rel (%p460) target = $region72
        $region71: #{_lambda_.1} parent=67 // pred_region
          %464 = dma.done [#allocation4], 5632
        $region72: #{_lambda_.1} parent=67 // pred_fallthru
          _
        // Predicated region
        $region73: #{_lambda_.1} parent=67 // pred_check
          %p465 = pneg %p115
        $region74: #{_lambda_.1} parent=67 // pred_check_branch
          %467 = sbr.rel (%p465) target = $region76
        $region75: #{_lambda_.1} parent=67 // pred_region
          %469 = dma.done [#allocation7], 17408
        $region76: #{_lambda_.1} parent=67 // pred_fallthru
          _
        // Predicated region
        $region77: #{_lambda_.1} parent=67 // pred_check
          %p470 = pneg %p136
        $region78: #{_lambda_.1} parent=67 // pred_check_branch
          %472 = sbr.rel (%p470) target = $region80
        $region79: #{_lambda_.1} parent=67 // pred_region
          %474 = dma.done [#allocation7], 5632
        $region80: #{_lambda_.1} parent=67 // pred_fallthru
          _
        %p475 = scmp.lt.s32.totalorder %s31, 1
        %s476 = scalar_select %p475, %s31, 1
        %s477 = smul.addr %s476, 4
        %s478 = scalar_lea.vmem %s0, %s477
        %p479 = pneg %p52
        %p480 = pneg %p49
        %p481 = pneg %p73
        %p482 = pneg %p70
        %p483 = pneg %p94
        %p484 = pneg %p91
        %p485 = pneg %p115
        %p486 = pneg %p112
        %p487 = pneg %p136
        %p488 = pneg %p133
        %p489 = pneg %p157
        %p490 = pneg %p154
        %p491 = pneg %p178
        %p492 = pneg %p175
        %p493 = pneg %p199
        %p494 = pneg %p196
        %p495 = pneg %p220
        %p496 = pneg %p217
        %p497 = pneg %p241
        %p498 = pneg %p238
        %p499 = pneg %p262
        %p500 = pneg %p259
        %p501 = pneg %p283
        %p502 = pneg %p280
        %p503 = pneg %p309
        %p504 = pneg %p306
        %s505 = sand.u32 %s296, 1
        %s506 = scalar_lea.sflag [#allocation5], %s505
        %s507 = sand.u32 %s296, 1
        %s508 = smul.addr %s507, 4
        %s509 = scalar_lea.vmem [#allocation9], %s508
        %p510 = pneg %p335
        %p511 = pneg %p332
        %p512 = scmp.lt.s32.totalorder %s31, 1
        %s513 = scalar_select %p512, %s31, 1
        %s514 = scalar_lea.vmem %s13, %s513
        %p515 = pneg %p361
        %p516 = pneg %p358
        %p517 = scmp.lt.s32.totalorder %s31, 1
        %s518 = scalar_select %p517, %s31, 1
        %s519 = scalar_lea.vmem %s14, %s518
        %p520 = scmp.lt.s32.totalorder %s31, 1
        %s521 = scalar_select %p520, %s31, 1
        %s522 = smul.addr %s521, 4
        %s523 = scalar_lea.vmem %s0, %s522
        %p524 = scmp.lt.s32.totalorder %s31, 1
        %s525 = scalar_select %p524, %s31, 1
        %s526 = scalar_lea.vmem %s13, %s525
        %p527 = scmp.lt.s32.totalorder %s31, 1
        %s528 = scalar_select %p527, %s31, 1
        %s529 = scalar_lea.vmem %s14, %s528
        %v531 = vld [vmem:[%s523] sm:$0xf]
        %v532 = vld [vmem:[%s9] sm:$0x1]
        %v533 = vld [vmem:[%s9 + $0x1] sm:$0x1]
        %vm534 = vcmask 257024
        %v535 = vsel %vm534, %v531, 0.0
        %536 = vadd.xlane.f32.xlu0 %v535
        %v537 = vpop.xlane.xlu0 %536
        %v538 = vrcp.pop 32.0
        %v539 = vmul.f32 32.0, %v538
        %v540 = vsub.f32 1.0, %v539
        %v541 = vmul.f32 %v538, %v540
        %v542 = vadd.f32 %v538, %v541
        %vm543 = vweird.f32 %v538
        %v544 = vsel %vm543, %v538, %v542
        %v545 = vmul.f32 %v537, %v544
        %v546 = vsub.f32 %v531, %v545
        %v547 = vmul.f32 %v546, %v546
        %v548 = vsel %vm534, %v547, 0.0
        %549 = vadd.xlane.f32.xlu0 %v548
        %v550 = vpop.xlane.xlu0 %549
        %v551 = vmul.f32 %v550, %v544
        %v552 = vadd.f32 %v551, 1e-05
        %v553 = vrsqrt.pop %v552
        %v554 = vmul.f32 %v553, %v552
        %v555 = vmul.f32 %v554, %v553
        %v556 = vmul.f32 0.5, %v555
        %v557 = vsub.f32 1.5, %v556
        %v558 = vmul.f32 %v553, %v557
        %vm559 = vweird.f32 %v552
        %vm560 = vweird.f32 %v553
        %vm561 = vmor %vm559, %vm560
        %v562 = vsel %vm561, %v553, %v558
        %v563 = vmul.f32 %v546, %v562
        %v565 = vperm.slane %v532, 0
        %v567 = vmul.f32 %v563, %v565
        %v569 = vperm.slane %v533, 0
        %v571 = vadd.f32 %v567, %v569
        %v572 = vld [vmem:[%s1] sm:$0xf]
        %v573 = vld [vmem:[%s1 + $0x1c] sm:$0xf]
        %v574 = vld [vmem:[%s1 + $0x38] sm:$0xf]
        %v575 = vld [vmem:[%s1 + $0x54] sm:$0xf]
        %v576 = vpack.c.bf16 %v571, %v571
        %v577 = vld [vmem:[%s9 + $0x2] sm:$0x1]
        %v579 = vperm.slane %v577, 0
        %v585 = vunpack.c.l.b16 %v572
        %v586 = vunpack.c.l.b16 %v573
        %v587 = vunpack.c.l.b16 %v574
        %v588 = vunpack.c.l.b16 %v575
        %v589 = vpack.c.b16 %v586, %v585
        %v590 = vpack.c.b16 %v588, %v587
        %vm593 = vcmask 261120
        %v595 = vsel %vm593, %v576, 0
        %597 = vmatpush.bf16.msra.mxu0 0
        %598 = vmatpush.bf16.msra.mxu0 0
        %599 = vmatpush.bf16.msra.mxu0 0
        %600 = vmatpush.bf16.msra.mxu0 0
        %601 = vmatpush.bf16.msra.mxu0 0
        %602 = vmatpush.bf16.msra.mxu0 0
        %603 = vmatpush.bf16.msra.mxu0 %v590
        %604 = vmatpush.bf16.msra.mxu0 %v589
        %605 = vmatmul.bf16.gmra.mxu0 %v595
        %v606 = vpop.f32.mrf.mxu0
        %v607 = vadd.f32 %v579, %v606
        %v608 = vpop.f32.mrf.mxu0
        %609 = vdwg.mxu0
        %611 = vrot.lane.b32.xlu0 %v607, 96
        %v612 = vpop.permute.xlu0 %611
        %vm613 = vcmask 64512
        %v614 = vsel %vm613, %v607, 0
        %v616 = vsel %vm613, %v612, 0
        %618 = vmatpush.xpose.msra.mxu0 0.0
        %619 = vmatpush.xpose.msra.mxu0 0.0
        %620 = vmatpush.xpose.msra.mxu0 0.0
        %621 = vmatpush.xpose.msra.mxu0 0.0
        %622 = vmatpush.xpose.msra.mxu0 0.0
        %623 = vmatpush.xpose.msra.mxu0 0.0
        %624 = vmatpush.xpose.msra.mxu0 0.0
        %625 = vmatpush.xpose.msra.mxu0 0.0
        %626 = vmatpush.xpose.msra.mxu0 0.0
        %627 = vmatpush.xpose.msra.mxu0 0.0
        %628 = vmatpush.xpose.msra.mxu0 0.0
        %629 = vmatpush.xpose.msra.mxu0 0.0
        %630 = vmatpush.xpose.msra.mxu0 0.0
        %631 = vmatpush.xpose.msra.mxu0 0.0
        %632 = vmatpush.xpose.msra.mxu0 0.0
        %633 = vmatpush.xpose.msra.mxu0 %v616
        %634 = vmatmul.f32.gmra.mxu0 %v614
        %v635 = vpop.f32.mrf.mxu0
        %v636 = vadd.f32 0.0, %v635
        %637 = vdwg.mxu0
        %v638 = vmul.f32 %v636, 0.35355338
        %vm639 = vcmask 27648
        %v640 = vsel %vm639, %v638, -inf
        %641 = vmax.xlane.f32.xlu0 %v640
        %v642 = vpop.xlane.xlu0 %641
        %v643 = vsub.f32 %v638, %v642
        %v644 = vmul.f32 %v643, 1.442695
        %v645 = vpow.pop %v644
        %v646 = vsel %vm639, %v645, 0.0
        %647 = vadd.xlane.f32.xlu0 %v646
        %v648 = vpop.xlane.xlu0 %647
        %v649 = vrcp.pop %v648
        %v650 = vmul.f32 %v645, %v649
        %651 = vrot.lane.b32.xlu0 %v607, 64
        %v652 = vpop.permute.xlu0 %651
        %vm653 = vcmask 31744
        %v655 = vsel %vm653, %v650, 0
        %vm657 = vcmask 1043456
        %v658 = vsel %vm657, %v652, 0
        %660 = vmatpush.msra.mxu0 0.0
        %661 = vmatpush.msra.mxu0 0.0
        %662 = vmatpush.msra.mxu0 0.0
        %663 = vmatpush.msra.mxu0 0.0
        %664 = vmatpush.msra.mxu0 0.0
        %665 = vmatpush.msra.mxu0 0.0
        %666 = vmatpush.msra.mxu0 0.0
        %667 = vmatpush.msra.mxu0 0.0
        %668 = vmatpush.msra.mxu0 0.0
        %669 = vmatpush.msra.mxu0 0.0
        %670 = vmatpush.msra.mxu0 0.0
        %671 = vmatpush.msra.mxu0 0.0
        %672 = vmatpush.msra.mxu0 0.0
        %673 = vmatpush.msra.mxu0 0.0
        %674 = vmatpush.msra.mxu0 0.0
        %675 = vmatpush.msra.mxu0 %v658
        %676 = vmatmul.f32.gmra.mxu0 %v655
        %v677 = vpop.f32.mrf.mxu0
        %v678 = vadd.f32 0.0, %v677
        %679 = vdwg.mxu0
        %vm680 = vcmask 60416
        %681 = vst.msk [vmem:[#allocation2] sm:$0xf] %vm680, %v678
        %682 = vrot.lane.b32.xlu0 %v607, 120
        %v683 = vpop.permute.xlu0 %682
        %684 = vrot.lane.b32.xlu0 %v607, 88
        %v685 = vpop.permute.xlu0 %684
        %v686 = vsel %vm613, %v683, 0
        %v688 = vsel %vm613, %v685, 0
        %690 = vmatpush.xpose.msra.mxu0 0.0
        %691 = vmatpush.xpose.msra.mxu0 0.0
        %692 = vmatpush.xpose.msra.mxu0 0.0
        %693 = vmatpush.xpose.msra.mxu0 0.0
        %694 = vmatpush.xpose.msra.mxu0 0.0
        %695 = vmatpush.xpose.msra.mxu0 0.0
        %696 = vmatpush.xpose.msra.mxu0 0.0
        %697 = vmatpush.xpose.msra.mxu0 0.0
        %698 = vmatpush.xpose.msra.mxu0 0.0
        %699 = vmatpush.xpose.msra.mxu0 0.0
        %700 = vmatpush.xpose.msra.mxu0 0.0
        %701 = vmatpush.xpose.msra.mxu0 0.0
        %702 = vmatpush.xpose.msra.mxu0 0.0
        %703 = vmatpush.xpose.msra.mxu0 0.0
        %704 = vmatpush.xpose.msra.mxu0 0.0
        %705 = vmatpush.xpose.msra.mxu0 %v688
        %706 = vmatmul.f32.gmra.mxu0 %v686
        %v707 = vpop.f32.mrf.mxu0
        %v708 = vadd.f32 0.0, %v707
        %709 = vdwg.mxu0
        %v710 = vmul.f32 %v708, 0.35355338
        %v711 = vsel %vm639, %v710, -inf
        %712 = vmax.xlane.f32.xlu0 %v711
        %v713 = vpop.xlane.xlu0 %712
        %v714 = vsub.f32 %v710, %v713
        %v715 = vmul.f32 %v714, 1.442695
        %v716 = vpow.pop %v715
        %v717 = vsel %vm639, %v716, 0.0
        %718 = vadd.xlane.f32.xlu0 %v717
        %v719 = vpop.xlane.xlu0 %718
        %v720 = vrcp.pop %v719
        %v721 = vmul.f32 %v716, %v720
        %722 = vrot.lane.b32.xlu0 %v607, 56
        %v723 = vpop.permute.xlu0 %722
        %v725 = vsel %vm653, %v721, 0
        %v727 = vsel %vm657, %v723, 0
        %729 = vmatpush.msra.mxu0 0.0
        %730 = vmatpush.msra.mxu0 0.0
        %731 = vmatpush.msra.mxu0 0.0
        %732 = vmatpush.msra.mxu0 0.0
        %733 = vmatpush.msra.mxu0 0.0
        %734 = vmatpush.msra.mxu0 0.0
        %735 = vmatpush.msra.mxu0 0.0
        %736 = vmatpush.msra.mxu0 0.0
        %737 = vmatpush.msra.mxu0 0.0
        %738 = vmatpush.msra.mxu0 0.0
        %739 = vmatpush.msra.mxu0 0.0
        %740 = vmatpush.msra.mxu0 0.0
        %741 = vmatpush.msra.mxu0 0.0
        %742 = vmatpush.msra.mxu0 0.0
        %743 = vmatpush.msra.mxu0 0.0
        %744 = vmatpush.msra.mxu0 %v727
        %745 = vmatmul.f32.gmra.mxu0 %v725
        %v746 = vpop.f32.mrf.mxu0
        %v747 = vadd.f32 0.0, %v746
        %748 = vdwg.mxu0
        %750 = vrot.lane.b32.xlu0 %v747, 8
        %v751 = vpop.permute.xlu0 %750
        %vm753 = vcmask 126016
        %754 = vst.msk [vmem:[#allocation2] sm:$0xf] %vm753, %v751
        %755 = vrot.lane.b32.xlu0 %v607, 112
        %v756 = vpop.permute.xlu0 %755
        %757 = vrot.lane.b32.xlu0 %v607, 80
        %v758 = vpop.permute.xlu0 %757
        %v759 = vsel %vm613, %v756, 0
        %v761 = vsel %vm613, %v758, 0
        %763 = vmatpush.xpose.msra.mxu0 0.0
        %764 = vmatpush.xpose.msra.mxu0 0.0
        %765 = vmatpush.xpose.msra.mxu0 0.0
        %766 = vmatpush.xpose.msra.mxu0 0.0
        %767 = vmatpush.xpose.msra.mxu0 0.0
        %768 = vmatpush.xpose.msra.mxu0 0.0
        %769 = vmatpush.xpose.msra.mxu0 0.0
        %770 = vmatpush.xpose.msra.mxu0 0.0
        %771 = vmatpush.xpose.msra.mxu0 0.0
        %772 = vmatpush.xpose.msra.mxu0 0.0
        %773 = vmatpush.xpose.msra.mxu0 0.0
        %774 = vmatpush.xpose.msra.mxu0 0.0
        %775 = vmatpush.xpose.msra.mxu0 0.0
        %776 = vmatpush.xpose.msra.mxu0 0.0
        %777 = vmatpush.xpose.msra.mxu0 0.0
        %778 = vmatpush.xpose.msra.mxu0 %v761
        %779 = vmatmul.f32.gmra.mxu0 %v759
        %v780 = vpop.f32.mrf.mxu0
        %v781 = vadd.f32 0.0, %v780
        %782 = vdwg.mxu0
        %v783 = vmul.f32 %v781, 0.35355338
        %v784 = vsel %vm639, %v783, -inf
        %785 = vmax.xlane.f32.xlu0 %v784
        %v786 = vpop.xlane.xlu0 %785
        %v787 = vsub.f32 %v783, %v786
        %v788 = vmul.f32 %v787, 1.442695
        %v789 = vpow.pop %v788
        %v790 = vsel %vm639, %v789, 0.0
        %791 = vadd.xlane.f32.xlu0 %v790
        %v792 = vpop.xlane.xlu0 %791
        %v793 = vrcp.pop %v792
        %v794 = vmul.f32 %v789, %v793
        %795 = vrot.lane.b32.xlu0 %v607, 48
        %v796 = vpop.permute.xlu0 %795
        %v798 = vsel %vm653, %v794, 0
        %v800 = vsel %vm657, %v796, 0
        %802 = vmatpush.msra.mxu0 0.0
        %803 = vmatpush.msra.mxu0 0.0
        %804 = vmatpush.msra.mxu0 0.0
        %805 = vmatpush.msra.mxu0 0.0
        %806 = vmatpush.msra.mxu0 0.0
        %807 = vmatpush.msra.mxu0 0.0
        %808 = vmatpush.msra.mxu0 0.0
        %809 = vmatpush.msra.mxu0 0.0
        %810 = vmatpush.msra.mxu0 0.0
        %811 = vmatpush.msra.mxu0 0.0
        %812 = vmatpush.msra.mxu0 0.0
        %813 = vmatpush.msra.mxu0 0.0
        %814 = vmatpush.msra.mxu0 0.0
        %815 = vmatpush.msra.mxu0 0.0
        %816 = vmatpush.msra.mxu0 0.0
        %817 = vmatpush.msra.mxu0 %v800
        %818 = vmatmul.f32.gmra.mxu0 %v798
        %v819 = vpop.f32.mrf.mxu0
        %v820 = vadd.f32 0.0, %v819
        %821 = vdwg.mxu0
        %823 = vrot.lane.b32.xlu0 %v820, 16
        %v824 = vpop.permute.xlu0 %823
        %vm826 = vcmask 191616
        %827 = vst.msk [vmem:[#allocation2] sm:$0xf] %vm826, %v824
        %828 = vrot.lane.b32.xlu0 %v607, 104
        %v829 = vpop.permute.xlu0 %828
        %830 = vrot.lane.b32.xlu0 %v607, 72
        %v831 = vpop.permute.xlu0 %830
        %v832 = vsel %vm613, %v829, 0
        %v834 = vsel %vm613, %v831, 0
        %836 = vmatpush.xpose.msra.mxu0 0.0
        %837 = vmatpush.xpose.msra.mxu0 0.0
        %838 = vmatpush.xpose.msra.mxu0 0.0
        %839 = vmatpush.xpose.msra.mxu0 0.0
        %840 = vmatpush.xpose.msra.mxu0 0.0
        %841 = vmatpush.xpose.msra.mxu0 0.0
        %842 = vmatpush.xpose.msra.mxu0 0.0
        %843 = vmatpush.xpose.msra.mxu0 0.0
        %844 = vmatpush.xpose.msra.mxu0 0.0
        %845 = vmatpush.xpose.msra.mxu0 0.0
        %846 = vmatpush.xpose.msra.mxu0 0.0
        %847 = vmatpush.xpose.msra.mxu0 0.0
        %848 = vmatpush.xpose.msra.mxu0 0.0
        %849 = vmatpush.xpose.msra.mxu0 0.0
        %850 = vmatpush.xpose.msra.mxu0 0.0
        %851 = vmatpush.xpose.msra.mxu0 %v834
        %852 = vmatmul.f32.gmra.mxu0 %v832
        %v853 = vpop.f32.mrf.mxu0
        %v854 = vadd.f32 0.0, %v853
        %855 = vdwg.mxu0
        %v856 = vmul.f32 %v854, 0.35355338
        %v857 = vsel %vm639, %v856, -inf
        %858 = vmax.xlane.f32.xlu0 %v857
        %v859 = vpop.xlane.xlu0 %858
        %v860 = vsub.f32 %v856, %v859
        %v861 = vmul.f32 %v860, 1.442695
        %v862 = vpow.pop %v861
        %v863 = vsel %vm639, %v862, 0.0
        %864 = vadd.xlane.f32.xlu0 %v863
        %v865 = vpop.xlane.xlu0 %864
        %v866 = vrcp.pop %v865
        %v867 = vmul.f32 %v862, %v866
        %868 = vrot.lane.b32.xlu0 %v607, 40
        %v869 = vpop.permute.xlu0 %868
        %v871 = vsel %vm653, %v867, 0
        %v873 = vsel %vm657, %v869, 0
        %875 = vmatpush.msra.mxu0 0.0
        %876 = vmatpush.msra.mxu0 0.0
        %877 = vmatpush.msra.mxu0 0.0
        %878 = vmatpush.msra.mxu0 0.0
        %879 = vmatpush.msra.mxu0 0.0
        %880 = vmatpush.msra.mxu0 0.0
        %881 = vmatpush.msra.mxu0 0.0
        %882 = vmatpush.msra.mxu0 0.0
        %883 = vmatpush.msra.mxu0 0.0
        %884 = vmatpush.msra.mxu0 0.0
        %885 = vmatpush.msra.mxu0 0.0
        %886 = vmatpush.msra.mxu0 0.0
        %887 = vmatpush.msra.mxu0 0.0
        %888 = vmatpush.msra.mxu0 0.0
        %889 = vmatpush.msra.mxu0 0.0
        %890 = vmatpush.msra.mxu0 %v873
        %891 = vmatmul.f32.gmra.mxu0 %v871
        %v892 = vpop.f32.mrf.mxu0
        %v893 = vadd.f32 0.0, %v892
        %894 = vdwg.mxu0
        %896 = vrot.lane.b32.xlu0 %v893, 24
        %v897 = vpop.permute.xlu0 %896
        %vm899 = vcmask 257216
        %900 = vst.msk [vmem:[#allocation2] sm:$0xf] %vm899, %v897
        %v901 = vld [vmem:[#allocation2] sm:$0xf]
        %v902 = vld [vmem:[%s1 + $0x4] sm:$0xf]
        %v903 = vld [vmem:[%s1 + $0x20] sm:$0xf]
        %v904 = vld [vmem:[%s1 + $0x3c] sm:$0xf]
        %v905 = vld [vmem:[%s1 + $0x58] sm:$0xf]
        %v906 = vpack.c.bf16 %v901, %v901
        %v911 = vunpack.c.l.b16 %v902
        %v912 = vunpack.c.l.b16 %v903
        %v913 = vunpack.c.l.b16 %v904
        %v914 = vunpack.c.l.b16 %v905
        %v915 = vpack.c.b16 %v912, %v911
        %v916 = vpack.c.b16 %v914, %v913
        %v920 = vsel %vm593, %v906, 0
        %922 = vmatpush.bf16.msra.mxu0 0
        %923 = vmatpush.bf16.msra.mxu0 0
        %924 = vmatpush.bf16.msra.mxu0 0
        %925 = vmatpush.bf16.msra.mxu0 0
        %926 = vmatpush.bf16.msra.mxu0 0
        %927 = vmatpush.bf16.msra.mxu0 0
        %928 = vmatpush.bf16.msra.mxu0 %v916
        %929 = vmatpush.bf16.msra.mxu0 %v915
        %930 = vmatmul.bf16.gmra.mxu0 %v920
        %v931 = vpop.f32.mrf.mxu0
        %v932 = vadd.f32 0.0, %v931
        %v933 = vpop.f32.mrf.mxu0
        %934 = vdwg.mxu0
        %v935 = vadd.f32 %v531, %v932
        %v936 = vld [vmem:[%s9 + $0x3] sm:$0x1]
        %v938 = vperm.slane %v936, 0
        %v940 = vadd.f32 %v935, %v938
        %v941 = vld [vmem:[%s9 + $0x4] sm:$0x1]
        %v942 = vld [vmem:[%s9 + $0x5] sm:$0x1]
        %v943 = vsel %vm534, %v940, 0.0
        %944 = vadd.xlane.f32.xlu0 %v943
        %v945 = vpop.xlane.xlu0 %944
        %v946 = vmul.f32 %v945, %v544
        %v947 = vsub.f32 %v940, %v946
        %v948 = vmul.f32 %v947, %v947
        %v949 = vsel %vm534, %v948, 0.0
        %950 = vadd.xlane.f32.xlu0 %v949
        %v951 = vpop.xlane.xlu0 %950
        %v952 = vmul.f32 %v951, %v544
        %v953 = vadd.f32 %v952, 1e-05
        %v954 = vrsqrt.pop %v953
        %v955 = vmul.f32 %v954, %v953
        %v956 = vmul.f32 %v955, %v954
        %v957 = vmul.f32 0.5, %v956
        %v958 = vsub.f32 1.5, %v957
        %v959 = vmul.f32 %v954, %v958
        %vm960 = vweird.f32 %v953
        %vm961 = vweird.f32 %v954
        %vm962 = vmor %vm960, %vm961
        %v963 = vsel %vm962, %v954, %v959
        %v964 = vmul.f32 %v947, %v963
        %v966 = vperm.slane %v941, 0
        %v968 = vmul.f32 %v964, %v966
        %v970 = vperm.slane %v942, 0
        %v972 = vadd.f32 %v968, %v970
        %v973 = vld [vmem:[%s1 + $0x8] sm:$0xf]
        %v974 = vld [vmem:[%s1 + $0x24] sm:$0xf]
        %v975 = vld [vmem:[%s1 + $0x40] sm:$0xf]
        %v976 = vld [vmem:[%s1 + $0x5c] sm:$0xf]
        %v977 = vpack.c.bf16 %v972, %v972
        %v978 = vld [vmem:[%s9 + $0x6] sm:$0x1]
        %v980 = vperm.slane %v978, 0
        %v986 = vunpack.c.l.b16 %v973
        %v987 = vunpack.c.l.b16 %v974
        %v988 = vunpack.c.l.b16 %v975
        %v989 = vunpack.c.l.b16 %v976
        %v990 = vpack.c.b16 %v987, %v986
        %v991 = vpack.c.b16 %v989, %v988
        %v995 = vsel %vm593, %v977, 0
        %997 = vmatpush.bf16.msra.mxu0 0
        %998 = vmatpush.bf16.msra.mxu0 0
        %999 = vmatpush.bf16.msra.mxu0 0
        %1000 = vmatpush.bf16.msra.mxu0 0
        %1001 = vmatpush.bf16.msra.mxu0 0
        %1002 = vmatpush.bf16.msra.mxu0 0
        %1003 = vmatpush.bf16.msra.mxu0 %v991
        %1004 = vmatpush.bf16.msra.mxu0 %v990
        %1005 = vmatmul.bf16.gmra.mxu0 %v995
        %v1006 = vpop.f32.mrf.mxu0
        %v1007 = vadd.f32 %v980, %v1006
        %v1008 = vpop.f32.mrf.mxu0
        %1009 = vdwg.mxu0
        %v1010 = vmul.f32 %v1007, %v1007
        %v1011 = vmul.f32 %v1007, %v1010
        %v1012 = vmul.f32 %v1011, 0.044715
        %v1013 = vadd.f32 %v1007, %v1012
        %v1014 = vmul.f32 %v1013, 0.7978846
        %v1015 = vtanh.pop %v1014
        %v1016 = vadd.f32 %v1015, 1.0
        %v1017 = vmul.f32 %v1016, 0.5
        %v1018 = vmul.f32 %v1007, %v1017
        %v1019 = vld [vmem:[%s5] sm:$0xf]
        %v1020 = vld [vmem:[%s5 + $0x4] sm:$0xf]
        %v1021 = vld [vmem:[%s5 + $0x8] sm:$0xf]
        %v1022 = vld [vmem:[%s5 + $0xc] sm:$0xf]
        %v1023 = vld [vmem:[%s5 + $0x10] sm:$0xf]
        %v1024 = vld [vmem:[%s5 + $0x14] sm:$0xf]
        %v1025 = vld [vmem:[%s5 + $0x18] sm:$0xf]
        %v1026 = vld [vmem:[%s5 + $0x1c] sm:$0xf]
        %v1027 = vld [vmem:[%s5 + $0x20] sm:$0xf]
        %v1028 = vld [vmem:[%s5 + $0x24] sm:$0xf]
        %v1029 = vld [vmem:[%s5 + $0x28] sm:$0xf]
        %v1030 = vld [vmem:[%s5 + $0x2c] sm:$0xf]
        %v1031 = vld [vmem:[%s5 + $0x30] sm:$0xf]
        %v1032 = vld [vmem:[%s5 + $0x34] sm:$0xf]
        %v1033 = vld [vmem:[%s5 + $0x38] sm:$0xf]
        %v1034 = vld [vmem:[%s5 + $0x3c] sm:$0xf]
        %v1035 = vpack.c.bf16 %v1018, %v1018
        %v1036 = vld [vmem:[%s9 + $0x7] sm:$0x1]
        %v1038 = vperm.slane %v1036, 0
        %v1056 = vunpack.c.l.b16 %v1019
        %v1057 = vunpack.c.l.b16 %v1020
        %v1058 = vunpack.c.l.b16 %v1021
        %v1059 = vunpack.c.l.b16 %v1022
        %v1060 = vunpack.c.l.b16 %v1023
        %v1061 = vunpack.c.l.b16 %v1024
        %v1062 = vunpack.c.l.b16 %v1025
        %v1063 = vunpack.c.l.b16 %v1026
        %v1064 = vunpack.c.l.b16 %v1027
        %v1065 = vunpack.c.l.b16 %v1028
        %v1066 = vunpack.c.l.b16 %v1029
        %v1067 = vunpack.c.l.b16 %v1030
        %v1068 = vunpack.c.l.b16 %v1031
        %v1069 = vunpack.c.l.b16 %v1032
        %v1070 = vunpack.c.l.b16 %v1033
        %v1071 = vunpack.c.l.b16 %v1034
        %v1072 = vpack.c.b16 %v1057, %v1056
        %v1073 = vpack.c.b16 %v1059, %v1058
        %v1074 = vpack.c.b16 %v1061, %v1060
        %v1075 = vpack.c.b16 %v1063, %v1062
        %v1076 = vpack.c.b16 %v1065, %v1064
        %v1077 = vpack.c.b16 %v1067, %v1066
        %v1078 = vpack.c.b16 %v1069, %v1068
        %v1079 = vpack.c.b16 %v1071, %v1070
        %1088 = vmatpush.bf16.msra.mxu0 %v1079
        %1089 = vmatpush.bf16.msra.mxu0 %v1078
        %1090 = vmatpush.bf16.msra.mxu0 %v1077
        %1091 = vmatpush.bf16.msra.mxu0 %v1076
        %1092 = vmatpush.bf16.msra.mxu0 %v1075
        %1093 = vmatpush.bf16.msra.mxu0 %v1074
        %1094 = vmatpush.bf16.msra.mxu0 %v1073
        %1095 = vmatpush.bf16.msra.mxu0 %v1072
        %1096 = vmatmul.bf16.gmra.mxu0 %v1035
        %v1097 = vpop.f32.mrf.mxu0
        %v1098 = vadd.f32 %v1038, %v1097
        %v1099 = vpop.f32.mrf.mxu0
        %1100 = vdwg.mxu0
        %v1101 = vadd.f32 %v940, %v1098
        %v1102 = vld [vmem:[%s9 + $0x8] sm:$0x1]
        %v1103 = vld [vmem:[%s9 + $0x9] sm:$0x1]
        %v1104 = vsel %vm534, %v1101, 0.0
        %1105 = vadd.xlane.f32.xlu0 %v1104
        %v1106 = vpop.xlane.xlu0 %1105
        %v1107 = vmul.f32 %v1106, %v544
        %v1108 = vsub.f32 %v1101, %v1107
        %v1109 = vmul.f32 %v1108, %v1108
        %v1110 = vsel %vm534, %v1109, 0.0
        %1111 = vadd.xlane.f32.xlu0 %v1110
        %v1112 = vpop.xlane.xlu0 %1111
        %v1113 = vmul.f32 %v1112, %v544
        %v1114 = vadd.f32 %v1113, 1e-05
        %v1115 = vrsqrt.pop %v1114
        %v1116 = vmul.f32 %v1115, %v1114
        %v1117 = vmul.f32 %v1116, %v1115
        %v1118 = vmul.f32 0.5, %v1117
        %v1119 = vsub.f32 1.5, %v1118
        %v1120 = vmul.f32 %v1115, %v1119
        %vm1121 = vweird.f32 %v1114
        %vm1122 = vweird.f32 %v1115
        %vm1123 = vmor %vm1121, %vm1122
        %v1124 = vsel %vm1123, %v1115, %v1120
        %v1125 = vmul.f32 %v1108, %v1124
        %v1127 = vperm.slane %v1102, 0
        %v1129 = vmul.f32 %v1125, %v1127
        %v1131 = vperm.slane %v1103, 0
        %v1133 = vadd.f32 %v1129, %v1131
        %v1134 = vld [vmem:[%s1 + $0xc] sm:$0xf]
        %v1135 = vld [vmem:[%s1 + $0x28] sm:$0xf]
        %v1136 = vld [vmem:[%s1 + $0x44] sm:$0xf]
        %v1137 = vld [vmem:[%s1 + $0x60] sm:$0xf]
        %v1138 = vpack.c.bf16 %v1133, %v1133
        %v1139 = vld [vmem:[%s9 + $0xa] sm:$0x1]
        %v1141 = vperm.slane %v1139, 0
        %v1147 = vunpack.c.l.b16 %v1134
        %v1148 = vunpack.c.l.b16 %v1135
        %v1149 = vunpack.c.l.b16 %v1136
        %v1150 = vunpack.c.l.b16 %v1137
        %v1151 = vpack.c.b16 %v1148, %v1147
        %v1152 = vpack.c.b16 %v1150, %v1149
        %v1156 = vsel %vm593, %v1138, 0
        %1158 = vmatpush.bf16.msra.mxu0 0
        %1159 = vmatpush.bf16.msra.mxu0 0
        %1160 = vmatpush.bf16.msra.mxu0 0
        %1161 = vmatpush.bf16.msra.mxu0 0
        %1162 = vmatpush.bf16.msra.mxu0 0
        %1163 = vmatpush.bf16.msra.mxu0 0
        %1164 = vmatpush.bf16.msra.mxu0 %v1152
        %1165 = vmatpush.bf16.msra.mxu0 %v1151
        %1166 = vmatmul.bf16.gmra.mxu0 %v1156
        %v1167 = vpop.f32.mrf.mxu0
        %v1168 = vadd.f32 %v1141, %v1167
        %v1169 = vpop.f32.mrf.mxu0
        %1170 = vdwg.mxu0
        %1172 = vrot.lane.b32.xlu0 %v1168, 96
        %v1173 = vpop.permute.xlu0 %1172
        %v1174 = vsel %vm613, %v1168, 0
        %v1176 = vsel %vm613, %v1173, 0
        %1178 = vmatpush.xpose.msra.mxu0 0.0
        %1179 = vmatpush.xpose.msra.mxu0 0.0
        %1180 = vmatpush.xpose.msra.mxu0 0.0
        %1181 = vmatpush.xpose.msra.mxu0 0.0
        %1182 = vmatpush.xpose.msra.mxu0 0.0
        %1183 = vmatpush.xpose.msra.mxu0 0.0
        %1184 = vmatpush.xpose.msra.mxu0 0.0
        %1185 = vmatpush.xpose.msra.mxu0 0.0
        %1186 = vmatpush.xpose.msra.mxu0 0.0
        %1187 = vmatpush.xpose.msra.mxu0 0.0
        %1188 = vmatpush.xpose.msra.mxu0 0.0
        %1189 = vmatpush.xpose.msra.mxu0 0.0
        %1190 = vmatpush.xpose.msra.mxu0 0.0
        %1191 = vmatpush.xpose.msra.mxu0 0.0
        %1192 = vmatpush.xpose.msra.mxu0 0.0
        %1193 = vmatpush.xpose.msra.mxu0 %v1176
        %1194 = vmatmul.f32.gmra.mxu0 %v1174
        %v1195 = vpop.f32.mrf.mxu0
        %v1196 = vadd.f32 0.0, %v1195
        %1197 = vdwg.mxu0
        %v1198 = vmul.f32 %v1196, 0.35355338
        %v1199 = vsel %vm639, %v1198, -inf
        %1200 = vmax.xlane.f32.xlu0 %v1199
        %v1201 = vpop.xlane.xlu0 %1200
        %v1202 = vsub.f32 %v1198, %v1201
        %v1203 = vmul.f32 %v1202, 1.442695
        %v1204 = vpow.pop %v1203
        %v1205 = vsel %vm639, %v1204, 0.0
        %1206 = vadd.xlane.f32.xlu0 %v1205
        %v1207 = vpop.xlane.xlu0 %1206
        %v1208 = vrcp.pop %v1207
        %v1209 = vmul.f32 %v1204, %v1208
        %1210 = vrot.lane.b32.xlu0 %v1168, 64
        %v1211 = vpop.permute.xlu0 %1210
        %v1213 = vsel %vm653, %v1209, 0
        %v1215 = vsel %vm657, %v1211, 0
        %1217 = vmatpush.msra.mxu0 0.0
        %1218 = vmatpush.msra.mxu0 0.0
        %1219 = vmatpush.msra.mxu0 0.0
        %1220 = vmatpush.msra.mxu0 0.0
        %1221 = vmatpush.msra.mxu0 0.0
        %1222 = vmatpush.msra.mxu0 0.0
        %1223 = vmatpush.msra.mxu0 0.0
        %1224 = vmatpush.msra.mxu0 0.0
        %1225 = vmatpush.msra.mxu0 0.0
        %1226 = vmatpush.msra.mxu0 0.0
        %1227 = vmatpush.msra.mxu0 0.0
        %1228 = vmatpush.msra.mxu0 0.0
        %1229 = vmatpush.msra.mxu0 0.0
        %1230 = vmatpush.msra.mxu0 0.0
        %1231 = vmatpush.msra.mxu0 0.0
        %1232 = vmatpush.msra.mxu0 %v1215
        %1233 = vmatmul.f32.gmra.mxu0 %v1213
        %v1234 = vpop.f32.mrf.mxu0
        %v1235 = vadd.f32 0.0, %v1234
        %1236 = vdwg.mxu0
        %1237 = vst.msk [vmem:[#allocation2] sm:$0xf] %vm680, %v1235
        %1238 = vrot.lane.b32.xlu0 %v1168, 120
        %v1239 = vpop.permute.xlu0 %1238
        %1240 = vrot.lane.b32.xlu0 %v1168, 88
        %v1241 = vpop.permute.xlu0 %1240
        %v1242 = vsel %vm613, %v1239, 0
        %v1244 = vsel %vm613, %v1241, 0
        %1246 = vmatpush.xpose.msra.mxu0 0.0
        %1247 = vmatpush.xpose.msra.mxu0 0.0
        %1248 = vmatpush.xpose.msra.mxu0 0.0
        %1249 = vmatpush.xpose.msra.mxu0 0.0
        %1250 = vmatpush.xpose.msra.mxu0 0.0
        %1251 = vmatpush.xpose.msra.mxu0 0.0
        %1252 = vmatpush.xpose.msra.mxu0 0.0
        %1253 = vmatpush.xpose.msra.mxu0 0.0
        %1254 = vmatpush.xpose.msra.mxu0 0.0
        %1255 = vmatpush.xpose.msra.mxu0 0.0
        %1256 = vmatpush.xpose.msra.mxu0 0.0
        %1257 = vmatpush.xpose.msra.mxu0 0.0
        %1258 = vmatpush.xpose.msra.mxu0 0.0
        %1259 = vmatpush.xpose.msra.mxu0 0.0
        %1260 = vmatpush.xpose.msra.mxu0 0.0
        %1261 = vmatpush.xpose.msra.mxu0 %v1244
        %1262 = vmatmul.f32.gmra.mxu0 %v1242
        %v1263 = vpop.f32.mrf.mxu0
        %v1264 = vadd.f32 0.0, %v1263
        %1265 = vdwg.mxu0
        %v1266 = vmul.f32 %v1264, 0.35355338
        %v1267 = vsel %vm639, %v1266, -inf
        %1268 = vmax.xlane.f32.xlu0 %v1267
        %v1269 = vpop.xlane.xlu0 %1268
        %v1270 = vsub.f32 %v1266, %v1269
        %v1271 = vmul.f32 %v1270, 1.442695
        %v1272 = vpow.pop %v1271
        %v1273 = vsel %vm639, %v1272, 0.0
        %1274 = vadd.xlane.f32.xlu0 %v1273
        %v1275 = vpop.xlane.xlu0 %1274
        %v1276 = vrcp.pop %v1275
        %v1277 = vmul.f32 %v1272, %v1276
        %1278 = vrot.lane.b32.xlu0 %v1168, 56
        %v1279 = vpop.permute.xlu0 %1278
        %v1281 = vsel %vm653, %v1277, 0
        %v1283 = vsel %vm657, %v1279, 0
        %1285 = vmatpush.msra.mxu0 0.0
        %1286 = vmatpush.msra.mxu0 0.0
        %1287 = vmatpush.msra.mxu0 0.0
        %1288 = vmatpush.msra.mxu0 0.0
        %1289 = vmatpush.msra.mxu0 0.0
        %1290 = vmatpush.msra.mxu0 0.0
        %1291 = vmatpush.msra.mxu0 0.0
        %1292 = vmatpush.msra.mxu0 0.0
        %1293 = vmatpush.msra.mxu0 0.0
        %1294 = vmatpush.msra.mxu0 0.0
        %1295 = vmatpush.msra.mxu0 0.0
        %1296 = vmatpush.msra.mxu0 0.0
        %1297 = vmatpush.msra.mxu0 0.0
        %1298 = vmatpush.msra.mxu0 0.0
        %1299 = vmatpush.msra.mxu0 0.0
        %1300 = vmatpush.msra.mxu0 %v1283
        %1301 = vmatmul.f32.gmra.mxu0 %v1281
        %v1302 = vpop.f32.mrf.mxu0
        %v1303 = vadd.f32 0.0, %v1302
        %1304 = vdwg.mxu0
        %1306 = vrot.lane.b32.xlu0 %v1303, 8
        %v1307 = vpop.permute.xlu0 %1306
        %1309 = vst.msk [vmem:[#allocation2] sm:$0xf] %vm753, %v1307
        %1310 = vrot.lane.b32.xlu0 %v1168, 112
        %v1311 = vpop.permute.xlu0 %1310
        %1312 = vrot.lane.b32.xlu0 %v1168, 80
        %v1313 = vpop.permute.xlu0 %1312
        %v1314 = vsel %vm613, %v1311, 0
        %v1316 = vsel %vm613, %v1313, 0
        %1318 = vmatpush.xpose.msra.mxu0 0.0
        %1319 = vmatpush.xpose.msra.mxu0 0.0
        %1320 = vmatpush.xpose.msra.mxu0 0.0
        %1321 = vmatpush.xpose.msra.mxu0 0.0
        %1322 = vmatpush.xpose.msra.mxu0 0.0
        %1323 = vmatpush.xpose.msra.mxu0 0.0
        %1324 = vmatpush.xpose.msra.mxu0 0.0
        %1325 = vmatpush.xpose.msra.mxu0 0.0
        %1326 = vmatpush.xpose.msra.mxu0 0.0
        %1327 = vmatpush.xpose.msra.mxu0 0.0
        %1328 = vmatpush.xpose.msra.mxu0 0.0
        %1329 = vmatpush.xpose.msra.mxu0 0.0
        %1330 = vmatpush.xpose.msra.mxu0 0.0
        %1331 = vmatpush.xpose.msra.mxu0 0.0
        %1332 = vmatpush.xpose.msra.mxu0 0.0
        %1333 = vmatpush.xpose.msra.mxu0 %v1316
        %1334 = vmatmul.f32.gmra.mxu0 %v1314
        %v1335 = vpop.f32.mrf.mxu0
        %v1336 = vadd.f32 0.0, %v1335
        %1337 = vdwg.mxu0
        %v1338 = vmul.f32 %v1336, 0.35355338
        %v1339 = vsel %vm639, %v1338, -inf
        %1340 = vmax.xlane.f32.xlu0 %v1339
        %v1341 = vpop.xlane.xlu0 %1340
        %v1342 = vsub.f32 %v1338, %v1341
        %v1343 = vmul.f32 %v1342, 1.442695
        %v1344 = vpow.pop %v1343
        %v1345 = vsel %vm639, %v1344, 0.0
        %1346 = vadd.xlane.f32.xlu0 %v1345
        %v1347 = vpop.xlane.xlu0 %1346
        %v1348 = vrcp.pop %v1347
        %v1349 = vmul.f32 %v1344, %v1348
        %1350 = vrot.lane.b32.xlu0 %v1168, 48
        %v1351 = vpop.permute.xlu0 %1350
        %v1353 = vsel %vm653, %v1349, 0
        %v1355 = vsel %vm657, %v1351, 0
        %1357 = vmatpush.msra.mxu0 0.0
        %1358 = vmatpush.msra.mxu0 0.0
        %1359 = vmatpush.msra.mxu0 0.0
        %1360 = vmatpush.msra.mxu0 0.0
        %1361 = vmatpush.msra.mxu0 0.0
        %1362 = vmatpush.msra.mxu0 0.0
        %1363 = vmatpush.msra.mxu0 0.0
        %1364 = vmatpush.msra.mxu0 0.0
        %1365 = vmatpush.msra.mxu0 0.0
        %1366 = vmatpush.msra.mxu0 0.0
        %1367 = vmatpush.msra.mxu0 0.0
        %1368 = vmatpush.msra.mxu0 0.0
        %1369 = vmatpush.msra.mxu0 0.0
        %1370 = vmatpush.msra.mxu0 0.0
        %1371 = vmatpush.msra.mxu0 0.0
        %1372 = vmatpush.msra.mxu0 %v1355
        %1373 = vmatmul.f32.gmra.mxu0 %v1353
        %v1374 = vpop.f32.mrf.mxu0
        %v1375 = vadd.f32 0.0, %v1374
        %1376 = vdwg.mxu0
        %1378 = vrot.lane.b32.xlu0 %v1375, 16
        %v1379 = vpop.permute.xlu0 %1378
        %1381 = vst.msk [vmem:[#allocation2] sm:$0xf] %vm826, %v1379
        %1382 = vrot.lane.b32.xlu0 %v1168, 104
        %v1383 = vpop.permute.xlu0 %1382
        %1384 = vrot.lane.b32.xlu0 %v1168, 72
        %v1385 = vpop.permute.xlu0 %1384
        %v1386 = vsel %vm613, %v1383, 0
        %v1388 = vsel %vm613, %v1385, 0
        %1390 = vmatpush.xpose.msra.mxu0 0.0
        %1391 = vmatpush.xpose.msra.mxu0 0.0
        %1392 = vmatpush.xpose.msra.mxu0 0.0
        %1393 = vmatpush.xpose.msra.mxu0 0.0
        %1394 = vmatpush.xpose.msra.mxu0 0.0
        %1395 = vmatpush.xpose.msra.mxu0 0.0
        %1396 = vmatpush.xpose.msra.mxu0 0.0
        %1397 = vmatpush.xpose.msra.mxu0 0.0
        %1398 = vmatpush.xpose.msra.mxu0 0.0
        %1399 = vmatpush.xpose.msra.mxu0 0.0
        %1400 = vmatpush.xpose.msra.mxu0 0.0
        %1401 = vmatpush.xpose.msra.mxu0 0.0
        %1402 = vmatpush.xpose.msra.mxu0 0.0
        %1403 = vmatpush.xpose.msra.mxu0 0.0
        %1404 = vmatpush.xpose.msra.mxu0 0.0
        %1405 = vmatpush.xpose.msra.mxu0 %v1388
        %1406 = vmatmul.f32.gmra.mxu0 %v1386
        %v1407 = vpop.f32.mrf.mxu0
        %v1408 = vadd.f32 0.0, %v1407
        %1409 = vdwg.mxu0
        %v1410 = vmul.f32 %v1408, 0.35355338
        %v1411 = vsel %vm639, %v1410, -inf
        %1412 = vmax.xlane.f32.xlu0 %v1411
        %v1413 = vpop.xlane.xlu0 %1412
        %v1414 = vsub.f32 %v1410, %v1413
        %v1415 = vmul.f32 %v1414, 1.442695
        %v1416 = vpow.pop %v1415
        %v1417 = vsel %vm639, %v1416, 0.0
        %1418 = vadd.xlane.f32.xlu0 %v1417
        %v1419 = vpop.xlane.xlu0 %1418
        %v1420 = vrcp.pop %v1419
        %v1421 = vmul.f32 %v1416, %v1420
        %1422 = vrot.lane.b32.xlu0 %v1168, 40
        %v1423 = vpop.permute.xlu0 %1422
        %v1425 = vsel %vm653, %v1421, 0
        %v1427 = vsel %vm657, %v1423, 0
        %1429 = vmatpush.msra.mxu0 0.0
        %1430 = vmatpush.msra.mxu0 0.0
        %1431 = vmatpush.msra.mxu0 0.0
        %1432 = vmatpush.msra.mxu0 0.0
        %1433 = vmatpush.msra.mxu0 0.0
        %1434 = vmatpush.msra.mxu0 0.0
        %1435 = vmatpush.msra.mxu0 0.0
        %1436 = vmatpush.msra.mxu0 0.0
        %1437 = vmatpush.msra.mxu0 0.0
        %1438 = vmatpush.msra.mxu0 0.0
        %1439 = vmatpush.msra.mxu0 0.0
        %1440 = vmatpush.msra.mxu0 0.0
        %1441 = vmatpush.msra.mxu0 0.0
        %1442 = vmatpush.msra.mxu0 0.0
        %1443 = vmatpush.msra.mxu0 0.0
        %1444 = vmatpush.msra.mxu0 %v1427
        %1445 = vmatmul.f32.gmra.mxu0 %v1425
        %v1446 = vpop.f32.mrf.mxu0
        %v1447 = vadd.f32 0.0, %v1446
        %1448 = vdwg.mxu0
        %1450 = vrot.lane.b32.xlu0 %v1447, 24
        %v1451 = vpop.permute.xlu0 %1450
        %1453 = vst.msk [vmem:[#allocation2] sm:$0xf] %vm899, %v1451
        %v1454 = vld [vmem:[#allocation2] sm:$0xf]
        %v1455 = vld [vmem:[%s1 + $0x10] sm:$0xf]
        %v1456 = vld [vmem:[%s1 + $0x2c] sm:$0xf]
        %v1457 = vld [vmem:[%s1 + $0x48] sm:$0xf]
        %v1458 = vld [vmem:[%s1 + $0x64] sm:$0xf]
        %v1459 = vpack.c.bf16 %v1454, %v1454
        %v1464 = vunpack.c.l.b16 %v1455
        %v1465 = vunpack.c.l.b16 %v1456
        %v1466 = vunpack.c.l.b16 %v1457
        %v1467 = vunpack.c.l.b16 %v1458
        %v1468 = vpack.c.b16 %v1465, %v1464
        %v1469 = vpack.c.b16 %v1467, %v1466
        %v1473 = vsel %vm593, %v1459, 0
        %1475 = vmatpush.bf16.msra.mxu0 0
        %1476 = vmatpush.bf16.msra.mxu0 0
        %1477 = vmatpush.bf16.msra.mxu0 0
        %1478 = vmatpush.bf16.msra.mxu0 0
        %1479 = vmatpush.bf16.msra.mxu0 0
        %1480 = vmatpush.bf16.msra.mxu0 0
        %1481 = vmatpush.bf16.msra.mxu0 %v1469
        %1482 = vmatpush.bf16.msra.mxu0 %v1468
        %1483 = vmatmul.bf16.gmra.mxu0 %v1473
        %v1484 = vpop.f32.mrf.mxu0
        %v1485 = vadd.f32 0.0, %v1484
        %v1486 = vpop.f32.mrf.mxu0
        %1487 = vdwg.mxu0
        %v1488 = vadd.f32 %v1101, %v1485
        %v1489 = vld [vmem:[%s9 + $0xb] sm:$0x1]
        %v1491 = vperm.slane %v1489, 0
        %v1493 = vadd.f32 %v1488, %v1491
        %v1494 = vld [vmem:[%s9 + $0xc] sm:$0x1]
        %v1495 = vld [vmem:[%s9 + $0xd] sm:$0x1]
        %v1496 = vsel %vm534, %v1493, 0.0
        %1497 = vadd.xlane.f32.xlu0 %v1496
        %v1498 = vpop.xlane.xlu0 %1497
        %v1499 = vmul.f32 %v1498, %v544
        %v1500 = vsub.f32 %v1493, %v1499
        %v1501 = vmul.f32 %v1500, %v1500
        %v1502 = vsel %vm534, %v1501, 0.0
        %1503 = vadd.xlane.f32.xlu0 %v1502
        %v1504 = vpop.xlane.xlu0 %1503
        %v1505 = vmul.f32 %v1504, %v544
        %v1506 = vadd.f32 %v1505, 1e-05
        %v1507 = vrsqrt.pop %v1506
        %v1508 = vmul.f32 %v1507, %v1506
        %v1509 = vmul.f32 %v1508, %v1507
        %v1510 = vmul.f32 0.5, %v1509
        %v1511 = vsub.f32 1.5, %v1510
        %v1512 = vmul.f32 %v1507, %v1511
        %vm1513 = vweird.f32 %v1506
        %vm1514 = vweird.f32 %v1507
        %vm1515 = vmor %vm1513, %vm1514
        %v1516 = vsel %vm1515, %v1507, %v1512
        %v1517 = vmul.f32 %v1500, %v1516
        %v1519 = vperm.slane %v1494, 0
        %v1521 = vmul.f32 %v1517, %v1519
        %v1523 = vperm.slane %v1495, 0
        %v1525 = vadd.f32 %v1521, %v1523
        %v1526 = vld [vmem:[%s1 + $0x14] sm:$0xf]
        %v1527 = vld [vmem:[%s1 + $0x30] sm:$0xf]
        %v1528 = vld [vmem:[%s1 + $0x4c] sm:$0xf]
        %v1529 = vld [vmem:[%s1 + $0x68] sm:$0xf]
        %v1530 = vpack.c.bf16 %v1525, %v1525
        %v1531 = vld [vmem:[%s9 + $0xe] sm:$0x1]
        %v1533 = vperm.slane %v1531, 0
        %v1539 = vunpack.c.l.b16 %v1526
        %v1540 = vunpack.c.l.b16 %v1527
        %v1541 = vunpack.c.l.b16 %v1528
        %v1542 = vunpack.c.l.b16 %v1529
        %v1543 = vpack.c.b16 %v1540, %v1539
        %v1544 = vpack.c.b16 %v1542, %v1541
        %v1548 = vsel %vm593, %v1530, 0
        %1550 = vmatpush.bf16.msra.mxu0 0
        %1551 = vmatpush.bf16.msra.mxu0 0
        %1552 = vmatpush.bf16.msra.mxu0 0
        %1553 = vmatpush.bf16.msra.mxu0 0
        %1554 = vmatpush.bf16.msra.mxu0 0
        %1555 = vmatpush.bf16.msra.mxu0 0
        %1556 = vmatpush.bf16.msra.mxu0 %v1544
        %1557 = vmatpush.bf16.msra.mxu0 %v1543
        %1558 = vmatmul.bf16.gmra.mxu0 %v1548
        %v1559 = vpop.f32.mrf.mxu0
        %v1560 = vadd.f32 %v1533, %v1559
        %v1561 = vpop.f32.mrf.mxu0
        %1562 = vdwg.mxu0
        %v1563 = vmul.f32 %v1560, %v1560
        %v1564 = vmul.f32 %v1560, %v1563
        %v1565 = vmul.f32 %v1564, 0.044715
        %v1566 = vadd.f32 %v1560, %v1565
        %v1567 = vmul.f32 %v1566, 0.7978846
        %v1568 = vtanh.pop %v1567
        %v1569 = vadd.f32 %v1568, 1.0
        %v1570 = vmul.f32 %v1569, 0.5
        %v1571 = vmul.f32 %v1560, %v1570
        %v1572 = vld [vmem:[%s5 + $0x40] sm:$0xf]
        %v1573 = vld [vmem:[%s5 + $0x44] sm:$0xf]
        %v1574 = vld [vmem:[%s5 + $0x48] sm:$0xf]
        %v1575 = vld [vmem:[%s5 + $0x4c] sm:$0xf]
        %v1576 = vld [vmem:[%s5 + $0x50] sm:$0xf]
        %v1577 = vld [vmem:[%s5 + $0x54] sm:$0xf]
        %v1578 = vld [vmem:[%s5 + $0x58] sm:$0xf]
        %v1579 = vld [vmem:[%s5 + $0x5c] sm:$0xf]
        %v1580 = vld [vmem:[%s5 + $0x60] sm:$0xf]
        %v1581 = vld [vmem:[%s5 + $0x64] sm:$0xf]
        %v1582 = vld [vmem:[%s5 + $0x68] sm:$0xf]
        %v1583 = vld [vmem:[%s5 + $0x6c] sm:$0xf]
        %v1584 = vld [vmem:[%s5 + $0x70] sm:$0xf]
        %v1585 = vld [vmem:[%s5 + $0x74] sm:$0xf]
        %v1586 = vld [vmem:[%s5 + $0x78] sm:$0xf]
        %v1587 = vld [vmem:[%s5 + $0x7c] sm:$0xf]
        %v1588 = vpack.c.bf16 %v1571, %v1571
        %v1589 = vld [vmem:[%s9 + $0xf] sm:$0x1]
        %v1591 = vperm.slane %v1589, 0
        %v1609 = vunpack.c.l.b16 %v1572
        %v1610 = vunpack.c.l.b16 %v1573
        %v1611 = vunpack.c.l.b16 %v1574
        %v1612 = vunpack.c.l.b16 %v1575
        %v1613 = vunpack.c.l.b16 %v1576
        %v1614 = vunpack.c.l.b16 %v1577
        %v1615 = vunpack.c.l.b16 %v1578
        %v1616 = vunpack.c.l.b16 %v1579
        %v1617 = vunpack.c.l.b16 %v1580
        %v1618 = vunpack.c.l.b16 %v1581
        %v1619 = vunpack.c.l.b16 %v1582
        %v1620 = vunpack.c.l.b16 %v1583
        %v1621 = vunpack.c.l.b16 %v1584
        %v1622 = vunpack.c.l.b16 %v1585
        %v1623 = vunpack.c.l.b16 %v1586
        %v1624 = vunpack.c.l.b16 %v1587
        %v1625 = vpack.c.b16 %v1610, %v1609
        %v1626 = vpack.c.b16 %v1612, %v1611
        %v1627 = vpack.c.b16 %v1614, %v1613
        %v1628 = vpack.c.b16 %v1616, %v1615
        %v1629 = vpack.c.b16 %v1618, %v1617
        %v1630 = vpack.c.b16 %v1620, %v1619
        %v1631 = vpack.c.b16 %v1622, %v1621
        %v1632 = vpack.c.b16 %v1624, %v1623
        %1641 = vmatpush.bf16.msra.mxu0 %v1632
        %1642 = vmatpush.bf16.msra.mxu0 %v1631
        %1643 = vmatpush.bf16.msra.mxu0 %v1630
        %1644 = vmatpush.bf16.msra.mxu0 %v1629
        %1645 = vmatpush.bf16.msra.mxu0 %v1628
        %1646 = vmatpush.bf16.msra.mxu0 %v1627
        %1647 = vmatpush.bf16.msra.mxu0 %v1626
        %1648 = vmatpush.bf16.msra.mxu0 %v1625
        %1649 = vmatmul.bf16.gmra.mxu0 %v1588
        %v1650 = vpop.f32.mrf.mxu0
        %v1651 = vadd.f32 %v1591, %v1650
        %v1652 = vpop.f32.mrf.mxu0
        %1653 = vdwg.mxu0
        %v1654 = vadd.f32 %v1493, %v1651
        %v1655 = vld [vmem:[%s5 + $0x80] sm:$0xf]
        %v1656 = vpack.c.bf16 %v1654, %v1654
        %v1658 = vsel %vm593, %v1655, 0
        %v1661 = vsel %vm593, %v1656, 0
        %1663 = vmatpush.bf16.xpose.msra.mxu0 0
        %1664 = vmatpush.bf16.xpose.msra.mxu0 0
        %1665 = vmatpush.bf16.xpose.msra.mxu0 0
        %1666 = vmatpush.bf16.xpose.msra.mxu0 0
        %1667 = vmatpush.bf16.xpose.msra.mxu0 0
        %1668 = vmatpush.bf16.xpose.msra.mxu0 0
        %1669 = vmatpush.bf16.xpose.msra.mxu0 0
        %1670 = vmatpush.bf16.xpose.msra.mxu0 %v1661
        %1671 = vmatmul.bf16.gmra.mxu0 %v1658
        %v1672 = vpop.f32.mrf.mxu0
        %v1673 = vadd.f32 0.0, %v1672
        %v1674 = vpop.f32.mrf.mxu0
        %1675 = vdwg.mxu0
        %v1676 = vmul.f32 %v1673, 0.17677669
        %v1677 = vsel %vm653, %v1676, -inf
        %1678 = vmax.xlane.f32.xlu0 %v1677
        %v1679 = vpop.xlane.xlu0 %1678
        %v1680 = vsub.f32 %v1676, %v1679
        %v1681 = vmul.f32 %v1680, 1.442695
        %v1682 = vpow.pop %v1681
        %v1683 = vsel %vm653, %v1682, 0.0
        %1684 = vadd.xlane.f32.xlu0 %v1683
        %v1685 = vpop.xlane.xlu0 %1684
        %v1686 = vrcp.pop %v1685
        %v1687 = vmul.f32 %v1682, %v1686
        %v1689 = vsel %vm653, %v1687, 0
        %v1692 = vsel %vm657, %v1654, 0
        %1694 = vmatpush.msra.mxu0 0.0
        %1695 = vmatpush.msra.mxu0 0.0
        %1696 = vmatpush.msra.mxu0 0.0
        %1697 = vmatpush.msra.mxu0 0.0
        %1698 = vmatpush.msra.mxu0 0.0
        %1699 = vmatpush.msra.mxu0 0.0
        %1700 = vmatpush.msra.mxu0 0.0
        %1701 = vmatpush.msra.mxu0 0.0
        %1702 = vmatpush.msra.mxu0 0.0
        %1703 = vmatpush.msra.mxu0 0.0
        %1704 = vmatpush.msra.mxu0 0.0
        %1705 = vmatpush.msra.mxu0 0.0
        %1706 = vmatpush.msra.mxu0 0.0
        %1707 = vmatpush.msra.mxu0 0.0
        %1708 = vmatpush.msra.mxu0 0.0
        %1709 = vmatpush.msra.mxu0 %v1692
        %1710 = vmatmul.f32.gmra.mxu0 %v1689
        %v1711 = vpop.f32.mrf.mxu0
        %v1712 = vadd.f32 0.0, %v1711
        %1713 = vdwg.mxu0
        %v1714 = vld [vmem:[%s1 + $0x18] sm:$0xf]
        %v1715 = vld [vmem:[%s1 + $0x34] sm:$0xf]
        %v1716 = vld [vmem:[%s1 + $0x50] sm:$0xf]
        %v1717 = vld [vmem:[%s1 + $0x6c] sm:$0xf]
        %v1718 = vpack.c.bf16 %v1712, %v1712
        %v1719 = vld [vmem:[%s9 + $0x10] sm:$0x1]
        %v1721 = vperm.slane %v1719, 0
        %v1727 = vunpack.c.l.b16 %v1714
        %v1728 = vunpack.c.l.b16 %v1715
        %v1729 = vunpack.c.l.b16 %v1716
        %v1730 = vunpack.c.l.b16 %v1717
        %v1731 = vpack.c.b16 %v1728, %v1727
        %v1732 = vpack.c.b16 %v1730, %v1729
        %v1736 = vsel %vm593, %v1718, 0
        %1738 = vmatpush.bf16.msra.mxu0 0
        %1739 = vmatpush.bf16.msra.mxu0 0
        %1740 = vmatpush.bf16.msra.mxu0 0
        %1741 = vmatpush.bf16.msra.mxu0 0
        %1742 = vmatpush.bf16.msra.mxu0 0
        %1743 = vmatpush.bf16.msra.mxu0 0
        %1744 = vmatpush.bf16.msra.mxu0 %v1732
        %1745 = vmatpush.bf16.msra.mxu0 %v1731
        %1746 = vmatmul.bf16.gmra.mxu0 %v1736
        %v1747 = vpop.f32.mrf.mxu0
        %v1748 = vadd.f32 %v1721, %v1747
        %v1749 = vpop.f32.mrf.mxu0
        %1750 = vdwg.mxu0
        %v1751 = vld [vmem:[%s9 + $0x11] sm:$0x1]
        %v1752 = vld [vmem:[%s9 + $0x12] sm:$0x1]
        %vm1753 = vcmask 523264
        %v1754 = vsel %vm1753, %v1748, 0.0
        %1755 = vadd.xlane.f32.xlu0 %v1754
        %v1756 = vpop.xlane.xlu0 %1755
        %v1757 = vrcp.pop 64.0
        %v1758 = vmul.f32 64.0, %v1757
        %v1759 = vsub.f32 1.0, %v1758
        %v1760 = vmul.f32 %v1757, %v1759
        %v1761 = vadd.f32 %v1757, %v1760
        %vm1762 = vweird.f32 %v1757
        %v1763 = vsel %vm1762, %v1757, %v1761
        %v1764 = vmul.f32 %v1756, %v1763
        %v1765 = vsub.f32 %v1748, %v1764
        %v1766 = vmul.f32 %v1765, %v1765
        %v1767 = vsel %vm1753, %v1766, 0.0
        %1768 = vadd.xlane.f32.xlu0 %v1767
        %v1769 = vpop.xlane.xlu0 %1768
        %v1770 = vmul.f32 %v1769, %v1763
        %v1771 = vadd.f32 %v1770, 1e-05
        %v1772 = vrsqrt.pop %v1771
        %v1773 = vmul.f32 %v1772, %v1771
        %v1774 = vmul.f32 %v1773, %v1772
        %v1775 = vmul.f32 0.5, %v1774
        %v1776 = vsub.f32 1.5, %v1775
        %v1777 = vmul.f32 %v1772, %v1776
        %vm1778 = vweird.f32 %v1771
        %vm1779 = vweird.f32 %v1772
        %vm1780 = vmor %vm1778, %vm1779
        %v1781 = vsel %vm1780, %v1772, %v1777
        %v1782 = vmul.f32 %v1765, %v1781
        %v1784 = vperm.slane %v1751, 0
        %v1786 = vmul.f32 %v1782, %v1784
        %v1788 = vperm.slane %v1752, 0
        %v1790 = vadd.f32 %v1786, %v1788
        %v1791 = vld [vmem:[#allocation3] sm:$0xff]
        %v1792 = vld [vmem:[#allocation3 + $0x2c] sm:$0xff]
        %v1793 = vld [vmem:[#allocation3 + $0x58] sm:$0xff]
        %v1794 = vld [vmem:[#allocation3 + $0x84] sm:$0xff]
        %v1795 = vld [vmem:[#allocation3 + $0xb0] sm:$0xff]
        %v1796 = vld [vmem:[#allocation3 + $0xdc] sm:$0xff]
        %v1797 = vld [vmem:[#allocation3 + $0x108] sm:$0xff]
        %v1798 = vld [vmem:[#allocation3 + $0x134] sm:$0xff]
        %v1799 = vpack.c.bf16 %v1790, %v1790
        %v1800 = vld [vmem:[%s9 + $0x13] sm:$0x3]
        %v1802 = vperm.slane %v1800, 0
        %v1803 = vperm.slane %v1800, 1
        %v1814 = vunpack.c.l.b16 %v1791
        %v1815 = vunpack.c.h.b16 %v1791
        %v1816 = vunpack.c.l.b16 %v1792
        %v1817 = vunpack.c.h.b16 %v1792
        %v1818 = vunpack.c.l.b16 %v1793
        %v1819 = vunpack.c.h.b16 %v1793
        %v1820 = vunpack.c.l.b16 %v1794
        %v1821 = vunpack.c.h.b16 %v1794
        %v1822 = vunpack.c.l.b16 %v1795
        %v1823 = vunpack.c.h.b16 %v1795
        %v1824 = vunpack.c.l.b16 %v1796
        %v1825 = vunpack.c.h.b16 %v1796
        %v1826 = vunpack.c.l.b16 %v1797
        %v1827 = vunpack.c.h.b16 %v1797
        %v1828 = vunpack.c.l.b16 %v1798
        %v1829 = vunpack.c.h.b16 %v1798
        %v1830 = vpack.c.b16 %v1816, %v1814
        %v1831 = vpack.c.b16 %v1817, %v1815
        %v1832 = vpack.c.b16 %v1820, %v1818
        %v1833 = vpack.c.b16 %v1821, %v1819
        %v1834 = vpack.c.b16 %v1824, %v1822
        %v1835 = vpack.c.b16 %v1825, %v1823
        %v1836 = vpack.c.b16 %v1828, %v1826
        %v1837 = vpack.c.b16 %v1829, %v1827
        %v1847 = vsel %vm1753, %v1799, 0
        %1849 = vmatpush.bf16.msra.mxu0 0
        %1850 = vmatpush.bf16.msra.mxu0 0
        %1851 = vmatpush.bf16.msra.mxu0 0
        %1852 = vmatpush.bf16.msra.mxu0 0
        %1853 = vmatpush.bf16.msra.mxu0 %v1836
        %1854 = vmatpush.bf16.msra.mxu0 %v1834
        %1855 = vmatpush.bf16.msra.mxu0 %v1832
        %1856 = vmatpush.bf16.msra.mxu0 %v1830
        %1857 = vmatmul.bf16.gmra.mxu0 %v1847
        %v1858 = vpop.f32.mrf.mxu0
        %v1859 = vadd.f32 %v1802, %v1858
        %v1860 = vpop.f32.mrf.mxu0
        %1861 = vdwg.mxu0
        %1862 = vmatpush.bf16.msra.mxu0 0
        %1863 = vmatpush.bf16.msra.mxu0 0
        %1864 = vmatpush.bf16.msra.mxu0 0
        %1865 = vmatpush.bf16.msra.mxu0 0
        %1866 = vmatpush.bf16.msra.mxu0 %v1837
        %1867 = vmatpush.bf16.msra.mxu0 %v1835
        %1868 = vmatpush.bf16.msra.mxu0 %v1833
        %1869 = vmatpush.bf16.msra.mxu0 %v1831
        %1870 = vmatmul.bf16.gmra.mxu0 %v1847
        %v1871 = vpop.f32.mrf.mxu0
        %v1872 = vadd.f32 %v1803, %v1871
        %v1873 = vpop.f32.mrf.mxu0
        %1874 = vdwg.mxu0
        %1876 = vrot.lane.b32.xlu0 %v1859, 64
        %v1877 = vpop.permute.xlu0 %1876
        %vm1878 = vcmask 130048
        %v1879 = vsel %vm1878, %v1859, 0
        %v1881 = vsel %vm1878, %v1877, 0
        %1883 = vmatpush.xpose.msra.mxu0 0.0
        %1884 = vmatpush.xpose.msra.mxu0 0.0
        %1885 = vmatpush.xpose.msra.mxu0 0.0
        %1886 = vmatpush.xpose.msra.mxu0 0.0
        %1887 = vmatpush.xpose.msra.mxu0 0.0
        %1888 = vmatpush.xpose.msra.mxu0 0.0
        %1889 = vmatpush.xpose.msra.mxu0 0.0
        %1890 = vmatpush.xpose.msra.mxu0 0.0
        %1891 = vmatpush.xpose.msra.mxu0 0.0
        %1892 = vmatpush.xpose.msra.mxu0 0.0
        %1893 = vmatpush.xpose.msra.mxu0 0.0
        %1894 = vmatpush.xpose.msra.mxu0 0.0
        %1895 = vmatpush.xpose.msra.mxu0 0.0
        %1896 = vmatpush.xpose.msra.mxu0 0.0
        %1897 = vmatpush.xpose.msra.mxu0 0.0
        %1898 = vmatpush.xpose.msra.mxu0 %v1881
        %1899 = vmatmul.f32.gmra.mxu0 %v1879
        %v1900 = vpop.f32.mrf.mxu0
        %v1901 = vadd.f32 0.0, %v1900
        %1902 = vdwg.mxu0
        %v1903 = vmul.f32 %v1901, 0.25
        %v1904 = vsel %vm613, %v1903, -inf
        %1905 = vmax.xlane.f32.xlu0 %v1904
        %v1906 = vpop.xlane.xlu0 %1905
        %v1907 = vsub.f32 %v1903, %v1906
        %v1908 = vmul.f32 %v1907, 1.442695
        %v1909 = vpow.pop %v1908
        %v1910 = vsel %vm613, %v1909, 0.0
        %1911 = vadd.xlane.f32.xlu0 %v1910
        %v1912 = vpop.xlane.xlu0 %1911
        %v1913 = vrcp.pop %v1912
        %v1914 = vmul.f32 %v1909, %v1913
        %v1916 = vsel %vm613, %v1914, 0
        %1918 = vmatpush.msra.mxu0 0.0
        %1919 = vmatpush.msra.mxu0 0.0
        %1920 = vmatpush.msra.mxu0 0.0
        %1921 = vmatpush.msra.mxu0 0.0
        %1922 = vmatpush.msra.mxu0 0.0
        %1923 = vmatpush.msra.mxu0 0.0
        %1924 = vmatpush.msra.mxu0 0.0
        %1925 = vmatpush.msra.mxu0 0.0
        %1926 = vmatpush.msra.mxu0 0.0
        %1927 = vmatpush.msra.mxu0 0.0
        %1928 = vmatpush.msra.mxu0 0.0
        %1929 = vmatpush.msra.mxu0 0.0
        %1930 = vmatpush.msra.mxu0 0.0
        %1931 = vmatpush.msra.mxu0 0.0
        %1932 = vmatpush.msra.mxu0 0.0
        %1933 = vmatpush.msra.mxu0 %v1872
        %1934 = vmatmul.f32.gmra.mxu0 %v1916
        %v1935 = vpop.f32.mrf.mxu0
        %v1936 = vadd.f32 0.0, %v1935
        %1937 = vdwg.mxu0
        %1938 = vst.msk [vmem:[#allocation2] sm:$0xff] %vm1878, %v1936
        %1939 = vrot.lane.b32.xlu0 %v1859, 112
        %v1940 = vpop.permute.xlu0 %1939
        %1941 = vrot.lane.b32.xlu0 %v1859, 48
        %v1942 = vpop.permute.xlu0 %1941
        %v1943 = vsel %vm1878, %v1940, 0
        %v1945 = vsel %vm1878, %v1942, 0
        %1947 = vmatpush.xpose.msra.mxu0 0.0
        %1948 = vmatpush.xpose.msra.mxu0 0.0
        %1949 = vmatpush.xpose.msra.mxu0 0.0
        %1950 = vmatpush.xpose.msra.mxu0 0.0
        %1951 = vmatpush.xpose.msra.mxu0 0.0
        %1952 = vmatpush.xpose.msra.mxu0 0.0
        %1953 = vmatpush.xpose.msra.mxu0 0.0
        %1954 = vmatpush.xpose.msra.mxu0 0.0
        %1955 = vmatpush.xpose.msra.mxu0 0.0
        %1956 = vmatpush.xpose.msra.mxu0 0.0
        %1957 = vmatpush.xpose.msra.mxu0 0.0
        %1958 = vmatpush.xpose.msra.mxu0 0.0
        %1959 = vmatpush.xpose.msra.mxu0 0.0
        %1960 = vmatpush.xpose.msra.mxu0 0.0
        %1961 = vmatpush.xpose.msra.mxu0 0.0
        %1962 = vmatpush.xpose.msra.mxu0 %v1945
        %1963 = vmatmul.f32.gmra.mxu0 %v1943
        %v1964 = vpop.f32.mrf.mxu0
        %v1965 = vadd.f32 0.0, %v1964
        %1966 = vdwg.mxu0
        %v1967 = vmul.f32 %v1965, 0.25
        %v1968 = vsel %vm613, %v1967, -inf
        %1969 = vmax.xlane.f32.xlu0 %v1968
        %v1970 = vpop.xlane.xlu0 %1969
        %v1971 = vsub.f32 %v1967, %v1970
        %v1972 = vmul.f32 %v1971, 1.442695
        %v1973 = vpow.pop %v1972
        %v1974 = vsel %vm613, %v1973, 0.0
        %1975 = vadd.xlane.f32.xlu0 %v1974
        %v1976 = vpop.xlane.xlu0 %1975
        %v1977 = vrcp.pop %v1976
        %v1978 = vmul.f32 %v1973, %v1977
        %1980 = vrot.lane.b32.xlu0 %v1872, 112
        %v1981 = vpop.permute.xlu0 %1980
        %v1984 = vsel %vm613, %v1978, 0
        %1986 = vmatpush.msra.mxu0 0.0
        %1987 = vmatpush.msra.mxu0 0.0
        %1988 = vmatpush.msra.mxu0 0.0
        %1989 = vmatpush.msra.mxu0 0.0
        %1990 = vmatpush.msra.mxu0 0.0
        %1991 = vmatpush.msra.mxu0 0.0
        %1992 = vmatpush.msra.mxu0 0.0
        %1993 = vmatpush.msra.mxu0 0.0
        %1994 = vmatpush.msra.mxu0 0.0
        %1995 = vmatpush.msra.mxu0 0.0
        %1996 = vmatpush.msra.mxu0 0.0
        %1997 = vmatpush.msra.mxu0 0.0
        %1998 = vmatpush.msra.mxu0 0.0
        %1999 = vmatpush.msra.mxu0 0.0
        %2000 = vmatpush.msra.mxu0 0.0
        %2001 = vmatpush.msra.mxu0 %v1981
        %2002 = vmatmul.f32.gmra.mxu0 %v1984
        %v2003 = vpop.f32.mrf.mxu0
        %v2004 = vadd.f32 0.0, %v2003
        %2005 = vdwg.mxu0
        %2007 = vrot.lane.b32.xlu0 %v2004, 16
        %v2008 = vpop.permute.xlu0 %2007
        %vm2010 = vcmask 261248
        %2011 = vst.msk [vmem:[#allocation2] sm:$0xff] %vm2010, %v2008
        %2012 = vrot.lane.b32.xlu0 %v1859, 96
        %v2013 = vpop.permute.xlu0 %2012
        %2014 = vrot.lane.b32.xlu0 %v1859, 32
        %v2015 = vpop.permute.xlu0 %2014
        %v2016 = vsel %vm1878, %v2013, 0
        %v2018 = vsel %vm1878, %v2015, 0
        %2020 = vmatpush.xpose.msra.mxu0 0.0
        %2021 = vmatpush.xpose.msra.mxu0 0.0
        %2022 = vmatpush.xpose.msra.mxu0 0.0
        %2023 = vmatpush.xpose.msra.mxu0 0.0
        %2024 = vmatpush.xpose.msra.mxu0 0.0
        %2025 = vmatpush.xpose.msra.mxu0 0.0
        %2026 = vmatpush.xpose.msra.mxu0 0.0
        %2027 = vmatpush.xpose.msra.mxu0 0.0
        %2028 = vmatpush.xpose.msra.mxu0 0.0
        %2029 = vmatpush.xpose.msra.mxu0 0.0
        %2030 = vmatpush.xpose.msra.mxu0 0.0
        %2031 = vmatpush.xpose.msra.mxu0 0.0
        %2032 = vmatpush.xpose.msra.mxu0 0.0
        %2033 = vmatpush.xpose.msra.mxu0 0.0
        %2034 = vmatpush.xpose.msra.mxu0 0.0
        %2035 = vmatpush.xpose.msra.mxu0 %v2018
        %2036 = vmatmul.f32.gmra.mxu0 %v2016
        %v2037 = vpop.f32.mrf.mxu0
        %v2038 = vadd.f32 0.0, %v2037
        %2039 = vdwg.mxu0
        %v2040 = vmul.f32 %v2038, 0.25
        %v2041 = vsel %vm613, %v2040, -inf
        %2042 = vmax.xlane.f32.xlu0 %v2041
        %v2043 = vpop.xlane.xlu0 %2042
        %v2044 = vsub.f32 %v2040, %v2043
        %v2045 = vmul.f32 %v2044, 1.442695
        %v2046 = vpow.pop %v2045
        %v2047 = vsel %vm613, %v2046, 0.0
        %2048 = vadd.xlane.f32.xlu0 %v2047
        %v2049 = vpop.xlane.xlu0 %2048
        %v2050 = vrcp.pop %v2049
        %v2051 = vmul.f32 %v2046, %v2050
        %2052 = vrot.lane.b32.xlu0 %v1872, 96
        %v2053 = vpop.permute.xlu0 %2052
        %v2056 = vsel %vm613, %v2051, 0
        %2058 = vmatpush.msra.mxu0 0.0
        %2059 = vmatpush.msra.mxu0 0.0
        %2060 = vmatpush.msra.mxu0 0.0
        %2061 = vmatpush.msra.mxu0 0.0
        %2062 = vmatpush.msra.mxu0 0.0
        %2063 = vmatpush.msra.mxu0 0.0
        %2064 = vmatpush.msra.mxu0 0.0
        %2065 = vmatpush.msra.mxu0 0.0
        %2066 = vmatpush.msra.mxu0 0.0
        %2067 = vmatpush.msra.mxu0 0.0
        %2068 = vmatpush.msra.mxu0 0.0
        %2069 = vmatpush.msra.mxu0 0.0
        %2070 = vmatpush.msra.mxu0 0.0
        %2071 = vmatpush.msra.mxu0 0.0
        %2072 = vmatpush.msra.mxu0 0.0
        %2073 = vmatpush.msra.mxu0 %v2053
        %2074 = vmatmul.f32.gmra.mxu0 %v2056
        %v2075 = vpop.f32.mrf.mxu0
        %v2076 = vadd.f32 0.0, %v2075
        %2077 = vdwg.mxu0
        %2079 = vrot.lane.b32.xlu0 %v2076, 32
        %v2080 = vpop.permute.xlu0 %2079
        %vm2082 = vcmask 392448
        %2083 = vst.msk [vmem:[#allocation2] sm:$0xff] %vm2082, %v2080
        %2084 = vrot.lane.b32.xlu0 %v1859, 80
        %v2085 = vpop.permute.xlu0 %2084
        %2086 = vrot.lane.b32.xlu0 %v1859, 16
        %v2087 = vpop.permute.xlu0 %2086
        %v2088 = vsel %vm1878, %v2085, 0
        %v2090 = vsel %vm1878, %v2087, 0
        %2092 = vmatpush.xpose.msra.mxu0 0.0
        %2093 = vmatpush.xpose.msra.mxu0 0.0
        %2094 = vmatpush.xpose.msra.mxu0 0.0
        %2095 = vmatpush.xpose.msra.mxu0 0.0
        %2096 = vmatpush.xpose.msra.mxu0 0.0
        %2097 = vmatpush.xpose.msra.mxu0 0.0
        %2098 = vmatpush.xpose.msra.mxu0 0.0
        %2099 = vmatpush.xpose.msra.mxu0 0.0
        %2100 = vmatpush.xpose.msra.mxu0 0.0
        %2101 = vmatpush.xpose.msra.mxu0 0.0
        %2102 = vmatpush.xpose.msra.mxu0 0.0
        %2103 = vmatpush.xpose.msra.mxu0 0.0
        %2104 = vmatpush.xpose.msra.mxu0 0.0
        %2105 = vmatpush.xpose.msra.mxu0 0.0
        %2106 = vmatpush.xpose.msra.mxu0 0.0
        %2107 = vmatpush.xpose.msra.mxu0 %v2090
        %2108 = vmatmul.f32.gmra.mxu0 %v2088
        %v2109 = vpop.f32.mrf.mxu0
        %v2110 = vadd.f32 0.0, %v2109
        %2111 = vdwg.mxu0
        %v2112 = vmul.f32 %v2110, 0.25
        %v2113 = vsel %vm613, %v2112, -inf
        %2114 = vmax.xlane.f32.xlu0 %v2113
        %v2115 = vpop.xlane.xlu0 %2114
        %v2116 = vsub.f32 %v2112, %v2115
        %v2117 = vmul.f32 %v2116, 1.442695
        %v2118 = vpow.pop %v2117
        %v2119 = vsel %vm613, %v2118, 0.0
        %2120 = vadd.xlane.f32.xlu0 %v2119
        %v2121 = vpop.xlane.xlu0 %2120
        %v2122 = vrcp.pop %v2121
        %v2123 = vmul.f32 %v2118, %v2122
        %2124 = vrot.lane.b32.xlu0 %v1872, 80
        %v2125 = vpop.permute.xlu0 %2124
        %v2128 = vsel %vm613, %v2123, 0
        %2130 = vmatpush.msra.mxu0 0.0
        %2131 = vmatpush.msra.mxu0 0.0
        %2132 = vmatpush.msra.mxu0 0.0
        %2133 = vmatpush.msra.mxu0 0.0
        %2134 = vmatpush.msra.mxu0 0.0
        %2135 = vmatpush.msra.mxu0 0.0
        %2136 = vmatpush.msra.mxu0 0.0
        %2137 = vmatpush.msra.mxu0 0.0
        %2138 = vmatpush.msra.mxu0 0.0
        %2139 = vmatpush.msra.mxu0 0.0
        %2140 = vmatpush.msra.mxu0 0.0
        %2141 = vmatpush.msra.mxu0 0.0
        %2142 = vmatpush.msra.mxu0 0.0
        %2143 = vmatpush.msra.mxu0 0.0
        %2144 = vmatpush.msra.mxu0 0.0
        %2145 = vmatpush.msra.mxu0 %v2125
        %2146 = vmatmul.f32.gmra.mxu0 %v2128
        %v2147 = vpop.f32.mrf.mxu0
        %v2148 = vadd.f32 0.0, %v2147
        %2149 = vdwg.mxu0
        %2151 = vrot.lane.b32.xlu0 %v2148, 48
        %v2152 = vpop.permute.xlu0 %2151
        %vm2154 = vcmask 523648
        %2155 = vst.msk [vmem:[#allocation2] sm:$0xff] %vm2154, %v2152
        %v2156 = vld [vmem:[#allocation2] sm:$0xff]
        %v2157 = vld [vmem:[#allocation3 + $0x8] sm:$0xf]
        %v2158 = vld [vmem:[#allocation3 + $0x34] sm:$0xf]
        %v2159 = vld [vmem:[#allocation3 + $0x60] sm:$0xf]
        %v2160 = vld [vmem:[#allocation3 + $0x8c] sm:$0xf]
        %v2161 = vld [vmem:[#allocation3 + $0xb8] sm:$0xf]
        %v2162 = vld [vmem:[#allocation3 + $0xe4] sm:$0xf]
        %v2163 = vld [vmem:[#allocation3 + $0x110] sm:$0xf]
        %v2164 = vld [vmem:[#allocation3 + $0x13c] sm:$0xf]
        %v2165 = vpack.c.bf16 %v2156, %v2156
        %v2174 = vunpack.c.l.b16 %v2157
        %v2175 = vunpack.c.l.b16 %v2158
        %v2176 = vunpack.c.l.b16 %v2159
        %v2177 = vunpack.c.l.b16 %v2160
        %v2178 = vunpack.c.l.b16 %v2161
        %v2179 = vunpack.c.l.b16 %v2162
        %v2180 = vunpack.c.l.b16 %v2163
        %v2181 = vunpack.c.l.b16 %v2164
        %v2182 = vpack.c.b16 %v2175, %v2174
        %v2183 = vpack.c.b16 %v2177, %v2176
        %v2184 = vpack.c.b16 %v2179, %v2178
        %v2185 = vpack.c.b16 %v2181, %v2180
        %v2191 = vsel %vm1753, %v2165, 0
        %2193 = vmatpush.bf16.msra.mxu0 0
        %2194 = vmatpush.bf16.msra.mxu0 0
        %2195 = vmatpush.bf16.msra.mxu0 0
        %2196 = vmatpush.bf16.msra.mxu0 0
        %2197 = vmatpush.bf16.msra.mxu0 %v2185
        %2198 = vmatpush.bf16.msra.mxu0 %v2184
        %2199 = vmatpush.bf16.msra.mxu0 %v2183
        %2200 = vmatpush.bf16.msra.mxu0 %v2182
        %2201 = vmatmul.bf16.gmra.mxu0 %v2191
        %v2202 = vpop.f32.mrf.mxu0
        %v2203 = vadd.f32 0.0, %v2202
        %v2204 = vpop.f32.mrf.mxu0
        %2205 = vdwg.mxu0
        %v2206 = vadd.f32 %v1748, %v2203
        %v2207 = vld [vmem:[%s9 + $0x15] sm:$0x1]
        %v2209 = vperm.slane %v2207, 0
        %v2211 = vadd.f32 %v2206, %v2209
        %v2212 = vld [vmem:[%s9 + $0x16] sm:$0x1]
        %v2213 = vld [vmem:[%s9 + $0x17] sm:$0x1]
        %v2214 = vsel %vm1753, %v2211, 0.0
        %2215 = vadd.xlane.f32.xlu0 %v2214
        %v2216 = vpop.xlane.xlu0 %2215
        %v2217 = vmul.f32 %v2216, %v1763
        %v2218 = vsub.f32 %v2211, %v2217
        %v2219 = vmul.f32 %v2218, %v2218
        %v2220 = vsel %vm1753, %v2219, 0.0
        %2221 = vadd.xlane.f32.xlu0 %v2220
        %v2222 = vpop.xlane.xlu0 %2221
        %v2223 = vmul.f32 %v2222, %v1763
        %v2224 = vadd.f32 %v2223, 1e-05
        %v2225 = vrsqrt.pop %v2224
        %v2226 = vmul.f32 %v2225, %v2224
        %v2227 = vmul.f32 %v2226, %v2225
        %v2228 = vmul.f32 0.5, %v2227
        %v2229 = vsub.f32 1.5, %v2228
        %v2230 = vmul.f32 %v2225, %v2229
        %vm2231 = vweird.f32 %v2224
        %vm2232 = vweird.f32 %v2225
        %vm2233 = vmor %vm2231, %vm2232
        %v2234 = vsel %vm2233, %v2225, %v2230
        %v2235 = vmul.f32 %v2218, %v2234
        %v2237 = vperm.slane %v2212, 0
        %v2239 = vmul.f32 %v2235, %v2237
        %v2241 = vperm.slane %v2213, 0
        %v2243 = vadd.f32 %v2239, %v2241
        %v2244 = vld [vmem:[#allocation3 + $0xc] sm:$0xff]
        %v2245 = vld [vmem:[#allocation3 + $0x38] sm:$0xff]
        %v2246 = vld [vmem:[#allocation3 + $0x64] sm:$0xff]
        %v2247 = vld [vmem:[#allocation3 + $0x90] sm:$0xff]
        %v2248 = vld [vmem:[#allocation3 + $0xbc] sm:$0xff]
        %v2249 = vld [vmem:[#allocation3 + $0xe8] sm:$0xff]
        %v2250 = vld [vmem:[#allocation3 + $0x114] sm:$0xff]
        %v2251 = vld [vmem:[#allocation3 + $0x140] sm:$0xff]
        %v2252 = vpack.c.bf16 %v2243, %v2243
        %v2253 = vld [vmem:[%s9 + $0x18] sm:$0x3]
        %v2255 = vperm.slane %v2253, 0
        %v2256 = vperm.slane %v2253, 1
        %v2267 = vunpack.c.l.b16 %v2244
        %v2268 = vunpack.c.h.b16 %v2244
        %v2269 = vunpack.c.l.b16 %v2245
        %v2270 = vunpack.c.h.b16 %v2245
        %v2271 = vunpack.c.l.b16 %v2246
        %v2272 = vunpack.c.h.b16 %v2246
        %v2273 = vunpack.c.l.b16 %v2247
        %v2274 = vunpack.c.h.b16 %v2247
        %v2275 = vunpack.c.l.b16 %v2248
        %v2276 = vunpack.c.h.b16 %v2248
        %v2277 = vunpack.c.l.b16 %v2249
        %v2278 = vunpack.c.h.b16 %v2249
        %v2279 = vunpack.c.l.b16 %v2250
        %v2280 = vunpack.c.h.b16 %v2250
        %v2281 = vunpack.c.l.b16 %v2251
        %v2282 = vunpack.c.h.b16 %v2251
        %v2283 = vpack.c.b16 %v2269, %v2267
        %v2284 = vpack.c.b16 %v2270, %v2268
        %v2285 = vpack.c.b16 %v2273, %v2271
        %v2286 = vpack.c.b16 %v2274, %v2272
        %v2287 = vpack.c.b16 %v2277, %v2275
        %v2288 = vpack.c.b16 %v2278, %v2276
        %v2289 = vpack.c.b16 %v2281, %v2279
        %v2290 = vpack.c.b16 %v2282, %v2280
        %v2300 = vsel %vm1753, %v2252, 0
        %2302 = vmatpush.bf16.msra.mxu0 0
        %2303 = vmatpush.bf16.msra.mxu0 0
        %2304 = vmatpush.bf16.msra.mxu0 0
        %2305 = vmatpush.bf16.msra.mxu0 0
        %2306 = vmatpush.bf16.msra.mxu0 %v2289
        %2307 = vmatpush.bf16.msra.mxu0 %v2287
        %2308 = vmatpush.bf16.msra.mxu0 %v2285
        %2309 = vmatpush.bf16.msra.mxu0 %v2283
        %2310 = vmatmul.bf16.gmra.mxu0 %v2300
        %v2311 = vpop.f32.mrf.mxu0
        %v2312 = vadd.f32 %v2255, %v2311
        %v2313 = vpop.f32.mrf.mxu0
        %2314 = vdwg.mxu0
        %2315 = vmatpush.bf16.msra.mxu0 0
        %2316 = vmatpush.bf16.msra.mxu0 0
        %2317 = vmatpush.bf16.msra.mxu0 0
        %2318 = vmatpush.bf16.msra.mxu0 0
        %2319 = vmatpush.bf16.msra.mxu0 %v2290
        %2320 = vmatpush.bf16.msra.mxu0 %v2288
        %2321 = vmatpush.bf16.msra.mxu0 %v2286
        %2322 = vmatpush.bf16.msra.mxu0 %v2284
        %2323 = vmatmul.bf16.gmra.mxu0 %v2300
        %v2324 = vpop.f32.mrf.mxu0
        %v2325 = vadd.f32 %v2256, %v2324
        %v2326 = vpop.f32.mrf.mxu0
        %2327 = vdwg.mxu0
        %v2328 = vmul.f32 %v2312, %v2312
        %v2329 = vmul.f32 %v2325, %v2325
        %v2330 = vmul.f32 %v2312, %v2328
        %v2331 = vmul.f32 %v2325, %v2329
        %v2332 = vmul.f32 %v2330, 0.044715
        %v2333 = vmul.f32 %v2331, 0.044715
        %v2334 = vadd.f32 %v2312, %v2332
        %v2335 = vadd.f32 %v2325, %v2333
        %v2336 = vmul.f32 %v2334, 0.7978846
        %v2337 = vmul.f32 %v2335, 0.7978846
        %v2338 = vtanh.pop %v2336
        %v2339 = vtanh.pop %v2337
        %v2340 = vadd.f32 %v2338, 1.0
        %v2341 = vadd.f32 %v2339, 1.0
        %v2342 = vmul.f32 %v2340, 0.5
        %v2343 = vmul.f32 %v2341, 0.5
        %v2344 = vmul.f32 %v2312, %v2342
        %v2345 = vmul.f32 %v2325, %v2343
        %v2346 = vld [vmem:[%s6] sm:$0xf]
        %v2347 = vld [vmem:[%s6 + $0x4] sm:$0xf]
        %v2348 = vld [vmem:[%s6 + $0x8] sm:$0xf]
        %v2349 = vld [vmem:[%s6 + $0xc] sm:$0xf]
        %v2350 = vld [vmem:[%s6 + $0x10] sm:$0xf]
        %v2351 = vld [vmem:[%s6 + $0x14] sm:$0xf]
        %v2352 = vld [vmem:[%s6 + $0x18] sm:$0xf]
        %v2353 = vld [vmem:[%s6 + $0x1c] sm:$0xf]
        %v2354 = vld [vmem:[%s6 + $0x20] sm:$0xf]
        %v2355 = vld [vmem:[%s6 + $0x24] sm:$0xf]
        %v2356 = vld [vmem:[%s6 + $0x28] sm:$0xf]
        %v2357 = vld [vmem:[%s6 + $0x2c] sm:$0xf]
        %v2358 = vld [vmem:[%s6 + $0x30] sm:$0xf]
        %v2359 = vld [vmem:[%s6 + $0x34] sm:$0xf]
        %v2360 = vld [vmem:[%s6 + $0x38] sm:$0xf]
        %v2361 = vld [vmem:[%s6 + $0x3c] sm:$0xf]
        %v2362 = vld [vmem:[%s6 + $0x40] sm:$0xf]
        %v2363 = vld [vmem:[%s6 + $0x44] sm:$0xf]
        %v2364 = vld [vmem:[%s6 + $0x48] sm:$0xf]
        %v2365 = vld [vmem:[%s6 + $0x4c] sm:$0xf]
        %v2366 = vld [vmem:[%s6 + $0x50] sm:$0xf]
        %v2367 = vld [vmem:[%s6 + $0x54] sm:$0xf]
        %v2368 = vld [vmem:[%s6 + $0x58] sm:$0xf]
        %v2369 = vld [vmem:[%s6 + $0x5c] sm:$0xf]
        %v2370 = vld [vmem:[%s6 + $0x60] sm:$0xf]
        %v2371 = vld [vmem:[%s6 + $0x64] sm:$0xf]
        %v2372 = vld [vmem:[%s6 + $0x68] sm:$0xf]
        %v2373 = vld [vmem:[%s6 + $0x6c] sm:$0xf]
        %v2374 = vld [vmem:[%s6 + $0x70] sm:$0xf]
        %v2375 = vld [vmem:[%s6 + $0x74] sm:$0xf]
        %v2376 = vld [vmem:[%s6 + $0x78] sm:$0xf]
        %v2377 = vld [vmem:[%s6 + $0x7c] sm:$0xf]
        %v2378 = vpack.c.bf16 %v2344, %v2344
        %v2379 = vpack.c.bf16 %v2345, %v2345
        %v2380 = vld [vmem:[%s9 + $0x1a] sm:$0x1]
        %v2382 = vperm.slane %v2380, 0
        %v2416 = vunpack.c.l.b16 %v2346
        %v2417 = vunpack.c.l.b16 %v2347
        %v2418 = vunpack.c.l.b16 %v2348
        %v2419 = vunpack.c.l.b16 %v2349
        %v2420 = vunpack.c.l.b16 %v2350
        %v2421 = vunpack.c.l.b16 %v2351
        %v2422 = vunpack.c.l.b16 %v2352
        %v2423 = vunpack.c.l.b16 %v2353
        %v2424 = vunpack.c.l.b16 %v2354
        %v2425 = vunpack.c.l.b16 %v2355
        %v2426 = vunpack.c.l.b16 %v2356
        %v2427 = vunpack.c.l.b16 %v2357
        %v2428 = vunpack.c.l.b16 %v2358
        %v2429 = vunpack.c.l.b16 %v2359
        %v2430 = vunpack.c.l.b16 %v2360
        %v2431 = vunpack.c.l.b16 %v2361
        %v2432 = vunpack.c.l.b16 %v2362
        %v2433 = vunpack.c.l.b16 %v2363
        %v2434 = vunpack.c.l.b16 %v2364
        %v2435 = vunpack.c.l.b16 %v2365
        %v2436 = vunpack.c.l.b16 %v2366
        %v2437 = vunpack.c.l.b16 %v2367
        %v2438 = vunpack.c.l.b16 %v2368
        %v2439 = vunpack.c.l.b16 %v2369
        %v2440 = vunpack.c.l.b16 %v2370
        %v2441 = vunpack.c.l.b16 %v2371
        %v2442 = vunpack.c.l.b16 %v2372
        %v2443 = vunpack.c.l.b16 %v2373
        %v2444 = vunpack.c.l.b16 %v2374
        %v2445 = vunpack.c.l.b16 %v2375
        %v2446 = vunpack.c.l.b16 %v2376
        %v2447 = vunpack.c.l.b16 %v2377
        %v2448 = vpack.c.b16 %v2417, %v2416
        %v2449 = vpack.c.b16 %v2419, %v2418
        %v2450 = vpack.c.b16 %v2421, %v2420
        %v2451 = vpack.c.b16 %v2423, %v2422
        %v2452 = vpack.c.b16 %v2425, %v2424
        %v2453 = vpack.c.b16 %v2427, %v2426
        %v2454 = vpack.c.b16 %v2429, %v2428
        %v2455 = vpack.c.b16 %v2431, %v2430
        %v2456 = vpack.c.b16 %v2433, %v2432
        %v2457 = vpack.c.b16 %v2435, %v2434
        %v2458 = vpack.c.b16 %v2437, %v2436
        %v2459 = vpack.c.b16 %v2439, %v2438
        %v2460 = vpack.c.b16 %v2441, %v2440
        %v2461 = vpack.c.b16 %v2443, %v2442
        %v2462 = vpack.c.b16 %v2445, %v2444
        %v2463 = vpack.c.b16 %v2447, %v2446
        %2480 = vmatpush.bf16.msra.mxu0 %v2455
        %2481 = vmatpush.bf16.msra.mxu0 %v2454
        %2482 = vmatpush.bf16.msra.mxu0 %v2453
        %2483 = vmatpush.bf16.msra.mxu0 %v2452
        %2484 = vmatpush.bf16.msra.mxu0 %v2451
        %2485 = vmatpush.bf16.msra.mxu0 %v2450
        %2486 = vmatpush.bf16.msra.mxu0 %v2449
        %2487 = vmatpush.bf16.msra.mxu0 %v2448
        %2488 = vmatmul.bf16.gmra.mxu0 %v2378
        %v2489 = vpop.f32.mrf.mxu0
        %v2490 = vadd.f32 %v2382, %v2489
        %v2491 = vpop.f32.mrf.mxu0
        %2492 = vdwg.mxu0
        %2493 = vmatpush.bf16.msra.mxu0 %v2463
        %2494 = vmatpush.bf16.msra.mxu0 %v2462
        %2495 = vmatpush.bf16.msra.mxu0 %v2461
        %2496 = vmatpush.bf16.msra.mxu0 %v2460
        %2497 = vmatpush.bf16.msra.mxu0 %v2459
        %2498 = vmatpush.bf16.msra.mxu0 %v2458
        %2499 = vmatpush.bf16.msra.mxu0 %v2457
        %2500 = vmatpush.bf16.msra.mxu0 %v2456
        %2501 = vmatmul.bf16.gmra.mxu0 %v2379
        %v2502 = vpop.f32.mrf.mxu0
        %v2503 = vadd.f32 %v2490, %v2502
        %v2504 = vpop.f32.mrf.mxu0
        %2505 = vdwg.mxu0
        %v2506 = vadd.f32 %v2211, %v2503
        %v2507 = vld [vmem:[%s9 + $0x1b] sm:$0x1]
        %v2508 = vld [vmem:[%s9 + $0x1c] sm:$0x1]
        %v2509 = vsel %vm1753, %v2506, 0.0
        %2510 = vadd.xlane.f32.xlu0 %v2509
        %v2511 = vpop.xlane.xlu0 %2510
        %v2512 = vmul.f32 %v2511, %v1763
        %v2513 = vsub.f32 %v2506, %v2512
        %v2514 = vmul.f32 %v2513, %v2513
        %v2515 = vsel %vm1753, %v2514, 0.0
        %2516 = vadd.xlane.f32.xlu0 %v2515
        %v2517 = vpop.xlane.xlu0 %2516
        %v2518 = vmul.f32 %v2517, %v1763
        %v2519 = vadd.f32 %v2518, 1e-05
        %v2520 = vrsqrt.pop %v2519
        %v2521 = vmul.f32 %v2520, %v2519
        %v2522 = vmul.f32 %v2521, %v2520
        %v2523 = vmul.f32 0.5, %v2522
        %v2524 = vsub.f32 1.5, %v2523
        %v2525 = vmul.f32 %v2520, %v2524
        %vm2526 = vweird.f32 %v2519
        %vm2527 = vweird.f32 %v2520
        %vm2528 = vmor %vm2526, %vm2527
        %v2529 = vsel %vm2528, %v2520, %v2525
        %v2530 = vmul.f32 %v2513, %v2529
        %v2532 = vperm.slane %v2507, 0
        %v2534 = vmul.f32 %v2530, %v2532
        %v2536 = vperm.slane %v2508, 0
        %v2538 = vadd.f32 %v2534, %v2536
        %v2539 = vld [vmem:[#allocation3 + $0x14] sm:$0xff]
        %v2540 = vld [vmem:[#allocation3 + $0x40] sm:$0xff]
        %v2541 = vld [vmem:[#allocation3 + $0x6c] sm:$0xff]
        %v2542 = vld [vmem:[#allocation3 + $0x98] sm:$0xff]
        %v2543 = vld [vmem:[#allocation3 + $0xc4] sm:$0xff]
        %v2544 = vld [vmem:[#allocation3 + $0xf0] sm:$0xff]
        %v2545 = vld [vmem:[#allocation3 + $0x11c] sm:$0xff]
        %v2546 = vld [vmem:[#allocation3 + $0x148] sm:$0xff]
        %v2547 = vpack.c.bf16 %v2538, %v2538
        %v2548 = vld [vmem:[%s9 + $0x1d] sm:$0x3]
        %v2550 = vperm.slane %v2548, 0
        %v2551 = vperm.slane %v2548, 1
        %v2562 = vunpack.c.l.b16 %v2539
        %v2563 = vunpack.c.h.b16 %v2539
        %v2564 = vunpack.c.l.b16 %v2540
        %v2565 = vunpack.c.h.b16 %v2540
        %v2566 = vunpack.c.l.b16 %v2541
        %v2567 = vunpack.c.h.b16 %v2541
        %v2568 = vunpack.c.l.b16 %v2542
        %v2569 = vunpack.c.h.b16 %v2542
        %v2570 = vunpack.c.l.b16 %v2543
        %v2571 = vunpack.c.h.b16 %v2543
        %v2572 = vunpack.c.l.b16 %v2544
        %v2573 = vunpack.c.h.b16 %v2544
        %v2574 = vunpack.c.l.b16 %v2545
        %v2575 = vunpack.c.h.b16 %v2545
        %v2576 = vunpack.c.l.b16 %v2546
        %v2577 = vunpack.c.h.b16 %v2546
        %v2578 = vpack.c.b16 %v2564, %v2562
        %v2579 = vpack.c.b16 %v2565, %v2563
        %v2580 = vpack.c.b16 %v2568, %v2566
        %v2581 = vpack.c.b16 %v2569, %v2567
        %v2582 = vpack.c.b16 %v2572, %v2570
        %v2583 = vpack.c.b16 %v2573, %v2571
        %v2584 = vpack.c.b16 %v2576, %v2574
        %v2585 = vpack.c.b16 %v2577, %v2575
        %v2595 = vsel %vm1753, %v2547, 0
        %2597 = vmatpush.bf16.msra.mxu0 0
        %2598 = vmatpush.bf16.msra.mxu0 0
        %2599 = vmatpush.bf16.msra.mxu0 0
        %2600 = vmatpush.bf16.msra.mxu0 0
        %2601 = vmatpush.bf16.msra.mxu0 %v2584
        %2602 = vmatpush.bf16.msra.mxu0 %v2582
        %2603 = vmatpush.bf16.msra.mxu0 %v2580
        %2604 = vmatpush.bf16.msra.mxu0 %v2578
        %2605 = vmatmul.bf16.gmra.mxu0 %v2595
        %v2606 = vpop.f32.mrf.mxu0
        %v2607 = vadd.f32 %v2550, %v2606
        %v2608 = vpop.f32.mrf.mxu0
        %2609 = vdwg.mxu0
        %2610 = vmatpush.bf16.msra.mxu0 0
        %2611 = vmatpush.bf16.msra.mxu0 0
        %2612 = vmatpush.bf16.msra.mxu0 0
        %2613 = vmatpush.bf16.msra.mxu0 0
        %2614 = vmatpush.bf16.msra.mxu0 %v2585
        %2615 = vmatpush.bf16.msra.mxu0 %v2583
        %2616 = vmatpush.bf16.msra.mxu0 %v2581
        %2617 = vmatpush.bf16.msra.mxu0 %v2579
        %2618 = vmatmul.bf16.gmra.mxu0 %v2595
        %v2619 = vpop.f32.mrf.mxu0
        %v2620 = vadd.f32 %v2551, %v2619
        %v2621 = vpop.f32.mrf.mxu0
        %2622 = vdwg.mxu0
        %2624 = vrot.lane.b32.xlu0 %v2607, 64
        %v2625 = vpop.permute.xlu0 %2624
        %v2626 = vsel %vm1878, %v2607, 0
        %v2628 = vsel %vm1878, %v2625, 0
        %2630 = vmatpush.xpose.msra.mxu0 0.0
        %2631 = vmatpush.xpose.msra.mxu0 0.0
        %2632 = vmatpush.xpose.msra.mxu0 0.0
        %2633 = vmatpush.xpose.msra.mxu0 0.0
        %2634 = vmatpush.xpose.msra.mxu0 0.0
        %2635 = vmatpush.xpose.msra.mxu0 0.0
        %2636 = vmatpush.xpose.msra.mxu0 0.0
        %2637 = vmatpush.xpose.msra.mxu0 0.0
        %2638 = vmatpush.xpose.msra.mxu0 0.0
        %2639 = vmatpush.xpose.msra.mxu0 0.0
        %2640 = vmatpush.xpose.msra.mxu0 0.0
        %2641 = vmatpush.xpose.msra.mxu0 0.0
        %2642 = vmatpush.xpose.msra.mxu0 0.0
        %2643 = vmatpush.xpose.msra.mxu0 0.0
        %2644 = vmatpush.xpose.msra.mxu0 0.0
        %2645 = vmatpush.xpose.msra.mxu0 %v2628
        %2646 = vmatmul.f32.gmra.mxu0 %v2626
        %v2647 = vpop.f32.mrf.mxu0
        %v2648 = vadd.f32 0.0, %v2647
        %2649 = vdwg.mxu0
        %v2650 = vmul.f32 %v2648, 0.25
        %v2651 = vsel %vm613, %v2650, -inf
        %2652 = vmax.xlane.f32.xlu0 %v2651
        %v2653 = vpop.xlane.xlu0 %2652
        %v2654 = vsub.f32 %v2650, %v2653
        %v2655 = vmul.f32 %v2654, 1.442695
        %v2656 = vpow.pop %v2655
        %v2657 = vsel %vm613, %v2656, 0.0
        %2658 = vadd.xlane.f32.xlu0 %v2657
        %v2659 = vpop.xlane.xlu0 %2658
        %v2660 = vrcp.pop %v2659
        %v2661 = vmul.f32 %v2656, %v2660
        %v2663 = vsel %vm613, %v2661, 0
        %2665 = vmatpush.msra.mxu0 0.0
        %2666 = vmatpush.msra.mxu0 0.0
        %2667 = vmatpush.msra.mxu0 0.0
        %2668 = vmatpush.msra.mxu0 0.0
        %2669 = vmatpush.msra.mxu0 0.0
        %2670 = vmatpush.msra.mxu0 0.0
        %2671 = vmatpush.msra.mxu0 0.0
        %2672 = vmatpush.msra.mxu0 0.0
        %2673 = vmatpush.msra.mxu0 0.0
        %2674 = vmatpush.msra.mxu0 0.0
        %2675 = vmatpush.msra.mxu0 0.0
        %2676 = vmatpush.msra.mxu0 0.0
        %2677 = vmatpush.msra.mxu0 0.0
        %2678 = vmatpush.msra.mxu0 0.0
        %2679 = vmatpush.msra.mxu0 0.0
        %2680 = vmatpush.msra.mxu0 %v2620
        %2681 = vmatmul.f32.gmra.mxu0 %v2663
        %v2682 = vpop.f32.mrf.mxu0
        %v2683 = vadd.f32 0.0, %v2682
        %2684 = vdwg.mxu0
        %2685 = vst.msk [vmem:[#allocation2] sm:$0xff] %vm1878, %v2683
        %2686 = vrot.lane.b32.xlu0 %v2607, 112
        %v2687 = vpop.permute.xlu0 %2686
        %2688 = vrot.lane.b32.xlu0 %v2607, 48
        %v2689 = vpop.permute.xlu0 %2688
        %v2690 = vsel %vm1878, %v2687, 0
        %v2692 = vsel %vm1878, %v2689, 0
        %2694 = vmatpush.xpose.msra.mxu0 0.0
        %2695 = vmatpush.xpose.msra.mxu0 0.0
        %2696 = vmatpush.xpose.msra.mxu0 0.0
        %2697 = vmatpush.xpose.msra.mxu0 0.0
        %2698 = vmatpush.xpose.msra.mxu0 0.0
        %2699 = vmatpush.xpose.msra.mxu0 0.0
        %2700 = vmatpush.xpose.msra.mxu0 0.0
        %2701 = vmatpush.xpose.msra.mxu0 0.0
        %2702 = vmatpush.xpose.msra.mxu0 0.0
        %2703 = vmatpush.xpose.msra.mxu0 0.0
        %2704 = vmatpush.xpose.msra.mxu0 0.0
        %2705 = vmatpush.xpose.msra.mxu0 0.0
        %2706 = vmatpush.xpose.msra.mxu0 0.0
        %2707 = vmatpush.xpose.msra.mxu0 0.0
        %2708 = vmatpush.xpose.msra.mxu0 0.0
        %2709 = vmatpush.xpose.msra.mxu0 %v2692
        %2710 = vmatmul.f32.gmra.mxu0 %v2690
        %v2711 = vpop.f32.mrf.mxu0
        %v2712 = vadd.f32 0.0, %v2711
        %2713 = vdwg.mxu0
        %v2714 = vmul.f32 %v2712, 0.25
        %v2715 = vsel %vm613, %v2714, -inf
        %2716 = vmax.xlane.f32.xlu0 %v2715
        %v2717 = vpop.xlane.xlu0 %2716
        %v2718 = vsub.f32 %v2714, %v2717
        %v2719 = vmul.f32 %v2718, 1.442695
        %v2720 = vpow.pop %v2719
        %v2721 = vsel %vm613, %v2720, 0.0
        %2722 = vadd.xlane.f32.xlu0 %v2721
        %v2723 = vpop.xlane.xlu0 %2722
        %v2724 = vrcp.pop %v2723
        %v2725 = vmul.f32 %v2720, %v2724
        %2727 = vrot.lane.b32.xlu0 %v2620, 112
        %v2728 = vpop.permute.xlu0 %2727
        %v2731 = vsel %vm613, %v2725, 0
        %2733 = vmatpush.msra.mxu0 0.0
        %2734 = vmatpush.msra.mxu0 0.0
        %2735 = vmatpush.msra.mxu0 0.0
        %2736 = vmatpush.msra.mxu0 0.0
        %2737 = vmatpush.msra.mxu0 0.0
        %2738 = vmatpush.msra.mxu0 0.0
        %2739 = vmatpush.msra.mxu0 0.0
        %2740 = vmatpush.msra.mxu0 0.0
        %2741 = vmatpush.msra.mxu0 0.0
        %2742 = vmatpush.msra.mxu0 0.0
        %2743 = vmatpush.msra.mxu0 0.0
        %2744 = vmatpush.msra.mxu0 0.0
        %2745 = vmatpush.msra.mxu0 0.0
        %2746 = vmatpush.msra.mxu0 0.0
        %2747 = vmatpush.msra.mxu0 0.0
        %2748 = vmatpush.msra.mxu0 %v2728
        %2749 = vmatmul.f32.gmra.mxu0 %v2731
        %v2750 = vpop.f32.mrf.mxu0
        %v2751 = vadd.f32 0.0, %v2750
        %2752 = vdwg.mxu0
        %2754 = vrot.lane.b32.xlu0 %v2751, 16
        %v2755 = vpop.permute.xlu0 %2754
        %2757 = vst.msk [vmem:[#allocation2] sm:$0xff] %vm2010, %v2755
        %2758 = vrot.lane.b32.xlu0 %v2607, 96
        %v2759 = vpop.permute.xlu0 %2758
        %2760 = vrot.lane.b32.xlu0 %v2607, 32
        %v2761 = vpop.permute.xlu0 %2760
        %v2762 = vsel %vm1878, %v2759, 0
        %v2764 = vsel %vm1878, %v2761, 0
        %2766 = vmatpush.xpose.msra.mxu0 0.0
        %2767 = vmatpush.xpose.msra.mxu0 0.0
        %2768 = vmatpush.xpose.msra.mxu0 0.0
        %2769 = vmatpush.xpose.msra.mxu0 0.0
        %2770 = vmatpush.xpose.msra.mxu0 0.0
        %2771 = vmatpush.xpose.msra.mxu0 0.0
        %2772 = vmatpush.xpose.msra.mxu0 0.0
        %2773 = vmatpush.xpose.msra.mxu0 0.0
        %2774 = vmatpush.xpose.msra.mxu0 0.0
        %2775 = vmatpush.xpose.msra.mxu0 0.0
        %2776 = vmatpush.xpose.msra.mxu0 0.0
        %2777 = vmatpush.xpose.msra.mxu0 0.0
        %2778 = vmatpush.xpose.msra.mxu0 0.0
        %2779 = vmatpush.xpose.msra.mxu0 0.0
        %2780 = vmatpush.xpose.msra.mxu0 0.0
        %2781 = vmatpush.xpose.msra.mxu0 %v2764
        %2782 = vmatmul.f32.gmra.mxu0 %v2762
        %v2783 = vpop.f32.mrf.mxu0
        %v2784 = vadd.f32 0.0, %v2783
        %2785 = vdwg.mxu0
        %v2786 = vmul.f32 %v2784, 0.25
        %v2787 = vsel %vm613, %v2786, -inf
        %2788 = vmax.xlane.f32.xlu0 %v2787
        %v2789 = vpop.xlane.xlu0 %2788
        %v2790 = vsub.f32 %v2786, %v2789
        %v2791 = vmul.f32 %v2790, 1.442695
        %v2792 = vpow.pop %v2791
        %v2793 = vsel %vm613, %v2792, 0.0
        %2794 = vadd.xlane.f32.xlu0 %v2793
        %v2795 = vpop.xlane.xlu0 %2794
        %v2796 = vrcp.pop %v2795
        %v2797 = vmul.f32 %v2792, %v2796
        %2798 = vrot.lane.b32.xlu0 %v2620, 96
        %v2799 = vpop.permute.xlu0 %2798
        %v2802 = vsel %vm613, %v2797, 0
        %2804 = vmatpush.msra.mxu0 0.0
        %2805 = vmatpush.msra.mxu0 0.0
        %2806 = vmatpush.msra.mxu0 0.0
        %2807 = vmatpush.msra.mxu0 0.0
        %2808 = vmatpush.msra.mxu0 0.0
        %2809 = vmatpush.msra.mxu0 0.0
        %2810 = vmatpush.msra.mxu0 0.0
        %2811 = vmatpush.msra.mxu0 0.0
        %2812 = vmatpush.msra.mxu0 0.0
        %2813 = vmatpush.msra.mxu0 0.0
        %2814 = vmatpush.msra.mxu0 0.0
        %2815 = vmatpush.msra.mxu0 0.0
        %2816 = vmatpush.msra.mxu0 0.0
        %2817 = vmatpush.msra.mxu0 0.0
        %2818 = vmatpush.msra.mxu0 0.0
        %2819 = vmatpush.msra.mxu0 %v2799
        %2820 = vmatmul.f32.gmra.mxu0 %v2802
        %v2821 = vpop.f32.mrf.mxu0
        %v2822 = vadd.f32 0.0, %v2821
        %2823 = vdwg.mxu0
        %2825 = vrot.lane.b32.xlu0 %v2822, 32
        %v2826 = vpop.permute.xlu0 %2825
        %2828 = vst.msk [vmem:[#allocation2] sm:$0xff] %vm2082, %v2826
        %2829 = vrot.lane.b32.xlu0 %v2607, 80
        %v2830 = vpop.permute.xlu0 %2829
        %2831 = vrot.lane.b32.xlu0 %v2607, 16
        %v2832 = vpop.permute.xlu0 %2831
        %v2833 = vsel %vm1878, %v2830, 0
        %v2835 = vsel %vm1878, %v2832, 0
        %2837 = vmatpush.xpose.msra.mxu0 0.0
        %2838 = vmatpush.xpose.msra.mxu0 0.0
        %2839 = vmatpush.xpose.msra.mxu0 0.0
        %2840 = vmatpush.xpose.msra.mxu0 0.0
        %2841 = vmatpush.xpose.msra.mxu0 0.0
        %2842 = vmatpush.xpose.msra.mxu0 0.0
        %2843 = vmatpush.xpose.msra.mxu0 0.0
        %2844 = vmatpush.xpose.msra.mxu0 0.0
        %2845 = vmatpush.xpose.msra.mxu0 0.0
        %2846 = vmatpush.xpose.msra.mxu0 0.0
        %2847 = vmatpush.xpose.msra.mxu0 0.0
        %2848 = vmatpush.xpose.msra.mxu0 0.0
        %2849 = vmatpush.xpose.msra.mxu0 0.0
        %2850 = vmatpush.xpose.msra.mxu0 0.0
        %2851 = vmatpush.xpose.msra.mxu0 0.0
        %2852 = vmatpush.xpose.msra.mxu0 %v2835
        %2853 = vmatmul.f32.gmra.mxu0 %v2833
        %v2854 = vpop.f32.mrf.mxu0
        %v2855 = vadd.f32 0.0, %v2854
        %2856 = vdwg.mxu0
        %v2857 = vmul.f32 %v2855, 0.25
        %v2858 = vsel %vm613, %v2857, -inf
        %2859 = vmax.xlane.f32.xlu0 %v2858
        %v2860 = vpop.xlane.xlu0 %2859
        %v2861 = vsub.f32 %v2857, %v2860
        %v2862 = vmul.f32 %v2861, 1.442695
        %v2863 = vpow.pop %v2862
        %v2864 = vsel %vm613, %v2863, 0.0
        %2865 = vadd.xlane.f32.xlu0 %v2864
        %v2866 = vpop.xlane.xlu0 %2865
        %v2867 = vrcp.pop %v2866
        %v2868 = vmul.f32 %v2863, %v2867
        %2869 = vrot.lane.b32.xlu0 %v2620, 80
        %v2870 = vpop.permute.xlu0 %2869
        %v2873 = vsel %vm613, %v2868, 0
        %2875 = vmatpush.msra.mxu0 0.0
        %2876 = vmatpush.msra.mxu0 0.0
        %2877 = vmatpush.msra.mxu0 0.0
        %2878 = vmatpush.msra.mxu0 0.0
        %2879 = vmatpush.msra.mxu0 0.0
        %2880 = vmatpush.msra.mxu0 0.0
        %2881 = vmatpush.msra.mxu0 0.0
        %2882 = vmatpush.msra.mxu0 0.0
        %2883 = vmatpush.msra.mxu0 0.0
        %2884 = vmatpush.msra.mxu0 0.0
        %2885 = vmatpush.msra.mxu0 0.0
        %2886 = vmatpush.msra.mxu0 0.0
        %2887 = vmatpush.msra.mxu0 0.0
        %2888 = vmatpush.msra.mxu0 0.0
        %2889 = vmatpush.msra.mxu0 0.0
        %2890 = vmatpush.msra.mxu0 %v2870
        %2891 = vmatmul.f32.gmra.mxu0 %v2873
        %v2892 = vpop.f32.mrf.mxu0
        %v2893 = vadd.f32 0.0, %v2892
        %2894 = vdwg.mxu0
        %2896 = vrot.lane.b32.xlu0 %v2893, 48
        %v2897 = vpop.permute.xlu0 %2896
        %2899 = vst.msk [vmem:[#allocation2] sm:$0xff] %vm2154, %v2897
        %v2900 = vld [vmem:[#allocation2] sm:$0xff]
        %v2901 = vld [vmem:[#allocation3 + $0x1c] sm:$0xf]
        %v2902 = vld [vmem:[#allocation3 + $0x48] sm:$0xf]
        %v2903 = vld [vmem:[#allocation3 + $0x74] sm:$0xf]
        %v2904 = vld [vmem:[#allocation3 + $0xa0] sm:$0xf]
        %v2905 = vld [vmem:[#allocation3 + $0xcc] sm:$0xf]
        %v2906 = vld [vmem:[#allocation3 + $0xf8] sm:$0xf]
        %v2907 = vld [vmem:[#allocation3 + $0x124] sm:$0xf]
        %v2908 = vld [vmem:[#allocation3 + $0x150] sm:$0xf]
        %v2909 = vpack.c.bf16 %v2900, %v2900
        %v2918 = vunpack.c.l.b16 %v2901
        %v2919 = vunpack.c.l.b16 %v2902
        %v2920 = vunpack.c.l.b16 %v2903
        %v2921 = vunpack.c.l.b16 %v2904
        %v2922 = vunpack.c.l.b16 %v2905
        %v2923 = vunpack.c.l.b16 %v2906
        %v2924 = vunpack.c.l.b16 %v2907
        %v2925 = vunpack.c.l.b16 %v2908
        %v2926 = vpack.c.b16 %v2919, %v2918
        %v2927 = vpack.c.b16 %v2921, %v2920
        %v2928 = vpack.c.b16 %v2923, %v2922
        %v2929 = vpack.c.b16 %v2925, %v2924
        %v2935 = vsel %vm1753, %v2909, 0
        %2937 = vmatpush.bf16.msra.mxu0 0
        %2938 = vmatpush.bf16.msra.mxu0 0
        %2939 = vmatpush.bf16.msra.mxu0 0
        %2940 = vmatpush.bf16.msra.mxu0 0
        %2941 = vmatpush.bf16.msra.mxu0 %v2929
        %2942 = vmatpush.bf16.msra.mxu0 %v2928
        %2943 = vmatpush.bf16.msra.mxu0 %v2927
        %2944 = vmatpush.bf16.msra.mxu0 %v2926
        %2945 = vmatmul.bf16.gmra.mxu0 %v2935
        %v2946 = vpop.f32.mrf.mxu0
        %v2947 = vadd.f32 0.0, %v2946
        %v2948 = vpop.f32.mrf.mxu0
        %2949 = vdwg.mxu0
        %v2950 = vadd.f32 %v2506, %v2947
        %v2951 = vld [vmem:[%s9 + $0x1f] sm:$0x1]
        %v2953 = vperm.slane %v2951, 0
        %v2955 = vadd.f32 %v2950, %v2953
        %v2956 = vld [vmem:[%s9 + $0x20] sm:$0x1]
        %v2957 = vld [vmem:[%s9 + $0x21] sm:$0x1]
        %v2958 = vsel %vm1753, %v2955, 0.0
        %2959 = vadd.xlane.f32.xlu0 %v2958
        %v2960 = vpop.xlane.xlu0 %2959
        %v2961 = vmul.f32 %v2960, %v1763
        %v2962 = vsub.f32 %v2955, %v2961
        %v2963 = vmul.f32 %v2962, %v2962
        %v2964 = vsel %vm1753, %v2963, 0.0
        %2965 = vadd.xlane.f32.xlu0 %v2964
        %v2966 = vpop.xlane.xlu0 %2965
        %v2967 = vmul.f32 %v2966, %v1763
        %v2968 = vadd.f32 %v2967, 1e-05
        %v2969 = vrsqrt.pop %v2968
        %v2970 = vmul.f32 %v2969, %v2968
        %v2971 = vmul.f32 %v2970, %v2969
        %v2972 = vmul.f32 0.5, %v2971
        %v2973 = vsub.f32 1.5, %v2972
        %v2974 = vmul.f32 %v2969, %v2973
        %vm2975 = vweird.f32 %v2968
        %vm2976 = vweird.f32 %v2969
        %vm2977 = vmor %vm2975, %vm2976
        %v2978 = vsel %vm2977, %v2969, %v2974
        %v2979 = vmul.f32 %v2962, %v2978
        %v2981 = vperm.slane %v2956, 0
        %v2983 = vmul.f32 %v2979, %v2981
        %v2985 = vperm.slane %v2957, 0
        %v2987 = vadd.f32 %v2983, %v2985
        %v2988 = vld [vmem:[#allocation3 + $0x20] sm:$0xff]
        %v2989 = vld [vmem:[#allocation3 + $0x4c] sm:$0xff]
        %v2990 = vld [vmem:[#allocation3 + $0x78] sm:$0xff]
        %v2991 = vld [vmem:[#allocation3 + $0xa4] sm:$0xff]
        %v2992 = vld [vmem:[#allocation3 + $0xd0] sm:$0xff]
        %v2993 = vld [vmem:[#allocation3 + $0xfc] sm:$0xff]
        %v2994 = vld [vmem:[#allocation3 + $0x128] sm:$0xff]
        %v2995 = vld [vmem:[#allocation3 + $0x154] sm:$0xff]
        %v2996 = vpack.c.bf16 %v2987, %v2987
        %v2997 = vld [vmem:[%s9 + $0x22] sm:$0x3]
        %v2999 = vperm.slane %v2997, 0
        %v3000 = vperm.slane %v2997, 1
        %v3011 = vunpack.c.l.b16 %v2988
        %v3012 = vunpack.c.h.b16 %v2988
        %v3013 = vunpack.c.l.b16 %v2989
        %v3014 = vunpack.c.h.b16 %v2989
        %v3015 = vunpack.c.l.b16 %v2990
        %v3016 = vunpack.c.h.b16 %v2990
        %v3017 = vunpack.c.l.b16 %v2991
        %v3018 = vunpack.c.h.b16 %v2991
        %v3019 = vunpack.c.l.b16 %v2992
        %v3020 = vunpack.c.h.b16 %v2992
        %v3021 = vunpack.c.l.b16 %v2993
        %v3022 = vunpack.c.h.b16 %v2993
        %v3023 = vunpack.c.l.b16 %v2994
        %v3024 = vunpack.c.h.b16 %v2994
        %v3025 = vunpack.c.l.b16 %v2995
        %v3026 = vunpack.c.h.b16 %v2995
        %v3027 = vpack.c.b16 %v3013, %v3011
        %v3028 = vpack.c.b16 %v3014, %v3012
        %v3029 = vpack.c.b16 %v3017, %v3015
        %v3030 = vpack.c.b16 %v3018, %v3016
        %v3031 = vpack.c.b16 %v3021, %v3019
        %v3032 = vpack.c.b16 %v3022, %v3020
        %v3033 = vpack.c.b16 %v3025, %v3023
        %v3034 = vpack.c.b16 %v3026, %v3024
        %v3044 = vsel %vm1753, %v2996, 0
        %3046 = vmatpush.bf16.msra.mxu0 0
        %3047 = vmatpush.bf16.msra.mxu0 0
        %3048 = vmatpush.bf16.msra.mxu0 0
        %3049 = vmatpush.bf16.msra.mxu0 0
        %3050 = vmatpush.bf16.msra.mxu0 %v3033
        %3051 = vmatpush.bf16.msra.mxu0 %v3031
        %3052 = vmatpush.bf16.msra.mxu0 %v3029
        %3053 = vmatpush.bf16.msra.mxu0 %v3027
        %3054 = vmatmul.bf16.gmra.mxu0 %v3044
        %v3055 = vpop.f32.mrf.mxu0
        %v3056 = vadd.f32 %v2999, %v3055
        %v3057 = vpop.f32.mrf.mxu0
        %3058 = vdwg.mxu0
        %3059 = vmatpush.bf16.msra.mxu0 0
        %3060 = vmatpush.bf16.msra.mxu0 0
        %3061 = vmatpush.bf16.msra.mxu0 0
        %3062 = vmatpush.bf16.msra.mxu0 0
        %3063 = vmatpush.bf16.msra.mxu0 %v3034
        %3064 = vmatpush.bf16.msra.mxu0 %v3032
        %3065 = vmatpush.bf16.msra.mxu0 %v3030
        %3066 = vmatpush.bf16.msra.mxu0 %v3028
        %3067 = vmatmul.bf16.gmra.mxu0 %v3044
        %v3068 = vpop.f32.mrf.mxu0
        %v3069 = vadd.f32 %v3000, %v3068
        %v3070 = vpop.f32.mrf.mxu0
        %3071 = vdwg.mxu0
        %v3072 = vmul.f32 %v3056, %v3056
        %v3073 = vmul.f32 %v3069, %v3069
        %v3074 = vmul.f32 %v3056, %v3072
        %v3075 = vmul.f32 %v3069, %v3073
        %v3076 = vmul.f32 %v3074, 0.044715
        %v3077 = vmul.f32 %v3075, 0.044715
        %v3078 = vadd.f32 %v3056, %v3076
        %v3079 = vadd.f32 %v3069, %v3077
        %v3080 = vmul.f32 %v3078, 0.7978846
        %v3081 = vmul.f32 %v3079, 0.7978846
        %v3082 = vtanh.pop %v3080
        %v3083 = vtanh.pop %v3081
        %v3084 = vadd.f32 %v3082, 1.0
        %v3085 = vadd.f32 %v3083, 1.0
        %v3086 = vmul.f32 %v3084, 0.5
        %v3087 = vmul.f32 %v3085, 0.5
        %v3088 = vmul.f32 %v3056, %v3086
        %v3089 = vmul.f32 %v3069, %v3087
        %v3090 = vld [vmem:[%s6 + $0x80] sm:$0xf]
        %v3091 = vld [vmem:[%s6 + $0x84] sm:$0xf]
        %v3092 = vld [vmem:[%s6 + $0x88] sm:$0xf]
        %v3093 = vld [vmem:[%s6 + $0x8c] sm:$0xf]
        %v3094 = vld [vmem:[%s6 + $0x90] sm:$0xf]
        %v3095 = vld [vmem:[%s6 + $0x94] sm:$0xf]
        %v3096 = vld [vmem:[%s6 + $0x98] sm:$0xf]
        %v3097 = vld [vmem:[%s6 + $0x9c] sm:$0xf]
        %v3098 = vld [vmem:[%s6 + $0xa0] sm:$0xf]
        %v3099 = vld [vmem:[%s6 + $0xa4] sm:$0xf]
        %v3100 = vld [vmem:[%s6 + $0xa8] sm:$0xf]
        %v3101 = vld [vmem:[%s6 + $0xac] sm:$0xf]
        %v3102 = vld [vmem:[%s6 + $0xb0] sm:$0xf]
        %v3103 = vld [vmem:[%s6 + $0xb4] sm:$0xf]
        %v3104 = vld [vmem:[%s6 + $0xb8] sm:$0xf]
        %v3105 = vld [vmem:[%s6 + $0xbc] sm:$0xf]
        %v3106 = vld [vmem:[%s6 + $0xc0] sm:$0xf]
        %v3107 = vld [vmem:[%s6 + $0xc4] sm:$0xf]
        %v3108 = vld [vmem:[%s6 + $0xc8] sm:$0xf]
        %v3109 = vld [vmem:[%s6 + $0xcc] sm:$0xf]
        %v3110 = vld [vmem:[%s6 + $0xd0] sm:$0xf]
        %v3111 = vld [vmem:[%s6 + $0xd4] sm:$0xf]
        %v3112 = vld [vmem:[%s6 + $0xd8] sm:$0xf]
        %v3113 = vld [vmem:[%s6 + $0xdc] sm:$0xf]
        %v3114 = vld [vmem:[%s6 + $0xe0] sm:$0xf]
        %v3115 = vld [vmem:[%s6 + $0xe4] sm:$0xf]
        %v3116 = vld [vmem:[%s6 + $0xe8] sm:$0xf]
        %v3117 = vld [vmem:[%s6 + $0xec] sm:$0xf]
        %v3118 = vld [vmem:[%s6 + $0xf0] sm:$0xf]
        %v3119 = vld [vmem:[%s6 + $0xf4] sm:$0xf]
        %v3120 = vld [vmem:[%s6 + $0xf8] sm:$0xf]
        %v3121 = vld [vmem:[%s6 + $0xfc] sm:$0xf]
        %v3122 = vpack.c.bf16 %v3088, %v3088
        %v3123 = vpack.c.bf16 %v3089, %v3089
        %v3124 = vld [vmem:[%s9 + $0x24] sm:$0x1]
        %v3126 = vperm.slane %v3124, 0
        %v3160 = vunpack.c.l.b16 %v3090
        %v3161 = vunpack.c.l.b16 %v3091
        %v3162 = vunpack.c.l.b16 %v3092
        %v3163 = vunpack.c.l.b16 %v3093
        %v3164 = vunpack.c.l.b16 %v3094
        %v3165 = vunpack.c.l.b16 %v3095
        %v3166 = vunpack.c.l.b16 %v3096
        %v3167 = vunpack.c.l.b16 %v3097
        %v3168 = vunpack.c.l.b16 %v3098
        %v3169 = vunpack.c.l.b16 %v3099
        %v3170 = vunpack.c.l.b16 %v3100
        %v3171 = vunpack.c.l.b16 %v3101
        %v3172 = vunpack.c.l.b16 %v3102
        %v3173 = vunpack.c.l.b16 %v3103
        %v3174 = vunpack.c.l.b16 %v3104
        %v3175 = vunpack.c.l.b16 %v3105
        %v3176 = vunpack.c.l.b16 %v3106
        %v3177 = vunpack.c.l.b16 %v3107
        %v3178 = vunpack.c.l.b16 %v3108
        %v3179 = vunpack.c.l.b16 %v3109
        %v3180 = vunpack.c.l.b16 %v3110
        %v3181 = vunpack.c.l.b16 %v3111
        %v3182 = vunpack.c.l.b16 %v3112
        %v3183 = vunpack.c.l.b16 %v3113
        %v3184 = vunpack.c.l.b16 %v3114
        %v3185 = vunpack.c.l.b16 %v3115
        %v3186 = vunpack.c.l.b16 %v3116
        %v3187 = vunpack.c.l.b16 %v3117
        %v3188 = vunpack.c.l.b16 %v3118
        %v3189 = vunpack.c.l.b16 %v3119
        %v3190 = vunpack.c.l.b16 %v3120
        %v3191 = vunpack.c.l.b16 %v3121
        %v3192 = vpack.c.b16 %v3161, %v3160
        %v3193 = vpack.c.b16 %v3163, %v3162
        %v3194 = vpack.c.b16 %v3165, %v3164
        %v3195 = vpack.c.b16 %v3167, %v3166
        %v3196 = vpack.c.b16 %v3169, %v3168
        %v3197 = vpack.c.b16 %v3171, %v3170
        %v3198 = vpack.c.b16 %v3173, %v3172
        %v3199 = vpack.c.b16 %v3175, %v3174
        %v3200 = vpack.c.b16 %v3177, %v3176
        %v3201 = vpack.c.b16 %v3179, %v3178
        %v3202 = vpack.c.b16 %v3181, %v3180
        %v3203 = vpack.c.b16 %v3183, %v3182
        %v3204 = vpack.c.b16 %v3185, %v3184
        %v3205 = vpack.c.b16 %v3187, %v3186
        %v3206 = vpack.c.b16 %v3189, %v3188
        %v3207 = vpack.c.b16 %v3191, %v3190
        %3224 = vmatpush.bf16.msra.mxu0 %v3199
        %3225 = vmatpush.bf16.msra.mxu0 %v3198
        %3226 = vmatpush.bf16.msra.mxu0 %v3197
        %3227 = vmatpush.bf16.msra.mxu0 %v3196
        %3228 = vmatpush.bf16.msra.mxu0 %v3195
        %3229 = vmatpush.bf16.msra.mxu0 %v3194
        %3230 = vmatpush.bf16.msra.mxu0 %v3193
        %3231 = vmatpush.bf16.msra.mxu0 %v3192
        %3232 = vmatmul.bf16.gmra.mxu0 %v3122
        %v3233 = vpop.f32.mrf.mxu0
        %v3234 = vadd.f32 %v3126, %v3233
        %v3235 = vpop.f32.mrf.mxu0
        %3236 = vdwg.mxu0
        %3237 = vmatpush.bf16.msra.mxu0 %v3207
        %3238 = vmatpush.bf16.msra.mxu0 %v3206
        %3239 = vmatpush.bf16.msra.mxu0 %v3205
        %3240 = vmatpush.bf16.msra.mxu0 %v3204
        %3241 = vmatpush.bf16.msra.mxu0 %v3203
        %3242 = vmatpush.bf16.msra.mxu0 %v3202
        %3243 = vmatpush.bf16.msra.mxu0 %v3201
        %3244 = vmatpush.bf16.msra.mxu0 %v3200
        %3245 = vmatmul.bf16.gmra.mxu0 %v3123
        %v3246 = vpop.f32.mrf.mxu0
        %v3247 = vadd.f32 %v3234, %v3246
        %v3248 = vpop.f32.mrf.mxu0
        %3249 = vdwg.mxu0
        %v3250 = vadd.f32 %v2955, %v3247
        %v3251 = vld [vmem:[%s6 + $0x100] sm:$0xf]
        %v3252 = vld [vmem:[%s6 + $0x104] sm:$0xf]
        %v3253 = vpack.c.bf16 %v3250, %v3250
        %v3256 = vunpack.c.l.b16 %v3251
        %v3257 = vunpack.c.l.b16 %v3252
        %v3258 = vpack.c.b16 %v3257, %v3256
        %v3260 = vsel %vm1753, %v3258, 0
        %v3263 = vsel %vm1753, %v3253, 0
        %3265 = vmatpush.bf16.xpose.msra.mxu0 0
        %3266 = vmatpush.bf16.xpose.msra.mxu0 0
        %3267 = vmatpush.bf16.xpose.msra.mxu0 0
        %3268 = vmatpush.bf16.xpose.msra.mxu0 0
        %3269 = vmatpush.bf16.xpose.msra.mxu0 0
        %3270 = vmatpush.bf16.xpose.msra.mxu0 0
        %3271 = vmatpush.bf16.xpose.msra.mxu0 0
        %3272 = vmatpush.bf16.xpose.msra.mxu0 %v3263
        %3273 = vmatmul.bf16.gmra.mxu0 %v3260
        %v3274 = vpop.f32.mrf.mxu0
        %v3275 = vadd.f32 0.0, %v3274
        %v3276 = vpop.f32.mrf.mxu0
        %v3277 = vadd.f32 0.0, %v3276
        %3278 = vdwg.mxu0
        %v3279 = vmul.f32 %v3275, 0.125
        %v3280 = vmul.f32 %v3277, 0.125
        %v3281 = vsel %vm613, %v3279, -inf
        %3282 = vmax.xlane.f32.xlu0 %v3281
        %v3283 = vpop.xlane.xlu0 %3282
        %v3284 = vsel %vm613, %v3280, -inf
        %3285 = vmax.xlane.f32.xlu0 %v3284
        %v3286 = vpop.xlane.xlu0 %3285
        %v3287 = vsub.f32 %v3279, %v3283
        %v3288 = vsub.f32 %v3280, %v3286
        %v3289 = vmul.f32 %v3287, 1.442695
        %v3290 = vpow.pop %v3289
        %v3291 = vmul.f32 %v3288, 1.442695
        %v3292 = vpow.pop %v3291
        %v3293 = vsel %vm613, %v3290, 0.0
        %3294 = vadd.xlane.f32.xlu0 %v3293
        %v3295 = vpop.xlane.xlu0 %3294
        %v3296 = vsel %vm613, %v3292, 0.0
        %3297 = vadd.xlane.f32.xlu0 %v3296
        %v3298 = vpop.xlane.xlu0 %3297
        %v3299 = vrcp.pop %v3295
        %v3300 = vrcp.pop %v3298
        %v3301 = vmul.f32 %v3290, %v3299
        %v3302 = vmul.f32 %v3292, %v3300
        %v3304 = vsel %vm613, %v3301, 0
        %v3307 = vsel %vm613, %v3302, 0
        %3309 = vmatpush.msra.mxu0 0.0
        %3310 = vmatpush.msra.mxu0 0.0
        %3311 = vmatpush.msra.mxu0 0.0
        %3312 = vmatpush.msra.mxu0 0.0
        %3313 = vmatpush.msra.mxu0 0.0
        %3314 = vmatpush.msra.mxu0 0.0
        %3315 = vmatpush.msra.mxu0 0.0
        %3316 = vmatpush.msra.mxu0 0.0
        %3317 = vmatpush.msra.mxu0 0.0
        %3318 = vmatpush.msra.mxu0 0.0
        %3319 = vmatpush.msra.mxu0 0.0
        %3320 = vmatpush.msra.mxu0 0.0
        %3321 = vmatpush.msra.mxu0 0.0
        %3322 = vmatpush.msra.mxu0 0.0
        %3323 = vmatpush.msra.mxu0 0.0
        %3324 = vmatpush.msra.mxu0 %v3250
        %3325 = vmatmul.f32.gmra.mxu0 %v3304
        %v3326 = vpop.f32.mrf.mxu0
        %v3327 = vadd.f32 0.0, %v3326
        %3328 = vmatmul.f32.gmra.mxu0 %v3307
        %v3329 = vpop.f32.mrf.mxu0
        %v3330 = vadd.f32 0.0, %v3329
        %3331 = vdwg.mxu0
        %v3332 = vld [vmem:[#allocation3 + $0x28] sm:$0xf]
        %v3333 = vld [vmem:[#allocation3 + $0x54] sm:$0xf]
        %v3334 = vld [vmem:[#allocation3 + $0x80] sm:$0xf]
        %v3335 = vld [vmem:[#allocation3 + $0xac] sm:$0xf]
        %v3336 = vld [vmem:[#allocation3 + $0xd8] sm:$0xf]
        %v3337 = vld [vmem:[#allocation3 + $0x104] sm:$0xf]
        %v3338 = vld [vmem:[#allocation3 + $0x130] sm:$0xf]
        %v3339 = vld [vmem:[#allocation3 + $0x15c] sm:$0xf]
        %v3340 = vpack.c.bf16 %v3330, %v3327
        %v3341 = vld [vmem:[%s9 + $0x25] sm:$0x1]
        %v3343 = vperm.slane %v3341, 0
        %v3353 = vunpack.c.l.b16 %v3332
        %v3354 = vunpack.c.l.b16 %v3333
        %v3355 = vunpack.c.l.b16 %v3334
        %v3356 = vunpack.c.l.b16 %v3335
        %v3357 = vunpack.c.l.b16 %v3336
        %v3358 = vunpack.c.l.b16 %v3337
        %v3359 = vunpack.c.l.b16 %v3338
        %v3360 = vunpack.c.l.b16 %v3339
        %v3361 = vpack.c.b16 %v3354, %v3353
        %v3362 = vpack.c.b16 %v3356, %v3355
        %v3363 = vpack.c.b16 %v3358, %v3357
        %v3364 = vpack.c.b16 %v3360, %v3359
        %v3370 = vsel %vm1753, %v3340, 0
        %3372 = vmatpush.bf16.msra.mxu0 0
        %3373 = vmatpush.bf16.msra.mxu0 0
        %3374 = vmatpush.bf16.msra.mxu0 0
        %3375 = vmatpush.bf16.msra.mxu0 0
        %3376 = vmatpush.bf16.msra.mxu0 %v3364
        %3377 = vmatpush.bf16.msra.mxu0 %v3363
        %3378 = vmatpush.bf16.msra.mxu0 %v3362
        %3379 = vmatpush.bf16.msra.mxu0 %v3361
        %3380 = vmatmul.bf16.gmra.mxu0 %v3370
        %v3381 = vpop.f32.mrf.mxu0
        %v3382 = vadd.f32 %v3343, %v3381
        %v3383 = vpop.f32.mrf.mxu0
        %v3384 = vadd.f32 %v3343, %v3383
        %3385 = vdwg.mxu0
        %v3386 = vld [vmem:[%s10 + $0x40] sm:$0xff]
        %v3387 = vld [vmem:[%s10 + $0x48] sm:$0xff]
        %v3388 = vld [vmem:[%s10 + $0x50] sm:$0xff]
        %v3389 = vld [vmem:[%s10 + $0x58] sm:$0xff]
        %v3390 = vld [vmem:[%s10 + $0x60] sm:$0xff]
        %v3391 = vld [vmem:[%s10 + $0x68] sm:$0xff]
        %v3392 = vld [vmem:[%s10 + $0x70] sm:$0xff]
        %v3393 = vld [vmem:[%s10 + $0x78] sm:$0xff]
        %v3394 = vld [vmem:[%s10 + $0x80] sm:$0xff]
        %v3395 = vld [vmem:[%s10 + $0x88] sm:$0xff]
        %v3396 = vld [vmem:[%s10 + $0x90] sm:$0xff]
        %v3397 = vld [vmem:[%s10 + $0x98] sm:$0xff]
        %v3398 = vld [vmem:[%s10 + $0xa0] sm:$0xff]
        %v3399 = vld [vmem:[%s10 + $0xa8] sm:$0xff]
        %v3400 = vld [vmem:[%s10 + $0xb0] sm:$0xff]
        %v3401 = vld [vmem:[%s10 + $0xb8] sm:$0xff]
        %v3402 = vld [vmem:[%s9 + $0x56] sm:$0x1]
        %v3404 = vperm.slane %v3402, 0
        %3406 = vmatpush.msra.mxu0 %v3401
        %3407 = vmatpush.msra.mxu0 %v3400
        %3408 = vmatpush.msra.mxu0 %v3399
        %3409 = vmatpush.msra.mxu0 %v3398
        %3410 = vmatpush.msra.mxu0 %v3397
        %3411 = vmatpush.msra.mxu0 %v3396
        %3412 = vmatpush.msra.mxu0 %v3395
        %3413 = vmatpush.msra.mxu0 %v3394
        %3414 = vmatpush.msra.mxu0 %v3393
        %3415 = vmatpush.msra.mxu0 %v3392
        %3416 = vmatpush.msra.mxu0 %v3391
        %3417 = vmatpush.msra.mxu0 %v3390
        %3418 = vmatpush.msra.mxu0 %v3389
        %3419 = vmatpush.msra.mxu0 %v3388
        %3420 = vmatpush.msra.mxu0 %v3387
        %3421 = vmatpush.msra.mxu0 %v3386
        %3422 = vmatmul.f32.gmra.mxu0 %v3382
        %v3423 = vpop.f32.mrf.mxu0
        %v3424 = vadd.f32 %v3404, %v3423
        %3425 = vmatmul.f32.gmra.mxu0 %v3384
        %v3426 = vpop.f32.mrf.mxu0
        %v3427 = vadd.f32 %v3404, %v3426
        %3428 = vdwg.mxu0
        %v3429 = vld [vmem:[%s10] sm:$0xff]
        %v3430 = vld [vmem:[%s10 + $0x8] sm:$0xff]
        %v3431 = vld [vmem:[%s10 + $0x10] sm:$0xff]
        %v3432 = vld [vmem:[%s10 + $0x18] sm:$0xff]
        %v3433 = vld [vmem:[%s10 + $0x20] sm:$0xff]
        %v3434 = vld [vmem:[%s10 + $0x28] sm:$0xff]
        %v3435 = vld [vmem:[%s10 + $0x30] sm:$0xff]
        %v3436 = vld [vmem:[%s10 + $0x38] sm:$0xff]
        %v3438 = vsel %vm1878, %v3424, 0
        %v3441 = vsel %vm1878, %v3427, 0
        %v3444 = vsel %vm1878, %v3429, 0
        %v3447 = vsel %vm1878, %v3430, 0
        %v3450 = vsel %vm1878, %v3431, 0
        %v3453 = vsel %vm1878, %v3432, 0
        %v3456 = vsel %vm1878, %v3433, 0
        %v3459 = vsel %vm1878, %v3434, 0
        %v3462 = vsel %vm1878, %v3435, 0
        %v3465 = vsel %vm1878, %v3436, 0
        %3467 = vmatpush.xpose.msra.mxu0 0.0
        %3468 = vmatpush.xpose.msra.mxu0 0.0
        %3469 = vmatpush.xpose.msra.mxu0 0.0
        %3470 = vmatpush.xpose.msra.mxu0 0.0
        %3471 = vmatpush.xpose.msra.mxu0 0.0
        %3472 = vmatpush.xpose.msra.mxu0 0.0
        %3473 = vmatpush.xpose.msra.mxu0 0.0
        %3474 = vmatpush.xpose.msra.mxu0 0.0
        %3475 = vmatpush.xpose.msra.mxu0 %v3465
        %3476 = vmatpush.xpose.msra.mxu0 %v3462
        %3477 = vmatpush.xpose.msra.mxu0 %v3459
        %3478 = vmatpush.xpose.msra.mxu0 %v3456
        %3479 = vmatpush.xpose.msra.mxu0 %v3453
        %3480 = vmatpush.xpose.msra.mxu0 %v3450
        %3481 = vmatpush.xpose.msra.mxu0 %v3447
        %3482 = vmatpush.xpose.msra.mxu0 %v3444
        %3483 = vmatmul.f32.gmra.mxu0 %v3438
        %v3484 = vpop.f32.mrf.mxu0
        %v3485 = vadd.f32 0.0, %v3484
        %3486 = vmatmul.f32.gmra.mxu0 %v3441
        %v3487 = vpop.f32.mrf.mxu0
        %v3488 = vadd.f32 0.0, %v3487
        %3489 = vdwg.mxu0
        %v3490 = vmul.f32 %v3429, %v3429
        %v3491 = vmul.f32 %v3430, %v3430
        %v3492 = vmul.f32 %v3431, %v3431
        %v3493 = vmul.f32 %v3432, %v3432
        %v3494 = vmul.f32 %v3433, %v3433
        %v3495 = vmul.f32 %v3434, %v3434
        %v3496 = vmul.f32 %v3435, %v3435
        %v3497 = vmul.f32 %v3436, %v3436
        %v3499 = vsel %vm1878, 1.0, 0
        %v3502 = vsel %vm1878, %v3490, 0
        %v3505 = vsel %vm1878, %v3491, 0
        %v3508 = vsel %vm1878, %v3492, 0
        %v3511 = vsel %vm1878, %v3493, 0
        %v3514 = vsel %vm1878, %v3494, 0
        %v3517 = vsel %vm1878, %v3495, 0
        %v3520 = vsel %vm1878, %v3496, 0
        %v3523 = vsel %vm1878, %v3497, 0
        %3525 = vmatpush.xpose.msra.mxu0 0.0
        %3526 = vmatpush.xpose.msra.mxu0 0.0
        %3527 = vmatpush.xpose.msra.mxu0 0.0
        %3528 = vmatpush.xpose.msra.mxu0 0.0
        %3529 = vmatpush.xpose.msra.mxu0 0.0
        %3530 = vmatpush.xpose.msra.mxu0 0.0
        %3531 = vmatpush.xpose.msra.mxu0 0.0
        %3532 = vmatpush.xpose.msra.mxu0 0.0
        %3533 = vmatpush.xpose.msra.mxu0 %v3523
        %3534 = vmatpush.xpose.msra.mxu0 %v3520
        %3535 = vmatpush.xpose.msra.mxu0 %v3517
        %3536 = vmatpush.xpose.msra.mxu0 %v3514
        %3537 = vmatpush.xpose.msra.mxu0 %v3511
        %3538 = vmatpush.xpose.msra.mxu0 %v3508
        %3539 = vmatpush.xpose.msra.mxu0 %v3505
        %3540 = vmatpush.xpose.msra.mxu0 %v3502
        %3541 = vmatmul.f32.gmra.mxu0 %v3499
        %v3542 = vpop.f32.mrf.mxu0
        %v3543 = vadd.f32 0.0, %v3542
        %3544 = vdwg.mxu0
        %v3545 = vmul.f32 %v3485, 2.0
        %v3546 = vmul.f32 %v3488, 2.0
        %v3547 = vperm.slane %v3543, 0
        %v3548 = vsub.f32 %v3547, %v3545
        %v3549 = vsub.f32 %v3547, %v3546
        %v3550 = vlaneseq
        %v3551 = vand.u32 %v3550, 127
        %v3552 = vsel %vm1753, %v3548, inf
        %3553 = vmin.xlane.f32.xlu0 %v3552
        %v3554 = vpop.xlane.xlu0 %3553
        %v3555 = vsel %vm1753, %v3549, inf
        %3556 = vmin.xlane.f32.xlu0 %v3555
        %v3557 = vpop.xlane.xlu0 %3556
        %vm3558 = vcmp.le.f32.partialorder %v3548, %v3554
        %vm3559 = vcmp.le.f32.partialorder %v3549, %v3557
        %v3560 = vsel %vm3558, %v3551, 64
        %v3561 = vsel %vm3559, %v3551, 64
        %v3562 = vsel %vm1753, %v3560, 2147483647
        %v3563 = vand.u32 %v3562, 65535
        %v3564 = vshra.s32 %v3562, 16
        %v3565 = vcvt.s32.f32 %v3563
        %v3566 = vcvt.s32.f32 %v3564
        %3567 = vmin.xlane.f32.xlu0 %v3566
        %v3568 = vpop.xlane.xlu0 %3567
        %vm3569 = vcmp.eq.f32.partialorder %v3566, %v3568
        %v3570 = vsel %vm3569, %v3565, inf
        %3571 = vmin.xlane.f32.xlu0 %v3570
        %v3572 = vpop.xlane.xlu0 %3571
        %v3573 = vcvt.f32.s32 %v3572
        %v3574 = vcvt.f32.s32 %v3568
        %v3575 = vshll.u32 %v3574, 16
        %v3576 = vadd.s32 %v3575, %v3573
        %v3577 = vsel %vm1753, %v3561, 2147483647
        %v3578 = vand.u32 %v3577, 65535
        %v3579 = vshra.s32 %v3577, 16
        %v3580 = vcvt.s32.f32 %v3578
        %v3581 = vcvt.s32.f32 %v3579
        %3582 = vmin.xlane.f32.xlu0 %v3581
        %v3583 = vpop.xlane.xlu0 %3582
        %vm3584 = vcmp.eq.f32.partialorder %v3581, %v3583
        %v3585 = vsel %vm3584, %v3580, inf
        %3586 = vmin.xlane.f32.xlu0 %v3585
        %v3587 = vpop.xlane.xlu0 %3586
        %v3588 = vcvt.f32.s32 %v3587
        %v3589 = vcvt.f32.s32 %v3583
        %v3590 = vshll.u32 %v3589, 16
        %v3591 = vadd.s32 %v3590, %v3588
        %vm3592 = vcmp.eq.s32.totalorder %v3551, %v3576
        %vm3593 = vcmp.eq.s32.totalorder %v3551, %v3591
        %v3594 = vsel %vm3592, 1, 0
        %v3595 = vsel %vm3593, 1, 0
        %v3596 = vcvt.s32.f32 %v3594
        %v3597 = vcvt.s32.f32 %v3595
        %v3599 = vsel %vm1753, %v3596, 0
        %v3602 = vsel %vm1753, %v3597, 0
        %3604 = vmatpush.msra.mxu0 0.0
        %3605 = vmatpush.msra.mxu0 0.0
        %3606 = vmatpush.msra.mxu0 0.0
        %3607 = vmatpush.msra.mxu0 0.0
        %3608 = vmatpush.msra.mxu0 0.0
        %3609 = vmatpush.msra.mxu0 0.0
        %3610 = vmatpush.msra.mxu0 0.0
        %3611 = vmatpush.msra.mxu0 0.0
        %3612 = vmatpush.msra.mxu0 %v3436
        %3613 = vmatpush.msra.mxu0 %v3435
        %3614 = vmatpush.msra.mxu0 %v3434
        %3615 = vmatpush.msra.mxu0 %v3433
        %3616 = vmatpush.msra.mxu0 %v3432
        %3617 = vmatpush.msra.mxu0 %v3431
        %3618 = vmatpush.msra.mxu0 %v3430
        %3619 = vmatpush.msra.mxu0 %v3429
        %3620 = vmatmul.f32.gmra.mxu0 %v3599
        %v3621 = vpop.f32.mrf.mxu0
        %v3622 = vadd.f32 0.0, %v3621
        %3623 = vmatmul.f32.gmra.mxu0 %v3602
        %v3624 = vpop.f32.mrf.mxu0
        %v3625 = vadd.f32 0.0, %v3624
        %3626 = vdwg.mxu0
        %v3627 = vcvt.s32.f32 %v3551
        %v3629 = vsel %vm1753, %v3627, 0
        %3631 = vmatpush.xpose.msra.mxu0 0.0
        %3632 = vmatpush.xpose.msra.mxu0 0.0
        %3633 = vmatpush.xpose.msra.mxu0 0.0
        %3634 = vmatpush.xpose.msra.mxu0 0.0
        %3635 = vmatpush.xpose.msra.mxu0 0.0
        %3636 = vmatpush.xpose.msra.mxu0 0.0
        %3637 = vmatpush.xpose.msra.mxu0 0.0
        %3638 = vmatpush.xpose.msra.mxu0 0.0
        %3639 = vmatpush.xpose.msra.mxu0 0.0
        %3640 = vmatpush.xpose.msra.mxu0 0.0
        %3641 = vmatpush.xpose.msra.mxu0 0.0
        %3642 = vmatpush.xpose.msra.mxu0 0.0
        %3643 = vmatpush.xpose.msra.mxu0 0.0
        %3644 = vmatpush.xpose.msra.mxu0 0.0
        %3645 = vmatpush.xpose.msra.mxu0 %v3602
        %3646 = vmatpush.xpose.msra.mxu0 %v3599
        %3647 = vmatmul.f32.gmra.mxu0 %v3629
        %v3648 = vpop.f32.mrf.mxu0
        %v3649 = vadd.f32 0.0, %v3648
        %3650 = vdwg.mxu0
        %v3651 = vcvt.f32.s32.to.zero.pseudo %v3649
        %vm3652 = vcmask 122880
        %3653 = vst.msk [vmem:[%s526] sm:$0x1] %vm3652, %v3651
        %v3654 = vsub.f32 %v3622, %v3424
        %v3655 = vsub.f32 %v3625, %v3427
        %v3656 = vmul.f32 %v3654, %v3654
        %v3657 = vmul.f32 %v3655, %v3655
        %v3658 = vsel %vm1878, %v3656, 0.0
        %3659 = vadd.xlane.f32.xlu0 %v3658
        %v3660 = vpop.xlane.xlu0 %3659
        %v3661 = vsel %vm1878, %v3657, 0.0
        %3662 = vadd.xlane.f32.xlu0 %v3661
        %v3663 = vpop.xlane.xlu0 %3662
        %v3664 = vadd.f32 %v3660, %v3663
        %v3665 = vrot.slane %v3664, 4
        %v3666 = vadd.f32 %v3664, %v3665
        %v3667 = vrot.slane %v3666, 2
        %v3668 = vadd.f32 %v3666, %v3667
        %v3669 = vrot.slane %v3668, 1
        %v3670 = vadd.f32 %v3668, %v3669
        %vm3671 = vcmask 0
        %3672 = vst.msk [vmem:[%s529] sm:$0x1] %vm3671, %v3670
        %v3673 = vld [vmem:[%s11] sm:$0xff]
        %v3674 = vld [vmem:[%s11 + $0x8] sm:$0xff]
        %v3675 = vld [vmem:[%s9 + $0x57] sm:$0x1]
        %v3677 = vperm.slane %v3675, 0
        %v3680 = vsel %vm1878, %v3622, 0
        %v3683 = vsel %vm1878, %v3625, 0
        %3685 = vmatpush.msra.mxu0 0.0
        %3686 = vmatpush.msra.mxu0 0.0
        %3687 = vmatpush.msra.mxu0 0.0
        %3688 = vmatpush.msra.mxu0 0.0
        %3689 = vmatpush.msra.mxu0 0.0
        %3690 = vmatpush.msra.mxu0 0.0
        %3691 = vmatpush.msra.mxu0 0.0
        %3692 = vmatpush.msra.mxu0 0.0
        %3693 = vmatpush.msra.mxu0 0.0
        %3694 = vmatpush.msra.mxu0 0.0
        %3695 = vmatpush.msra.mxu0 0.0
        %3696 = vmatpush.msra.mxu0 0.0
        %3697 = vmatpush.msra.mxu0 0.0
        %3698 = vmatpush.msra.mxu0 0.0
        %3699 = vmatpush.msra.mxu0 %v3674
        %3700 = vmatpush.msra.mxu0 %v3673
        %3701 = vmatmul.f32.gmra.mxu0 %v3680
        %v3702 = vpop.f32.mrf.mxu0
        %v3703 = vadd.f32 %v3677, %v3702
        %3704 = vmatmul.f32.gmra.mxu0 %v3683
        %v3705 = vpop.f32.mrf.mxu0
        %v3706 = vadd.f32 %v3677, %v3705
        %3707 = vdwg.mxu0
        %v3708 = vld [vmem:[%s9 + $0x26] sm:$0x1]
        %v3709 = vld [vmem:[%s9 + $0x27] sm:$0x1]
        %3710 = vadd.xlane.f32.xlu0 %v3703
        %v3711 = vpop.xlane.xlu0 %3710
        %3712 = vadd.xlane.f32.xlu0 %v3706
        %v3713 = vpop.xlane.xlu0 %3712
        %v3714 = vrcp.pop 128.0
        %v3715 = vmul.f32 128.0, %v3714
        %v3716 = vsub.f32 1.0, %v3715
        %v3717 = vmul.f32 %v3714, %v3716
        %v3718 = vadd.f32 %v3714, %v3717
        %vm3719 = vweird.f32 %v3714
        %v3720 = vsel %vm3719, %v3714, %v3718
        %v3721 = vmul.f32 %v3711, %v3720
        %v3722 = vmul.f32 %v3713, %v3720
        %v3723 = vsub.f32 %v3703, %v3721
        %v3724 = vsub.f32 %v3706, %v3722
        %v3725 = vmul.f32 %v3723, %v3723
        %v3726 = vmul.f32 %v3724, %v3724
        %3727 = vadd.xlane.f32.xlu0 %v3725
        %v3728 = vpop.xlane.xlu0 %3727
        %3729 = vadd.xlane.f32.xlu0 %v3726
        %v3730 = vpop.xlane.xlu0 %3729
        %v3731 = vmul.f32 %v3728, %v3720
        %v3732 = vmul.f32 %v3730, %v3720
        %v3733 = vadd.f32 %v3731, 1e-05
        %v3734 = vadd.f32 %v3732, 1e-05
        %v3735 = vrsqrt.pop %v3733
        %v3736 = vmul.f32 %v3735, %v3733
        %v3737 = vmul.f32 %v3736, %v3735
        %v3738 = vmul.f32 0.5, %v3737
        %v3739 = vsub.f32 1.5, %v3738
        %v3740 = vmul.f32 %v3735, %v3739
        %vm3741 = vweird.f32 %v3733
        %vm3742 = vweird.f32 %v3735
        %vm3743 = vmor %vm3741, %vm3742
        %v3744 = vsel %vm3743, %v3735, %v3740
        %v3745 = vrsqrt.pop %v3734
        %v3746 = vmul.f32 %v3745, %v3734
        %v3747 = vmul.f32 %v3746, %v3745
        %v3748 = vmul.f32 0.5, %v3747
        %v3749 = vsub.f32 1.5, %v3748
        %v3750 = vmul.f32 %v3745, %v3749
        %vm3751 = vweird.f32 %v3734
        %vm3752 = vweird.f32 %v3745
        %vm3753 = vmor %vm3751, %vm3752
        %v3754 = vsel %vm3753, %v3745, %v3750
        %v3755 = vmul.f32 %v3723, %v3744
        %v3756 = vmul.f32 %v3724, %v3754
        %v3758 = vperm.slane %v3708, 0
        %v3760 = vmul.f32 %v3755, %v3758
        %v3761 = vmul.f32 %v3756, %v3758
        %v3763 = vperm.slane %v3709, 0
        %v3765 = vadd.f32 %v3760, %v3763
        %v3766 = vadd.f32 %v3761, %v3763
        %v3767 = vld [vmem:[#allocation6] sm:$0xff]
        %v3768 = vld [vmem:[#allocation6 + $0x8] sm:$0xf]
        %v3769 = vld [vmem:[#allocation6 + $0x44] sm:$0xff]
        %v3770 = vld [vmem:[#allocation6 + $0x4c] sm:$0xf]
        %v3771 = vld [vmem:[#allocation6 + $0x88] sm:$0xff]
        %v3772 = vld [vmem:[#allocation6 + $0x90] sm:$0xf]
        %v3773 = vld [vmem:[#allocation6 + $0xcc] sm:$0xff]
        %v3774 = vld [vmem:[#allocation6 + $0xd4] sm:$0xf]
        %v3775 = vld [vmem:[#allocation6 + $0x110] sm:$0xff]
        %v3776 = vld [vmem:[#allocation6 + $0x118] sm:$0xf]
        %v3777 = vld [vmem:[#allocation6 + $0x154] sm:$0xff]
        %v3778 = vld [vmem:[#allocation6 + $0x15c] sm:$0xf]
        %v3779 = vld [vmem:[#allocation6 + $0x198] sm:$0xff]
        %v3780 = vld [vmem:[#allocation6 + $0x1a0] sm:$0xf]
        %v3781 = vld [vmem:[#allocation6 + $0x1dc] sm:$0xff]
        %v3782 = vld [vmem:[#allocation6 + $0x1e4] sm:$0xf]
        %v3783 = vld [vmem:[#allocation6 + $0x220] sm:$0xff]
        %v3784 = vld [vmem:[#allocation6 + $0x228] sm:$0xf]
        %v3785 = vld [vmem:[#allocation6 + $0x264] sm:$0xff]
        %v3786 = vld [vmem:[#allocation6 + $0x26c] sm:$0xf]
        %v3787 = vld [vmem:[#allocation6 + $0x2a8] sm:$0xff]
        %v3788 = vld [vmem:[#allocation6 + $0x2b0] sm:$0xf]
        %v3789 = vld [vmem:[#allocation6 + $0x2ec] sm:$0xff]
        %v3790 = vld [vmem:[#allocation6 + $0x2f4] sm:$0xf]
        %v3791 = vld [vmem:[#allocation6 + $0x330] sm:$0xff]
        %v3792 = vld [vmem:[#allocation6 + $0x338] sm:$0xf]
        %v3793 = vld [vmem:[#allocation6 + $0x374] sm:$0xff]
        %v3794 = vld [vmem:[#allocation6 + $0x37c] sm:$0xf]
        %v3795 = vld [vmem:[#allocation6 + $0x3b8] sm:$0xff]
        %v3796 = vld [vmem:[#allocation6 + $0x3c0] sm:$0xf]
        %v3797 = vld [vmem:[#allocation6 + $0x3fc] sm:$0xff]
        %v3798 = vld [vmem:[#allocation6 + $0x404] sm:$0xf]
        %v3799 = vpack.c.bf16 %v3766, %v3765
        %v3800 = vld [vmem:[%s9 + $0x28] sm:$0x7]
        %v3802 = vperm.slane %v3800, 0
        %v3803 = vperm.slane %v3800, 1
        %v3804 = vperm.slane %v3800, 2
        %v3840 = vunpack.c.l.b16 %v3767
        %v3841 = vunpack.c.h.b16 %v3767
        %v3842 = vunpack.c.l.b16 %v3768
        %v3843 = vunpack.c.l.b16 %v3769
        %v3844 = vunpack.c.h.b16 %v3769
        %v3845 = vunpack.c.l.b16 %v3770
        %v3846 = vunpack.c.l.b16 %v3771
        %v3847 = vunpack.c.h.b16 %v3771
        %v3848 = vunpack.c.l.b16 %v3772
        %v3849 = vunpack.c.l.b16 %v3773
        %v3850 = vunpack.c.h.b16 %v3773
        %v3851 = vunpack.c.l.b16 %v3774
        %v3852 = vunpack.c.l.b16 %v3775
        %v3853 = vunpack.c.h.b16 %v3775
        %v3854 = vunpack.c.l.b16 %v3776
        %v3855 = vunpack.c.l.b16 %v3777
        %v3856 = vunpack.c.h.b16 %v3777
        %v3857 = vunpack.c.l.b16 %v3778
        %v3858 = vunpack.c.l.b16 %v3779
        %v3859 = vunpack.c.h.b16 %v3779
        %v3860 = vunpack.c.l.b16 %v3780
        %v3861 = vunpack.c.l.b16 %v3781
        %v3862 = vunpack.c.h.b16 %v3781
        %v3863 = vunpack.c.l.b16 %v3782
        %v3864 = vunpack.c.l.b16 %v3783
        %v3865 = vunpack.c.h.b16 %v3783
        %v3866 = vunpack.c.l.b16 %v3784
        %v3867 = vunpack.c.l.b16 %v3785
        %v3868 = vunpack.c.h.b16 %v3785
        %v3869 = vunpack.c.l.b16 %v3786
        %v3870 = vunpack.c.l.b16 %v3787
        %v3871 = vunpack.c.h.b16 %v3787
        %v3872 = vunpack.c.l.b16 %v3788
        %v3873 = vunpack.c.l.b16 %v3789
        %v3874 = vunpack.c.h.b16 %v3789
        %v3875 = vunpack.c.l.b16 %v3790
        %v3876 = vunpack.c.l.b16 %v3791
        %v3877 = vunpack.c.h.b16 %v3791
        %v3878 = vunpack.c.l.b16 %v3792
        %v3879 = vunpack.c.l.b16 %v3793
        %v3880 = vunpack.c.h.b16 %v3793
        %v3881 = vunpack.c.l.b16 %v3794
        %v3882 = vunpack.c.l.b16 %v3795
        %v3883 = vunpack.c.h.b16 %v3795
        %v3884 = vunpack.c.l.b16 %v3796
        %v3885 = vunpack.c.l.b16 %v3797
        %v3886 = vunpack.c.h.b16 %v3797
        %v3887 = vunpack.c.l.b16 %v3798
        %v3888 = vpack.c.b16 %v3843, %v3840
        %v3889 = vpack.c.b16 %v3844, %v3841
        %v3890 = vpack.c.b16 %v3845, %v3842
        %v3891 = vpack.c.b16 %v3849, %v3846
        %v3892 = vpack.c.b16 %v3850, %v3847
        %v3893 = vpack.c.b16 %v3851, %v3848
        %v3894 = vpack.c.b16 %v3855, %v3852
        %v3895 = vpack.c.b16 %v3856, %v3853
        %v3896 = vpack.c.b16 %v3857, %v3854
        %v3897 = vpack.c.b16 %v3861, %v3858
        %v3898 = vpack.c.b16 %v3862, %v3859
        %v3899 = vpack.c.b16 %v3863, %v3860
        %v3900 = vpack.c.b16 %v3867, %v3864
        %v3901 = vpack.c.b16 %v3868, %v3865
        %v3902 = vpack.c.b16 %v3869, %v3866
        %v3903 = vpack.c.b16 %v3873, %v3870
        %v3904 = vpack.c.b16 %v3874, %v3871
        %v3905 = vpack.c.b16 %v3875, %v3872
        %v3906 = vpack.c.b16 %v3879, %v3876
        %v3907 = vpack.c.b16 %v3880, %v3877
        %v3908 = vpack.c.b16 %v3881, %v3878
        %v3909 = vpack.c.b16 %v3885, %v3882
        %v3910 = vpack.c.b16 %v3886, %v3883
        %v3911 = vpack.c.b16 %v3887, %v3884
        %3936 = vmatpush.bf16.msra.mxu0 %v3909
        %3937 = vmatpush.bf16.msra.mxu0 %v3906
        %3938 = vmatpush.bf16.msra.mxu0 %v3903
        %3939 = vmatpush.bf16.msra.mxu0 %v3900
        %3940 = vmatpush.bf16.msra.mxu0 %v3897
        %3941 = vmatpush.bf16.msra.mxu0 %v3894
        %3942 = vmatpush.bf16.msra.mxu0 %v3891
        %3943 = vmatpush.bf16.msra.mxu0 %v3888
        %3944 = vmatmul.bf16.gmra.mxu0 %v3799
        %v3945 = vpop.f32.mrf.mxu0
        %v3946 = vadd.f32 %v3802, %v3945
        %v3947 = vpop.f32.mrf.mxu0
        %v3948 = vadd.f32 %v3802, %v3947
        %3949 = vdwg.mxu0
        %3950 = vmatpush.bf16.msra.mxu0 %v3910
        %3951 = vmatpush.bf16.msra.mxu0 %v3907
        %3952 = vmatpush.bf16.msra.mxu0 %v3904
        %3953 = vmatpush.bf16.msra.mxu0 %v3901
        %3954 = vmatpush.bf16.msra.mxu0 %v3898
        %3955 = vmatpush.bf16.msra.mxu0 %v3895
        %3956 = vmatpush.bf16.msra.mxu0 %v3892
        %3957 = vmatpush.bf16.msra.mxu0 %v3889
        %3958 = vmatmul.bf16.gmra.mxu0 %v3799
        %v3959 = vpop.f32.mrf.mxu0
        %v3960 = vadd.f32 %v3803, %v3959
        %v3961 = vpop.f32.mrf.mxu0
        %v3962 = vadd.f32 %v3803, %v3961
        %3963 = vdwg.mxu0
        %3964 = vmatpush.bf16.msra.mxu0 %v3911
        %3965 = vmatpush.bf16.msra.mxu0 %v3908
        %3966 = vmatpush.bf16.msra.mxu0 %v3905
        %3967 = vmatpush.bf16.msra.mxu0 %v3902
        %3968 = vmatpush.bf16.msra.mxu0 %v3899
        %3969 = vmatpush.bf16.msra.mxu0 %v3896
        %3970 = vmatpush.bf16.msra.mxu0 %v3893
        %3971 = vmatpush.bf16.msra.mxu0 %v3890
        %3972 = vmatmul.bf16.gmra.mxu0 %v3799
        %v3973 = vpop.f32.mrf.mxu0
        %v3974 = vadd.f32 %v3804, %v3973
        %v3975 = vpop.f32.mrf.mxu0
        %v3976 = vadd.f32 %v3804, %v3975
        %3977 = vdwg.mxu0
        %v3979 = vsel %vm593, %v3946, 0
        %v3982 = vsel %vm593, %v3948, 0
        %v3985 = vsel %vm593, %v3960, 0
        %v3988 = vsel %vm593, %v3962, 0
        %3990 = vmatpush.xpose.msra.mxu0 0.0
        %3991 = vmatpush.xpose.msra.mxu0 0.0
        %3992 = vmatpush.xpose.msra.mxu0 0.0
        %3993 = vmatpush.xpose.msra.mxu0 0.0
        %3994 = vmatpush.xpose.msra.mxu0 0.0
        %3995 = vmatpush.xpose.msra.mxu0 0.0
        %3996 = vmatpush.xpose.msra.mxu0 0.0
        %3997 = vmatpush.xpose.msra.mxu0 0.0
        %3998 = vmatpush.xpose.msra.mxu0 0.0
        %3999 = vmatpush.xpose.msra.mxu0 0.0
        %4000 = vmatpush.xpose.msra.mxu0 0.0
        %4001 = vmatpush.xpose.msra.mxu0 0.0
        %4002 = vmatpush.xpose.msra.mxu0 0.0
        %4003 = vmatpush.xpose.msra.mxu0 0.0
        %4004 = vmatpush.xpose.msra.mxu0 %v3988
        %4005 = vmatpush.xpose.msra.mxu0 %v3985
        %4006 = vmatmul.f32.gmra.mxu0 %v3979
        %v4007 = vpop.f32.mrf.mxu0
        %v4008 = vadd.f32 0.0, %v4007
        %4009 = vmatmul.f32.gmra.mxu0 %v3982
        %v4010 = vpop.f32.mrf.mxu0
        %v4011 = vadd.f32 0.0, %v4010
        %4012 = vdwg.mxu0
        %v4013 = vmul.f32 %v4008, 0.17677669
        %v4014 = vmul.f32 %v4011, 0.17677669
        %v4015 = vsel %vm1878, %v4013, -inf
        %4016 = vmax.xlane.f32.xlu0 %v4015
        %v4017 = vpop.xlane.xlu0 %4016
        %v4018 = vsel %vm1878, %v4014, -inf
        %4019 = vmax.xlane.f32.xlu0 %v4018
        %v4020 = vpop.xlane.xlu0 %4019
        %v4021 = vsub.f32 %v4013, %v4017
        %v4022 = vsub.f32 %v4014, %v4020
        %v4023 = vmul.f32 %v4021, 1.442695
        %v4024 = vpow.pop %v4023
        %v4025 = vmul.f32 %v4022, 1.442695
        %v4026 = vpow.pop %v4025
        %v4027 = vsel %vm1878, %v4024, 0.0
        %4028 = vadd.xlane.f32.xlu0 %v4027
        %v4029 = vpop.xlane.xlu0 %4028
        %v4030 = vsel %vm1878, %v4026, 0.0
        %4031 = vadd.xlane.f32.xlu0 %v4030
        %v4032 = vpop.xlane.xlu0 %4031
        %v4033 = vrcp.pop %v4029
        %v4034 = vrcp.pop %v4032
        %v4035 = vmul.f32 %v4024, %v4033
        %v4036 = vmul.f32 %v4026, %v4034
        %v4038 = vsel %vm1878, %v4035, 0
        %v4041 = vsel %vm1878, %v4036, 0
        %4043 = vmatpush.msra.mxu0 0.0
        %4044 = vmatpush.msra.mxu0 0.0
        %4045 = vmatpush.msra.mxu0 0.0
        %4046 = vmatpush.msra.mxu0 0.0
        %4047 = vmatpush.msra.mxu0 0.0
        %4048 = vmatpush.msra.mxu0 0.0
        %4049 = vmatpush.msra.mxu0 0.0
        %4050 = vmatpush.msra.mxu0 0.0
        %4051 = vmatpush.msra.mxu0 0.0
        %4052 = vmatpush.msra.mxu0 0.0
        %4053 = vmatpush.msra.mxu0 0.0
        %4054 = vmatpush.msra.mxu0 0.0
        %4055 = vmatpush.msra.mxu0 0.0
        %4056 = vmatpush.msra.mxu0 0.0
        %4057 = vmatpush.msra.mxu0 %v3976
        %4058 = vmatpush.msra.mxu0 %v3974
        %4059 = vmatmul.f32.gmra.mxu0 %v4038
        %v4060 = vpop.f32.mrf.mxu0
        %v4061 = vadd.f32 0.0, %v4060
        %4062 = vmatmul.f32.gmra.mxu0 %v4041
        %v4063 = vpop.f32.mrf.mxu0
        %v4064 = vadd.f32 0.0, %v4063
        %4065 = vdwg.mxu0
        %4066 = vst.msk [vmem:[#allocation2] sm:$0xff] %vm593, %v4061
        %4067 = vst.msk [vmem:[#allocation2 + $0x8] sm:$0xff] %vm593, %v4064
        %4068 = vrot.lane.b32.xlu0 %v3946, 96
        %v4069 = vpop.permute.xlu0 %4068
        %4070 = vrot.lane.b32.xlu0 %v3948, 96
        %v4071 = vpop.permute.xlu0 %4070
        %4072 = vrot.lane.b32.xlu0 %v3960, 96
        %v4073 = vpop.permute.xlu0 %4072
        %4074 = vrot.lane.b32.xlu0 %v3962, 96
        %v4075 = vpop.permute.xlu0 %4074
        %v4076 = vsel %vm593, %v4069, 0
        %v4078 = vsel %vm593, %v4071, 0
        %v4080 = vsel %vm593, %v4073, 0
        %v4082 = vsel %vm593, %v4075, 0
        %4084 = vmatpush.xpose.msra.mxu0 0.0
        %4085 = vmatpush.xpose.msra.mxu0 0.0
        %4086 = vmatpush.xpose.msra.mxu0 0.0
        %4087 = vmatpush.xpose.msra.mxu0 0.0
        %4088 = vmatpush.xpose.msra.mxu0 0.0
        %4089 = vmatpush.xpose.msra.mxu0 0.0
        %4090 = vmatpush.xpose.msra.mxu0 0.0
        %4091 = vmatpush.xpose.msra.mxu0 0.0
        %4092 = vmatpush.xpose.msra.mxu0 0.0
        %4093 = vmatpush.xpose.msra.mxu0 0.0
        %4094 = vmatpush.xpose.msra.mxu0 0.0
        %4095 = vmatpush.xpose.msra.mxu0 0.0
        %4096 = vmatpush.xpose.msra.mxu0 0.0
        %4097 = vmatpush.xpose.msra.mxu0 0.0
        %4098 = vmatpush.xpose.msra.mxu0 %v4082
        %4099 = vmatpush.xpose.msra.mxu0 %v4080
        %4100 = vmatmul.f32.gmra.mxu0 %v4076
        %v4101 = vpop.f32.mrf.mxu0
        %v4102 = vadd.f32 0.0, %v4101
        %4103 = vmatmul.f32.gmra.mxu0 %v4078
        %v4104 = vpop.f32.mrf.mxu0
        %v4105 = vadd.f32 0.0, %v4104
        %4106 = vdwg.mxu0
        %v4107 = vmul.f32 %v4102, 0.17677669
        %v4108 = vmul.f32 %v4105, 0.17677669
        %v4109 = vsel %vm1878, %v4107, -inf
        %4110 = vmax.xlane.f32.xlu0 %v4109
        %v4111 = vpop.xlane.xlu0 %4110
        %v4112 = vsel %vm1878, %v4108, -inf
        %4113 = vmax.xlane.f32.xlu0 %v4112
        %v4114 = vpop.xlane.xlu0 %4113
        %v4115 = vsub.f32 %v4107, %v4111
        %v4116 = vsub.f32 %v4108, %v4114
        %v4117 = vmul.f32 %v4115, 1.442695
        %v4118 = vpow.pop %v4117
        %v4119 = vmul.f32 %v4116, 1.442695
        %v4120 = vpow.pop %v4119
        %v4121 = vsel %vm1878, %v4118, 0.0
        %4122 = vadd.xlane.f32.xlu0 %v4121
        %v4123 = vpop.xlane.xlu0 %4122
        %v4124 = vsel %vm1878, %v4120, 0.0
        %4125 = vadd.xlane.f32.xlu0 %v4124
        %v4126 = vpop.xlane.xlu0 %4125
        %v4127 = vrcp.pop %v4123
        %v4128 = vrcp.pop %v4126
        %v4129 = vmul.f32 %v4118, %v4127
        %v4130 = vmul.f32 %v4120, %v4128
        %4133 = vrot.lane.b32.xlu0 %v3974, 96
        %v4134 = vpop.permute.xlu0 %4133
        %4135 = vrot.lane.b32.xlu0 %v3976, 96
        %v4136 = vpop.permute.xlu0 %4135
        %v4140 = vsel %vm1878, %v4129, 0
        %v4143 = vsel %vm1878, %v4130, 0
        %4145 = vmatpush.msra.mxu0 0.0
        %4146 = vmatpush.msra.mxu0 0.0
        %4147 = vmatpush.msra.mxu0 0.0
        %4148 = vmatpush.msra.mxu0 0.0
        %4149 = vmatpush.msra.mxu0 0.0
        %4150 = vmatpush.msra.mxu0 0.0
        %4151 = vmatpush.msra.mxu0 0.0
        %4152 = vmatpush.msra.mxu0 0.0
        %4153 = vmatpush.msra.mxu0 0.0
        %4154 = vmatpush.msra.mxu0 0.0
        %4155 = vmatpush.msra.mxu0 0.0
        %4156 = vmatpush.msra.mxu0 0.0
        %4157 = vmatpush.msra.mxu0 0.0
        %4158 = vmatpush.msra.mxu0 0.0
        %4159 = vmatpush.msra.mxu0 %v4136
        %4160 = vmatpush.msra.mxu0 %v4134
        %4161 = vmatmul.f32.gmra.mxu0 %v4140
        %v4162 = vpop.f32.mrf.mxu0
        %v4163 = vadd.f32 0.0, %v4162
        %4164 = vmatmul.f32.gmra.mxu0 %v4143
        %v4165 = vpop.f32.mrf.mxu0
        %v4166 = vadd.f32 0.0, %v4165
        %4167 = vdwg.mxu0
        %4170 = vrot.lane.b32.xlu0 %v4163, 32
        %v4171 = vpop.permute.xlu0 %4170
        %4172 = vrot.lane.b32.xlu0 %v4166, 32
        %v4173 = vpop.permute.xlu0 %4172
        %vm4176 = vcmask 523520
        %4177 = vst.msk [vmem:[#allocation2] sm:$0xff] %vm4176, %v4171
        %4178 = vst.msk [vmem:[#allocation2 + $0x8] sm:$0xff] %vm4176, %v4173
        %4179 = vrot.lane.b32.xlu0 %v3946, 64
        %v4180 = vpop.permute.xlu0 %4179
        %4181 = vrot.lane.b32.xlu0 %v3948, 64
        %v4182 = vpop.permute.xlu0 %4181
        %4183 = vrot.lane.b32.xlu0 %v3960, 64
        %v4184 = vpop.permute.xlu0 %4183
        %4185 = vrot.lane.b32.xlu0 %v3962, 64
        %v4186 = vpop.permute.xlu0 %4185
        %v4187 = vsel %vm593, %v4180, 0
        %v4189 = vsel %vm593, %v4182, 0
        %v4191 = vsel %vm593, %v4184, 0
        %v4193 = vsel %vm593, %v4186, 0
        %4195 = vmatpush.xpose.msra.mxu0 0.0
        %4196 = vmatpush.xpose.msra.mxu0 0.0
        %4197 = vmatpush.xpose.msra.mxu0 0.0
        %4198 = vmatpush.xpose.msra.mxu0 0.0
        %4199 = vmatpush.xpose.msra.mxu0 0.0
        %4200 = vmatpush.xpose.msra.mxu0 0.0
        %4201 = vmatpush.xpose.msra.mxu0 0.0
        %4202 = vmatpush.xpose.msra.mxu0 0.0
        %4203 = vmatpush.xpose.msra.mxu0 0.0
        %4204 = vmatpush.xpose.msra.mxu0 0.0
        %4205 = vmatpush.xpose.msra.mxu0 0.0
        %4206 = vmatpush.xpose.msra.mxu0 0.0
        %4207 = vmatpush.xpose.msra.mxu0 0.0
        %4208 = vmatpush.xpose.msra.mxu0 0.0
        %4209 = vmatpush.xpose.msra.mxu0 %v4193
        %4210 = vmatpush.xpose.msra.mxu0 %v4191
        %4211 = vmatmul.f32.gmra.mxu0 %v4187
        %v4212 = vpop.f32.mrf.mxu0
        %v4213 = vadd.f32 0.0, %v4212
        %4214 = vmatmul.f32.gmra.mxu0 %v4189
        %v4215 = vpop.f32.mrf.mxu0
        %v4216 = vadd.f32 0.0, %v4215
        %4217 = vdwg.mxu0
        %v4218 = vmul.f32 %v4213, 0.17677669
        %v4219 = vmul.f32 %v4216, 0.17677669
        %v4220 = vsel %vm1878, %v4218, -inf
        %4221 = vmax.xlane.f32.xlu0 %v4220
        %v4222 = vpop.xlane.xlu0 %4221
        %v4223 = vsel %vm1878, %v4219, -inf
        %4224 = vmax.xlane.f32.xlu0 %v4223
        %v4225 = vpop.xlane.xlu0 %4224
        %v4226 = vsub.f32 %v4218, %v4222
        %v4227 = vsub.f32 %v4219, %v4225
        %v4228 = vmul.f32 %v4226, 1.442695
        %v4229 = vpow.pop %v4228
        %v4230 = vmul.f32 %v4227, 1.442695
        %v4231 = vpow.pop %v4230
        %v4232 = vsel %vm1878, %v4229, 0.0
        %4233 = vadd.xlane.f32.xlu0 %v4232
        %v4234 = vpop.xlane.xlu0 %4233
        %v4235 = vsel %vm1878, %v4231, 0.0
        %4236 = vadd.xlane.f32.xlu0 %v4235
        %v4237 = vpop.xlane.xlu0 %4236
        %v4238 = vrcp.pop %v4234
        %v4239 = vrcp.pop %v4237
        %v4240 = vmul.f32 %v4229, %v4238
        %v4241 = vmul.f32 %v4231, %v4239
        %4242 = vrot.lane.b32.xlu0 %v3974, 64
        %v4243 = vpop.permute.xlu0 %4242
        %4244 = vrot.lane.b32.xlu0 %v3976, 64
        %v4245 = vpop.permute.xlu0 %4244
        %v4249 = vsel %vm1878, %v4240, 0
        %v4252 = vsel %vm1878, %v4241, 0
        %4254 = vmatpush.msra.mxu0 0.0
        %4255 = vmatpush.msra.mxu0 0.0
        %4256 = vmatpush.msra.mxu0 0.0
        %4257 = vmatpush.msra.mxu0 0.0
        %4258 = vmatpush.msra.mxu0 0.0
        %4259 = vmatpush.msra.mxu0 0.0
        %4260 = vmatpush.msra.mxu0 0.0
        %4261 = vmatpush.msra.mxu0 0.0
        %4262 = vmatpush.msra.mxu0 0.0
        %4263 = vmatpush.msra.mxu0 0.0
        %4264 = vmatpush.msra.mxu0 0.0
        %4265 = vmatpush.msra.mxu0 0.0
        %4266 = vmatpush.msra.mxu0 0.0
        %4267 = vmatpush.msra.mxu0 0.0
        %4268 = vmatpush.msra.mxu0 %v4245
        %4269 = vmatpush.msra.mxu0 %v4243
        %4270 = vmatmul.f32.gmra.mxu0 %v4249
        %v4271 = vpop.f32.mrf.mxu0
        %v4272 = vadd.f32 0.0, %v4271
        %4273 = vmatmul.f32.gmra.mxu0 %v4252
        %v4274 = vpop.f32.mrf.mxu0
        %v4275 = vadd.f32 0.0, %v4274
        %4276 = vdwg.mxu0
        %4279 = vrot.lane.b32.xlu0 %v4272, 64
        %v4280 = vpop.permute.xlu0 %4279
        %4281 = vrot.lane.b32.xlu0 %v4275, 64
        %v4282 = vpop.permute.xlu0 %4281
        %vm4285 = vcmask 785920
        %4286 = vst.msk [vmem:[#allocation2] sm:$0xff] %vm4285, %v4280
        %4287 = vst.msk [vmem:[#allocation2 + $0x8] sm:$0xff] %vm4285, %v4282
        %4288 = vrot.lane.b32.xlu0 %v3946, 32
        %v4289 = vpop.permute.xlu0 %4288
        %4290 = vrot.lane.b32.xlu0 %v3948, 32
        %v4291 = vpop.permute.xlu0 %4290
        %4292 = vrot.lane.b32.xlu0 %v3960, 32
        %v4293 = vpop.permute.xlu0 %4292
        %4294 = vrot.lane.b32.xlu0 %v3962, 32
        %v4295 = vpop.permute.xlu0 %4294
        %v4296 = vsel %vm593, %v4289, 0
        %v4298 = vsel %vm593, %v4291, 0
        %v4300 = vsel %vm593, %v4293, 0
        %v4302 = vsel %vm593, %v4295, 0
        %4304 = vmatpush.xpose.msra.mxu0 0.0
        %4305 = vmatpush.xpose.msra.mxu0 0.0
        %4306 = vmatpush.xpose.msra.mxu0 0.0
        %4307 = vmatpush.xpose.msra.mxu0 0.0
        %4308 = vmatpush.xpose.msra.mxu0 0.0
        %4309 = vmatpush.xpose.msra.mxu0 0.0
        %4310 = vmatpush.xpose.msra.mxu0 0.0
        %4311 = vmatpush.xpose.msra.mxu0 0.0
        %4312 = vmatpush.xpose.msra.mxu0 0.0
        %4313 = vmatpush.xpose.msra.mxu0 0.0
        %4314 = vmatpush.xpose.msra.mxu0 0.0
        %4315 = vmatpush.xpose.msra.mxu0 0.0
        %4316 = vmatpush.xpose.msra.mxu0 0.0
        %4317 = vmatpush.xpose.msra.mxu0 0.0
        %4318 = vmatpush.xpose.msra.mxu0 %v4302
        %4319 = vmatpush.xpose.msra.mxu0 %v4300
        %4320 = vmatmul.f32.gmra.mxu0 %v4296
        %v4321 = vpop.f32.mrf.mxu0
        %v4322 = vadd.f32 0.0, %v4321
        %4323 = vmatmul.f32.gmra.mxu0 %v4298
        %v4324 = vpop.f32.mrf.mxu0
        %v4325 = vadd.f32 0.0, %v4324
        %4326 = vdwg.mxu0
        %v4327 = vmul.f32 %v4322, 0.17677669
        %v4328 = vmul.f32 %v4325, 0.17677669
        %v4329 = vsel %vm1878, %v4327, -inf
        %4330 = vmax.xlane.f32.xlu0 %v4329
        %v4331 = vpop.xlane.xlu0 %4330
        %v4332 = vsel %vm1878, %v4328, -inf
        %4333 = vmax.xlane.f32.xlu0 %v4332
        %v4334 = vpop.xlane.xlu0 %4333
        %v4335 = vsub.f32 %v4327, %v4331
        %v4336 = vsub.f32 %v4328, %v4334
        %v4337 = vmul.f32 %v4335, 1.442695
        %v4338 = vpow.pop %v4337
        %v4339 = vmul.f32 %v4336, 1.442695
        %v4340 = vpow.pop %v4339
        %v4341 = vsel %vm1878, %v4338, 0.0
        %4342 = vadd.xlane.f32.xlu0 %v4341
        %v4343 = vpop.xlane.xlu0 %4342
        %v4344 = vsel %vm1878, %v4340, 0.0
        %4345 = vadd.xlane.f32.xlu0 %v4344
        %v4346 = vpop.xlane.xlu0 %4345
        %v4347 = vrcp.pop %v4343
        %v4348 = vrcp.pop %v4346
        %v4349 = vmul.f32 %v4338, %v4347
        %v4350 = vmul.f32 %v4340, %v4348
        %4351 = vrot.lane.b32.xlu0 %v3974, 32
        %v4352 = vpop.permute.xlu0 %4351
        %4353 = vrot.lane.b32.xlu0 %v3976, 32
        %v4354 = vpop.permute.xlu0 %4353
        %v4358 = vsel %vm1878, %v4349, 0
        %v4361 = vsel %vm1878, %v4350, 0
        %4363 = vmatpush.msra.mxu0 0.0
        %4364 = vmatpush.msra.mxu0 0.0
        %4365 = vmatpush.msra.mxu0 0.0
        %4366 = vmatpush.msra.mxu0 0.0
        %4367 = vmatpush.msra.mxu0 0.0
        %4368 = vmatpush.msra.mxu0 0.0
        %4369 = vmatpush.msra.mxu0 0.0
        %4370 = vmatpush.msra.mxu0 0.0
        %4371 = vmatpush.msra.mxu0 0.0
        %4372 = vmatpush.msra.mxu0 0.0
        %4373 = vmatpush.msra.mxu0 0.0
        %4374 = vmatpush.msra.mxu0 0.0
        %4375 = vmatpush.msra.mxu0 0.0
        %4376 = vmatpush.msra.mxu0 0.0
        %4377 = vmatpush.msra.mxu0 %v4354
        %4378 = vmatpush.msra.mxu0 %v4352
        %4379 = vmatmul.f32.gmra.mxu0 %v4358
        %v4380 = vpop.f32.mrf.mxu0
        %v4381 = vadd.f32 0.0, %v4380
        %4382 = vmatmul.f32.gmra.mxu0 %v4361
        %v4383 = vpop.f32.mrf.mxu0
        %v4384 = vadd.f32 0.0, %v4383
        %4385 = vdwg.mxu0
        %4388 = vrot.lane.b32.xlu0 %v4381, 96
        %v4389 = vpop.permute.xlu0 %4388
        %4390 = vrot.lane.b32.xlu0 %v4384, 96
        %v4391 = vpop.permute.xlu0 %4390
        %vm4394 = vcmask 1048320
        %4395 = vst.msk [vmem:[#allocation2] sm:$0xff] %vm4394, %v4389
        %4396 = vst.msk [vmem:[#allocation2 + $0x8] sm:$0xff] %vm4394, %v4391
        %v4397 = vld [vmem:[#allocation2] sm:$0xff]
        %v4398 = vld [vmem:[#allocation2 + $0x8] sm:$0xff]
        %v4399 = vld [vmem:[#allocation6 + $0xc] sm:$0xf]
        %v4400 = vld [vmem:[#allocation6 + $0x50] sm:$0xf]
        %v4401 = vld [vmem:[#allocation6 + $0x94] sm:$0xf]
        %v4402 = vld [vmem:[#allocation6 + $0xd8] sm:$0xf]
        %v4403 = vld [vmem:[#allocation6 + $0x11c] sm:$0xf]
        %v4404 = vld [vmem:[#allocation6 + $0x160] sm:$0xf]
        %v4405 = vld [vmem:[#allocation6 + $0x1a4] sm:$0xf]
        %v4406 = vld [vmem:[#allocation6 + $0x1e8] sm:$0xf]
        %v4407 = vld [vmem:[#allocation6 + $0x22c] sm:$0xf]
        %v4408 = vld [vmem:[#allocation6 + $0x270] sm:$0xf]
        %v4409 = vld [vmem:[#allocation6 + $0x2b4] sm:$0xf]
        %v4410 = vld [vmem:[#allocation6 + $0x2f8] sm:$0xf]
        %v4411 = vld [vmem:[#allocation6 + $0x33c] sm:$0xf]
        %v4412 = vld [vmem:[#allocation6 + $0x380] sm:$0xf]
        %v4413 = vld [vmem:[#allocation6 + $0x3c4] sm:$0xf]
        %v4414 = vld [vmem:[#allocation6 + $0x408] sm:$0xf]
        %v4415 = vpack.c.bf16 %v4398, %v4397
        %v4432 = vunpack.c.l.b16 %v4399
        %v4433 = vunpack.c.l.b16 %v4400
        %v4434 = vunpack.c.l.b16 %v4401
        %v4435 = vunpack.c.l.b16 %v4402
        %v4436 = vunpack.c.l.b16 %v4403
        %v4437 = vunpack.c.l.b16 %v4404
        %v4438 = vunpack.c.l.b16 %v4405
        %v4439 = vunpack.c.l.b16 %v4406
        %v4440 = vunpack.c.l.b16 %v4407
        %v4441 = vunpack.c.l.b16 %v4408
        %v4442 = vunpack.c.l.b16 %v4409
        %v4443 = vunpack.c.l.b16 %v4410
        %v4444 = vunpack.c.l.b16 %v4411
        %v4445 = vunpack.c.l.b16 %v4412
        %v4446 = vunpack.c.l.b16 %v4413
        %v4447 = vunpack.c.l.b16 %v4414
        %v4448 = vpack.c.b16 %v4433, %v4432
        %v4449 = vpack.c.b16 %v4435, %v4434
        %v4450 = vpack.c.b16 %v4437, %v4436
        %v4451 = vpack.c.b16 %v4439, %v4438
        %v4452 = vpack.c.b16 %v4441, %v4440
        %v4453 = vpack.c.b16 %v4443, %v4442
        %v4454 = vpack.c.b16 %v4445, %v4444
        %v4455 = vpack.c.b16 %v4447, %v4446
        %4464 = vmatpush.bf16.msra.mxu0 %v4455
        %4465 = vmatpush.bf16.msra.mxu0 %v4454
        %4466 = vmatpush.bf16.msra.mxu0 %v4453
        %4467 = vmatpush.bf16.msra.mxu0 %v4452
        %4468 = vmatpush.bf16.msra.mxu0 %v4451
        %4469 = vmatpush.bf16.msra.mxu0 %v4450
        %4470 = vmatpush.bf16.msra.mxu0 %v4449
        %4471 = vmatpush.bf16.msra.mxu0 %v4448
        %4472 = vmatmul.bf16.gmra.mxu0 %v4415
        %v4473 = vpop.f32.mrf.mxu0
        %v4474 = vadd.f32 0.0, %v4473
        %v4475 = vpop.f32.mrf.mxu0
        %v4476 = vadd.f32 0.0, %v4475
        %4477 = vdwg.mxu0
        %v4478 = vadd.f32 %v3703, %v4474
        %v4479 = vadd.f32 %v3706, %v4476
        %v4480 = vld [vmem:[%s9 + $0x2b] sm:$0x1]
        %v4482 = vperm.slane %v4480, 0
        %v4484 = vadd.f32 %v4478, %v4482
        %v4485 = vadd.f32 %v4479, %v4482
        %v4486 = vld [vmem:[%s9 + $0x2c] sm:$0x1]
        %v4487 = vld [vmem:[%s9 + $0x2d] sm:$0x1]
        %4488 = vadd.xlane.f32.xlu0 %v4484
        %v4489 = vpop.xlane.xlu0 %4488
        %4490 = vadd.xlane.f32.xlu0 %v4485
        %v4491 = vpop.xlane.xlu0 %4490
        %v4492 = vmul.f32 %v4489, %v3720
        %v4493 = vmul.f32 %v4491, %v3720
        %v4494 = vsub.f32 %v4484, %v4492
        %v4495 = vsub.f32 %v4485, %v4493
        %v4496 = vmul.f32 %v4494, %v4494
        %v4497 = vmul.f32 %v4495, %v4495
        %4498 = vadd.xlane.f32.xlu0 %v4496
        %v4499 = vpop.xlane.xlu0 %4498
        %4500 = vadd.xlane.f32.xlu0 %v4497
        %v4501 = vpop.xlane.xlu0 %4500
        %v4502 = vmul.f32 %v4499, %v3720
        %v4503 = vmul.f32 %v4501, %v3720
        %v4504 = vadd.f32 %v4502, 1e-05
        %v4505 = vadd.f32 %v4503, 1e-05
        %v4506 = vrsqrt.pop %v4504
        %v4507 = vmul.f32 %v4506, %v4504
        %v4508 = vmul.f32 %v4507, %v4506
        %v4509 = vmul.f32 0.5, %v4508
        %v4510 = vsub.f32 1.5, %v4509
        %v4511 = vmul.f32 %v4506, %v4510
        %vm4512 = vweird.f32 %v4504
        %vm4513 = vweird.f32 %v4506
        %vm4514 = vmor %vm4512, %vm4513
        %v4515 = vsel %vm4514, %v4506, %v4511
        %v4516 = vrsqrt.pop %v4505
        %v4517 = vmul.f32 %v4516, %v4505
        %v4518 = vmul.f32 %v4517, %v4516
        %v4519 = vmul.f32 0.5, %v4518
        %v4520 = vsub.f32 1.5, %v4519
        %v4521 = vmul.f32 %v4516, %v4520
        %vm4522 = vweird.f32 %v4505
        %vm4523 = vweird.f32 %v4516
        %vm4524 = vmor %vm4522, %vm4523
        %v4525 = vsel %vm4524, %v4516, %v4521
        %v4526 = vmul.f32 %v4494, %v4515
        %v4527 = vmul.f32 %v4495, %v4525
        %v4529 = vperm.slane %v4486, 0
        %v4531 = vmul.f32 %v4526, %v4529
        %v4532 = vmul.f32 %v4527, %v4529
        %v4534 = vperm.slane %v4487, 0
        %v4536 = vadd.f32 %v4531, %v4534
        %v4537 = vadd.f32 %v4532, %v4534
        %v4538 = vld [vmem:[#allocation6 + $0x10] sm:$0xff]
        %v4539 = vld [vmem:[#allocation6 + $0x18] sm:$0xff]
        %v4540 = vld [vmem:[#allocation6 + $0x54] sm:$0xff]
        %v4541 = vld [vmem:[#allocation6 + $0x5c] sm:$0xff]
        %v4542 = vld [vmem:[#allocation6 + $0x98] sm:$0xff]
        %v4543 = vld [vmem:[#allocation6 + $0xa0] sm:$0xff]
        %v4544 = vld [vmem:[#allocation6 + $0xdc] sm:$0xff]
        %v4545 = vld [vmem:[#allocation6 + $0xe4] sm:$0xff]
        %v4546 = vld [vmem:[#allocation6 + $0x120] sm:$0xff]
        %v4547 = vld [vmem:[#allocation6 + $0x128] sm:$0xff]
        %v4548 = vld [vmem:[#allocation6 + $0x164] sm:$0xff]
        %v4549 = vld [vmem:[#allocation6 + $0x16c] sm:$0xff]
        %v4550 = vld [vmem:[#allocation6 + $0x1a8] sm:$0xff]
        %v4551 = vld [vmem:[#allocation6 + $0x1b0] sm:$0xff]
        %v4552 = vld [vmem:[#allocation6 + $0x1ec] sm:$0xff]
        %v4553 = vld [vmem:[#allocation6 + $0x1f4] sm:$0xff]
        %v4554 = vld [vmem:[#allocation6 + $0x230] sm:$0xff]
        %v4555 = vld [vmem:[#allocation6 + $0x238] sm:$0xff]
        %v4556 = vld [vmem:[#allocation6 + $0x274] sm:$0xff]
        %v4557 = vld [vmem:[#allocation6 + $0x27c] sm:$0xff]
        %v4558 = vld [vmem:[#allocation6 + $0x2b8] sm:$0xff]
        %v4559 = vld [vmem:[#allocation6 + $0x2c0] sm:$0xff]
        %v4560 = vld [vmem:[#allocation6 + $0x2fc] sm:$0xff]
        %v4561 = vld [vmem:[#allocation6 + $0x304] sm:$0xff]
        %v4562 = vld [vmem:[#allocation6 + $0x340] sm:$0xff]
        %v4563 = vld [vmem:[#allocation6 + $0x348] sm:$0xff]
        %v4564 = vld [vmem:[#allocation6 + $0x384] sm:$0xff]
        %v4565 = vld [vmem:[#allocation6 + $0x38c] sm:$0xff]
        %v4566 = vld [vmem:[#allocation6 + $0x3c8] sm:$0xff]
        %v4567 = vld [vmem:[#allocation6 + $0x3d0] sm:$0xff]
        %v4568 = vld [vmem:[#allocation6 + $0x40c] sm:$0xff]
        %v4569 = vld [vmem:[#allocation6 + $0x414] sm:$0xff]
        %v4570 = vpack.c.bf16 %v4537, %v4536
        %v4571 = vld [vmem:[%s9 + $0x2e] sm:$0xf]
        %v4573 = vperm.slane %v4571, 0
        %v4574 = vperm.slane %v4571, 1
        %v4575 = vperm.slane %v4571, 2
        %v4576 = vperm.slane %v4571, 3
        %v4613 = vunpack.c.l.b16 %v4538
        %v4614 = vunpack.c.h.b16 %v4538
        %v4615 = vunpack.c.l.b16 %v4539
        %v4616 = vunpack.c.h.b16 %v4539
        %v4617 = vunpack.c.l.b16 %v4540
        %v4618 = vunpack.c.h.b16 %v4540
        %v4619 = vunpack.c.l.b16 %v4541
        %v4620 = vunpack.c.h.b16 %v4541
        %v4621 = vunpack.c.l.b16 %v4542
        %v4622 = vunpack.c.h.b16 %v4542
        %v4623 = vunpack.c.l.b16 %v4543
        %v4624 = vunpack.c.h.b16 %v4543
        %v4625 = vunpack.c.l.b16 %v4544
        %v4626 = vunpack.c.h.b16 %v4544
        %v4627 = vunpack.c.l.b16 %v4545
        %v4628 = vunpack.c.h.b16 %v4545
        %v4629 = vunpack.c.l.b16 %v4546
        %v4630 = vunpack.c.h.b16 %v4546
        %v4631 = vunpack.c.l.b16 %v4547
        %v4632 = vunpack.c.h.b16 %v4547
        %v4633 = vunpack.c.l.b16 %v4548
        %v4634 = vunpack.c.h.b16 %v4548
        %v4635 = vunpack.c.l.b16 %v4549
        %v4636 = vunpack.c.h.b16 %v4549
        %v4637 = vunpack.c.l.b16 %v4550
        %v4638 = vunpack.c.h.b16 %v4550
        %v4639 = vunpack.c.l.b16 %v4551
        %v4640 = vunpack.c.h.b16 %v4551
        %v4641 = vunpack.c.l.b16 %v4552
        %v4642 = vunpack.c.h.b16 %v4552
        %v4643 = vunpack.c.l.b16 %v4553
        %v4644 = vunpack.c.h.b16 %v4553
        %v4645 = vunpack.c.l.b16 %v4554
        %v4646 = vunpack.c.h.b16 %v4554
        %v4647 = vunpack.c.l.b16 %v4555
        %v4648 = vunpack.c.h.b16 %v4555
        %v4649 = vunpack.c.l.b16 %v4556
        %v4650 = vunpack.c.h.b16 %v4556
        %v4651 = vunpack.c.l.b16 %v4557
        %v4652 = vunpack.c.h.b16 %v4557
        %v4653 = vunpack.c.l.b16 %v4558
        %v4654 = vunpack.c.h.b16 %v4558
        %v4655 = vunpack.c.l.b16 %v4559
        %v4656 = vunpack.c.h.b16 %v4559
        %v4657 = vunpack.c.l.b16 %v4560
        %v4658 = vunpack.c.h.b16 %v4560
        %v4659 = vunpack.c.l.b16 %v4561
        %v4660 = vunpack.c.h.b16 %v4561
        %v4661 = vunpack.c.l.b16 %v4562
        %v4662 = vunpack.c.h.b16 %v4562
        %v4663 = vunpack.c.l.b16 %v4563
        %v4664 = vunpack.c.h.b16 %v4563
        %v4665 = vunpack.c.l.b16 %v4564
        %v4666 = vunpack.c.h.b16 %v4564
        %v4667 = vunpack.c.l.b16 %v4565
        %v4668 = vunpack.c.h.b16 %v4565
        %v4669 = vunpack.c.l.b16 %v4566
        %v4670 = vunpack.c.h.b16 %v4566
        %v4671 = vunpack.c.l.b16 %v4567
        %v4672 = vunpack.c.h.b16 %v4567
        %v4673 = vunpack.c.l.b16 %v4568
        %v4674 = vunpack.c.h.b16 %v4568
        %v4675 = vunpack.c.l.b16 %v4569
        %v4676 = vunpack.c.h.b16 %v4569
        %v4677 = vpack.c.b16 %v4617, %v4613
        %v4678 = vpack.c.b16 %v4618, %v4614
        %v4679 = vpack.c.b16 %v4619, %v4615
        %v4680 = vpack.c.b16 %v4620, %v4616
        %v4681 = vpack.c.b16 %v4625, %v4621
        %v4682 = vpack.c.b16 %v4626, %v4622
        %v4683 = vpack.c.b16 %v4627, %v4623
        %v4684 = vpack.c.b16 %v4628, %v4624
        %v4685 = vpack.c.b16 %v4633, %v4629
        %v4686 = vpack.c.b16 %v4634, %v4630
        %v4687 = vpack.c.b16 %v4635, %v4631
        %v4688 = vpack.c.b16 %v4636, %v4632
        %v4689 = vpack.c.b16 %v4641, %v4637
        %v4690 = vpack.c.b16 %v4642, %v4638
        %v4691 = vpack.c.b16 %v4643, %v4639
        %v4692 = vpack.c.b16 %v4644, %v4640
        %v4693 = vpack.c.b16 %v4649, %v4645
        %v4694 = vpack.c.b16 %v4650, %v4646
        %v4695 = vpack.c.b16 %v4651, %v4647
        %v4696 = vpack.c.b16 %v4652, %v4648
        %v4697 = vpack.c.b16 %v4657, %v4653
        %v4698 = vpack.c.b16 %v4658, %v4654
        %v4699 = vpack.c.b16 %v4659, %v4655
        %v4700 = vpack.c.b16 %v4660, %v4656
        %v4701 = vpack.c.b16 %v4665, %v4661
        %v4702 = vpack.c.b16 %v4666, %v4662
        %v4703 = vpack.c.b16 %v4667, %v4663
        %v4704 = vpack.c.b16 %v4668, %v4664
        %v4705 = vpack.c.b16 %v4673, %v4669
        %v4706 = vpack.c.b16 %v4674, %v4670
        %v4707 = vpack.c.b16 %v4675, %v4671
        %v4708 = vpack.c.b16 %v4676, %v4672
        %4741 = vmatpush.bf16.msra.mxu0 %v4705
        %4742 = vmatpush.bf16.msra.mxu0 %v4701
        %4743 = vmatpush.bf16.msra.mxu0 %v4697
        %4744 = vmatpush.bf16.msra.mxu0 %v4693
        %4745 = vmatpush.bf16.msra.mxu0 %v4689
        %4746 = vmatpush.bf16.msra.mxu0 %v4685
        %4747 = vmatpush.bf16.msra.mxu0 %v4681
        %4748 = vmatpush.bf16.msra.mxu0 %v4677
        %4749 = vmatmul.bf16.gmra.mxu0 %v4570
        %v4750 = vpop.f32.mrf.mxu0
        %v4751 = vadd.f32 %v4573, %v4750
        %v4752 = vpop.f32.mrf.mxu0
        %v4753 = vadd.f32 %v4573, %v4752
        %4754 = vdwg.mxu0
        %4755 = vmatpush.bf16.msra.mxu0 %v4706
        %4756 = vmatpush.bf16.msra.mxu0 %v4702
        %4757 = vmatpush.bf16.msra.mxu0 %v4698
        %4758 = vmatpush.bf16.msra.mxu0 %v4694
        %4759 = vmatpush.bf16.msra.mxu0 %v4690
        %4760 = vmatpush.bf16.msra.mxu0 %v4686
        %4761 = vmatpush.bf16.msra.mxu0 %v4682
        %4762 = vmatpush.bf16.msra.mxu0 %v4678
        %4763 = vmatmul.bf16.gmra.mxu0 %v4570
        %v4764 = vpop.f32.mrf.mxu0
        %v4765 = vadd.f32 %v4574, %v4764
        %v4766 = vpop.f32.mrf.mxu0
        %v4767 = vadd.f32 %v4574, %v4766
        %4768 = vdwg.mxu0
        %4769 = vmatpush.bf16.msra.mxu0 %v4707
        %4770 = vmatpush.bf16.msra.mxu0 %v4703
        %4771 = vmatpush.bf16.msra.mxu0 %v4699
        %4772 = vmatpush.bf16.msra.mxu0 %v4695
        %4773 = vmatpush.bf16.msra.mxu0 %v4691
        %4774 = vmatpush.bf16.msra.mxu0 %v4687
        %4775 = vmatpush.bf16.msra.mxu0 %v4683
        %4776 = vmatpush.bf16.msra.mxu0 %v4679
        %4777 = vmatmul.bf16.gmra.mxu0 %v4570
        %v4778 = vpop.f32.mrf.mxu0
        %v4779 = vadd.f32 %v4575, %v4778
        %v4780 = vpop.f32.mrf.mxu0
        %v4781 = vadd.f32 %v4575, %v4780
        %4782 = vdwg.mxu0
        %4783 = vmatpush.bf16.msra.mxu0 %v4708
        %4784 = vmatpush.bf16.msra.mxu0 %v4704
        %4785 = vmatpush.bf16.msra.mxu0 %v4700
        %4786 = vmatpush.bf16.msra.mxu0 %v4696
        %4787 = vmatpush.bf16.msra.mxu0 %v4692
        %4788 = vmatpush.bf16.msra.mxu0 %v4688
        %4789 = vmatpush.bf16.msra.mxu0 %v4684
        %4790 = vmatpush.bf16.msra.mxu0 %v4680
        %4791 = vmatmul.bf16.gmra.mxu0 %v4570
        %v4792 = vpop.f32.mrf.mxu0
        %v4793 = vadd.f32 %v4576, %v4792
        %v4794 = vpop.f32.mrf.mxu0
        %v4795 = vadd.f32 %v4576, %v4794
        %4796 = vdwg.mxu0
        %v4797 = vmul.f32 %v4751, %v4751
        %v4798 = vmul.f32 %v4765, %v4765
        %v4799 = vmul.f32 %v4779, %v4779
        %v4800 = vmul.f32 %v4793, %v4793
        %v4801 = vmul.f32 %v4753, %v4753
        %v4802 = vmul.f32 %v4767, %v4767
        %v4803 = vmul.f32 %v4781, %v4781
        %v4804 = vmul.f32 %v4795, %v4795
        %v4805 = vmul.f32 %v4751, %v4797
        %v4806 = vmul.f32 %v4765, %v4798
        %v4807 = vmul.f32 %v4779, %v4799
        %v4808 = vmul.f32 %v4793, %v4800
        %v4809 = vmul.f32 %v4753, %v4801
        %v4810 = vmul.f32 %v4767, %v4802
        %v4811 = vmul.f32 %v4781, %v4803
        %v4812 = vmul.f32 %v4795, %v4804
        %v4813 = vmul.f32 %v4805, 0.044715
        %v4814 = vmul.f32 %v4806, 0.044715
        %v4815 = vmul.f32 %v4807, 0.044715
        %v4816 = vmul.f32 %v4808, 0.044715
        %v4817 = vmul.f32 %v4809, 0.044715
        %v4818 = vmul.f32 %v4810, 0.044715
        %v4819 = vmul.f32 %v4811, 0.044715
        %v4820 = vmul.f32 %v4812, 0.044715
        %v4821 = vadd.f32 %v4751, %v4813
        %v4822 = vadd.f32 %v4765, %v4814
        %v4823 = vadd.f32 %v4779, %v4815
        %v4824 = vadd.f32 %v4793, %v4816
        %v4825 = vadd.f32 %v4753, %v4817
        %v4826 = vadd.f32 %v4767, %v4818
        %v4827 = vadd.f32 %v4781, %v4819
        %v4828 = vadd.f32 %v4795, %v4820
        %v4829 = vmul.f32 %v4821, 0.7978846
        %v4830 = vmul.f32 %v4822, 0.7978846
        %v4831 = vmul.f32 %v4823, 0.7978846
        %v4832 = vmul.f32 %v4824, 0.7978846
        %v4833 = vmul.f32 %v4825, 0.7978846
        %v4834 = vmul.f32 %v4826, 0.7978846
        %v4835 = vmul.f32 %v4827, 0.7978846
        %v4836 = vmul.f32 %v4828, 0.7978846
        %v4837 = vtanh.pop %v4829
        %v4838 = vtanh.pop %v4830
        %v4839 = vtanh.pop %v4831
        %v4840 = vtanh.pop %v4832
        %v4841 = vtanh.pop %v4833
        %v4842 = vtanh.pop %v4834
        %v4843 = vtanh.pop %v4835
        %v4844 = vtanh.pop %v4836
        %v4845 = vadd.f32 %v4837, 1.0
        %v4846 = vadd.f32 %v4838, 1.0
        %v4847 = vadd.f32 %v4839, 1.0
        %v4848 = vadd.f32 %v4840, 1.0
        %v4849 = vadd.f32 %v4841, 1.0
        %v4850 = vadd.f32 %v4842, 1.0
        %v4851 = vadd.f32 %v4843, 1.0
        %v4852 = vadd.f32 %v4844, 1.0
        %v4853 = vmul.f32 %v4845, 0.5
        %v4854 = vmul.f32 %v4846, 0.5
        %v4855 = vmul.f32 %v4847, 0.5
        %v4856 = vmul.f32 %v4848, 0.5
        %v4857 = vmul.f32 %v4849, 0.5
        %v4858 = vmul.f32 %v4850, 0.5
        %v4859 = vmul.f32 %v4851, 0.5
        %v4860 = vmul.f32 %v4852, 0.5
        %v4861 = vmul.f32 %v4751, %v4853
        %v4862 = vmul.f32 %v4765, %v4854
        %v4863 = vmul.f32 %v4779, %v4855
        %v4864 = vmul.f32 %v4793, %v4856
        %v4865 = vmul.f32 %v4753, %v4857
        %v4866 = vmul.f32 %v4767, %v4858
        %v4867 = vmul.f32 %v4781, %v4859
        %v4868 = vmul.f32 %v4795, %v4860
        %v4869 = vld [vmem:[%s7] sm:$0xf]
        %v4870 = vld [vmem:[%s7 + $0x4] sm:$0xf]
        %v4871 = vld [vmem:[%s7 + $0x8] sm:$0xf]
        %v4872 = vld [vmem:[%s7 + $0xc] sm:$0xf]
        %v4873 = vld [vmem:[%s7 + $0x10] sm:$0xf]
        %v4874 = vld [vmem:[%s7 + $0x14] sm:$0xf]
        %v4875 = vld [vmem:[%s7 + $0x18] sm:$0xf]
        %v4876 = vld [vmem:[%s7 + $0x1c] sm:$0xf]
        %v4877 = vld [vmem:[%s7 + $0x20] sm:$0xf]
        %v4878 = vld [vmem:[%s7 + $0x24] sm:$0xf]
        %v4879 = vld [vmem:[%s7 + $0x28] sm:$0xf]
        %v4880 = vld [vmem:[%s7 + $0x2c] sm:$0xf]
        %v4881 = vld [vmem:[%s7 + $0x30] sm:$0xf]
        %v4882 = vld [vmem:[%s7 + $0x34] sm:$0xf]
        %v4883 = vld [vmem:[%s7 + $0x38] sm:$0xf]
        %v4884 = vld [vmem:[%s7 + $0x3c] sm:$0xf]
        %v4885 = vld [vmem:[%s7 + $0x40] sm:$0xf]
        %v4886 = vld [vmem:[%s7 + $0x44] sm:$0xf]
        %v4887 = vld [vmem:[%s7 + $0x48] sm:$0xf]
        %v4888 = vld [vmem:[%s7 + $0x4c] sm:$0xf]
        %v4889 = vld [vmem:[%s7 + $0x50] sm:$0xf]
        %v4890 = vld [vmem:[%s7 + $0x54] sm:$0xf]
        %v4891 = vld [vmem:[%s7 + $0x58] sm:$0xf]
        %v4892 = vld [vmem:[%s7 + $0x5c] sm:$0xf]
        %v4893 = vld [vmem:[%s7 + $0x60] sm:$0xf]
        %v4894 = vld [vmem:[%s7 + $0x64] sm:$0xf]
        %v4895 = vld [vmem:[%s7 + $0x68] sm:$0xf]
        %v4896 = vld [vmem:[%s7 + $0x6c] sm:$0xf]
        %v4897 = vld [vmem:[%s7 + $0x70] sm:$0xf]
        %v4898 = vld [vmem:[%s7 + $0x74] sm:$0xf]
        %v4899 = vld [vmem:[%s7 + $0x78] sm:$0xf]
        %v4900 = vld [vmem:[%s7 + $0x7c] sm:$0xf]
        %v4901 = vld [vmem:[%s7 + $0x80] sm:$0xf]
        %v4902 = vld [vmem:[%s7 + $0x84] sm:$0xf]
        %v4903 = vld [vmem:[%s7 + $0x88] sm:$0xf]
        %v4904 = vld [vmem:[%s7 + $0x8c] sm:$0xf]
        %v4905 = vld [vmem:[%s7 + $0x90] sm:$0xf]
        %v4906 = vld [vmem:[%s7 + $0x94] sm:$0xf]
        %v4907 = vld [vmem:[%s7 + $0x98] sm:$0xf]
        %v4908 = vld [vmem:[%s7 + $0x9c] sm:$0xf]
        %v4909 = vld [vmem:[%s7 + $0xa0] sm:$0xf]
        %v4910 = vld [vmem:[%s7 + $0xa4] sm:$0xf]
        %v4911 = vld [vmem:[%s7 + $0xa8] sm:$0xf]
        %v4912 = vld [vmem:[%s7 + $0xac] sm:$0xf]
        %v4913 = vld [vmem:[%s7 + $0xb0] sm:$0xf]
        %v4914 = vld [vmem:[%s7 + $0xb4] sm:$0xf]
        %v4915 = vld [vmem:[%s7 + $0xb8] sm:$0xf]
        %v4916 = vld [vmem:[%s7 + $0xbc] sm:$0xf]
        %v4917 = vld [vmem:[%s7 + $0xc0] sm:$0xf]
        %v4918 = vld [vmem:[%s7 + $0xc4] sm:$0xf]
        %v4919 = vld [vmem:[%s7 + $0xc8] sm:$0xf]
        %v4920 = vld [vmem:[%s7 + $0xcc] sm:$0xf]
        %v4921 = vld [vmem:[%s7 + $0xd0] sm:$0xf]
        %v4922 = vld [vmem:[%s7 + $0xd4] sm:$0xf]
        %v4923 = vld [vmem:[%s7 + $0xd8] sm:$0xf]
        %v4924 = vld [vmem:[%s7 + $0xdc] sm:$0xf]
        %v4925 = vld [vmem:[%s7 + $0xe0] sm:$0xf]
        %v4926 = vld [vmem:[%s7 + $0xe4] sm:$0xf]
        %v4927 = vld [vmem:[%s7 + $0xe8] sm:$0xf]
        %v4928 = vld [vmem:[%s7 + $0xec] sm:$0xf]
        %v4929 = vld [vmem:[%s7 + $0xf0] sm:$0xf]
        %v4930 = vld [vmem:[%s7 + $0xf4] sm:$0xf]
        %v4931 = vld [vmem:[%s7 + $0xf8] sm:$0xf]
        %v4932 = vld [vmem:[%s7 + $0xfc] sm:$0xf]
        %v4933 = vpack.c.bf16 %v4865, %v4861
        %v4934 = vpack.c.bf16 %v4866, %v4862
        %v4935 = vpack.c.bf16 %v4867, %v4863
        %v4936 = vpack.c.bf16 %v4868, %v4864
        %v4937 = vld [vmem:[%s9 + $0x32] sm:$0x1]
        %v4939 = vperm.slane %v4937, 0
        %v5005 = vunpack.c.l.b16 %v4869
        %v5006 = vunpack.c.l.b16 %v4870
        %v5007 = vunpack.c.l.b16 %v4871
        %v5008 = vunpack.c.l.b16 %v4872
        %v5009 = vunpack.c.l.b16 %v4873
        %v5010 = vunpack.c.l.b16 %v4874
        %v5011 = vunpack.c.l.b16 %v4875
        %v5012 = vunpack.c.l.b16 %v4876
        %v5013 = vunpack.c.l.b16 %v4877
        %v5014 = vunpack.c.l.b16 %v4878
        %v5015 = vunpack.c.l.b16 %v4879
        %v5016 = vunpack.c.l.b16 %v4880
        %v5017 = vunpack.c.l.b16 %v4881
        %v5018 = vunpack.c.l.b16 %v4882
        %v5019 = vunpack.c.l.b16 %v4883
        %v5020 = vunpack.c.l.b16 %v4884
        %v5021 = vunpack.c.l.b16 %v4885
        %v5022 = vunpack.c.l.b16 %v4886
        %v5023 = vunpack.c.l.b16 %v4887
        %v5024 = vunpack.c.l.b16 %v4888
        %v5025 = vunpack.c.l.b16 %v4889
        %v5026 = vunpack.c.l.b16 %v4890
        %v5027 = vunpack.c.l.b16 %v4891
        %v5028 = vunpack.c.l.b16 %v4892
        %v5029 = vunpack.c.l.b16 %v4893
        %v5030 = vunpack.c.l.b16 %v4894
        %v5031 = vunpack.c.l.b16 %v4895
        %v5032 = vunpack.c.l.b16 %v4896
        %v5033 = vunpack.c.l.b16 %v4897
        %v5034 = vunpack.c.l.b16 %v4898
        %v5035 = vunpack.c.l.b16 %v4899
        %v5036 = vunpack.c.l.b16 %v4900
        %v5037 = vunpack.c.l.b16 %v4901
        %v5038 = vunpack.c.l.b16 %v4902
        %v5039 = vunpack.c.l.b16 %v4903
        %v5040 = vunpack.c.l.b16 %v4904
        %v5041 = vunpack.c.l.b16 %v4905
        %v5042 = vunpack.c.l.b16 %v4906
        %v5043 = vunpack.c.l.b16 %v4907
        %v5044 = vunpack.c.l.b16 %v4908
        %v5045 = vunpack.c.l.b16 %v4909
        %v5046 = vunpack.c.l.b16 %v4910
        %v5047 = vunpack.c.l.b16 %v4911
        %v5048 = vunpack.c.l.b16 %v4912
        %v5049 = vunpack.c.l.b16 %v4913
        %v5050 = vunpack.c.l.b16 %v4914
        %v5051 = vunpack.c.l.b16 %v4915
        %v5052 = vunpack.c.l.b16 %v4916
        %v5053 = vunpack.c.l.b16 %v4917
        %v5054 = vunpack.c.l.b16 %v4918
        %v5055 = vunpack.c.l.b16 %v4919
        %v5056 = vunpack.c.l.b16 %v4920
        %v5057 = vunpack.c.l.b16 %v4921
        %v5058 = vunpack.c.l.b16 %v4922
        %v5059 = vunpack.c.l.b16 %v4923
        %v5060 = vunpack.c.l.b16 %v4924
        %v5061 = vunpack.c.l.b16 %v4925
        %v5062 = vunpack.c.l.b16 %v4926
        %v5063 = vunpack.c.l.b16 %v4927
        %v5064 = vunpack.c.l.b16 %v4928
        %v5065 = vunpack.c.l.b16 %v4929
        %v5066 = vunpack.c.l.b16 %v4930
        %v5067 = vunpack.c.l.b16 %v4931
        %v5068 = vunpack.c.l.b16 %v4932
        %v5069 = vpack.c.b16 %v5006, %v5005
        %v5070 = vpack.c.b16 %v5008, %v5007
        %v5071 = vpack.c.b16 %v5010, %v5009
        %v5072 = vpack.c.b16 %v5012, %v5011
        %v5073 = vpack.c.b16 %v5014, %v5013
        %v5074 = vpack.c.b16 %v5016, %v5015
        %v5075 = vpack.c.b16 %v5018, %v5017
        %v5076 = vpack.c.b16 %v5020, %v5019
        %v5077 = vpack.c.b16 %v5022, %v5021
        %v5078 = vpack.c.b16 %v5024, %v5023
        %v5079 = vpack.c.b16 %v5026, %v5025
        %v5080 = vpack.c.b16 %v5028, %v5027
        %v5081 = vpack.c.b16 %v5030, %v5029
        %v5082 = vpack.c.b16 %v5032, %v5031
        %v5083 = vpack.c.b16 %v5034, %v5033
        %v5084 = vpack.c.b16 %v5036, %v5035
        %v5085 = vpack.c.b16 %v5038, %v5037
        %v5086 = vpack.c.b16 %v5040, %v5039
        %v5087 = vpack.c.b16 %v5042, %v5041
        %v5088 = vpack.c.b16 %v5044, %v5043
        %v5089 = vpack.c.b16 %v5046, %v5045
        %v5090 = vpack.c.b16 %v5048, %v5047
        %v5091 = vpack.c.b16 %v5050, %v5049
        %v5092 = vpack.c.b16 %v5052, %v5051
        %v5093 = vpack.c.b16 %v5054, %v5053
        %v5094 = vpack.c.b16 %v5056, %v5055
        %v5095 = vpack.c.b16 %v5058, %v5057
        %v5096 = vpack.c.b16 %v5060, %v5059
        %v5097 = vpack.c.b16 %v5062, %v5061
        %v5098 = vpack.c.b16 %v5064, %v5063
        %v5099 = vpack.c.b16 %v5066, %v5065
        %v5100 = vpack.c.b16 %v5068, %v5067
        %5133 = vmatpush.bf16.msra.mxu0 %v5076
        %5134 = vmatpush.bf16.msra.mxu0 %v5075
        %5135 = vmatpush.bf16.msra.mxu0 %v5074
        %5136 = vmatpush.bf16.msra.mxu0 %v5073
        %5137 = vmatpush.bf16.msra.mxu0 %v5072
        %5138 = vmatpush.bf16.msra.mxu0 %v5071
        %5139 = vmatpush.bf16.msra.mxu0 %v5070
        %5140 = vmatpush.bf16.msra.mxu0 %v5069
        %5141 = vmatmul.bf16.gmra.mxu0 %v4933
        %v5142 = vpop.f32.mrf.mxu0
        %v5143 = vadd.f32 %v4939, %v5142
        %v5144 = vpop.f32.mrf.mxu0
        %v5145 = vadd.f32 %v4939, %v5144
        %5146 = vdwg.mxu0
        %5147 = vmatpush.bf16.msra.mxu0 %v5084
        %5148 = vmatpush.bf16.msra.mxu0 %v5083
        %5149 = vmatpush.bf16.msra.mxu0 %v5082
        %5150 = vmatpush.bf16.msra.mxu0 %v5081
        %5151 = vmatpush.bf16.msra.mxu0 %v5080
        %5152 = vmatpush.bf16.msra.mxu0 %v5079
        %5153 = vmatpush.bf16.msra.mxu0 %v5078
        %5154 = vmatpush.bf16.msra.mxu0 %v5077
        %5155 = vmatmul.bf16.gmra.mxu0 %v4934
        %v5156 = vpop.f32.mrf.mxu0
        %v5157 = vadd.f32 %v5143, %v5156
        %v5158 = vpop.f32.mrf.mxu0
        %v5159 = vadd.f32 %v5145, %v5158
        %5160 = vdwg.mxu0
        %5161 = vmatpush.bf16.msra.mxu0 %v5092
        %5162 = vmatpush.bf16.msra.mxu0 %v5091
        %5163 = vmatpush.bf16.msra.mxu0 %v5090
        %5164 = vmatpush.bf16.msra.mxu0 %v5089
        %5165 = vmatpush.bf16.msra.mxu0 %v5088
        %5166 = vmatpush.bf16.msra.mxu0 %v5087
        %5167 = vmatpush.bf16.msra.mxu0 %v5086
        %5168 = vmatpush.bf16.msra.mxu0 %v5085
        %5169 = vmatmul.bf16.gmra.mxu0 %v4935
        %v5170 = vpop.f32.mrf.mxu0
        %v5171 = vadd.f32 %v5157, %v5170
        %v5172 = vpop.f32.mrf.mxu0
        %v5173 = vadd.f32 %v5159, %v5172
        %5174 = vdwg.mxu0
        %5175 = vmatpush.bf16.msra.mxu0 %v5100
        %5176 = vmatpush.bf16.msra.mxu0 %v5099
        %5177 = vmatpush.bf16.msra.mxu0 %v5098
        %5178 = vmatpush.bf16.msra.mxu0 %v5097
        %5179 = vmatpush.bf16.msra.mxu0 %v5096
        %5180 = vmatpush.bf16.msra.mxu0 %v5095
        %5181 = vmatpush.bf16.msra.mxu0 %v5094
        %5182 = vmatpush.bf16.msra.mxu0 %v5093
        %5183 = vmatmul.bf16.gmra.mxu0 %v4936
        %v5184 = vpop.f32.mrf.mxu0
        %v5185 = vadd.f32 %v5171, %v5184
        %v5186 = vpop.f32.mrf.mxu0
        %v5187 = vadd.f32 %v5173, %v5186
        %5188 = vdwg.mxu0
        %v5189 = vadd.f32 %v4484, %v5185
        %v5190 = vadd.f32 %v4485, %v5187
        %v5191 = vld [vmem:[%s9 + $0x33] sm:$0x1]
        %v5192 = vld [vmem:[%s9 + $0x34] sm:$0x1]
        %5193 = vadd.xlane.f32.xlu0 %v5189
        %v5194 = vpop.xlane.xlu0 %5193
        %5195 = vadd.xlane.f32.xlu0 %v5190
        %v5196 = vpop.xlane.xlu0 %5195
        %v5197 = vmul.f32 %v5194, %v3720
        %v5198 = vmul.f32 %v5196, %v3720
        %v5199 = vsub.f32 %v5189, %v5197
        %v5200 = vsub.f32 %v5190, %v5198
        %v5201 = vmul.f32 %v5199, %v5199
        %v5202 = vmul.f32 %v5200, %v5200
        %5203 = vadd.xlane.f32.xlu0 %v5201
        %v5204 = vpop.xlane.xlu0 %5203
        %5205 = vadd.xlane.f32.xlu0 %v5202
        %v5206 = vpop.xlane.xlu0 %5205
        %v5207 = vmul.f32 %v5204, %v3720
        %v5208 = vmul.f32 %v5206, %v3720
        %v5209 = vadd.f32 %v5207, 1e-05
        %v5210 = vadd.f32 %v5208, 1e-05
        %v5211 = vrsqrt.pop %v5209
        %v5212 = vmul.f32 %v5211, %v5209
        %v5213 = vmul.f32 %v5212, %v5211
        %v5214 = vmul.f32 0.5, %v5213
        %v5215 = vsub.f32 1.5, %v5214
        %v5216 = vmul.f32 %v5211, %v5215
        %vm5217 = vweird.f32 %v5209
        %vm5218 = vweird.f32 %v5211
        %vm5219 = vmor %vm5217, %vm5218
        %v5220 = vsel %vm5219, %v5211, %v5216
        %v5221 = vrsqrt.pop %v5210
        %v5222 = vmul.f32 %v5221, %v5210
        %v5223 = vmul.f32 %v5222, %v5221
        %v5224 = vmul.f32 0.5, %v5223
        %v5225 = vsub.f32 1.5, %v5224
        %v5226 = vmul.f32 %v5221, %v5225
        %vm5227 = vweird.f32 %v5210
        %vm5228 = vweird.f32 %v5221
        %vm5229 = vmor %vm5227, %vm5228
        %v5230 = vsel %vm5229, %v5221, %v5226
        %v5231 = vmul.f32 %v5199, %v5220
        %v5232 = vmul.f32 %v5200, %v5230
        %v5234 = vperm.slane %v5191, 0
        %v5236 = vmul.f32 %v5231, %v5234
        %v5237 = vmul.f32 %v5232, %v5234
        %v5239 = vperm.slane %v5192, 0
        %v5241 = vadd.f32 %v5236, %v5239
        %v5242 = vadd.f32 %v5237, %v5239
        %v5243 = vld [vmem:[#allocation6 + $0x20] sm:$0xff]
        %v5244 = vld [vmem:[#allocation6 + $0x28] sm:$0xf]
        %v5245 = vld [vmem:[#allocation6 + $0x64] sm:$0xff]
        %v5246 = vld [vmem:[#allocation6 + $0x6c] sm:$0xf]
        %v5247 = vld [vmem:[#allocation6 + $0xa8] sm:$0xff]
        %v5248 = vld [vmem:[#allocation6 + $0xb0] sm:$0xf]
        %v5249 = vld [vmem:[#allocation6 + $0xec] sm:$0xff]
        %v5250 = vld [vmem:[#allocation6 + $0xf4] sm:$0xf]
        %v5251 = vld [vmem:[#allocation6 + $0x130] sm:$0xff]
        %v5252 = vld [vmem:[#allocation6 + $0x138] sm:$0xf]
        %v5253 = vld [vmem:[#allocation6 + $0x174] sm:$0xff]
        %v5254 = vld [vmem:[#allocation6 + $0x17c] sm:$0xf]
        %v5255 = vld [vmem:[#allocation6 + $0x1b8] sm:$0xff]
        %v5256 = vld [vmem:[#allocation6 + $0x1c0] sm:$0xf]
        %v5257 = vld [vmem:[#allocation6 + $0x1fc] sm:$0xff]
        %v5258 = vld [vmem:[#allocation6 + $0x204] sm:$0xf]
        %v5259 = vld [vmem:[#allocation6 + $0x240] sm:$0xff]
        %v5260 = vld [vmem:[#allocation6 + $0x248] sm:$0xf]
        %v5261 = vld [vmem:[#allocation6 + $0x284] sm:$0xff]
        %v5262 = vld [vmem:[#allocation6 + $0x28c] sm:$0xf]
        %v5263 = vld [vmem:[#allocation6 + $0x2c8] sm:$0xff]
        %v5264 = vld [vmem:[#allocation6 + $0x2d0] sm:$0xf]
        %v5265 = vld [vmem:[#allocation6 + $0x30c] sm:$0xff]
        %v5266 = vld [vmem:[#allocation6 + $0x314] sm:$0xf]
        %v5267 = vld [vmem:[#allocation6 + $0x350] sm:$0xff]
        %v5268 = vld [vmem:[#allocation6 + $0x358] sm:$0xf]
        %v5269 = vld [vmem:[#allocation6 + $0x394] sm:$0xff]
        %v5270 = vld [vmem:[#allocation6 + $0x39c] sm:$0xf]
        %v5271 = vld [vmem:[#allocation6 + $0x3d8] sm:$0xff]
        %v5272 = vld [vmem:[#allocation6 + $0x3e0] sm:$0xf]
        %v5273 = vld [vmem:[#allocation6 + $0x41c] sm:$0xff]
        %v5274 = vld [vmem:[#allocation6 + $0x424] sm:$0xf]
        %v5275 = vpack.c.bf16 %v5242, %v5241
        %v5276 = vld [vmem:[%s9 + $0x35] sm:$0x7]
        %v5278 = vperm.slane %v5276, 0
        %v5279 = vperm.slane %v5276, 1
        %v5280 = vperm.slane %v5276, 2
        %v5316 = vunpack.c.l.b16 %v5243
        %v5317 = vunpack.c.h.b16 %v5243
        %v5318 = vunpack.c.l.b16 %v5244
        %v5319 = vunpack.c.l.b16 %v5245
        %v5320 = vunpack.c.h.b16 %v5245
        %v5321 = vunpack.c.l.b16 %v5246
        %v5322 = vunpack.c.l.b16 %v5247
        %v5323 = vunpack.c.h.b16 %v5247
        %v5324 = vunpack.c.l.b16 %v5248
        %v5325 = vunpack.c.l.b16 %v5249
        %v5326 = vunpack.c.h.b16 %v5249
        %v5327 = vunpack.c.l.b16 %v5250
        %v5328 = vunpack.c.l.b16 %v5251
        %v5329 = vunpack.c.h.b16 %v5251
        %v5330 = vunpack.c.l.b16 %v5252
        %v5331 = vunpack.c.l.b16 %v5253
        %v5332 = vunpack.c.h.b16 %v5253
        %v5333 = vunpack.c.l.b16 %v5254
        %v5334 = vunpack.c.l.b16 %v5255
        %v5335 = vunpack.c.h.b16 %v5255
        %v5336 = vunpack.c.l.b16 %v5256
        %v5337 = vunpack.c.l.b16 %v5257
        %v5338 = vunpack.c.h.b16 %v5257
        %v5339 = vunpack.c.l.b16 %v5258
        %v5340 = vunpack.c.l.b16 %v5259
        %v5341 = vunpack.c.h.b16 %v5259
        %v5342 = vunpack.c.l.b16 %v5260
        %v5343 = vunpack.c.l.b16 %v5261
        %v5344 = vunpack.c.h.b16 %v5261
        %v5345 = vunpack.c.l.b16 %v5262
        %v5346 = vunpack.c.l.b16 %v5263
        %v5347 = vunpack.c.h.b16 %v5263
        %v5348 = vunpack.c.l.b16 %v5264
        %v5349 = vunpack.c.l.b16 %v5265
        %v5350 = vunpack.c.h.b16 %v5265
        %v5351 = vunpack.c.l.b16 %v5266
        %v5352 = vunpack.c.l.b16 %v5267
        %v5353 = vunpack.c.h.b16 %v5267
        %v5354 = vunpack.c.l.b16 %v5268
        %v5355 = vunpack.c.l.b16 %v5269
        %v5356 = vunpack.c.h.b16 %v5269
        %v5357 = vunpack.c.l.b16 %v5270
        %v5358 = vunpack.c.l.b16 %v5271
        %v5359 = vunpack.c.h.b16 %v5271
        %v5360 = vunpack.c.l.b16 %v5272
        %v5361 = vunpack.c.l.b16 %v5273
        %v5362 = vunpack.c.h.b16 %v5273
        %v5363 = vunpack.c.l.b16 %v5274
        %v5364 = vpack.c.b16 %v5319, %v5316
        %v5365 = vpack.c.b16 %v5320, %v5317
        %v5366 = vpack.c.b16 %v5321, %v5318
        %v5367 = vpack.c.b16 %v5325, %v5322
        %v5368 = vpack.c.b16 %v5326, %v5323
        %v5369 = vpack.c.b16 %v5327, %v5324
        %v5370 = vpack.c.b16 %v5331, %v5328
        %v5371 = vpack.c.b16 %v5332, %v5329
        %v5372 = vpack.c.b16 %v5333, %v5330
        %v5373 = vpack.c.b16 %v5337, %v5334
        %v5374 = vpack.c.b16 %v5338, %v5335
        %v5375 = vpack.c.b16 %v5339, %v5336
        %v5376 = vpack.c.b16 %v5343, %v5340
        %v5377 = vpack.c.b16 %v5344, %v5341
        %v5378 = vpack.c.b16 %v5345, %v5342
        %v5379 = vpack.c.b16 %v5349, %v5346
        %v5380 = vpack.c.b16 %v5350, %v5347
        %v5381 = vpack.c.b16 %v5351, %v5348
        %v5382 = vpack.c.b16 %v5355, %v5352
        %v5383 = vpack.c.b16 %v5356, %v5353
        %v5384 = vpack.c.b16 %v5357, %v5354
        %v5385 = vpack.c.b16 %v5361, %v5358
        %v5386 = vpack.c.b16 %v5362, %v5359
        %v5387 = vpack.c.b16 %v5363, %v5360
        %5412 = vmatpush.bf16.msra.mxu0 %v5385
        %5413 = vmatpush.bf16.msra.mxu0 %v5382
        %5414 = vmatpush.bf16.msra.mxu0 %v5379
        %5415 = vmatpush.bf16.msra.mxu0 %v5376
        %5416 = vmatpush.bf16.msra.mxu0 %v5373
        %5417 = vmatpush.bf16.msra.mxu0 %v5370
        %5418 = vmatpush.bf16.msra.mxu0 %v5367
        %5419 = vmatpush.bf16.msra.mxu0 %v5364
        %5420 = vmatmul.bf16.gmra.mxu0 %v5275
        %v5421 = vpop.f32.mrf.mxu0
        %v5422 = vadd.f32 %v5278, %v5421
        %v5423 = vpop.f32.mrf.mxu0
        %v5424 = vadd.f32 %v5278, %v5423
        %5425 = vdwg.mxu0
        %5426 = vmatpush.bf16.msra.mxu0 %v5386
        %5427 = vmatpush.bf16.msra.mxu0 %v5383
        %5428 = vmatpush.bf16.msra.mxu0 %v5380
        %5429 = vmatpush.bf16.msra.mxu0 %v5377
        %5430 = vmatpush.bf16.msra.mxu0 %v5374
        %5431 = vmatpush.bf16.msra.mxu0 %v5371
        %5432 = vmatpush.bf16.msra.mxu0 %v5368
        %5433 = vmatpush.bf16.msra.mxu0 %v5365
        %5434 = vmatmul.bf16.gmra.mxu0 %v5275
        %v5435 = vpop.f32.mrf.mxu0
        %v5436 = vadd.f32 %v5279, %v5435
        %v5437 = vpop.f32.mrf.mxu0
        %v5438 = vadd.f32 %v5279, %v5437
        %5439 = vdwg.mxu0
        %5440 = vmatpush.bf16.msra.mxu0 %v5387
        %5441 = vmatpush.bf16.msra.mxu0 %v5384
        %5442 = vmatpush.bf16.msra.mxu0 %v5381
        %5443 = vmatpush.bf16.msra.mxu0 %v5378
        %5444 = vmatpush.bf16.msra.mxu0 %v5375
        %5445 = vmatpush.bf16.msra.mxu0 %v5372
        %5446 = vmatpush.bf16.msra.mxu0 %v5369
        %5447 = vmatpush.bf16.msra.mxu0 %v5366
        %5448 = vmatmul.bf16.gmra.mxu0 %v5275
        %v5449 = vpop.f32.mrf.mxu0
        %v5450 = vadd.f32 %v5280, %v5449
        %v5451 = vpop.f32.mrf.mxu0
        %v5452 = vadd.f32 %v5280, %v5451
        %5453 = vdwg.mxu0
        %v5455 = vsel %vm593, %v5422, 0
        %v5458 = vsel %vm593, %v5424, 0
        %v5461 = vsel %vm593, %v5436, 0
        %v5464 = vsel %vm593, %v5438, 0
        %5466 = vmatpush.xpose.msra.mxu0 0.0
        %5467 = vmatpush.xpose.msra.mxu0 0.0
        %5468 = vmatpush.xpose.msra.mxu0 0.0
        %5469 = vmatpush.xpose.msra.mxu0 0.0
        %5470 = vmatpush.xpose.msra.mxu0 0.0
        %5471 = vmatpush.xpose.msra.mxu0 0.0
        %5472 = vmatpush.xpose.msra.mxu0 0.0
        %5473 = vmatpush.xpose.msra.mxu0 0.0
        %5474 = vmatpush.xpose.msra.mxu0 0.0
        %5475 = vmatpush.xpose.msra.mxu0 0.0
        %5476 = vmatpush.xpose.msra.mxu0 0.0
        %5477 = vmatpush.xpose.msra.mxu0 0.0
        %5478 = vmatpush.xpose.msra.mxu0 0.0
        %5479 = vmatpush.xpose.msra.mxu0 0.0
        %5480 = vmatpush.xpose.msra.mxu0 %v5464
        %5481 = vmatpush.xpose.msra.mxu0 %v5461
        %5482 = vmatmul.f32.gmra.mxu0 %v5455
        %v5483 = vpop.f32.mrf.mxu0
        %v5484 = vadd.f32 0.0, %v5483
        %5485 = vmatmul.f32.gmra.mxu0 %v5458
        %v5486 = vpop.f32.mrf.mxu0
        %v5487 = vadd.f32 0.0, %v5486
        %5488 = vdwg.mxu0
        %v5489 = vmul.f32 %v5484, 0.17677669
        %v5490 = vmul.f32 %v5487, 0.17677669
        %v5491 = vsel %vm1878, %v5489, -inf
        %5492 = vmax.xlane.f32.xlu0 %v5491
        %v5493 = vpop.xlane.xlu0 %5492
        %v5494 = vsel %vm1878, %v5490, -inf
        %5495 = vmax.xlane.f32.xlu0 %v5494
        %v5496 = vpop.xlane.xlu0 %5495
        %v5497 = vsub.f32 %v5489, %v5493
        %v5498 = vsub.f32 %v5490, %v5496
        %v5499 = vmul.f32 %v5497, 1.442695
        %v5500 = vpow.pop %v5499
        %v5501 = vmul.f32 %v5498, 1.442695
        %v5502 = vpow.pop %v5501
        %v5503 = vsel %vm1878, %v5500, 0.0
        %5504 = vadd.xlane.f32.xlu0 %v5503
        %v5505 = vpop.xlane.xlu0 %5504
        %v5506 = vsel %vm1878, %v5502, 0.0
        %5507 = vadd.xlane.f32.xlu0 %v5506
        %v5508 = vpop.xlane.xlu0 %5507
        %v5509 = vrcp.pop %v5505
        %v5510 = vrcp.pop %v5508
        %v5511 = vmul.f32 %v5500, %v5509
        %v5512 = vmul.f32 %v5502, %v5510
        %v5514 = vsel %vm1878, %v5511, 0
        %v5517 = vsel %vm1878, %v5512, 0
        %5519 = vmatpush.msra.mxu0 0.0
        %5520 = vmatpush.msra.mxu0 0.0
        %5521 = vmatpush.msra.mxu0 0.0
        %5522 = vmatpush.msra.mxu0 0.0
        %5523 = vmatpush.msra.mxu0 0.0
        %5524 = vmatpush.msra.mxu0 0.0
        %5525 = vmatpush.msra.mxu0 0.0
        %5526 = vmatpush.msra.mxu0 0.0
        %5527 = vmatpush.msra.mxu0 0.0
        %5528 = vmatpush.msra.mxu0 0.0
        %5529 = vmatpush.msra.mxu0 0.0
        %5530 = vmatpush.msra.mxu0 0.0
        %5531 = vmatpush.msra.mxu0 0.0
        %5532 = vmatpush.msra.mxu0 0.0
        %5533 = vmatpush.msra.mxu0 %v5452
        %5534 = vmatpush.msra.mxu0 %v5450
        %5535 = vmatmul.f32.gmra.mxu0 %v5514
        %v5536 = vpop.f32.mrf.mxu0
        %v5537 = vadd.f32 0.0, %v5536
        %5538 = vmatmul.f32.gmra.mxu0 %v5517
        %v5539 = vpop.f32.mrf.mxu0
        %v5540 = vadd.f32 0.0, %v5539
        %5541 = vdwg.mxu0
        %5542 = vst.msk [vmem:[#allocation2] sm:$0xff] %vm593, %v5537
        %5543 = vst.msk [vmem:[#allocation2 + $0x8] sm:$0xff] %vm593, %v5540
        %5544 = vrot.lane.b32.xlu0 %v5422, 96
        %v5545 = vpop.permute.xlu0 %5544
        %5546 = vrot.lane.b32.xlu0 %v5424, 96
        %v5547 = vpop.permute.xlu0 %5546
        %5548 = vrot.lane.b32.xlu0 %v5436, 96
        %v5549 = vpop.permute.xlu0 %5548
        %5550 = vrot.lane.b32.xlu0 %v5438, 96
        %v5551 = vpop.permute.xlu0 %5550
        %v5552 = vsel %vm593, %v5545, 0
        %v5554 = vsel %vm593, %v5547, 0
        %v5556 = vsel %vm593, %v5549, 0
        %v5558 = vsel %vm593, %v5551, 0
        %5560 = vmatpush.xpose.msra.mxu0 0.0
        %5561 = vmatpush.xpose.msra.mxu0 0.0
        %5562 = vmatpush.xpose.msra.mxu0 0.0
        %5563 = vmatpush.xpose.msra.mxu0 0.0
        %5564 = vmatpush.xpose.msra.mxu0 0.0
        %5565 = vmatpush.xpose.msra.mxu0 0.0
        %5566 = vmatpush.xpose.msra.mxu0 0.0
        %5567 = vmatpush.xpose.msra.mxu0 0.0
        %5568 = vmatpush.xpose.msra.mxu0 0.0
        %5569 = vmatpush.xpose.msra.mxu0 0.0
        %5570 = vmatpush.xpose.msra.mxu0 0.0
        %5571 = vmatpush.xpose.msra.mxu0 0.0
        %5572 = vmatpush.xpose.msra.mxu0 0.0
        %5573 = vmatpush.xpose.msra.mxu0 0.0
        %5574 = vmatpush.xpose.msra.mxu0 %v5558
        %5575 = vmatpush.xpose.msra.mxu0 %v5556
        %5576 = vmatmul.f32.gmra.mxu0 %v5552
        %v5577 = vpop.f32.mrf.mxu0
        %v5578 = vadd.f32 0.0, %v5577
        %5579 = vmatmul.f32.gmra.mxu0 %v5554
        %v5580 = vpop.f32.mrf.mxu0
        %v5581 = vadd.f32 0.0, %v5580
        %5582 = vdwg.mxu0
        %v5583 = vmul.f32 %v5578, 0.17677669
        %v5584 = vmul.f32 %v5581, 0.17677669
        %v5585 = vsel %vm1878, %v5583, -inf
        %5586 = vmax.xlane.f32.xlu0 %v5585
        %v5587 = vpop.xlane.xlu0 %5586
        %v5588 = vsel %vm1878, %v5584, -inf
        %5589 = vmax.xlane.f32.xlu0 %v5588
        %v5590 = vpop.xlane.xlu0 %5589
        %v5591 = vsub.f32 %v5583, %v5587
        %v5592 = vsub.f32 %v5584, %v5590
        %v5593 = vmul.f32 %v5591, 1.442695
        %v5594 = vpow.pop %v5593
        %v5595 = vmul.f32 %v5592, 1.442695
        %v5596 = vpow.pop %v5595
        %v5597 = vsel %vm1878, %v5594, 0.0
        %5598 = vadd.xlane.f32.xlu0 %v5597
        %v5599 = vpop.xlane.xlu0 %5598
        %v5600 = vsel %vm1878, %v5596, 0.0
        %5601 = vadd.xlane.f32.xlu0 %v5600
        %v5602 = vpop.xlane.xlu0 %5601
        %v5603 = vrcp.pop %v5599
        %v5604 = vrcp.pop %v5602
        %v5605 = vmul.f32 %v5594, %v5603
        %v5606 = vmul.f32 %v5596, %v5604
        %5609 = vrot.lane.b32.xlu0 %v5450, 96
        %v5610 = vpop.permute.xlu0 %5609
        %5611 = vrot.lane.b32.xlu0 %v5452, 96
        %v5612 = vpop.permute.xlu0 %5611
        %v5616 = vsel %vm1878, %v5605, 0
        %v5619 = vsel %vm1878, %v5606, 0
        %5621 = vmatpush.msra.mxu0 0.0
        %5622 = vmatpush.msra.mxu0 0.0
        %5623 = vmatpush.msra.mxu0 0.0
        %5624 = vmatpush.msra.mxu0 0.0
        %5625 = vmatpush.msra.mxu0 0.0
        %5626 = vmatpush.msra.mxu0 0.0
        %5627 = vmatpush.msra.mxu0 0.0
        %5628 = vmatpush.msra.mxu0 0.0
        %5629 = vmatpush.msra.mxu0 0.0
        %5630 = vmatpush.msra.mxu0 0.0
        %5631 = vmatpush.msra.mxu0 0.0
        %5632 = vmatpush.msra.mxu0 0.0
        %5633 = vmatpush.msra.mxu0 0.0
        %5634 = vmatpush.msra.mxu0 0.0
        %5635 = vmatpush.msra.mxu0 %v5612
        %5636 = vmatpush.msra.mxu0 %v5610
        %5637 = vmatmul.f32.gmra.mxu0 %v5616
        %v5638 = vpop.f32.mrf.mxu0
        %v5639 = vadd.f32 0.0, %v5638
        %5640 = vmatmul.f32.gmra.mxu0 %v5619
        %v5641 = vpop.f32.mrf.mxu0
        %v5642 = vadd.f32 0.0, %v5641
        %5643 = vdwg.mxu0
        %5646 = vrot.lane.b32.xlu0 %v5639, 32
        %v5647 = vpop.permute.xlu0 %5646
        %5648 = vrot.lane.b32.xlu0 %v5642, 32
        %v5649 = vpop.permute.xlu0 %5648
        %5652 = vst.msk [vmem:[#allocation2] sm:$0xff] %vm4176, %v5647
        %5653 = vst.msk [vmem:[#allocation2 + $0x8] sm:$0xff] %vm4176, %v5649
        %5654 = vrot.lane.b32.xlu0 %v5422, 64
        %v5655 = vpop.permute.xlu0 %5654
        %5656 = vrot.lane.b32.xlu0 %v5424, 64
        %v5657 = vpop.permute.xlu0 %5656
        %5658 = vrot.lane.b32.xlu0 %v5436, 64
        %v5659 = vpop.permute.xlu0 %5658
        %5660 = vrot.lane.b32.xlu0 %v5438, 64
        %v5661 = vpop.permute.xlu0 %5660
        %v5662 = vsel %vm593, %v5655, 0
        %v5664 = vsel %vm593, %v5657, 0
        %v5666 = vsel %vm593, %v5659, 0
        %v5668 = vsel %vm593, %v5661, 0
        %5670 = vmatpush.xpose.msra.mxu0 0.0
        %5671 = vmatpush.xpose.msra.mxu0 0.0
        %5672 = vmatpush.xpose.msra.mxu0 0.0
        %5673 = vmatpush.xpose.msra.mxu0 0.0
        %5674 = vmatpush.xpose.msra.mxu0 0.0
        %5675 = vmatpush.xpose.msra.mxu0 0.0
        %5676 = vmatpush.xpose.msra.mxu0 0.0
        %5677 = vmatpush.xpose.msra.mxu0 0.0
        %5678 = vmatpush.xpose.msra.mxu0 0.0
        %5679 = vmatpush.xpose.msra.mxu0 0.0
        %5680 = vmatpush.xpose.msra.mxu0 0.0
        %5681 = vmatpush.xpose.msra.mxu0 0.0
        %5682 = vmatpush.xpose.msra.mxu0 0.0
        %5683 = vmatpush.xpose.msra.mxu0 0.0
        %5684 = vmatpush.xpose.msra.mxu0 %v5668
        %5685 = vmatpush.xpose.msra.mxu0 %v5666
        %5686 = vmatmul.f32.gmra.mxu0 %v5662
        %v5687 = vpop.f32.mrf.mxu0
        %v5688 = vadd.f32 0.0, %v5687
        %5689 = vmatmul.f32.gmra.mxu0 %v5664
        %v5690 = vpop.f32.mrf.mxu0
        %v5691 = vadd.f32 0.0, %v5690
        %5692 = vdwg.mxu0
        %v5693 = vmul.f32 %v5688, 0.17677669
        %v5694 = vmul.f32 %v5691, 0.17677669
        %v5695 = vsel %vm1878, %v5693, -inf
        %5696 = vmax.xlane.f32.xlu0 %v5695
        %v5697 = vpop.xlane.xlu0 %5696
        %v5698 = vsel %vm1878, %v5694, -inf
        %5699 = vmax.xlane.f32.xlu0 %v5698
        %v5700 = vpop.xlane.xlu0 %5699
        %v5701 = vsub.f32 %v5693, %v5697
        %v5702 = vsub.f32 %v5694, %v5700
        %v5703 = vmul.f32 %v5701, 1.442695
        %v5704 = vpow.pop %v5703
        %v5705 = vmul.f32 %v5702, 1.442695
        %v5706 = vpow.pop %v5705
        %v5707 = vsel %vm1878, %v5704, 0.0
        %5708 = vadd.xlane.f32.xlu0 %v5707
        %v5709 = vpop.xlane.xlu0 %5708
        %v5710 = vsel %vm1878, %v5706, 0.0
        %5711 = vadd.xlane.f32.xlu0 %v5710
        %v5712 = vpop.xlane.xlu0 %5711
        %v5713 = vrcp.pop %v5709
        %v5714 = vrcp.pop %v5712
        %v5715 = vmul.f32 %v5704, %v5713
        %v5716 = vmul.f32 %v5706, %v5714
        %5717 = vrot.lane.b32.xlu0 %v5450, 64
        %v5718 = vpop.permute.xlu0 %5717
        %5719 = vrot.lane.b32.xlu0 %v5452, 64
        %v5720 = vpop.permute.xlu0 %5719
        %v5724 = vsel %vm1878, %v5715, 0
        %v5727 = vsel %vm1878, %v5716, 0
        %5729 = vmatpush.msra.mxu0 0.0
        %5730 = vmatpush.msra.mxu0 0.0
        %5731 = vmatpush.msra.mxu0 0.0
        %5732 = vmatpush.msra.mxu0 0.0
        %5733 = vmatpush.msra.mxu0 0.0
        %5734 = vmatpush.msra.mxu0 0.0
        %5735 = vmatpush.msra.mxu0 0.0
        %5736 = vmatpush.msra.mxu0 0.0
        %5737 = vmatpush.msra.mxu0 0.0
        %5738 = vmatpush.msra.mxu0 0.0
        %5739 = vmatpush.msra.mxu0 0.0
        %5740 = vmatpush.msra.mxu0 0.0
        %5741 = vmatpush.msra.mxu0 0.0
        %5742 = vmatpush.msra.mxu0 0.0
        %5743 = vmatpush.msra.mxu0 %v5720
        %5744 = vmatpush.msra.mxu0 %v5718
        %5745 = vmatmul.f32.gmra.mxu0 %v5724
        %v5746 = vpop.f32.mrf.mxu0
        %v5747 = vadd.f32 0.0, %v5746
        %5748 = vmatmul.f32.gmra.mxu0 %v5727
        %v5749 = vpop.f32.mrf.mxu0
        %v5750 = vadd.f32 0.0, %v5749
        %5751 = vdwg.mxu0
        %5754 = vrot.lane.b32.xlu0 %v5747, 64
        %v5755 = vpop.permute.xlu0 %5754
        %5756 = vrot.lane.b32.xlu0 %v5750, 64
        %v5757 = vpop.permute.xlu0 %5756
        %5760 = vst.msk [vmem:[#allocation2] sm:$0xff] %vm4285, %v5755
        %5761 = vst.msk [vmem:[#allocation2 + $0x8] sm:$0xff] %vm4285, %v5757
        %5762 = vrot.lane.b32.xlu0 %v5422, 32
        %v5763 = vpop.permute.xlu0 %5762
        %5764 = vrot.lane.b32.xlu0 %v5424, 32
        %v5765 = vpop.permute.xlu0 %5764
        %5766 = vrot.lane.b32.xlu0 %v5436, 32
        %v5767 = vpop.permute.xlu0 %5766
        %5768 = vrot.lane.b32.xlu0 %v5438, 32
        %v5769 = vpop.permute.xlu0 %5768
        %v5770 = vsel %vm593, %v5763, 0
        %v5772 = vsel %vm593, %v5765, 0
        %v5774 = vsel %vm593, %v5767, 0
        %v5776 = vsel %vm593, %v5769, 0
        %5778 = vmatpush.xpose.msra.mxu0 0.0
        %5779 = vmatpush.xpose.msra.mxu0 0.0
        %5780 = vmatpush.xpose.msra.mxu0 0.0
        %5781 = vmatpush.xpose.msra.mxu0 0.0
        %5782 = vmatpush.xpose.msra.mxu0 0.0
        %5783 = vmatpush.xpose.msra.mxu0 0.0
        %5784 = vmatpush.xpose.msra.mxu0 0.0
        %5785 = vmatpush.xpose.msra.mxu0 0.0
        %5786 = vmatpush.xpose.msra.mxu0 0.0
        %5787 = vmatpush.xpose.msra.mxu0 0.0
        %5788 = vmatpush.xpose.msra.mxu0 0.0
        %5789 = vmatpush.xpose.msra.mxu0 0.0
        %5790 = vmatpush.xpose.msra.mxu0 0.0
        %5791 = vmatpush.xpose.msra.mxu0 0.0
        %5792 = vmatpush.xpose.msra.mxu0 %v5776
        %5793 = vmatpush.xpose.msra.mxu0 %v5774
        %5794 = vmatmul.f32.gmra.mxu0 %v5770
        %v5795 = vpop.f32.mrf.mxu0
        %v5796 = vadd.f32 0.0, %v5795
        %5797 = vmatmul.f32.gmra.mxu0 %v5772
        %v5798 = vpop.f32.mrf.mxu0
        %v5799 = vadd.f32 0.0, %v5798
        %5800 = vdwg.mxu0
        %v5801 = vmul.f32 %v5796, 0.17677669
        %v5802 = vmul.f32 %v5799, 0.17677669
        %v5803 = vsel %vm1878, %v5801, -inf
        %5804 = vmax.xlane.f32.xlu0 %v5803
        %v5805 = vpop.xlane.xlu0 %5804
        %v5806 = vsel %vm1878, %v5802, -inf
        %5807 = vmax.xlane.f32.xlu0 %v5806
        %v5808 = vpop.xlane.xlu0 %5807
        %v5809 = vsub.f32 %v5801, %v5805
        %v5810 = vsub.f32 %v5802, %v5808
        %v5811 = vmul.f32 %v5809, 1.442695
        %v5812 = vpow.pop %v5811
        %v5813 = vmul.f32 %v5810, 1.442695
        %v5814 = vpow.pop %v5813
        %v5815 = vsel %vm1878, %v5812, 0.0
        %5816 = vadd.xlane.f32.xlu0 %v5815
        %v5817 = vpop.xlane.xlu0 %5816
        %v5818 = vsel %vm1878, %v5814, 0.0
        %5819 = vadd.xlane.f32.xlu0 %v5818
        %v5820 = vpop.xlane.xlu0 %5819
        %v5821 = vrcp.pop %v5817
        %v5822 = vrcp.pop %v5820
        %v5823 = vmul.f32 %v5812, %v5821
        %v5824 = vmul.f32 %v5814, %v5822
        %5825 = vrot.lane.b32.xlu0 %v5450, 32
        %v5826 = vpop.permute.xlu0 %5825
        %5827 = vrot.lane.b32.xlu0 %v5452, 32
        %v5828 = vpop.permute.xlu0 %5827
        %v5832 = vsel %vm1878, %v5823, 0
        %v5835 = vsel %vm1878, %v5824, 0
        %5837 = vmatpush.msra.mxu0 0.0
        %5838 = vmatpush.msra.mxu0 0.0
        %5839 = vmatpush.msra.mxu0 0.0
        %5840 = vmatpush.msra.mxu0 0.0
        %5841 = vmatpush.msra.mxu0 0.0
        %5842 = vmatpush.msra.mxu0 0.0
        %5843 = vmatpush.msra.mxu0 0.0
        %5844 = vmatpush.msra.mxu0 0.0
        %5845 = vmatpush.msra.mxu0 0.0
        %5846 = vmatpush.msra.mxu0 0.0
        %5847 = vmatpush.msra.mxu0 0.0
        %5848 = vmatpush.msra.mxu0 0.0
        %5849 = vmatpush.msra.mxu0 0.0
        %5850 = vmatpush.msra.mxu0 0.0
        %5851 = vmatpush.msra.mxu0 %v5828
        %5852 = vmatpush.msra.mxu0 %v5826
        %5853 = vmatmul.f32.gmra.mxu0 %v5832
        %v5854 = vpop.f32.mrf.mxu0
        %v5855 = vadd.f32 0.0, %v5854
        %5856 = vmatmul.f32.gmra.mxu0 %v5835
        %v5857 = vpop.f32.mrf.mxu0
        %v5858 = vadd.f32 0.0, %v5857
        %5859 = vdwg.mxu0
        %5862 = vrot.lane.b32.xlu0 %v5855, 96
        %v5863 = vpop.permute.xlu0 %5862
        %5864 = vrot.lane.b32.xlu0 %v5858, 96
        %v5865 = vpop.permute.xlu0 %5864
        %5868 = vst.msk [vmem:[#allocation2] sm:$0xff] %vm4394, %v5863
        %5869 = vst.msk [vmem:[#allocation2 + $0x8] sm:$0xff] %vm4394, %v5865
        %v5870 = vld [vmem:[#allocation2] sm:$0xff]
        %v5871 = vld [vmem:[#allocation2 + $0x8] sm:$0xff]
        %v5872 = vld [vmem:[#allocation6 + $0x2c] sm:$0xf]
        %v5873 = vld [vmem:[#allocation6 + $0x70] sm:$0xf]
        %v5874 = vld [vmem:[#allocation6 + $0xb4] sm:$0xf]
        %v5875 = vld [vmem:[#allocation6 + $0xf8] sm:$0xf]
        %v5876 = vld [vmem:[#allocation6 + $0x13c] sm:$0xf]
        %v5877 = vld [vmem:[#allocation6 + $0x180] sm:$0xf]
        %v5878 = vld [vmem:[#allocation6 + $0x1c4] sm:$0xf]
        %v5879 = vld [vmem:[#allocation6 + $0x208] sm:$0xf]
        %v5880 = vld [vmem:[#allocation6 + $0x24c] sm:$0xf]
        %v5881 = vld [vmem:[#allocation6 + $0x290] sm:$0xf]
        %v5882 = vld [vmem:[#allocation6 + $0x2d4] sm:$0xf]
        %v5883 = vld [vmem:[#allocation6 + $0x318] sm:$0xf]
        %v5884 = vld [vmem:[#allocation6 + $0x35c] sm:$0xf]
        %v5885 = vld [vmem:[#allocation6 + $0x3a0] sm:$0xf]
        %v5886 = vld [vmem:[#allocation6 + $0x3e4] sm:$0xf]
        %v5887 = vld [vmem:[#allocation6 + $0x428] sm:$0xf]
        %v5888 = vpack.c.bf16 %v5871, %v5870
        %v5905 = vunpack.c.l.b16 %v5872
        %v5906 = vunpack.c.l.b16 %v5873
        %v5907 = vunpack.c.l.b16 %v5874
        %v5908 = vunpack.c.l.b16 %v5875
        %v5909 = vunpack.c.l.b16 %v5876
        %v5910 = vunpack.c.l.b16 %v5877
        %v5911 = vunpack.c.l.b16 %v5878
        %v5912 = vunpack.c.l.b16 %v5879
        %v5913 = vunpack.c.l.b16 %v5880
        %v5914 = vunpack.c.l.b16 %v5881
        %v5915 = vunpack.c.l.b16 %v5882
        %v5916 = vunpack.c.l.b16 %v5883
        %v5917 = vunpack.c.l.b16 %v5884
        %v5918 = vunpack.c.l.b16 %v5885
        %v5919 = vunpack.c.l.b16 %v5886
        %v5920 = vunpack.c.l.b16 %v5887
        %v5921 = vpack.c.b16 %v5906, %v5905
        %v5922 = vpack.c.b16 %v5908, %v5907
        %v5923 = vpack.c.b16 %v5910, %v5909
        %v5924 = vpack.c.b16 %v5912, %v5911
        %v5925 = vpack.c.b16 %v5914, %v5913
        %v5926 = vpack.c.b16 %v5916, %v5915
        %v5927 = vpack.c.b16 %v5918, %v5917
        %v5928 = vpack.c.b16 %v5920, %v5919
        %5937 = vmatpush.bf16.msra.mxu0 %v5928
        %5938 = vmatpush.bf16.msra.mxu0 %v5927
        %5939 = vmatpush.bf16.msra.mxu0 %v5926
        %5940 = vmatpush.bf16.msra.mxu0 %v5925
        %5941 = vmatpush.bf16.msra.mxu0 %v5924
        %5942 = vmatpush.bf16.msra.mxu0 %v5923
        %5943 = vmatpush.bf16.msra.mxu0 %v5922
        %5944 = vmatpush.bf16.msra.mxu0 %v5921
        %5945 = vmatmul.bf16.gmra.mxu0 %v5888
        %v5946 = vpop.f32.mrf.mxu0
        %v5947 = vadd.f32 0.0, %v5946
        %v5948 = vpop.f32.mrf.mxu0
        %v5949 = vadd.f32 0.0, %v5948
        %5950 = vdwg.mxu0
        %v5951 = vadd.f32 %v5189, %v5947
        %v5952 = vadd.f32 %v5190, %v5949
        %v5953 = vld [vmem:[%s9 + $0x38] sm:$0x1]
        %v5955 = vperm.slane %v5953, 0
        %v5957 = vadd.f32 %v5951, %v5955
        %v5958 = vadd.f32 %v5952, %v5955
        %v5959 = vld [vmem:[%s9 + $0x39] sm:$0x1]
        %v5960 = vld [vmem:[%s9 + $0x3a] sm:$0x1]
        %5961 = vadd.xlane.f32.xlu0 %v5957
        %v5962 = vpop.xlane.xlu0 %5961
        %5963 = vadd.xlane.f32.xlu0 %v5958
        %v5964 = vpop.xlane.xlu0 %5963
        %v5965 = vmul.f32 %v5962, %v3720
        %v5966 = vmul.f32 %v5964, %v3720
        %v5967 = vsub.f32 %v5957, %v5965
        %v5968 = vsub.f32 %v5958, %v5966
        %v5969 = vmul.f32 %v5967, %v5967
        %v5970 = vmul.f32 %v5968, %v5968
        %5971 = vadd.xlane.f32.xlu0 %v5969
        %v5972 = vpop.xlane.xlu0 %5971
        %5973 = vadd.xlane.f32.xlu0 %v5970
        %v5974 = vpop.xlane.xlu0 %5973
        %v5975 = vmul.f32 %v5972, %v3720
        %v5976 = vmul.f32 %v5974, %v3720
        %v5977 = vadd.f32 %v5975, 1e-05
        %v5978 = vadd.f32 %v5976, 1e-05
        %v5979 = vrsqrt.pop %v5977
        %v5980 = vmul.f32 %v5979, %v5977
        %v5981 = vmul.f32 %v5980, %v5979
        %v5982 = vmul.f32 0.5, %v5981
        %v5983 = vsub.f32 1.5, %v5982
        %v5984 = vmul.f32 %v5979, %v5983
        %vm5985 = vweird.f32 %v5977
        %vm5986 = vweird.f32 %v5979
        %vm5987 = vmor %vm5985, %vm5986
        %v5988 = vsel %vm5987, %v5979, %v5984
        %v5989 = vrsqrt.pop %v5978
        %v5990 = vmul.f32 %v5989, %v5978
        %v5991 = vmul.f32 %v5990, %v5989
        %v5992 = vmul.f32 0.5, %v5991
        %v5993 = vsub.f32 1.5, %v5992
        %v5994 = vmul.f32 %v5989, %v5993
        %vm5995 = vweird.f32 %v5978
        %vm5996 = vweird.f32 %v5989
        %vm5997 = vmor %vm5995, %vm5996
        %v5998 = vsel %vm5997, %v5989, %v5994
        %v5999 = vmul.f32 %v5967, %v5988
        %v6000 = vmul.f32 %v5968, %v5998
        %v6002 = vperm.slane %v5959, 0
        %v6004 = vmul.f32 %v5999, %v6002
        %v6005 = vmul.f32 %v6000, %v6002
        %v6007 = vperm.slane %v5960, 0
        %v6009 = vadd.f32 %v6004, %v6007
        %v6010 = vadd.f32 %v6005, %v6007
        %v6011 = vld [vmem:[#allocation6 + $0x30] sm:$0xff]
        %v6012 = vld [vmem:[#allocation6 + $0x38] sm:$0xff]
        %v6013 = vld [vmem:[#allocation6 + $0x74] sm:$0xff]
        %v6014 = vld [vmem:[#allocation6 + $0x7c] sm:$0xff]
        %v6015 = vld [vmem:[#allocation6 + $0xb8] sm:$0xff]
        %v6016 = vld [vmem:[#allocation6 + $0xc0] sm:$0xff]
        %v6017 = vld [vmem:[#allocation6 + $0xfc] sm:$0xff]
        %v6018 = vld [vmem:[#allocation6 + $0x104] sm:$0xff]
        %v6019 = vld [vmem:[#allocation6 + $0x140] sm:$0xff]
        %v6020 = vld [vmem:[#allocation6 + $0x148] sm:$0xff]
        %v6021 = vld [vmem:[#allocation6 + $0x184] sm:$0xff]
        %v6022 = vld [vmem:[#allocation6 + $0x18c] sm:$0xff]
        %v6023 = vld [vmem:[#allocation6 + $0x1c8] sm:$0xff]
        %v6024 = vld [vmem:[#allocation6 + $0x1d0] sm:$0xff]
        %v6025 = vld [vmem:[#allocation6 + $0x20c] sm:$0xff]
        %v6026 = vld [vmem:[#allocation6 + $0x214] sm:$0xff]
        %v6027 = vld [vmem:[#allocation6 + $0x250] sm:$0xff]
        %v6028 = vld [vmem:[#allocation6 + $0x258] sm:$0xff]
        %v6029 = vld [vmem:[#allocation6 + $0x294] sm:$0xff]
        %v6030 = vld [vmem:[#allocation6 + $0x29c] sm:$0xff]
        %v6031 = vld [vmem:[#allocation6 + $0x2d8] sm:$0xff]
        %v6032 = vld [vmem:[#allocation6 + $0x2e0] sm:$0xff]
        %v6033 = vld [vmem:[#allocation6 + $0x31c] sm:$0xff]
        %v6034 = vld [vmem:[#allocation6 + $0x324] sm:$0xff]
        %v6035 = vld [vmem:[#allocation6 + $0x360] sm:$0xff]
        %v6036 = vld [vmem:[#allocation6 + $0x368] sm:$0xff]
        %v6037 = vld [vmem:[#allocation6 + $0x3a4] sm:$0xff]
        %v6038 = vld [vmem:[#allocation6 + $0x3ac] sm:$0xff]
        %v6039 = vld [vmem:[#allocation6 + $0x3e8] sm:$0xff]
        %v6040 = vld [vmem:[#allocation6 + $0x3f0] sm:$0xff]
        %v6041 = vld [vmem:[#allocation6 + $0x42c] sm:$0xff]
        %v6042 = vld [vmem:[#allocation6 + $0x434] sm:$0xff]
        %v6043 = vpack.c.bf16 %v6010, %v6009
        %v6044 = vld [vmem:[%s9 + $0x3b] sm:$0xf]
        %v6046 = vperm.slane %v6044, 0
        %v6047 = vperm.slane %v6044, 1
        %v6048 = vperm.slane %v6044, 2
        %v6049 = vperm.slane %v6044, 3
        %v6086 = vunpack.c.l.b16 %v6011
        %v6087 = vunpack.c.h.b16 %v6011
        %v6088 = vunpack.c.l.b16 %v6012
        %v6089 = vunpack.c.h.b16 %v6012
        %v6090 = vunpack.c.l.b16 %v6013
        %v6091 = vunpack.c.h.b16 %v6013
        %v6092 = vunpack.c.l.b16 %v6014
        %v6093 = vunpack.c.h.b16 %v6014
        %v6094 = vunpack.c.l.b16 %v6015
        %v6095 = vunpack.c.h.b16 %v6015
        %v6096 = vunpack.c.l.b16 %v6016
        %v6097 = vunpack.c.h.b16 %v6016
        %v6098 = vunpack.c.l.b16 %v6017
        %v6099 = vunpack.c.h.b16 %v6017
        %v6100 = vunpack.c.l.b16 %v6018
        %v6101 = vunpack.c.h.b16 %v6018
        %v6102 = vunpack.c.l.b16 %v6019
        %v6103 = vunpack.c.h.b16 %v6019
        %v6104 = vunpack.c.l.b16 %v6020
        %v6105 = vunpack.c.h.b16 %v6020
        %v6106 = vunpack.c.l.b16 %v6021
        %v6107 = vunpack.c.h.b16 %v6021
        %v6108 = vunpack.c.l.b16 %v6022
        %v6109 = vunpack.c.h.b16 %v6022
        %v6110 = vunpack.c.l.b16 %v6023
        %v6111 = vunpack.c.h.b16 %v6023
        %v6112 = vunpack.c.l.b16 %v6024
        %v6113 = vunpack.c.h.b16 %v6024
        %v6114 = vunpack.c.l.b16 %v6025
        %v6115 = vunpack.c.h.b16 %v6025
        %v6116 = vunpack.c.l.b16 %v6026
        %v6117 = vunpack.c.h.b16 %v6026
        %v6118 = vunpack.c.l.b16 %v6027
        %v6119 = vunpack.c.h.b16 %v6027
        %v6120 = vunpack.c.l.b16 %v6028
        %v6121 = vunpack.c.h.b16 %v6028
        %v6122 = vunpack.c.l.b16 %v6029
        %v6123 = vunpack.c.h.b16 %v6029
        %v6124 = vunpack.c.l.b16 %v6030
        %v6125 = vunpack.c.h.b16 %v6030
        %v6126 = vunpack.c.l.b16 %v6031
        %v6127 = vunpack.c.h.b16 %v6031
        %v6128 = vunpack.c.l.b16 %v6032
        %v6129 = vunpack.c.h.b16 %v6032
        %v6130 = vunpack.c.l.b16 %v6033
        %v6131 = vunpack.c.h.b16 %v6033
        %v6132 = vunpack.c.l.b16 %v6034
        %v6133 = vunpack.c.h.b16 %v6034
        %v6134 = vunpack.c.l.b16 %v6035
        %v6135 = vunpack.c.h.b16 %v6035
        %v6136 = vunpack.c.l.b16 %v6036
        %v6137 = vunpack.c.h.b16 %v6036
        %v6138 = vunpack.c.l.b16 %v6037
        %v6139 = vunpack.c.h.b16 %v6037
        %v6140 = vunpack.c.l.b16 %v6038
        %v6141 = vunpack.c.h.b16 %v6038
        %v6142 = vunpack.c.l.b16 %v6039
        %v6143 = vunpack.c.h.b16 %v6039
        %v6144 = vunpack.c.l.b16 %v6040
        %v6145 = vunpack.c.h.b16 %v6040
        %v6146 = vunpack.c.l.b16 %v6041
        %v6147 = vunpack.c.h.b16 %v6041
        %v6148 = vunpack.c.l.b16 %v6042
        %v6149 = vunpack.c.h.b16 %v6042
        %v6150 = vpack.c.b16 %v6090, %v6086
        %v6151 = vpack.c.b16 %v6091, %v6087
        %v6152 = vpack.c.b16 %v6092, %v6088
        %v6153 = vpack.c.b16 %v6093, %v6089
        %v6154 = vpack.c.b16 %v6098, %v6094
        %v6155 = vpack.c.b16 %v6099, %v6095
        %v6156 = vpack.c.b16 %v6100, %v6096
        %v6157 = vpack.c.b16 %v6101, %v6097
        %v6158 = vpack.c.b16 %v6106, %v6102
        %v6159 = vpack.c.b16 %v6107, %v6103
        %v6160 = vpack.c.b16 %v6108, %v6104
        %v6161 = vpack.c.b16 %v6109, %v6105
        %v6162 = vpack.c.b16 %v6114, %v6110
        %v6163 = vpack.c.b16 %v6115, %v6111
        %v6164 = vpack.c.b16 %v6116, %v6112
        %v6165 = vpack.c.b16 %v6117, %v6113
        %v6166 = vpack.c.b16 %v6122, %v6118
        %v6167 = vpack.c.b16 %v6123, %v6119
        %v6168 = vpack.c.b16 %v6124, %v6120
        %v6169 = vpack.c.b16 %v6125, %v6121
        %v6170 = vpack.c.b16 %v6130, %v6126
        %v6171 = vpack.c.b16 %v6131, %v6127
        %v6172 = vpack.c.b16 %v6132, %v6128
        %v6173 = vpack.c.b16 %v6133, %v6129
        %v6174 = vpack.c.b16 %v6138, %v6134
        %v6175 = vpack.c.b16 %v6139, %v6135
        %v6176 = vpack.c.b16 %v6140, %v6136
        %v6177 = vpack.c.b16 %v6141, %v6137
        %v6178 = vpack.c.b16 %v6146, %v6142
        %v6179 = vpack.c.b16 %v6147, %v6143
        %v6180 = vpack.c.b16 %v6148, %v6144
        %v6181 = vpack.c.b16 %v6149, %v6145
        %6214 = vmatpush.bf16.msra.mxu0 %v6178
        %6215 = vmatpush.bf16.msra.mxu0 %v6174
        %6216 = vmatpush.bf16.msra.mxu0 %v6170
        %6217 = vmatpush.bf16.msra.mxu0 %v6166
        %6218 = vmatpush.bf16.msra.mxu0 %v6162
        %6219 = vmatpush.bf16.msra.mxu0 %v6158
        %6220 = vmatpush.bf16.msra.mxu0 %v6154
        %6221 = vmatpush.bf16.msra.mxu0 %v6150
        %6222 = vmatmul.bf16.gmra.mxu0 %v6043
        %v6223 = vpop.f32.mrf.mxu0
        %v6224 = vadd.f32 %v6046, %v6223
        %v6225 = vpop.f32.mrf.mxu0
        %v6226 = vadd.f32 %v6046, %v6225
        %6227 = vdwg.mxu0
        %6228 = vmatpush.bf16.msra.mxu0 %v6179
        %6229 = vmatpush.bf16.msra.mxu0 %v6175
        %6230 = vmatpush.bf16.msra.mxu0 %v6171
        %6231 = vmatpush.bf16.msra.mxu0 %v6167
        %6232 = vmatpush.bf16.msra.mxu0 %v6163
        %6233 = vmatpush.bf16.msra.mxu0 %v6159
        %6234 = vmatpush.bf16.msra.mxu0 %v6155
        %6235 = vmatpush.bf16.msra.mxu0 %v6151
        %6236 = vmatmul.bf16.gmra.mxu0 %v6043
        %v6237 = vpop.f32.mrf.mxu0
        %v6238 = vadd.f32 %v6047, %v6237
        %v6239 = vpop.f32.mrf.mxu0
        %v6240 = vadd.f32 %v6047, %v6239
        %6241 = vdwg.mxu0
        %6242 = vmatpush.bf16.msra.mxu0 %v6180
        %6243 = vmatpush.bf16.msra.mxu0 %v6176
        %6244 = vmatpush.bf16.msra.mxu0 %v6172
        %6245 = vmatpush.bf16.msra.mxu0 %v6168
        %6246 = vmatpush.bf16.msra.mxu0 %v6164
        %6247 = vmatpush.bf16.msra.mxu0 %v6160
        %6248 = vmatpush.bf16.msra.mxu0 %v6156
        %6249 = vmatpush.bf16.msra.mxu0 %v6152
        %6250 = vmatmul.bf16.gmra.mxu0 %v6043
        %v6251 = vpop.f32.mrf.mxu0
        %v6252 = vadd.f32 %v6048, %v6251
        %v6253 = vpop.f32.mrf.mxu0
        %v6254 = vadd.f32 %v6048, %v6253
        %6255 = vdwg.mxu0
        %6256 = vmatpush.bf16.msra.mxu0 %v6181
        %6257 = vmatpush.bf16.msra.mxu0 %v6177
        %6258 = vmatpush.bf16.msra.mxu0 %v6173
        %6259 = vmatpush.bf16.msra.mxu0 %v6169
        %6260 = vmatpush.bf16.msra.mxu0 %v6165
        %6261 = vmatpush.bf16.msra.mxu0 %v6161
        %6262 = vmatpush.bf16.msra.mxu0 %v6157
        %6263 = vmatpush.bf16.msra.mxu0 %v6153
        %6264 = vmatmul.bf16.gmra.mxu0 %v6043
        %v6265 = vpop.f32.mrf.mxu0
        %v6266 = vadd.f32 %v6049, %v6265
        %v6267 = vpop.f32.mrf.mxu0
        %v6268 = vadd.f32 %v6049, %v6267
        %6269 = vdwg.mxu0
        %v6270 = vmul.f32 %v6224, %v6224
        %v6271 = vmul.f32 %v6238, %v6238
        %v6272 = vmul.f32 %v6252, %v6252
        %v6273 = vmul.f32 %v6266, %v6266
        %v6274 = vmul.f32 %v6226, %v6226
        %v6275 = vmul.f32 %v6240, %v6240
        %v6276 = vmul.f32 %v6254, %v6254
        %v6277 = vmul.f32 %v6268, %v6268
        %v6278 = vmul.f32 %v6224, %v6270
        %v6279 = vmul.f32 %v6238, %v6271
        %v6280 = vmul.f32 %v6252, %v6272
        %v6281 = vmul.f32 %v6266, %v6273
        %v6282 = vmul.f32 %v6226, %v6274
        %v6283 = vmul.f32 %v6240, %v6275
        %v6284 = vmul.f32 %v6254, %v6276
        %v6285 = vmul.f32 %v6268, %v6277
        %v6286 = vmul.f32 %v6278, 0.044715
        %v6287 = vmul.f32 %v6279, 0.044715
        %v6288 = vmul.f32 %v6280, 0.044715
        %v6289 = vmul.f32 %v6281, 0.044715
        %v6290 = vmul.f32 %v6282, 0.044715
        %v6291 = vmul.f32 %v6283, 0.044715
        %v6292 = vmul.f32 %v6284, 0.044715
        %v6293 = vmul.f32 %v6285, 0.044715
        %v6294 = vadd.f32 %v6224, %v6286
        %v6295 = vadd.f32 %v6238, %v6287
        %v6296 = vadd.f32 %v6252, %v6288
        %v6297 = vadd.f32 %v6266, %v6289
        %v6298 = vadd.f32 %v6226, %v6290
        %v6299 = vadd.f32 %v6240, %v6291
        %v6300 = vadd.f32 %v6254, %v6292
        %v6301 = vadd.f32 %v6268, %v6293
        %v6302 = vmul.f32 %v6294, 0.7978846
        %v6303 = vmul.f32 %v6295, 0.7978846
        %v6304 = vmul.f32 %v6296, 0.7978846
        %v6305 = vmul.f32 %v6297, 0.7978846
        %v6306 = vmul.f32 %v6298, 0.7978846
        %v6307 = vmul.f32 %v6299, 0.7978846
        %v6308 = vmul.f32 %v6300, 0.7978846
        %v6309 = vmul.f32 %v6301, 0.7978846
        %v6310 = vtanh.pop %v6302
        %v6311 = vtanh.pop %v6303
        %v6312 = vtanh.pop %v6304
        %v6313 = vtanh.pop %v6305
        %v6314 = vtanh.pop %v6306
        %v6315 = vtanh.pop %v6307
        %v6316 = vtanh.pop %v6308
        %v6317 = vtanh.pop %v6309
        %v6318 = vadd.f32 %v6310, 1.0
        %v6319 = vadd.f32 %v6311, 1.0
        %v6320 = vadd.f32 %v6312, 1.0
        %v6321 = vadd.f32 %v6313, 1.0
        %v6322 = vadd.f32 %v6314, 1.0
        %v6323 = vadd.f32 %v6315, 1.0
        %v6324 = vadd.f32 %v6316, 1.0
        %v6325 = vadd.f32 %v6317, 1.0
        %v6326 = vmul.f32 %v6318, 0.5
        %v6327 = vmul.f32 %v6319, 0.5
        %v6328 = vmul.f32 %v6320, 0.5
        %v6329 = vmul.f32 %v6321, 0.5
        %v6330 = vmul.f32 %v6322, 0.5
        %v6331 = vmul.f32 %v6323, 0.5
        %v6332 = vmul.f32 %v6324, 0.5
        %v6333 = vmul.f32 %v6325, 0.5
        %v6334 = vmul.f32 %v6224, %v6326
        %v6335 = vmul.f32 %v6238, %v6327
        %v6336 = vmul.f32 %v6252, %v6328
        %v6337 = vmul.f32 %v6266, %v6329
        %v6338 = vmul.f32 %v6226, %v6330
        %v6339 = vmul.f32 %v6240, %v6331
        %v6340 = vmul.f32 %v6254, %v6332
        %v6341 = vmul.f32 %v6268, %v6333
        %v6342 = vld [vmem:[%s7 + $0x100] sm:$0xf]
        %v6343 = vld [vmem:[%s7 + $0x104] sm:$0xf]
        %v6344 = vld [vmem:[%s7 + $0x108] sm:$0xf]
        %v6345 = vld [vmem:[%s7 + $0x10c] sm:$0xf]
        %v6346 = vld [vmem:[%s7 + $0x110] sm:$0xf]
        %v6347 = vld [vmem:[%s7 + $0x114] sm:$0xf]
        %v6348 = vld [vmem:[%s7 + $0x118] sm:$0xf]
        %v6349 = vld [vmem:[%s7 + $0x11c] sm:$0xf]
        %v6350 = vld [vmem:[%s7 + $0x120] sm:$0xf]
        %v6351 = vld [vmem:[%s7 + $0x124] sm:$0xf]
        %v6352 = vld [vmem:[%s7 + $0x128] sm:$0xf]
        %v6353 = vld [vmem:[%s7 + $0x12c] sm:$0xf]
        %v6354 = vld [vmem:[%s7 + $0x130] sm:$0xf]
        %v6355 = vld [vmem:[%s7 + $0x134] sm:$0xf]
        %v6356 = vld [vmem:[%s7 + $0x138] sm:$0xf]
        %v6357 = vld [vmem:[%s7 + $0x13c] sm:$0xf]
        %v6358 = vld [vmem:[%s7 + $0x140] sm:$0xf]
        %v6359 = vld [vmem:[%s7 + $0x144] sm:$0xf]
        %v6360 = vld [vmem:[%s7 + $0x148] sm:$0xf]
        %v6361 = vld [vmem:[%s7 + $0x14c] sm:$0xf]
        %v6362 = vld [vmem:[%s7 + $0x150] sm:$0xf]
        %v6363 = vld [vmem:[%s7 + $0x154] sm:$0xf]
        %v6364 = vld [vmem:[%s7 + $0x158] sm:$0xf]
        %v6365 = vld [vmem:[%s7 + $0x15c] sm:$0xf]
        %v6366 = vld [vmem:[%s7 + $0x160] sm:$0xf]
        %v6367 = vld [vmem:[%s7 + $0x164] sm:$0xf]
        %v6368 = vld [vmem:[%s7 + $0x168] sm:$0xf]
        %v6369 = vld [vmem:[%s7 + $0x16c] sm:$0xf]
        %v6370 = vld [vmem:[%s7 + $0x170] sm:$0xf]
        %v6371 = vld [vmem:[%s7 + $0x174] sm:$0xf]
        %v6372 = vld [vmem:[%s7 + $0x178] sm:$0xf]
        %v6373 = vld [vmem:[%s7 + $0x17c] sm:$0xf]
        %v6374 = vld [vmem:[%s7 + $0x180] sm:$0xf]
        %v6375 = vld [vmem:[%s7 + $0x184] sm:$0xf]
        %v6376 = vld [vmem:[%s7 + $0x188] sm:$0xf]
        %v6377 = vld [vmem:[%s7 + $0x18c] sm:$0xf]
        %v6378 = vld [vmem:[%s7 + $0x190] sm:$0xf]
        %v6379 = vld [vmem:[%s7 + $0x194] sm:$0xf]
        %v6380 = vld [vmem:[%s7 + $0x198] sm:$0xf]
        %v6381 = vld [vmem:[%s7 + $0x19c] sm:$0xf]
        %v6382 = vld [vmem:[%s7 + $0x1a0] sm:$0xf]
        %v6383 = vld [vmem:[%s7 + $0x1a4] sm:$0xf]
        %v6384 = vld [vmem:[%s7 + $0x1a8] sm:$0xf]
        %v6385 = vld [vmem:[%s7 + $0x1ac] sm:$0xf]
        %v6386 = vld [vmem:[%s7 + $0x1b0] sm:$0xf]
        %v6387 = vld [vmem:[%s7 + $0x1b4] sm:$0xf]
        %v6388 = vld [vmem:[%s7 + $0x1b8] sm:$0xf]
        %v6389 = vld [vmem:[%s7 + $0x1bc] sm:$0xf]
        %v6390 = vld [vmem:[%s7 + $0x1c0] sm:$0xf]
        %v6391 = vld [vmem:[%s7 + $0x1c4] sm:$0xf]
        %v6392 = vld [vmem:[%s7 + $0x1c8] sm:$0xf]
        %v6393 = vld [vmem:[%s7 + $0x1cc] sm:$0xf]
        %v6394 = vld [vmem:[%s7 + $0x1d0] sm:$0xf]
        %v6395 = vld [vmem:[%s7 + $0x1d4] sm:$0xf]
        %v6396 = vld [vmem:[%s7 + $0x1d8] sm:$0xf]
        %v6397 = vld [vmem:[%s7 + $0x1dc] sm:$0xf]
        %v6398 = vld [vmem:[%s7 + $0x1e0] sm:$0xf]
        %v6399 = vld [vmem:[%s7 + $0x1e4] sm:$0xf]
        %v6400 = vld [vmem:[%s7 + $0x1e8] sm:$0xf]
        %v6401 = vld [vmem:[%s7 + $0x1ec] sm:$0xf]
        %v6402 = vld [vmem:[%s7 + $0x1f0] sm:$0xf]
        %v6403 = vld [vmem:[%s7 + $0x1f4] sm:$0xf]
        %v6404 = vld [vmem:[%s7 + $0x1f8] sm:$0xf]
        %v6405 = vld [vmem:[%s7 + $0x1fc] sm:$0xf]
        %v6406 = vpack.c.bf16 %v6338, %v6334
        %v6407 = vpack.c.bf16 %v6339, %v6335
        %v6408 = vpack.c.bf16 %v6340, %v6336
        %v6409 = vpack.c.bf16 %v6341, %v6337
        %v6410 = vld [vmem:[%s9 + $0x3f] sm:$0x1]
        %v6412 = vperm.slane %v6410, 0
        %v6478 = vunpack.c.l.b16 %v6342
        %v6479 = vunpack.c.l.b16 %v6343
        %v6480 = vunpack.c.l.b16 %v6344
        %v6481 = vunpack.c.l.b16 %v6345
        %v6482 = vunpack.c.l.b16 %v6346
        %v6483 = vunpack.c.l.b16 %v6347
        %v6484 = vunpack.c.l.b16 %v6348
        %v6485 = vunpack.c.l.b16 %v6349
        %v6486 = vunpack.c.l.b16 %v6350
        %v6487 = vunpack.c.l.b16 %v6351
        %v6488 = vunpack.c.l.b16 %v6352
        %v6489 = vunpack.c.l.b16 %v6353
        %v6490 = vunpack.c.l.b16 %v6354
        %v6491 = vunpack.c.l.b16 %v6355
        %v6492 = vunpack.c.l.b16 %v6356
        %v6493 = vunpack.c.l.b16 %v6357
        %v6494 = vunpack.c.l.b16 %v6358
        %v6495 = vunpack.c.l.b16 %v6359
        %v6496 = vunpack.c.l.b16 %v6360
        %v6497 = vunpack.c.l.b16 %v6361
        %v6498 = vunpack.c.l.b16 %v6362
        %v6499 = vunpack.c.l.b16 %v6363
        %v6500 = vunpack.c.l.b16 %v6364
        %v6501 = vunpack.c.l.b16 %v6365
        %v6502 = vunpack.c.l.b16 %v6366
        %v6503 = vunpack.c.l.b16 %v6367
        %v6504 = vunpack.c.l.b16 %v6368
        %v6505 = vunpack.c.l.b16 %v6369
        %v6506 = vunpack.c.l.b16 %v6370
        %v6507 = vunpack.c.l.b16 %v6371
        %v6508 = vunpack.c.l.b16 %v6372
        %v6509 = vunpack.c.l.b16 %v6373
        %v6510 = vunpack.c.l.b16 %v6374
        %v6511 = vunpack.c.l.b16 %v6375
        %v6512 = vunpack.c.l.b16 %v6376
        %v6513 = vunpack.c.l.b16 %v6377
        %v6514 = vunpack.c.l.b16 %v6378
        %v6515 = vunpack.c.l.b16 %v6379
        %v6516 = vunpack.c.l.b16 %v6380
        %v6517 = vunpack.c.l.b16 %v6381
        %v6518 = vunpack.c.l.b16 %v6382
        %v6519 = vunpack.c.l.b16 %v6383
        %v6520 = vunpack.c.l.b16 %v6384
        %v6521 = vunpack.c.l.b16 %v6385
        %v6522 = vunpack.c.l.b16 %v6386
        %v6523 = vunpack.c.l.b16 %v6387
        %v6524 = vunpack.c.l.b16 %v6388
        %v6525 = vunpack.c.l.b16 %v6389
        %v6526 = vunpack.c.l.b16 %v6390
        %v6527 = vunpack.c.l.b16 %v6391
        %v6528 = vunpack.c.l.b16 %v6392
        %v6529 = vunpack.c.l.b16 %v6393
        %v6530 = vunpack.c.l.b16 %v6394
        %v6531 = vunpack.c.l.b16 %v6395
        %v6532 = vunpack.c.l.b16 %v6396
        %v6533 = vunpack.c.l.b16 %v6397
        %v6534 = vunpack.c.l.b16 %v6398
        %v6535 = vunpack.c.l.b16 %v6399
        %v6536 = vunpack.c.l.b16 %v6400
        %v6537 = vunpack.c.l.b16 %v6401
        %v6538 = vunpack.c.l.b16 %v6402
        %v6539 = vunpack.c.l.b16 %v6403
        %v6540 = vunpack.c.l.b16 %v6404
        %v6541 = vunpack.c.l.b16 %v6405
        %v6542 = vpack.c.b16 %v6479, %v6478
        %v6543 = vpack.c.b16 %v6481, %v6480
        %v6544 = vpack.c.b16 %v6483, %v6482
        %v6545 = vpack.c.b16 %v6485, %v6484
        %v6546 = vpack.c.b16 %v6487, %v6486
        %v6547 = vpack.c.b16 %v6489, %v6488
        %v6548 = vpack.c.b16 %v6491, %v6490
        %v6549 = vpack.c.b16 %v6493, %v6492
        %v6550 = vpack.c.b16 %v6495, %v6494
        %v6551 = vpack.c.b16 %v6497, %v6496
        %v6552 = vpack.c.b16 %v6499, %v6498
        %v6553 = vpack.c.b16 %v6501, %v6500
        %v6554 = vpack.c.b16 %v6503, %v6502
        %v6555 = vpack.c.b16 %v6505, %v6504
        %v6556 = vpack.c.b16 %v6507, %v6506
        %v6557 = vpack.c.b16 %v6509, %v6508
        %v6558 = vpack.c.b16 %v6511, %v6510
        %v6559 = vpack.c.b16 %v6513, %v6512
        %v6560 = vpack.c.b16 %v6515, %v6514
        %v6561 = vpack.c.b16 %v6517, %v6516
        %v6562 = vpack.c.b16 %v6519, %v6518
        %v6563 = vpack.c.b16 %v6521, %v6520
        %v6564 = vpack.c.b16 %v6523, %v6522
        %v6565 = vpack.c.b16 %v6525, %v6524
        %v6566 = vpack.c.b16 %v6527, %v6526
        %v6567 = vpack.c.b16 %v6529, %v6528
        %v6568 = vpack.c.b16 %v6531, %v6530
        %v6569 = vpack.c.b16 %v6533, %v6532
        %v6570 = vpack.c.b16 %v6535, %v6534
        %v6571 = vpack.c.b16 %v6537, %v6536
        %v6572 = vpack.c.b16 %v6539, %v6538
        %v6573 = vpack.c.b16 %v6541, %v6540
        %6606 = vmatpush.bf16.msra.mxu0 %v6549
        %6607 = vmatpush.bf16.msra.mxu0 %v6548
        %6608 = vmatpush.bf16.msra.mxu0 %v6547
        %6609 = vmatpush.bf16.msra.mxu0 %v6546
        %6610 = vmatpush.bf16.msra.mxu0 %v6545
        %6611 = vmatpush.bf16.msra.mxu0 %v6544
        %6612 = vmatpush.bf16.msra.mxu0 %v6543
        %6613 = vmatpush.bf16.msra.mxu0 %v6542
        %6614 = vmatmul.bf16.gmra.mxu0 %v6406
        %v6615 = vpop.f32.mrf.mxu0
        %v6616 = vadd.f32 %v6412, %v6615
        %v6617 = vpop.f32.mrf.mxu0
        %v6618 = vadd.f32 %v6412, %v6617
        %6619 = vdwg.mxu0
        %6620 = vmatpush.bf16.msra.mxu0 %v6557
        %6621 = vmatpush.bf16.msra.mxu0 %v6556
        %6622 = vmatpush.bf16.msra.mxu0 %v6555
        %6623 = vmatpush.bf16.msra.mxu0 %v6554
        %6624 = vmatpush.bf16.msra.mxu0 %v6553
        %6625 = vmatpush.bf16.msra.mxu0 %v6552
        %6626 = vmatpush.bf16.msra.mxu0 %v6551
        %6627 = vmatpush.bf16.msra.mxu0 %v6550
        %6628 = vmatmul.bf16.gmra.mxu0 %v6407
        %v6629 = vpop.f32.mrf.mxu0
        %v6630 = vadd.f32 %v6616, %v6629
        %v6631 = vpop.f32.mrf.mxu0
        %v6632 = vadd.f32 %v6618, %v6631
        %6633 = vdwg.mxu0
        %6634 = vmatpush.bf16.msra.mxu0 %v6565
        %6635 = vmatpush.bf16.msra.mxu0 %v6564
        %6636 = vmatpush.bf16.msra.mxu0 %v6563
        %6637 = vmatpush.bf16.msra.mxu0 %v6562
        %6638 = vmatpush.bf16.msra.mxu0 %v6561
        %6639 = vmatpush.bf16.msra.mxu0 %v6560
        %6640 = vmatpush.bf16.msra.mxu0 %v6559
        %6641 = vmatpush.bf16.msra.mxu0 %v6558
        %6642 = vmatmul.bf16.gmra.mxu0 %v6408
        %v6643 = vpop.f32.mrf.mxu0
        %v6644 = vadd.f32 %v6630, %v6643
        %v6645 = vpop.f32.mrf.mxu0
        %v6646 = vadd.f32 %v6632, %v6645
        %6647 = vdwg.mxu0
        %6648 = vmatpush.bf16.msra.mxu0 %v6573
        %6649 = vmatpush.bf16.msra.mxu0 %v6572
        %6650 = vmatpush.bf16.msra.mxu0 %v6571
        %6651 = vmatpush.bf16.msra.mxu0 %v6570
        %6652 = vmatpush.bf16.msra.mxu0 %v6569
        %6653 = vmatpush.bf16.msra.mxu0 %v6568
        %6654 = vmatpush.bf16.msra.mxu0 %v6567
        %6655 = vmatpush.bf16.msra.mxu0 %v6566
        %6656 = vmatmul.bf16.gmra.mxu0 %v6409
        %v6657 = vpop.f32.mrf.mxu0
        %v6658 = vadd.f32 %v6644, %v6657
        %v6659 = vpop.f32.mrf.mxu0
        %v6660 = vadd.f32 %v6646, %v6659
        %6661 = vdwg.mxu0
        %v6662 = vadd.f32 %v5957, %v6658
        %v6663 = vadd.f32 %v5958, %v6660
        %v6664 = vld [vmem:[%s7 + $0x200] sm:$0xf]
        %v6665 = vpack.c.bf16 %v6663, %v6662
        %6666 = vmatpush.bf16.xpose.msra.mxu0 0
        %6667 = vmatpush.bf16.xpose.msra.mxu0 0
        %6668 = vmatpush.bf16.xpose.msra.mxu0 0
        %6669 = vmatpush.bf16.xpose.msra.mxu0 0
        %6670 = vmatpush.bf16.xpose.msra.mxu0 0
        %6671 = vmatpush.bf16.xpose.msra.mxu0 0
        %6672 = vmatpush.bf16.xpose.msra.mxu0 0
        %6673 = vmatpush.bf16.xpose.msra.mxu0 %v6665
        %6674 = vmatmul.bf16.gmra.mxu0 %v6664
        %v6675 = vpop.f32.mrf.mxu0
        %v6676 = vadd.f32 0.0, %v6675
        %v6677 = vpop.f32.mrf.mxu0
        %6678 = vdwg.mxu0
        %v6679 = vmul.f32 %v6676, 0.088388346
        %v6680 = vsel %vm1878, %v6679, -inf
        %6681 = vmax.xlane.f32.xlu0 %v6680
        %v6682 = vpop.xlane.xlu0 %6681
        %v6683 = vsub.f32 %v6679, %v6682
        %v6684 = vmul.f32 %v6683, 1.442695
        %v6685 = vpow.pop %v6684
        %v6686 = vsel %vm1878, %v6685, 0.0
        %6687 = vadd.xlane.f32.xlu0 %v6686
        %v6688 = vpop.xlane.xlu0 %6687
        %v6689 = vrcp.pop %v6688
        %v6690 = vmul.f32 %v6685, %v6689
        %v6692 = vsel %vm1878, %v6690, 0
        %6694 = vmatpush.msra.mxu0 0.0
        %6695 = vmatpush.msra.mxu0 0.0
        %6696 = vmatpush.msra.mxu0 0.0
        %6697 = vmatpush.msra.mxu0 0.0
        %6698 = vmatpush.msra.mxu0 0.0
        %6699 = vmatpush.msra.mxu0 0.0
        %6700 = vmatpush.msra.mxu0 0.0
        %6701 = vmatpush.msra.mxu0 0.0
        %6702 = vmatpush.msra.mxu0 0.0
        %6703 = vmatpush.msra.mxu0 0.0
        %6704 = vmatpush.msra.mxu0 0.0
        %6705 = vmatpush.msra.mxu0 0.0
        %6706 = vmatpush.msra.mxu0 0.0
        %6707 = vmatpush.msra.mxu0 0.0
        %6708 = vmatpush.msra.mxu0 %v6663
        %6709 = vmatpush.msra.mxu0 %v6662
        %6710 = vmatmul.f32.gmra.mxu0 %v6692
        %v6711 = vpop.f32.mrf.mxu0
        %v6712 = vadd.f32 0.0, %v6711
        %6713 = vdwg.mxu0
        %v6714 = vld [vmem:[#allocation6 + $0x40] sm:$0xf]
        %v6715 = vld [vmem:[#allocation6 + $0x84] sm:$0xf]
        %v6716 = vld [vmem:[#allocation6 + $0xc8] sm:$0xf]
        %v6717 = vld [vmem:[#allocation6 + $0x10c] sm:$0xf]
        %v6718 = vld [vmem:[#allocation6 + $0x150] sm:$0xf]
        %v6719 = vld [vmem:[#allocation6 + $0x194] sm:$0xf]
        %v6720 = vld [vmem:[#allocation6 + $0x1d8] sm:$0xf]
        %v6721 = vld [vmem:[#allocation6 + $0x21c] sm:$0xf]
        %v6722 = vld [vmem:[#allocation6 + $0x260] sm:$0xf]
        %v6723 = vld [vmem:[#allocation6 + $0x2a4] sm:$0xf]
        %v6724 = vld [vmem:[#allocation6 + $0x2e8] sm:$0xf]
        %v6725 = vld [vmem:[#allocation6 + $0x32c] sm:$0xf]
        %v6726 = vld [vmem:[#allocation6 + $0x370] sm:$0xf]
        %v6727 = vld [vmem:[#allocation6 + $0x3b4] sm:$0xf]
        %v6728 = vld [vmem:[#allocation6 + $0x3f8] sm:$0xf]
        %v6729 = vld [vmem:[#allocation6 + $0x43c] sm:$0xf]
        %v6730 = vpack.c.bf16 %v6712, %v6712
        %v6731 = vld [vmem:[%s9 + $0x40] sm:$0x1]
        %v6733 = vperm.slane %v6731, 0
        %v6751 = vunpack.c.l.b16 %v6714
        %v6752 = vunpack.c.l.b16 %v6715
        %v6753 = vunpack.c.l.b16 %v6716
        %v6754 = vunpack.c.l.b16 %v6717
        %v6755 = vunpack.c.l.b16 %v6718
        %v6756 = vunpack.c.l.b16 %v6719
        %v6757 = vunpack.c.l.b16 %v6720
        %v6758 = vunpack.c.l.b16 %v6721
        %v6759 = vunpack.c.l.b16 %v6722
        %v6760 = vunpack.c.l.b16 %v6723
        %v6761 = vunpack.c.l.b16 %v6724
        %v6762 = vunpack.c.l.b16 %v6725
        %v6763 = vunpack.c.l.b16 %v6726
        %v6764 = vunpack.c.l.b16 %v6727
        %v6765 = vunpack.c.l.b16 %v6728
        %v6766 = vunpack.c.l.b16 %v6729
        %v6767 = vpack.c.b16 %v6752, %v6751
        %v6768 = vpack.c.b16 %v6754, %v6753
        %v6769 = vpack.c.b16 %v6756, %v6755
        %v6770 = vpack.c.b16 %v6758, %v6757
        %v6771 = vpack.c.b16 %v6760, %v6759
        %v6772 = vpack.c.b16 %v6762, %v6761
        %v6773 = vpack.c.b16 %v6764, %v6763
        %v6774 = vpack.c.b16 %v6766, %v6765
        %6783 = vmatpush.bf16.msra.mxu0 %v6774
        %6784 = vmatpush.bf16.msra.mxu0 %v6773
        %6785 = vmatpush.bf16.msra.mxu0 %v6772
        %6786 = vmatpush.bf16.msra.mxu0 %v6771
        %6787 = vmatpush.bf16.msra.mxu0 %v6770
        %6788 = vmatpush.bf16.msra.mxu0 %v6769
        %6789 = vmatpush.bf16.msra.mxu0 %v6768
        %6790 = vmatpush.bf16.msra.mxu0 %v6767
        %6791 = vmatmul.bf16.gmra.mxu0 %v6730
        %v6792 = vpop.f32.mrf.mxu0
        %v6793 = vadd.f32 %v6733, %v6792
        %v6794 = vpop.f32.mrf.mxu0
        %6795 = vdwg.mxu0
        %v6796 = vld [vmem:[%s9 + $0x41] sm:$0x1]
        %v6797 = vld [vmem:[%s9 + $0x42] sm:$0x1]
        %v6798 = vsel %vm1753, %v6793, 0.0
        %6799 = vadd.xlane.f32.xlu0 %v6798
        %v6800 = vpop.xlane.xlu0 %6799
        %v6801 = vmul.f32 %v6800, %v1763
        %v6802 = vsub.f32 %v6793, %v6801
        %v6803 = vmul.f32 %v6802, %v6802
        %v6804 = vsel %vm1753, %v6803, 0.0
        %6805 = vadd.xlane.f32.xlu0 %v6804
        %v6806 = vpop.xlane.xlu0 %6805
        %v6807 = vmul.f32 %v6806, %v1763
        %v6808 = vadd.f32 %v6807, 1e-05
        %v6809 = vrsqrt.pop %v6808
        %v6810 = vmul.f32 %v6809, %v6808
        %v6811 = vmul.f32 %v6810, %v6809
        %v6812 = vmul.f32 0.5, %v6811
        %v6813 = vsub.f32 1.5, %v6812
        %v6814 = vmul.f32 %v6809, %v6813
        %vm6815 = vweird.f32 %v6808
        %vm6816 = vweird.f32 %v6809
        %vm6817 = vmor %vm6815, %vm6816
        %v6818 = vsel %vm6817, %v6809, %v6814
        %v6819 = vmul.f32 %v6802, %v6818
        %v6821 = vperm.slane %v6796, 0
        %v6823 = vmul.f32 %v6819, %v6821
        %v6825 = vperm.slane %v6797, 0
        %v6827 = vadd.f32 %v6823, %v6825
        %v6828 = vld [vmem:[#allocation8] sm:$0xff]
        %v6829 = vld [vmem:[#allocation8 + $0x2c] sm:$0xff]
        %v6830 = vld [vmem:[#allocation8 + $0x58] sm:$0xff]
        %v6831 = vld [vmem:[#allocation8 + $0x84] sm:$0xff]
        %v6832 = vld [vmem:[#allocation8 + $0xb0] sm:$0xff]
        %v6833 = vld [vmem:[#allocation8 + $0xdc] sm:$0xff]
        %v6834 = vld [vmem:[#allocation8 + $0x108] sm:$0xff]
        %v6835 = vld [vmem:[#allocation8 + $0x134] sm:$0xff]
        %v6836 = vpack.c.bf16 %v6827, %v6827
        %v6837 = vld [vmem:[%s9 + $0x43] sm:$0x3]
        %v6839 = vperm.slane %v6837, 0
        %v6840 = vperm.slane %v6837, 1
        %v6851 = vunpack.c.l.b16 %v6828
        %v6852 = vunpack.c.h.b16 %v6828
        %v6853 = vunpack.c.l.b16 %v6829
        %v6854 = vunpack.c.h.b16 %v6829
        %v6855 = vunpack.c.l.b16 %v6830
        %v6856 = vunpack.c.h.b16 %v6830
        %v6857 = vunpack.c.l.b16 %v6831
        %v6858 = vunpack.c.h.b16 %v6831
        %v6859 = vunpack.c.l.b16 %v6832
        %v6860 = vunpack.c.h.b16 %v6832
        %v6861 = vunpack.c.l.b16 %v6833
        %v6862 = vunpack.c.h.b16 %v6833
        %v6863 = vunpack.c.l.b16 %v6834
        %v6864 = vunpack.c.h.b16 %v6834
        %v6865 = vunpack.c.l.b16 %v6835
        %v6866 = vunpack.c.h.b16 %v6835
        %v6867 = vpack.c.b16 %v6853, %v6851
        %v6868 = vpack.c.b16 %v6854, %v6852
        %v6869 = vpack.c.b16 %v6857, %v6855
        %v6870 = vpack.c.b16 %v6858, %v6856
        %v6871 = vpack.c.b16 %v6861, %v6859
        %v6872 = vpack.c.b16 %v6862, %v6860
        %v6873 = vpack.c.b16 %v6865, %v6863
        %v6874 = vpack.c.b16 %v6866, %v6864
        %v6884 = vsel %vm1753, %v6836, 0
        %6886 = vmatpush.bf16.msra.mxu0 0
        %6887 = vmatpush.bf16.msra.mxu0 0
        %6888 = vmatpush.bf16.msra.mxu0 0
        %6889 = vmatpush.bf16.msra.mxu0 0
        %6890 = vmatpush.bf16.msra.mxu0 %v6873
        %6891 = vmatpush.bf16.msra.mxu0 %v6871
        %6892 = vmatpush.bf16.msra.mxu0 %v6869
        %6893 = vmatpush.bf16.msra.mxu0 %v6867
        %6894 = vmatmul.bf16.gmra.mxu0 %v6884
        %v6895 = vpop.f32.mrf.mxu0
        %v6896 = vadd.f32 %v6839, %v6895
        %v6897 = vpop.f32.mrf.mxu0
        %6898 = vdwg.mxu0
        %6899 = vmatpush.bf16.msra.mxu0 0
        %6900 = vmatpush.bf16.msra.mxu0 0
        %6901 = vmatpush.bf16.msra.mxu0 0
        %6902 = vmatpush.bf16.msra.mxu0 0
        %6903 = vmatpush.bf16.msra.mxu0 %v6874
        %6904 = vmatpush.bf16.msra.mxu0 %v6872
        %6905 = vmatpush.bf16.msra.mxu0 %v6870
        %6906 = vmatpush.bf16.msra.mxu0 %v6868
        %6907 = vmatmul.bf16.gmra.mxu0 %v6884
        %v6908 = vpop.f32.mrf.mxu0
        %v6909 = vadd.f32 %v6840, %v6908
        %v6910 = vpop.f32.mrf.mxu0
        %6911 = vdwg.mxu0
        %6913 = vrot.lane.b32.xlu0 %v6896, 64
        %v6914 = vpop.permute.xlu0 %6913
        %v6915 = vsel %vm1878, %v6896, 0
        %v6917 = vsel %vm1878, %v6914, 0
        %6919 = vmatpush.xpose.msra.mxu0 0.0
        %6920 = vmatpush.xpose.msra.mxu0 0.0
        %6921 = vmatpush.xpose.msra.mxu0 0.0
        %6922 = vmatpush.xpose.msra.mxu0 0.0
        %6923 = vmatpush.xpose.msra.mxu0 0.0
        %6924 = vmatpush.xpose.msra.mxu0 0.0
        %6925 = vmatpush.xpose.msra.mxu0 0.0
        %6926 = vmatpush.xpose.msra.mxu0 0.0
        %6927 = vmatpush.xpose.msra.mxu0 0.0
        %6928 = vmatpush.xpose.msra.mxu0 0.0
        %6929 = vmatpush.xpose.msra.mxu0 0.0
        %6930 = vmatpush.xpose.msra.mxu0 0.0
        %6931 = vmatpush.xpose.msra.mxu0 0.0
        %6932 = vmatpush.xpose.msra.mxu0 0.0
        %6933 = vmatpush.xpose.msra.mxu0 0.0
        %6934 = vmatpush.xpose.msra.mxu0 %v6917
        %6935 = vmatmul.f32.gmra.mxu0 %v6915
        %v6936 = vpop.f32.mrf.mxu0
        %v6937 = vadd.f32 0.0, %v6936
        %6938 = vdwg.mxu0
        %v6939 = vmul.f32 %v6937, 0.25
        %v6940 = vsel %vm613, %v6939, -inf
        %6941 = vmax.xlane.f32.xlu0 %v6940
        %v6942 = vpop.xlane.xlu0 %6941
        %v6943 = vsub.f32 %v6939, %v6942
        %v6944 = vmul.f32 %v6943, 1.442695
        %v6945 = vpow.pop %v6944
        %v6946 = vsel %vm613, %v6945, 0.0
        %6947 = vadd.xlane.f32.xlu0 %v6946
        %v6948 = vpop.xlane.xlu0 %6947
        %v6949 = vrcp.pop %v6948
        %v6950 = vmul.f32 %v6945, %v6949
        %v6952 = vsel %vm613, %v6950, 0
        %6954 = vmatpush.msra.mxu0 0.0
        %6955 = vmatpush.msra.mxu0 0.0
        %6956 = vmatpush.msra.mxu0 0.0
        %6957 = vmatpush.msra.mxu0 0.0
        %6958 = vmatpush.msra.mxu0 0.0
        %6959 = vmatpush.msra.mxu0 0.0
        %6960 = vmatpush.msra.mxu0 0.0
        %6961 = vmatpush.msra.mxu0 0.0
        %6962 = vmatpush.msra.mxu0 0.0
        %6963 = vmatpush.msra.mxu0 0.0
        %6964 = vmatpush.msra.mxu0 0.0
        %6965 = vmatpush.msra.mxu0 0.0
        %6966 = vmatpush.msra.mxu0 0.0
        %6967 = vmatpush.msra.mxu0 0.0
        %6968 = vmatpush.msra.mxu0 0.0
        %6969 = vmatpush.msra.mxu0 %v6909
        %6970 = vmatmul.f32.gmra.mxu0 %v6952
        %v6971 = vpop.f32.mrf.mxu0
        %v6972 = vadd.f32 0.0, %v6971
        %6973 = vdwg.mxu0
        %6974 = vst.msk [vmem:[#allocation2] sm:$0xff] %vm1878, %v6972
        %6975 = vrot.lane.b32.xlu0 %v6896, 112
        %v6976 = vpop.permute.xlu0 %6975
        %6977 = vrot.lane.b32.xlu0 %v6896, 48
        %v6978 = vpop.permute.xlu0 %6977
        %v6979 = vsel %vm1878, %v6976, 0
        %v6981 = vsel %vm1878, %v6978, 0
        %6983 = vmatpush.xpose.msra.mxu0 0.0
        %6984 = vmatpush.xpose.msra.mxu0 0.0
        %6985 = vmatpush.xpose.msra.mxu0 0.0
        %6986 = vmatpush.xpose.msra.mxu0 0.0
        %6987 = vmatpush.xpose.msra.mxu0 0.0
        %6988 = vmatpush.xpose.msra.mxu0 0.0
        %6989 = vmatpush.xpose.msra.mxu0 0.0
        %6990 = vmatpush.xpose.msra.mxu0 0.0
        %6991 = vmatpush.xpose.msra.mxu0 0.0
        %6992 = vmatpush.xpose.msra.mxu0 0.0
        %6993 = vmatpush.xpose.msra.mxu0 0.0
        %6994 = vmatpush.xpose.msra.mxu0 0.0
        %6995 = vmatpush.xpose.msra.mxu0 0.0
        %6996 = vmatpush.xpose.msra.mxu0 0.0
        %6997 = vmatpush.xpose.msra.mxu0 0.0
        %6998 = vmatpush.xpose.msra.mxu0 %v6981
        %6999 = vmatmul.f32.gmra.mxu0 %v6979
        %v7000 = vpop.f32.mrf.mxu0
        %v7001 = vadd.f32 0.0, %v7000
        %7002 = vdwg.mxu0
        %v7003 = vmul.f32 %v7001, 0.25
        %v7004 = vsel %vm613, %v7003, -inf
        %7005 = vmax.xlane.f32.xlu0 %v7004
        %v7006 = vpop.xlane.xlu0 %7005
        %v7007 = vsub.f32 %v7003, %v7006
        %v7008 = vmul.f32 %v7007, 1.442695
        %v7009 = vpow.pop %v7008
        %v7010 = vsel %vm613, %v7009, 0.0
        %7011 = vadd.xlane.f32.xlu0 %v7010
        %v7012 = vpop.xlane.xlu0 %7011
        %v7013 = vrcp.pop %v7012
        %v7014 = vmul.f32 %v7009, %v7013
        %7016 = vrot.lane.b32.xlu0 %v6909, 112
        %v7017 = vpop.permute.xlu0 %7016
        %v7020 = vsel %vm613, %v7014, 0
        %7022 = vmatpush.msra.mxu0 0.0
        %7023 = vmatpush.msra.mxu0 0.0
        %7024 = vmatpush.msra.mxu0 0.0
        %7025 = vmatpush.msra.mxu0 0.0
        %7026 = vmatpush.msra.mxu0 0.0
        %7027 = vmatpush.msra.mxu0 0.0
        %7028 = vmatpush.msra.mxu0 0.0
        %7029 = vmatpush.msra.mxu0 0.0
        %7030 = vmatpush.msra.mxu0 0.0
        %7031 = vmatpush.msra.mxu0 0.0
        %7032 = vmatpush.msra.mxu0 0.0
        %7033 = vmatpush.msra.mxu0 0.0
        %7034 = vmatpush.msra.mxu0 0.0
        %7035 = vmatpush.msra.mxu0 0.0
        %7036 = vmatpush.msra.mxu0 0.0
        %7037 = vmatpush.msra.mxu0 %v7017
        %7038 = vmatmul.f32.gmra.mxu0 %v7020
        %v7039 = vpop.f32.mrf.mxu0
        %v7040 = vadd.f32 0.0, %v7039
        %7041 = vdwg.mxu0
        %7043 = vrot.lane.b32.xlu0 %v7040, 16
        %v7044 = vpop.permute.xlu0 %7043
        %7046 = vst.msk [vmem:[#allocation2] sm:$0xff] %vm2010, %v7044
        %7047 = vrot.lane.b32.xlu0 %v6896, 96
        %v7048 = vpop.permute.xlu0 %7047
        %7049 = vrot.lane.b32.xlu0 %v6896, 32
        %v7050 = vpop.permute.xlu0 %7049
        %v7051 = vsel %vm1878, %v7048, 0
        %v7053 = vsel %vm1878, %v7050, 0
        %7055 = vmatpush.xpose.msra.mxu0 0.0
        %7056 = vmatpush.xpose.msra.mxu0 0.0
        %7057 = vmatpush.xpose.msra.mxu0 0.0
        %7058 = vmatpush.xpose.msra.mxu0 0.0
        %7059 = vmatpush.xpose.msra.mxu0 0.0
        %7060 = vmatpush.xpose.msra.mxu0 0.0
        %7061 = vmatpush.xpose.msra.mxu0 0.0
        %7062 = vmatpush.xpose.msra.mxu0 0.0
        %7063 = vmatpush.xpose.msra.mxu0 0.0
        %7064 = vmatpush.xpose.msra.mxu0 0.0
        %7065 = vmatpush.xpose.msra.mxu0 0.0
        %7066 = vmatpush.xpose.msra.mxu0 0.0
        %7067 = vmatpush.xpose.msra.mxu0 0.0
        %7068 = vmatpush.xpose.msra.mxu0 0.0
        %7069 = vmatpush.xpose.msra.mxu0 0.0
        %7070 = vmatpush.xpose.msra.mxu0 %v7053
        %7071 = vmatmul.f32.gmra.mxu0 %v7051
        %v7072 = vpop.f32.mrf.mxu0
        %v7073 = vadd.f32 0.0, %v7072
        %7074 = vdwg.mxu0
        %v7075 = vmul.f32 %v7073, 0.25
        %v7076 = vsel %vm613, %v7075, -inf
        %7077 = vmax.xlane.f32.xlu0 %v7076
        %v7078 = vpop.xlane.xlu0 %7077
        %v7079 = vsub.f32 %v7075, %v7078
        %v7080 = vmul.f32 %v7079, 1.442695
        %v7081 = vpow.pop %v7080
        %v7082 = vsel %vm613, %v7081, 0.0
        %7083 = vadd.xlane.f32.xlu0 %v7082
        %v7084 = vpop.xlane.xlu0 %7083
        %v7085 = vrcp.pop %v7084
        %v7086 = vmul.f32 %v7081, %v7085
        %7087 = vrot.lane.b32.xlu0 %v6909, 96
        %v7088 = vpop.permute.xlu0 %7087
        %v7091 = vsel %vm613, %v7086, 0
        %7093 = vmatpush.msra.mxu0 0.0
        %7094 = vmatpush.msra.mxu0 0.0
        %7095 = vmatpush.msra.mxu0 0.0
        %7096 = vmatpush.msra.mxu0 0.0
        %7097 = vmatpush.msra.mxu0 0.0
        %7098 = vmatpush.msra.mxu0 0.0
        %7099 = vmatpush.msra.mxu0 0.0
        %7100 = vmatpush.msra.mxu0 0.0
        %7101 = vmatpush.msra.mxu0 0.0
        %7102 = vmatpush.msra.mxu0 0.0
        %7103 = vmatpush.msra.mxu0 0.0
        %7104 = vmatpush.msra.mxu0 0.0
        %7105 = vmatpush.msra.mxu0 0.0
        %7106 = vmatpush.msra.mxu0 0.0
        %7107 = vmatpush.msra.mxu0 0.0
        %7108 = vmatpush.msra.mxu0 %v7088
        %7109 = vmatmul.f32.gmra.mxu0 %v7091
        %v7110 = vpop.f32.mrf.mxu0
        %v7111 = vadd.f32 0.0, %v7110
        %7112 = vdwg.mxu0
        %7114 = vrot.lane.b32.xlu0 %v7111, 32
        %v7115 = vpop.permute.xlu0 %7114
        %7117 = vst.msk [vmem:[#allocation2] sm:$0xff] %vm2082, %v7115
        %7118 = vrot.lane.b32.xlu0 %v6896, 80
        %v7119 = vpop.permute.xlu0 %7118
        %7120 = vrot.lane.b32.xlu0 %v6896, 16
        %v7121 = vpop.permute.xlu0 %7120
        %v7122 = vsel %vm1878, %v7119, 0
        %v7124 = vsel %vm1878, %v7121, 0
        %7126 = vmatpush.xpose.msra.mxu0 0.0
        %7127 = vmatpush.xpose.msra.mxu0 0.0
        %7128 = vmatpush.xpose.msra.mxu0 0.0
        %7129 = vmatpush.xpose.msra.mxu0 0.0
        %7130 = vmatpush.xpose.msra.mxu0 0.0
        %7131 = vmatpush.xpose.msra.mxu0 0.0
        %7132 = vmatpush.xpose.msra.mxu0 0.0
        %7133 = vmatpush.xpose.msra.mxu0 0.0
        %7134 = vmatpush.xpose.msra.mxu0 0.0
        %7135 = vmatpush.xpose.msra.mxu0 0.0
        %7136 = vmatpush.xpose.msra.mxu0 0.0
        %7137 = vmatpush.xpose.msra.mxu0 0.0
        %7138 = vmatpush.xpose.msra.mxu0 0.0
        %7139 = vmatpush.xpose.msra.mxu0 0.0
        %7140 = vmatpush.xpose.msra.mxu0 0.0
        %7141 = vmatpush.xpose.msra.mxu0 %v7124
        %7142 = vmatmul.f32.gmra.mxu0 %v7122
        %v7143 = vpop.f32.mrf.mxu0
        %v7144 = vadd.f32 0.0, %v7143
        %7145 = vdwg.mxu0
        %v7146 = vmul.f32 %v7144, 0.25
        %v7147 = vsel %vm613, %v7146, -inf
        %7148 = vmax.xlane.f32.xlu0 %v7147
        %v7149 = vpop.xlane.xlu0 %7148
        %v7150 = vsub.f32 %v7146, %v7149
        %v7151 = vmul.f32 %v7150, 1.442695
        %v7152 = vpow.pop %v7151
        %v7153 = vsel %vm613, %v7152, 0.0
        %7154 = vadd.xlane.f32.xlu0 %v7153
        %v7155 = vpop.xlane.xlu0 %7154
        %v7156 = vrcp.pop %v7155
        %v7157 = vmul.f32 %v7152, %v7156
        %7158 = vrot.lane.b32.xlu0 %v6909, 80
        %v7159 = vpop.permute.xlu0 %7158
        %v7162 = vsel %vm613, %v7157, 0
        %7164 = vmatpush.msra.mxu0 0.0
        %7165 = vmatpush.msra.mxu0 0.0
        %7166 = vmatpush.msra.mxu0 0.0
        %7167 = vmatpush.msra.mxu0 0.0
        %7168 = vmatpush.msra.mxu0 0.0
        %7169 = vmatpush.msra.mxu0 0.0
        %7170 = vmatpush.msra.mxu0 0.0
        %7171 = vmatpush.msra.mxu0 0.0
        %7172 = vmatpush.msra.mxu0 0.0
        %7173 = vmatpush.msra.mxu0 0.0
        %7174 = vmatpush.msra.mxu0 0.0
        %7175 = vmatpush.msra.mxu0 0.0
        %7176 = vmatpush.msra.mxu0 0.0
        %7177 = vmatpush.msra.mxu0 0.0
        %7178 = vmatpush.msra.mxu0 0.0
        %7179 = vmatpush.msra.mxu0 %v7159
        %7180 = vmatmul.f32.gmra.mxu0 %v7162
        %v7181 = vpop.f32.mrf.mxu0
        %v7182 = vadd.f32 0.0, %v7181
        %7183 = vdwg.mxu0
        %7185 = vrot.lane.b32.xlu0 %v7182, 48
        %v7186 = vpop.permute.xlu0 %7185
        %7188 = vst.msk [vmem:[#allocation2] sm:$0xff] %vm2154, %v7186
        %v7189 = vld [vmem:[#allocation2] sm:$0xff]
        %v7190 = vld [vmem:[#allocation8 + $0x8] sm:$0xf]
        %v7191 = vld [vmem:[#allocation8 + $0x34] sm:$0xf]
        %v7192 = vld [vmem:[#allocation8 + $0x60] sm:$0xf]
        %v7193 = vld [vmem:[#allocation8 + $0x8c] sm:$0xf]
        %v7194 = vld [vmem:[#allocation8 + $0xb8] sm:$0xf]
        %v7195 = vld [vmem:[#allocation8 + $0xe4] sm:$0xf]
        %v7196 = vld [vmem:[#allocation8 + $0x110] sm:$0xf]
        %v7197 = vld [vmem:[#allocation8 + $0x13c] sm:$0xf]
        %v7198 = vpack.c.bf16 %v7189, %v7189
        %v7207 = vunpack.c.l.b16 %v7190
        %v7208 = vunpack.c.l.b16 %v7191
        %v7209 = vunpack.c.l.b16 %v7192
        %v7210 = vunpack.c.l.b16 %v7193
        %v7211 = vunpack.c.l.b16 %v7194
        %v7212 = vunpack.c.l.b16 %v7195
        %v7213 = vunpack.c.l.b16 %v7196
        %v7214 = vunpack.c.l.b16 %v7197
        %v7215 = vpack.c.b16 %v7208, %v7207
        %v7216 = vpack.c.b16 %v7210, %v7209
        %v7217 = vpack.c.b16 %v7212, %v7211
        %v7218 = vpack.c.b16 %v7214, %v7213
        %v7224 = vsel %vm1753, %v7198, 0
        %7226 = vmatpush.bf16.msra.mxu0 0
        %7227 = vmatpush.bf16.msra.mxu0 0
        %7228 = vmatpush.bf16.msra.mxu0 0
        %7229 = vmatpush.bf16.msra.mxu0 0
        %7230 = vmatpush.bf16.msra.mxu0 %v7218
        %7231 = vmatpush.bf16.msra.mxu0 %v7217
        %7232 = vmatpush.bf16.msra.mxu0 %v7216
        %7233 = vmatpush.bf16.msra.mxu0 %v7215
        %7234 = vmatmul.bf16.gmra.mxu0 %v7224
        %v7235 = vpop.f32.mrf.mxu0
        %v7236 = vadd.f32 0.0, %v7235
        %v7237 = vpop.f32.mrf.mxu0
        %7238 = vdwg.mxu0
        %v7239 = vadd.f32 %v6793, %v7236
        %v7240 = vld [vmem:[%s9 + $0x45] sm:$0x1]
        %v7242 = vperm.slane %v7240, 0
        %v7244 = vadd.f32 %v7239, %v7242
        %v7245 = vld [vmem:[%s9 + $0x46] sm:$0x1]
        %v7246 = vld [vmem:[%s9 + $0x47] sm:$0x1]
        %v7247 = vsel %vm1753, %v7244, 0.0
        %7248 = vadd.xlane.f32.xlu0 %v7247
        %v7249 = vpop.xlane.xlu0 %7248
        %v7250 = vmul.f32 %v7249, %v1763
        %v7251 = vsub.f32 %v7244, %v7250
        %v7252 = vmul.f32 %v7251, %v7251
        %v7253 = vsel %vm1753, %v7252, 0.0
        %7254 = vadd.xlane.f32.xlu0 %v7253
        %v7255 = vpop.xlane.xlu0 %7254
        %v7256 = vmul.f32 %v7255, %v1763
        %v7257 = vadd.f32 %v7256, 1e-05
        %v7258 = vrsqrt.pop %v7257
        %v7259 = vmul.f32 %v7258, %v7257
        %v7260 = vmul.f32 %v7259, %v7258
        %v7261 = vmul.f32 0.5, %v7260
        %v7262 = vsub.f32 1.5, %v7261
        %v7263 = vmul.f32 %v7258, %v7262
        %vm7264 = vweird.f32 %v7257
        %vm7265 = vweird.f32 %v7258
        %vm7266 = vmor %vm7264, %vm7265
        %v7267 = vsel %vm7266, %v7258, %v7263
        %v7268 = vmul.f32 %v7251, %v7267
        %v7270 = vperm.slane %v7245, 0
        %v7272 = vmul.f32 %v7268, %v7270
        %v7274 = vperm.slane %v7246, 0
        %v7276 = vadd.f32 %v7272, %v7274
        %v7277 = vld [vmem:[#allocation8 + $0xc] sm:$0xff]
        %v7278 = vld [vmem:[#allocation8 + $0x38] sm:$0xff]
        %v7279 = vld [vmem:[#allocation8 + $0x64] sm:$0xff]
        %v7280 = vld [vmem:[#allocation8 + $0x90] sm:$0xff]
        %v7281 = vld [vmem:[#allocation8 + $0xbc] sm:$0xff]
        %v7282 = vld [vmem:[#allocation8 + $0xe8] sm:$0xff]
        %v7283 = vld [vmem:[#allocation8 + $0x114] sm:$0xff]
        %v7284 = vld [vmem:[#allocation8 + $0x140] sm:$0xff]
        %v7285 = vpack.c.bf16 %v7276, %v7276
        %v7286 = vld [vmem:[%s9 + $0x48] sm:$0x3]
        %v7288 = vperm.slane %v7286, 0
        %v7289 = vperm.slane %v7286, 1
        %v7300 = vunpack.c.l.b16 %v7277
        %v7301 = vunpack.c.h.b16 %v7277
        %v7302 = vunpack.c.l.b16 %v7278
        %v7303 = vunpack.c.h.b16 %v7278
        %v7304 = vunpack.c.l.b16 %v7279
        %v7305 = vunpack.c.h.b16 %v7279
        %v7306 = vunpack.c.l.b16 %v7280
        %v7307 = vunpack.c.h.b16 %v7280
        %v7308 = vunpack.c.l.b16 %v7281
        %v7309 = vunpack.c.h.b16 %v7281
        %v7310 = vunpack.c.l.b16 %v7282
        %v7311 = vunpack.c.h.b16 %v7282
        %v7312 = vunpack.c.l.b16 %v7283
        %v7313 = vunpack.c.h.b16 %v7283
        %v7314 = vunpack.c.l.b16 %v7284
        %v7315 = vunpack.c.h.b16 %v7284
        %v7316 = vpack.c.b16 %v7302, %v7300
        %v7317 = vpack.c.b16 %v7303, %v7301
        %v7318 = vpack.c.b16 %v7306, %v7304
        %v7319 = vpack.c.b16 %v7307, %v7305
        %v7320 = vpack.c.b16 %v7310, %v7308
        %v7321 = vpack.c.b16 %v7311, %v7309
        %v7322 = vpack.c.b16 %v7314, %v7312
        %v7323 = vpack.c.b16 %v7315, %v7313
        %v7333 = vsel %vm1753, %v7285, 0
        %7335 = vmatpush.bf16.msra.mxu0 0
        %7336 = vmatpush.bf16.msra.mxu0 0
        %7337 = vmatpush.bf16.msra.mxu0 0
        %7338 = vmatpush.bf16.msra.mxu0 0
        %7339 = vmatpush.bf16.msra.mxu0 %v7322
        %7340 = vmatpush.bf16.msra.mxu0 %v7320
        %7341 = vmatpush.bf16.msra.mxu0 %v7318
        %7342 = vmatpush.bf16.msra.mxu0 %v7316
        %7343 = vmatmul.bf16.gmra.mxu0 %v7333
        %v7344 = vpop.f32.mrf.mxu0
        %v7345 = vadd.f32 %v7288, %v7344
        %v7346 = vpop.f32.mrf.mxu0
        %7347 = vdwg.mxu0
        %7348 = vmatpush.bf16.msra.mxu0 0
        %7349 = vmatpush.bf16.msra.mxu0 0
        %7350 = vmatpush.bf16.msra.mxu0 0
        %7351 = vmatpush.bf16.msra.mxu0 0
        %7352 = vmatpush.bf16.msra.mxu0 %v7323
        %7353 = vmatpush.bf16.msra.mxu0 %v7321
        %7354 = vmatpush.bf16.msra.mxu0 %v7319
        %7355 = vmatpush.bf16.msra.mxu0 %v7317
        %7356 = vmatmul.bf16.gmra.mxu0 %v7333
        %v7357 = vpop.f32.mrf.mxu0
        %v7358 = vadd.f32 %v7289, %v7357
        %v7359 = vpop.f32.mrf.mxu0
        %7360 = vdwg.mxu0
        %v7361 = vmul.f32 %v7345, %v7345
        %v7362 = vmul.f32 %v7358, %v7358
        %v7363 = vmul.f32 %v7345, %v7361
        %v7364 = vmul.f32 %v7358, %v7362
        %v7365 = vmul.f32 %v7363, 0.044715
        %v7366 = vmul.f32 %v7364, 0.044715
        %v7367 = vadd.f32 %v7345, %v7365
        %v7368 = vadd.f32 %v7358, %v7366
        %v7369 = vmul.f32 %v7367, 0.7978846
        %v7370 = vmul.f32 %v7368, 0.7978846
        %v7371 = vtanh.pop %v7369
        %v7372 = vtanh.pop %v7370
        %v7373 = vadd.f32 %v7371, 1.0
        %v7374 = vadd.f32 %v7372, 1.0
        %v7375 = vmul.f32 %v7373, 0.5
        %v7376 = vmul.f32 %v7374, 0.5
        %v7377 = vmul.f32 %v7345, %v7375
        %v7378 = vmul.f32 %v7358, %v7376
        %v7379 = vld [vmem:[%s8] sm:$0xf]
        %v7380 = vld [vmem:[%s8 + $0x4] sm:$0xf]
        %v7381 = vld [vmem:[%s8 + $0x8] sm:$0xf]
        %v7382 = vld [vmem:[%s8 + $0xc] sm:$0xf]
        %v7383 = vld [vmem:[%s8 + $0x10] sm:$0xf]
        %v7384 = vld [vmem:[%s8 + $0x14] sm:$0xf]
        %v7385 = vld [vmem:[%s8 + $0x18] sm:$0xf]
        %v7386 = vld [vmem:[%s8 + $0x1c] sm:$0xf]
        %v7387 = vld [vmem:[%s8 + $0x20] sm:$0xf]
        %v7388 = vld [vmem:[%s8 + $0x24] sm:$0xf]
        %v7389 = vld [vmem:[%s8 + $0x28] sm:$0xf]
        %v7390 = vld [vmem:[%s8 + $0x2c] sm:$0xf]
        %v7391 = vld [vmem:[%s8 + $0x30] sm:$0xf]
        %v7392 = vld [vmem:[%s8 + $0x34] sm:$0xf]
        %v7393 = vld [vmem:[%s8 + $0x38] sm:$0xf]
        %v7394 = vld [vmem:[%s8 + $0x3c] sm:$0xf]
        %v7395 = vld [vmem:[%s8 + $0x40] sm:$0xf]
        %v7396 = vld [vmem:[%s8 + $0x44] sm:$0xf]
        %v7397 = vld [vmem:[%s8 + $0x48] sm:$0xf]
        %v7398 = vld [vmem:[%s8 + $0x4c] sm:$0xf]
        %v7399 = vld [vmem:[%s8 + $0x50] sm:$0xf]
        %v7400 = vld [vmem:[%s8 + $0x54] sm:$0xf]
        %v7401 = vld [vmem:[%s8 + $0x58] sm:$0xf]
        %v7402 = vld [vmem:[%s8 + $0x5c] sm:$0xf]
        %v7403 = vld [vmem:[%s8 + $0x60] sm:$0xf]
        %v7404 = vld [vmem:[%s8 + $0x64] sm:$0xf]
        %v7405 = vld [vmem:[%s8 + $0x68] sm:$0xf]
        %v7406 = vld [vmem:[%s8 + $0x6c] sm:$0xf]
        %v7407 = vld [vmem:[%s8 + $0x70] sm:$0xf]
        %v7408 = vld [vmem:[%s8 + $0x74] sm:$0xf]
        %v7409 = vld [vmem:[%s8 + $0x78] sm:$0xf]
        %v7410 = vld [vmem:[%s8 + $0x7c] sm:$0xf]
        %v7411 = vpack.c.bf16 %v7377, %v7377
        %v7412 = vpack.c.bf16 %v7378, %v7378
        %v7413 = vld [vmem:[%s9 + $0x4a] sm:$0x1]
        %v7415 = vperm.slane %v7413, 0
        %v7449 = vunpack.c.l.b16 %v7379
        %v7450 = vunpack.c.l.b16 %v7380
        %v7451 = vunpack.c.l.b16 %v7381
        %v7452 = vunpack.c.l.b16 %v7382
        %v7453 = vunpack.c.l.b16 %v7383
        %v7454 = vunpack.c.l.b16 %v7384
        %v7455 = vunpack.c.l.b16 %v7385
        %v7456 = vunpack.c.l.b16 %v7386
        %v7457 = vunpack.c.l.b16 %v7387
        %v7458 = vunpack.c.l.b16 %v7388
        %v7459 = vunpack.c.l.b16 %v7389
        %v7460 = vunpack.c.l.b16 %v7390
        %v7461 = vunpack.c.l.b16 %v7391
        %v7462 = vunpack.c.l.b16 %v7392
        %v7463 = vunpack.c.l.b16 %v7393
        %v7464 = vunpack.c.l.b16 %v7394
        %v7465 = vunpack.c.l.b16 %v7395
        %v7466 = vunpack.c.l.b16 %v7396
        %v7467 = vunpack.c.l.b16 %v7397
        %v7468 = vunpack.c.l.b16 %v7398
        %v7469 = vunpack.c.l.b16 %v7399
        %v7470 = vunpack.c.l.b16 %v7400
        %v7471 = vunpack.c.l.b16 %v7401
        %v7472 = vunpack.c.l.b16 %v7402
        %v7473 = vunpack.c.l.b16 %v7403
        %v7474 = vunpack.c.l.b16 %v7404
        %v7475 = vunpack.c.l.b16 %v7405
        %v7476 = vunpack.c.l.b16 %v7406
        %v7477 = vunpack.c.l.b16 %v7407
        %v7478 = vunpack.c.l.b16 %v7408
        %v7479 = vunpack.c.l.b16 %v7409
        %v7480 = vunpack.c.l.b16 %v7410
        %v7481 = vpack.c.b16 %v7450, %v7449
        %v7482 = vpack.c.b16 %v7452, %v7451
        %v7483 = vpack.c.b16 %v7454, %v7453
        %v7484 = vpack.c.b16 %v7456, %v7455
        %v7485 = vpack.c.b16 %v7458, %v7457
        %v7486 = vpack.c.b16 %v7460, %v7459
        %v7487 = vpack.c.b16 %v7462, %v7461
        %v7488 = vpack.c.b16 %v7464, %v7463
        %v7489 = vpack.c.b16 %v7466, %v7465
        %v7490 = vpack.c.b16 %v7468, %v7467
        %v7491 = vpack.c.b16 %v7470, %v7469
        %v7492 = vpack.c.b16 %v7472, %v7471
        %v7493 = vpack.c.b16 %v7474, %v7473
        %v7494 = vpack.c.b16 %v7476, %v7475
        %v7495 = vpack.c.b16 %v7478, %v7477
        %v7496 = vpack.c.b16 %v7480, %v7479
        %7513 = vmatpush.bf16.msra.mxu0 %v7488
        %7514 = vmatpush.bf16.msra.mxu0 %v7487
        %7515 = vmatpush.bf16.msra.mxu0 %v7486
        %7516 = vmatpush.bf16.msra.mxu0 %v7485
        %7517 = vmatpush.bf16.msra.mxu0 %v7484
        %7518 = vmatpush.bf16.msra.mxu0 %v7483
        %7519 = vmatpush.bf16.msra.mxu0 %v7482
        %7520 = vmatpush.bf16.msra.mxu0 %v7481
        %7521 = vmatmul.bf16.gmra.mxu0 %v7411
        %v7522 = vpop.f32.mrf.mxu0
        %v7523 = vadd.f32 %v7415, %v7522
        %v7524 = vpop.f32.mrf.mxu0
        %7525 = vdwg.mxu0
        %7526 = vmatpush.bf16.msra.mxu0 %v7496
        %7527 = vmatpush.bf16.msra.mxu0 %v7495
        %7528 = vmatpush.bf16.msra.mxu0 %v7494
        %7529 = vmatpush.bf16.msra.mxu0 %v7493
        %7530 = vmatpush.bf16.msra.mxu0 %v7492
        %7531 = vmatpush.bf16.msra.mxu0 %v7491
        %7532 = vmatpush.bf16.msra.mxu0 %v7490
        %7533 = vmatpush.bf16.msra.mxu0 %v7489
        %7534 = vmatmul.bf16.gmra.mxu0 %v7412
        %v7535 = vpop.f32.mrf.mxu0
        %v7536 = vadd.f32 %v7523, %v7535
        %v7537 = vpop.f32.mrf.mxu0
        %7538 = vdwg.mxu0
        %v7539 = vadd.f32 %v7244, %v7536
        %v7540 = vld [vmem:[%s9 + $0x4b] sm:$0x1]
        %v7541 = vld [vmem:[%s9 + $0x4c] sm:$0x1]
        %v7542 = vsel %vm1753, %v7539, 0.0
        %7543 = vadd.xlane.f32.xlu0 %v7542
        %v7544 = vpop.xlane.xlu0 %7543
        %v7545 = vmul.f32 %v7544, %v1763
        %v7546 = vsub.f32 %v7539, %v7545
        %v7547 = vmul.f32 %v7546, %v7546
        %v7548 = vsel %vm1753, %v7547, 0.0
        %7549 = vadd.xlane.f32.xlu0 %v7548
        %v7550 = vpop.xlane.xlu0 %7549
        %v7551 = vmul.f32 %v7550, %v1763
        %v7552 = vadd.f32 %v7551, 1e-05
        %v7553 = vrsqrt.pop %v7552
        %v7554 = vmul.f32 %v7553, %v7552
        %v7555 = vmul.f32 %v7554, %v7553
        %v7556 = vmul.f32 0.5, %v7555
        %v7557 = vsub.f32 1.5, %v7556
        %v7558 = vmul.f32 %v7553, %v7557
        %vm7559 = vweird.f32 %v7552
        %vm7560 = vweird.f32 %v7553
        %vm7561 = vmor %vm7559, %vm7560
        %v7562 = vsel %vm7561, %v7553, %v7558
        %v7563 = vmul.f32 %v7546, %v7562
        %v7565 = vperm.slane %v7540, 0
        %v7567 = vmul.f32 %v7563, %v7565
        %v7569 = vperm.slane %v7541, 0
        %v7571 = vadd.f32 %v7567, %v7569
        %v7572 = vld [vmem:[#allocation8 + $0x14] sm:$0xff]
        %v7573 = vld [vmem:[#allocation8 + $0x40] sm:$0xff]
        %v7574 = vld [vmem:[#allocation8 + $0x6c] sm:$0xff]
        %v7575 = vld [vmem:[#allocation8 + $0x98] sm:$0xff]
        %v7576 = vld [vmem:[#allocation8 + $0xc4] sm:$0xff]
        %v7577 = vld [vmem:[#allocation8 + $0xf0] sm:$0xff]
        %v7578 = vld [vmem:[#allocation8 + $0x11c] sm:$0xff]
        %v7579 = vld [vmem:[#allocation8 + $0x148] sm:$0xff]
        %v7580 = vpack.c.bf16 %v7571, %v7571
        %v7581 = vld [vmem:[%s9 + $0x4d] sm:$0x3]
        %v7583 = vperm.slane %v7581, 0
        %v7584 = vperm.slane %v7581, 1
        %v7595 = vunpack.c.l.b16 %v7572
        %v7596 = vunpack.c.h.b16 %v7572
        %v7597 = vunpack.c.l.b16 %v7573
        %v7598 = vunpack.c.h.b16 %v7573
        %v7599 = vunpack.c.l.b16 %v7574
        %v7600 = vunpack.c.h.b16 %v7574
        %v7601 = vunpack.c.l.b16 %v7575
        %v7602 = vunpack.c.h.b16 %v7575
        %v7603 = vunpack.c.l.b16 %v7576
        %v7604 = vunpack.c.h.b16 %v7576
        %v7605 = vunpack.c.l.b16 %v7577
        %v7606 = vunpack.c.h.b16 %v7577
        %v7607 = vunpack.c.l.b16 %v7578
        %v7608 = vunpack.c.h.b16 %v7578
        %v7609 = vunpack.c.l.b16 %v7579
        %v7610 = vunpack.c.h.b16 %v7579
        %v7611 = vpack.c.b16 %v7597, %v7595
        %v7612 = vpack.c.b16 %v7598, %v7596
        %v7613 = vpack.c.b16 %v7601, %v7599
        %v7614 = vpack.c.b16 %v7602, %v7600
        %v7615 = vpack.c.b16 %v7605, %v7603
        %v7616 = vpack.c.b16 %v7606, %v7604
        %v7617 = vpack.c.b16 %v7609, %v7607
        %v7618 = vpack.c.b16 %v7610, %v7608
        %v7628 = vsel %vm1753, %v7580, 0
        %7630 = vmatpush.bf16.msra.mxu0 0
        %7631 = vmatpush.bf16.msra.mxu0 0
        %7632 = vmatpush.bf16.msra.mxu0 0
        %7633 = vmatpush.bf16.msra.mxu0 0
        %7634 = vmatpush.bf16.msra.mxu0 %v7617
        %7635 = vmatpush.bf16.msra.mxu0 %v7615
        %7636 = vmatpush.bf16.msra.mxu0 %v7613
        %7637 = vmatpush.bf16.msra.mxu0 %v7611
        %7638 = vmatmul.bf16.gmra.mxu0 %v7628
        %v7639 = vpop.f32.mrf.mxu0
        %v7640 = vadd.f32 %v7583, %v7639
        %v7641 = vpop.f32.mrf.mxu0
        %7642 = vdwg.mxu0
        %7643 = vmatpush.bf16.msra.mxu0 0
        %7644 = vmatpush.bf16.msra.mxu0 0
        %7645 = vmatpush.bf16.msra.mxu0 0
        %7646 = vmatpush.bf16.msra.mxu0 0
        %7647 = vmatpush.bf16.msra.mxu0 %v7618
        %7648 = vmatpush.bf16.msra.mxu0 %v7616
        %7649 = vmatpush.bf16.msra.mxu0 %v7614
        %7650 = vmatpush.bf16.msra.mxu0 %v7612
        %7651 = vmatmul.bf16.gmra.mxu0 %v7628
        %v7652 = vpop.f32.mrf.mxu0
        %v7653 = vadd.f32 %v7584, %v7652
        %v7654 = vpop.f32.mrf.mxu0
        %7655 = vdwg.mxu0
        %7657 = vrot.lane.b32.xlu0 %v7640, 64
        %v7658 = vpop.permute.xlu0 %7657
        %v7659 = vsel %vm1878, %v7640, 0
        %v7661 = vsel %vm1878, %v7658, 0
        %7663 = vmatpush.xpose.msra.mxu0 0.0
        %7664 = vmatpush.xpose.msra.mxu0 0.0
        %7665 = vmatpush.xpose.msra.mxu0 0.0
        %7666 = vmatpush.xpose.msra.mxu0 0.0
        %7667 = vmatpush.xpose.msra.mxu0 0.0
        %7668 = vmatpush.xpose.msra.mxu0 0.0
        %7669 = vmatpush.xpose.msra.mxu0 0.0
        %7670 = vmatpush.xpose.msra.mxu0 0.0
        %7671 = vmatpush.xpose.msra.mxu0 0.0
        %7672 = vmatpush.xpose.msra.mxu0 0.0
        %7673 = vmatpush.xpose.msra.mxu0 0.0
        %7674 = vmatpush.xpose.msra.mxu0 0.0
        %7675 = vmatpush.xpose.msra.mxu0 0.0
        %7676 = vmatpush.xpose.msra.mxu0 0.0
        %7677 = vmatpush.xpose.msra.mxu0 0.0
        %7678 = vmatpush.xpose.msra.mxu0 %v7661
        %7679 = vmatmul.f32.gmra.mxu0 %v7659
        %v7680 = vpop.f32.mrf.mxu0
        %v7681 = vadd.f32 0.0, %v7680
        %7682 = vdwg.mxu0
        %v7683 = vmul.f32 %v7681, 0.25
        %v7684 = vsel %vm613, %v7683, -inf
        %7685 = vmax.xlane.f32.xlu0 %v7684
        %v7686 = vpop.xlane.xlu0 %7685
        %v7687 = vsub.f32 %v7683, %v7686
        %v7688 = vmul.f32 %v7687, 1.442695
        %v7689 = vpow.pop %v7688
        %v7690 = vsel %vm613, %v7689, 0.0
        %7691 = vadd.xlane.f32.xlu0 %v7690
        %v7692 = vpop.xlane.xlu0 %7691
        %v7693 = vrcp.pop %v7692
        %v7694 = vmul.f32 %v7689, %v7693
        %v7696 = vsel %vm613, %v7694, 0
        %7698 = vmatpush.msra.mxu0 0.0
        %7699 = vmatpush.msra.mxu0 0.0
        %7700 = vmatpush.msra.mxu0 0.0
        %7701 = vmatpush.msra.mxu0 0.0
        %7702 = vmatpush.msra.mxu0 0.0
        %7703 = vmatpush.msra.mxu0 0.0
        %7704 = vmatpush.msra.mxu0 0.0
        %7705 = vmatpush.msra.mxu0 0.0
        %7706 = vmatpush.msra.mxu0 0.0
        %7707 = vmatpush.msra.mxu0 0.0
        %7708 = vmatpush.msra.mxu0 0.0
        %7709 = vmatpush.msra.mxu0 0.0
        %7710 = vmatpush.msra.mxu0 0.0
        %7711 = vmatpush.msra.mxu0 0.0
        %7712 = vmatpush.msra.mxu0 0.0
        %7713 = vmatpush.msra.mxu0 %v7653
        %7714 = vmatmul.f32.gmra.mxu0 %v7696
        %v7715 = vpop.f32.mrf.mxu0
        %v7716 = vadd.f32 0.0, %v7715
        %7717 = vdwg.mxu0
        %7718 = vst.msk [vmem:[#allocation2] sm:$0xff] %vm1878, %v7716
        %7719 = vrot.lane.b32.xlu0 %v7640, 112
        %v7720 = vpop.permute.xlu0 %7719
        %7721 = vrot.lane.b32.xlu0 %v7640, 48
        %v7722 = vpop.permute.xlu0 %7721
        %v7723 = vsel %vm1878, %v7720, 0
        %v7725 = vsel %vm1878, %v7722, 0
        %7727 = vmatpush.xpose.msra.mxu0 0.0
        %7728 = vmatpush.xpose.msra.mxu0 0.0
        %7729 = vmatpush.xpose.msra.mxu0 0.0
        %7730 = vmatpush.xpose.msra.mxu0 0.0
        %7731 = vmatpush.xpose.msra.mxu0 0.0
        %7732 = vmatpush.xpose.msra.mxu0 0.0
        %7733 = vmatpush.xpose.msra.mxu0 0.0
        %7734 = vmatpush.xpose.msra.mxu0 0.0
        %7735 = vmatpush.xpose.msra.mxu0 0.0
        %7736 = vmatpush.xpose.msra.mxu0 0.0
        %7737 = vmatpush.xpose.msra.mxu0 0.0
        %7738 = vmatpush.xpose.msra.mxu0 0.0
        %7739 = vmatpush.xpose.msra.mxu0 0.0
        %7740 = vmatpush.xpose.msra.mxu0 0.0
        %7741 = vmatpush.xpose.msra.mxu0 0.0
        %7742 = vmatpush.xpose.msra.mxu0 %v7725
        %7743 = vmatmul.f32.gmra.mxu0 %v7723
        %v7744 = vpop.f32.mrf.mxu0
        %v7745 = vadd.f32 0.0, %v7744
        %7746 = vdwg.mxu0
        %v7747 = vmul.f32 %v7745, 0.25
        %v7748 = vsel %vm613, %v7747, -inf
        %7749 = vmax.xlane.f32.xlu0 %v7748
        %v7750 = vpop.xlane.xlu0 %7749
        %v7751 = vsub.f32 %v7747, %v7750
        %v7752 = vmul.f32 %v7751, 1.442695
        %v7753 = vpow.pop %v7752
        %v7754 = vsel %vm613, %v7753, 0.0
        %7755 = vadd.xlane.f32.xlu0 %v7754
        %v7756 = vpop.xlane.xlu0 %7755
        %v7757 = vrcp.pop %v7756
        %v7758 = vmul.f32 %v7753, %v7757
        %7760 = vrot.lane.b32.xlu0 %v7653, 112
        %v7761 = vpop.permute.xlu0 %7760
        %v7764 = vsel %vm613, %v7758, 0
        %7766 = vmatpush.msra.mxu0 0.0
        %7767 = vmatpush.msra.mxu0 0.0
        %7768 = vmatpush.msra.mxu0 0.0
        %7769 = vmatpush.msra.mxu0 0.0
        %7770 = vmatpush.msra.mxu0 0.0
        %7771 = vmatpush.msra.mxu0 0.0
        %7772 = vmatpush.msra.mxu0 0.0
        %7773 = vmatpush.msra.mxu0 0.0
        %7774 = vmatpush.msra.mxu0 0.0
        %7775 = vmatpush.msra.mxu0 0.0
        %7776 = vmatpush.msra.mxu0 0.0
        %7777 = vmatpush.msra.mxu0 0.0
        %7778 = vmatpush.msra.mxu0 0.0
        %7779 = vmatpush.msra.mxu0 0.0
        %7780 = vmatpush.msra.mxu0 0.0
        %7781 = vmatpush.msra.mxu0 %v7761
        %7782 = vmatmul.f32.gmra.mxu0 %v7764
        %v7783 = vpop.f32.mrf.mxu0
        %v7784 = vadd.f32 0.0, %v7783
        %7785 = vdwg.mxu0
        %7787 = vrot.lane.b32.xlu0 %v7784, 16
        %v7788 = vpop.permute.xlu0 %7787
        %7790 = vst.msk [vmem:[#allocation2] sm:$0xff] %vm2010, %v7788
        %7791 = vrot.lane.b32.xlu0 %v7640, 96
        %v7792 = vpop.permute.xlu0 %7791
        %7793 = vrot.lane.b32.xlu0 %v7640, 32
        %v7794 = vpop.permute.xlu0 %7793
        %v7795 = vsel %vm1878, %v7792, 0
        %v7797 = vsel %vm1878, %v7794, 0
        %7799 = vmatpush.xpose.msra.mxu0 0.0
        %7800 = vmatpush.xpose.msra.mxu0 0.0
        %7801 = vmatpush.xpose.msra.mxu0 0.0
        %7802 = vmatpush.xpose.msra.mxu0 0.0
        %7803 = vmatpush.xpose.msra.mxu0 0.0
        %7804 = vmatpush.xpose.msra.mxu0 0.0
        %7805 = vmatpush.xpose.msra.mxu0 0.0
        %7806 = vmatpush.xpose.msra.mxu0 0.0
        %7807 = vmatpush.xpose.msra.mxu0 0.0
        %7808 = vmatpush.xpose.msra.mxu0 0.0
        %7809 = vmatpush.xpose.msra.mxu0 0.0
        %7810 = vmatpush.xpose.msra.mxu0 0.0
        %7811 = vmatpush.xpose.msra.mxu0 0.0
        %7812 = vmatpush.xpose.msra.mxu0 0.0
        %7813 = vmatpush.xpose.msra.mxu0 0.0
        %7814 = vmatpush.xpose.msra.mxu0 %v7797
        %7815 = vmatmul.f32.gmra.mxu0 %v7795
        %v7816 = vpop.f32.mrf.mxu0
        %v7817 = vadd.f32 0.0, %v7816
        %7818 = vdwg.mxu0
        %v7819 = vmul.f32 %v7817, 0.25
        %v7820 = vsel %vm613, %v7819, -inf
        %7821 = vmax.xlane.f32.xlu0 %v7820
        %v7822 = vpop.xlane.xlu0 %7821
        %v7823 = vsub.f32 %v7819, %v7822
        %v7824 = vmul.f32 %v7823, 1.442695
        %v7825 = vpow.pop %v7824
        %v7826 = vsel %vm613, %v7825, 0.0
        %7827 = vadd.xlane.f32.xlu0 %v7826
        %v7828 = vpop.xlane.xlu0 %7827
        %v7829 = vrcp.pop %v7828
        %v7830 = vmul.f32 %v7825, %v7829
        %7831 = vrot.lane.b32.xlu0 %v7653, 96
        %v7832 = vpop.permute.xlu0 %7831
        %v7835 = vsel %vm613, %v7830, 0
        %7837 = vmatpush.msra.mxu0 0.0
        %7838 = vmatpush.msra.mxu0 0.0
        %7839 = vmatpush.msra.mxu0 0.0
        %7840 = vmatpush.msra.mxu0 0.0
        %7841 = vmatpush.msra.mxu0 0.0
        %7842 = vmatpush.msra.mxu0 0.0
        %7843 = vmatpush.msra.mxu0 0.0
        %7844 = vmatpush.msra.mxu0 0.0
        %7845 = vmatpush.msra.mxu0 0.0
        %7846 = vmatpush.msra.mxu0 0.0
        %7847 = vmatpush.msra.mxu0 0.0
        %7848 = vmatpush.msra.mxu0 0.0
        %7849 = vmatpush.msra.mxu0 0.0
        %7850 = vmatpush.msra.mxu0 0.0
        %7851 = vmatpush.msra.mxu0 0.0
        %7852 = vmatpush.msra.mxu0 %v7832
        %7853 = vmatmul.f32.gmra.mxu0 %v7835
        %v7854 = vpop.f32.mrf.mxu0
        %v7855 = vadd.f32 0.0, %v7854
        %7856 = vdwg.mxu0
        %7858 = vrot.lane.b32.xlu0 %v7855, 32
        %v7859 = vpop.permute.xlu0 %7858
        %7861 = vst.msk [vmem:[#allocation2] sm:$0xff] %vm2082, %v7859
        %7862 = vrot.lane.b32.xlu0 %v7640, 80
        %v7863 = vpop.permute.xlu0 %7862
        %7864 = vrot.lane.b32.xlu0 %v7640, 16
        %v7865 = vpop.permute.xlu0 %7864
        %v7866 = vsel %vm1878, %v7863, 0
        %v7868 = vsel %vm1878, %v7865, 0
        %7870 = vmatpush.xpose.msra.mxu0 0.0
        %7871 = vmatpush.xpose.msra.mxu0 0.0
        %7872 = vmatpush.xpose.msra.mxu0 0.0
        %7873 = vmatpush.xpose.msra.mxu0 0.0
        %7874 = vmatpush.xpose.msra.mxu0 0.0
        %7875 = vmatpush.xpose.msra.mxu0 0.0
        %7876 = vmatpush.xpose.msra.mxu0 0.0
        %7877 = vmatpush.xpose.msra.mxu0 0.0
        %7878 = vmatpush.xpose.msra.mxu0 0.0
        %7879 = vmatpush.xpose.msra.mxu0 0.0
        %7880 = vmatpush.xpose.msra.mxu0 0.0
        %7881 = vmatpush.xpose.msra.mxu0 0.0
        %7882 = vmatpush.xpose.msra.mxu0 0.0
        %7883 = vmatpush.xpose.msra.mxu0 0.0
        %7884 = vmatpush.xpose.msra.mxu0 0.0
        %7885 = vmatpush.xpose.msra.mxu0 %v7868
        %7886 = vmatmul.f32.gmra.mxu0 %v7866
        %v7887 = vpop.f32.mrf.mxu0
        %v7888 = vadd.f32 0.0, %v7887
        %7889 = vdwg.mxu0
        %v7890 = vmul.f32 %v7888, 0.25
        %v7891 = vsel %vm613, %v7890, -inf
        %7892 = vmax.xlane.f32.xlu0 %v7891
        %v7893 = vpop.xlane.xlu0 %7892
        %v7894 = vsub.f32 %v7890, %v7893
        %v7895 = vmul.f32 %v7894, 1.442695
        %v7896 = vpow.pop %v7895
        %v7897 = vsel %vm613, %v7896, 0.0
        %7898 = vadd.xlane.f32.xlu0 %v7897
        %v7899 = vpop.xlane.xlu0 %7898
        %v7900 = vrcp.pop %v7899
        %v7901 = vmul.f32 %v7896, %v7900
        %7902 = vrot.lane.b32.xlu0 %v7653, 80
        %v7903 = vpop.permute.xlu0 %7902
        %v7906 = vsel %vm613, %v7901, 0
        %7908 = vmatpush.msra.mxu0 0.0
        %7909 = vmatpush.msra.mxu0 0.0
        %7910 = vmatpush.msra.mxu0 0.0
        %7911 = vmatpush.msra.mxu0 0.0
        %7912 = vmatpush.msra.mxu0 0.0
        %7913 = vmatpush.msra.mxu0 0.0
        %7914 = vmatpush.msra.mxu0 0.0
        %7915 = vmatpush.msra.mxu0 0.0
        %7916 = vmatpush.msra.mxu0 0.0
        %7917 = vmatpush.msra.mxu0 0.0
        %7918 = vmatpush.msra.mxu0 0.0
        %7919 = vmatpush.msra.mxu0 0.0
        %7920 = vmatpush.msra.mxu0 0.0
        %7921 = vmatpush.msra.mxu0 0.0
        %7922 = vmatpush.msra.mxu0 0.0
        %7923 = vmatpush.msra.mxu0 %v7903
        %7924 = vmatmul.f32.gmra.mxu0 %v7906
        %v7925 = vpop.f32.mrf.mxu0
        %v7926 = vadd.f32 0.0, %v7925
        %7927 = vdwg.mxu0
        %7929 = vrot.lane.b32.xlu0 %v7926, 48
        %v7930 = vpop.permute.xlu0 %7929
        %7932 = vst.msk [vmem:[#allocation2] sm:$0xff] %vm2154, %v7930
        %v7933 = vld [vmem:[#allocation2] sm:$0xff]
        %v7934 = vld [vmem:[#allocation8 + $0x1c] sm:$0xf]
        %v7935 = vld [vmem:[#allocation8 + $0x48] sm:$0xf]
        %v7936 = vld [vmem:[#allocation8 + $0x74] sm:$0xf]
        %v7937 = vld [vmem:[#allocation8 + $0xa0] sm:$0xf]
        %v7938 = vld [vmem:[#allocation8 + $0xcc] sm:$0xf]
        %v7939 = vld [vmem:[#allocation8 + $0xf8] sm:$0xf]
        %v7940 = vld [vmem:[#allocation8 + $0x124] sm:$0xf]
        %v7941 = vld [vmem:[#allocation8 + $0x150] sm:$0xf]
        %v7942 = vpack.c.bf16 %v7933, %v7933
        %v7951 = vunpack.c.l.b16 %v7934
        %v7952 = vunpack.c.l.b16 %v7935
        %v7953 = vunpack.c.l.b16 %v7936
        %v7954 = vunpack.c.l.b16 %v7937
        %v7955 = vunpack.c.l.b16 %v7938
        %v7956 = vunpack.c.l.b16 %v7939
        %v7957 = vunpack.c.l.b16 %v7940
        %v7958 = vunpack.c.l.b16 %v7941
        %v7959 = vpack.c.b16 %v7952, %v7951
        %v7960 = vpack.c.b16 %v7954, %v7953
        %v7961 = vpack.c.b16 %v7956, %v7955
        %v7962 = vpack.c.b16 %v7958, %v7957
        %v7968 = vsel %vm1753, %v7942, 0
        %7970 = vmatpush.bf16.msra.mxu0 0
        %7971 = vmatpush.bf16.msra.mxu0 0
        %7972 = vmatpush.bf16.msra.mxu0 0
        %7973 = vmatpush.bf16.msra.mxu0 0
        %7974 = vmatpush.bf16.msra.mxu0 %v7962
        %7975 = vmatpush.bf16.msra.mxu0 %v7961
        %7976 = vmatpush.bf16.msra.mxu0 %v7960
        %7977 = vmatpush.bf16.msra.mxu0 %v7959
        %7978 = vmatmul.bf16.gmra.mxu0 %v7968
        %v7979 = vpop.f32.mrf.mxu0
        %v7980 = vadd.f32 0.0, %v7979
        %v7981 = vpop.f32.mrf.mxu0
        %7982 = vdwg.mxu0
        %v7983 = vadd.f32 %v7539, %v7980
        %v7984 = vld [vmem:[%s9 + $0x4f] sm:$0x1]
        %v7986 = vperm.slane %v7984, 0
        %v7988 = vadd.f32 %v7983, %v7986
        %v7989 = vld [vmem:[%s9 + $0x50] sm:$0x1]
        %v7990 = vld [vmem:[%s9 + $0x51] sm:$0x1]
        %v7991 = vsel %vm1753, %v7988, 0.0
        %7992 = vadd.xlane.f32.xlu0 %v7991
        %v7993 = vpop.xlane.xlu0 %7992
        %v7994 = vmul.f32 %v7993, %v1763
        %v7995 = vsub.f32 %v7988, %v7994
        %v7996 = vmul.f32 %v7995, %v7995
        %v7997 = vsel %vm1753, %v7996, 0.0
        %7998 = vadd.xlane.f32.xlu0 %v7997
        %v7999 = vpop.xlane.xlu0 %7998
        %v8000 = vmul.f32 %v7999, %v1763
        %v8001 = vadd.f32 %v8000, 1e-05
        %v8002 = vrsqrt.pop %v8001
        %v8003 = vmul.f32 %v8002, %v8001
        %v8004 = vmul.f32 %v8003, %v8002
        %v8005 = vmul.f32 0.5, %v8004
        %v8006 = vsub.f32 1.5, %v8005
        %v8007 = vmul.f32 %v8002, %v8006
        %vm8008 = vweird.f32 %v8001
        %vm8009 = vweird.f32 %v8002
        %vm8010 = vmor %vm8008, %vm8009
        %v8011 = vsel %vm8010, %v8002, %v8007
        %v8012 = vmul.f32 %v7995, %v8011
        %v8014 = vperm.slane %v7989, 0
        %v8016 = vmul.f32 %v8012, %v8014
        %v8018 = vperm.slane %v7990, 0
        %v8020 = vadd.f32 %v8016, %v8018
        %v8021 = vld [vmem:[#allocation8 + $0x20] sm:$0xff]
        %v8022 = vld [vmem:[#allocation8 + $0x4c] sm:$0xff]
        %v8023 = vld [vmem:[#allocation8 + $0x78] sm:$0xff]
        %v8024 = vld [vmem:[#allocation8 + $0xa4] sm:$0xff]
        %v8025 = vld [vmem:[#allocation8 + $0xd0] sm:$0xff]
        %v8026 = vld [vmem:[#allocation8 + $0xfc] sm:$0xff]
        %v8027 = vld [vmem:[#allocation8 + $0x128] sm:$0xff]
        %v8028 = vld [vmem:[#allocation8 + $0x154] sm:$0xff]
        %v8029 = vpack.c.bf16 %v8020, %v8020
        %v8030 = vld [vmem:[%s9 + $0x52] sm:$0x3]
        %v8032 = vperm.slane %v8030, 0
        %v8033 = vperm.slane %v8030, 1
        %v8044 = vunpack.c.l.b16 %v8021
        %v8045 = vunpack.c.h.b16 %v8021
        %v8046 = vunpack.c.l.b16 %v8022
        %v8047 = vunpack.c.h.b16 %v8022
        %v8048 = vunpack.c.l.b16 %v8023
        %v8049 = vunpack.c.h.b16 %v8023
        %v8050 = vunpack.c.l.b16 %v8024
        %v8051 = vunpack.c.h.b16 %v8024
        %v8052 = vunpack.c.l.b16 %v8025
        %v8053 = vunpack.c.h.b16 %v8025
        %v8054 = vunpack.c.l.b16 %v8026
        %v8055 = vunpack.c.h.b16 %v8026
        %v8056 = vunpack.c.l.b16 %v8027
        %v8057 = vunpack.c.h.b16 %v8027
        %v8058 = vunpack.c.l.b16 %v8028
        %v8059 = vunpack.c.h.b16 %v8028
        %v8060 = vpack.c.b16 %v8046, %v8044
        %v8061 = vpack.c.b16 %v8047, %v8045
        %v8062 = vpack.c.b16 %v8050, %v8048
        %v8063 = vpack.c.b16 %v8051, %v8049
        %v8064 = vpack.c.b16 %v8054, %v8052
        %v8065 = vpack.c.b16 %v8055, %v8053
        %v8066 = vpack.c.b16 %v8058, %v8056
        %v8067 = vpack.c.b16 %v8059, %v8057
        %v8077 = vsel %vm1753, %v8029, 0
        %8079 = vmatpush.bf16.msra.mxu0 0
        %8080 = vmatpush.bf16.msra.mxu0 0
        %8081 = vmatpush.bf16.msra.mxu0 0
        %8082 = vmatpush.bf16.msra.mxu0 0
        %8083 = vmatpush.bf16.msra.mxu0 %v8066
        %8084 = vmatpush.bf16.msra.mxu0 %v8064
        %8085 = vmatpush.bf16.msra.mxu0 %v8062
        %8086 = vmatpush.bf16.msra.mxu0 %v8060
        %8087 = vmatmul.bf16.gmra.mxu0 %v8077
        %v8088 = vpop.f32.mrf.mxu0
        %v8089 = vadd.f32 %v8032, %v8088
        %v8090 = vpop.f32.mrf.mxu0
        %8091 = vdwg.mxu0
        %8092 = vmatpush.bf16.msra.mxu0 0
        %8093 = vmatpush.bf16.msra.mxu0 0
        %8094 = vmatpush.bf16.msra.mxu0 0
        %8095 = vmatpush.bf16.msra.mxu0 0
        %8096 = vmatpush.bf16.msra.mxu0 %v8067
        %8097 = vmatpush.bf16.msra.mxu0 %v8065
        %8098 = vmatpush.bf16.msra.mxu0 %v8063
        %8099 = vmatpush.bf16.msra.mxu0 %v8061
        %8100 = vmatmul.bf16.gmra.mxu0 %v8077
        %v8101 = vpop.f32.mrf.mxu0
        %v8102 = vadd.f32 %v8033, %v8101
        %v8103 = vpop.f32.mrf.mxu0
        %8104 = vdwg.mxu0
        %v8105 = vmul.f32 %v8089, %v8089
        %v8106 = vmul.f32 %v8102, %v8102
        %v8107 = vmul.f32 %v8089, %v8105
        %v8108 = vmul.f32 %v8102, %v8106
        %v8109 = vmul.f32 %v8107, 0.044715
        %v8110 = vmul.f32 %v8108, 0.044715
        %v8111 = vadd.f32 %v8089, %v8109
        %v8112 = vadd.f32 %v8102, %v8110
        %v8113 = vmul.f32 %v8111, 0.7978846
        %v8114 = vmul.f32 %v8112, 0.7978846
        %v8115 = vtanh.pop %v8113
        %v8116 = vtanh.pop %v8114
        %v8117 = vadd.f32 %v8115, 1.0
        %v8118 = vadd.f32 %v8116, 1.0
        %v8119 = vmul.f32 %v8117, 0.5
        %v8120 = vmul.f32 %v8118, 0.5
        %v8121 = vmul.f32 %v8089, %v8119
        %v8122 = vmul.f32 %v8102, %v8120
        %v8123 = vld [vmem:[%s8 + $0x80] sm:$0xf]
        %v8124 = vld [vmem:[%s8 + $0x84] sm:$0xf]
        %v8125 = vld [vmem:[%s8 + $0x88] sm:$0xf]
        %v8126 = vld [vmem:[%s8 + $0x8c] sm:$0xf]
        %v8127 = vld [vmem:[%s8 + $0x90] sm:$0xf]
        %v8128 = vld [vmem:[%s8 + $0x94] sm:$0xf]
        %v8129 = vld [vmem:[%s8 + $0x98] sm:$0xf]
        %v8130 = vld [vmem:[%s8 + $0x9c] sm:$0xf]
        %v8131 = vld [vmem:[%s8 + $0xa0] sm:$0xf]
        %v8132 = vld [vmem:[%s8 + $0xa4] sm:$0xf]
        %v8133 = vld [vmem:[%s8 + $0xa8] sm:$0xf]
        %v8134 = vld [vmem:[%s8 + $0xac] sm:$0xf]
        %v8135 = vld [vmem:[%s8 + $0xb0] sm:$0xf]
        %v8136 = vld [vmem:[%s8 + $0xb4] sm:$0xf]
        %v8137 = vld [vmem:[%s8 + $0xb8] sm:$0xf]
        %v8138 = vld [vmem:[%s8 + $0xbc] sm:$0xf]
        %v8139 = vld [vmem:[%s8 + $0xc0] sm:$0xf]
        %v8140 = vld [vmem:[%s8 + $0xc4] sm:$0xf]
        %v8141 = vld [vmem:[%s8 + $0xc8] sm:$0xf]
        %v8142 = vld [vmem:[%s8 + $0xcc] sm:$0xf]
        %v8143 = vld [vmem:[%s8 + $0xd0] sm:$0xf]
        %v8144 = vld [vmem:[%s8 + $0xd4] sm:$0xf]
        %v8145 = vld [vmem:[%s8 + $0xd8] sm:$0xf]
        %v8146 = vld [vmem:[%s8 + $0xdc] sm:$0xf]
        %v8147 = vld [vmem:[%s8 + $0xe0] sm:$0xf]
        %v8148 = vld [vmem:[%s8 + $0xe4] sm:$0xf]
        %v8149 = vld [vmem:[%s8 + $0xe8] sm:$0xf]
        %v8150 = vld [vmem:[%s8 + $0xec] sm:$0xf]
        %v8151 = vld [vmem:[%s8 + $0xf0] sm:$0xf]
        %v8152 = vld [vmem:[%s8 + $0xf4] sm:$0xf]
        %v8153 = vld [vmem:[%s8 + $0xf8] sm:$0xf]
        %v8154 = vld [vmem:[%s8 + $0xfc] sm:$0xf]
        %v8155 = vpack.c.bf16 %v8121, %v8121
        %v8156 = vpack.c.bf16 %v8122, %v8122
        %v8157 = vld [vmem:[%s9 + $0x54] sm:$0x1]
        %v8159 = vperm.slane %v8157, 0
        %v8193 = vunpack.c.l.b16 %v8123
        %v8194 = vunpack.c.l.b16 %v8124
        %v8195 = vunpack.c.l.b16 %v8125
        %v8196 = vunpack.c.l.b16 %v8126
        %v8197 = vunpack.c.l.b16 %v8127
        %v8198 = vunpack.c.l.b16 %v8128
        %v8199 = vunpack.c.l.b16 %v8129
        %v8200 = vunpack.c.l.b16 %v8130
        %v8201 = vunpack.c.l.b16 %v8131
        %v8202 = vunpack.c.l.b16 %v8132
        %v8203 = vunpack.c.l.b16 %v8133
        %v8204 = vunpack.c.l.b16 %v8134
        %v8205 = vunpack.c.l.b16 %v8135
        %v8206 = vunpack.c.l.b16 %v8136
        %v8207 = vunpack.c.l.b16 %v8137
        %v8208 = vunpack.c.l.b16 %v8138
        %v8209 = vunpack.c.l.b16 %v8139
        %v8210 = vunpack.c.l.b16 %v8140
        %v8211 = vunpack.c.l.b16 %v8141
        %v8212 = vunpack.c.l.b16 %v8142
        %v8213 = vunpack.c.l.b16 %v8143
        %v8214 = vunpack.c.l.b16 %v8144
        %v8215 = vunpack.c.l.b16 %v8145
        %v8216 = vunpack.c.l.b16 %v8146
        %v8217 = vunpack.c.l.b16 %v8147
        %v8218 = vunpack.c.l.b16 %v8148
        %v8219 = vunpack.c.l.b16 %v8149
        %v8220 = vunpack.c.l.b16 %v8150
        %v8221 = vunpack.c.l.b16 %v8151
        %v8222 = vunpack.c.l.b16 %v8152
        %v8223 = vunpack.c.l.b16 %v8153
        %v8224 = vunpack.c.l.b16 %v8154
        %v8225 = vpack.c.b16 %v8194, %v8193
        %v8226 = vpack.c.b16 %v8196, %v8195
        %v8227 = vpack.c.b16 %v8198, %v8197
        %v8228 = vpack.c.b16 %v8200, %v8199
        %v8229 = vpack.c.b16 %v8202, %v8201
        %v8230 = vpack.c.b16 %v8204, %v8203
        %v8231 = vpack.c.b16 %v8206, %v8205
        %v8232 = vpack.c.b16 %v8208, %v8207
        %v8233 = vpack.c.b16 %v8210, %v8209
        %v8234 = vpack.c.b16 %v8212, %v8211
        %v8235 = vpack.c.b16 %v8214, %v8213
        %v8236 = vpack.c.b16 %v8216, %v8215
        %v8237 = vpack.c.b16 %v8218, %v8217
        %v8238 = vpack.c.b16 %v8220, %v8219
        %v8239 = vpack.c.b16 %v8222, %v8221
        %v8240 = vpack.c.b16 %v8224, %v8223
        %8257 = vmatpush.bf16.msra.mxu0 %v8232
        %8258 = vmatpush.bf16.msra.mxu0 %v8231
        %8259 = vmatpush.bf16.msra.mxu0 %v8230
        %8260 = vmatpush.bf16.msra.mxu0 %v8229
        %8261 = vmatpush.bf16.msra.mxu0 %v8228
        %8262 = vmatpush.bf16.msra.mxu0 %v8227
        %8263 = vmatpush.bf16.msra.mxu0 %v8226
        %8264 = vmatpush.bf16.msra.mxu0 %v8225
        %8265 = vmatmul.bf16.gmra.mxu0 %v8155
        %v8266 = vpop.f32.mrf.mxu0
        %v8267 = vadd.f32 %v8159, %v8266
        %v8268 = vpop.f32.mrf.mxu0
        %8269 = vdwg.mxu0
        %8270 = vmatpush.bf16.msra.mxu0 %v8240
        %8271 = vmatpush.bf16.msra.mxu0 %v8239
        %8272 = vmatpush.bf16.msra.mxu0 %v8238
        %8273 = vmatpush.bf16.msra.mxu0 %v8237
        %8274 = vmatpush.bf16.msra.mxu0 %v8236
        %8275 = vmatpush.bf16.msra.mxu0 %v8235
        %8276 = vmatpush.bf16.msra.mxu0 %v8234
        %8277 = vmatpush.bf16.msra.mxu0 %v8233
        %8278 = vmatmul.bf16.gmra.mxu0 %v8156
        %v8279 = vpop.f32.mrf.mxu0
        %v8280 = vadd.f32 %v8267, %v8279
        %v8281 = vpop.f32.mrf.mxu0
        %8282 = vdwg.mxu0
        %v8283 = vadd.f32 %v7988, %v8280
        %v8284 = vld [vmem:[%s8 + $0x100] sm:$0x3]
        %v8285 = vpack.c.bf16 %v8283, %v8283
        %v8287 = vsel %vm1753, %v8284, 0
        %v8290 = vsel %vm1753, %v8285, 0
        %8292 = vmatpush.bf16.xpose.msra.mxu0 0
        %8293 = vmatpush.bf16.xpose.msra.mxu0 0
        %8294 = vmatpush.bf16.xpose.msra.mxu0 0
        %8295 = vmatpush.bf16.xpose.msra.mxu0 0
        %8296 = vmatpush.bf16.xpose.msra.mxu0 0
        %8297 = vmatpush.bf16.xpose.msra.mxu0 0
        %8298 = vmatpush.bf16.xpose.msra.mxu0 0
        %8299 = vmatpush.bf16.xpose.msra.mxu0 %v8290
        %8300 = vmatmul.bf16.gmra.mxu0 %v8287
        %v8301 = vpop.f32.mrf.mxu0
        %v8302 = vadd.f32 0.0, %v8301
        %v8303 = vpop.f32.mrf.mxu0
        %8304 = vdwg.mxu0
        %v8305 = vmul.f32 %v8302, 0.125
        %v8306 = vsel %vm680, %v8305, -inf
        %8307 = vmax.xlane.f32.xlu0 %v8306
        %v8308 = vpop.xlane.xlu0 %8307
        %v8309 = vsub.f32 %v8305, %v8308
        %v8310 = vmul.f32 %v8309, 1.442695
        %v8311 = vpow.pop %v8310
        %v8312 = vsel %vm680, %v8311, 0.0
        %8313 = vadd.xlane.f32.xlu0 %v8312
        %v8314 = vpop.xlane.xlu0 %8313
        %v8315 = vrcp.pop %v8314
        %v8316 = vmul.f32 %v8311, %v8315
        %v8318 = vsel %vm613, %v8316, 0
        %8320 = vmatpush.msra.mxu0 0.0
        %8321 = vmatpush.msra.mxu0 0.0
        %8322 = vmatpush.msra.mxu0 0.0
        %8323 = vmatpush.msra.mxu0 0.0
        %8324 = vmatpush.msra.mxu0 0.0
        %8325 = vmatpush.msra.mxu0 0.0
        %8326 = vmatpush.msra.mxu0 0.0
        %8327 = vmatpush.msra.mxu0 0.0
        %8328 = vmatpush.msra.mxu0 0.0
        %8329 = vmatpush.msra.mxu0 0.0
        %8330 = vmatpush.msra.mxu0 0.0
        %8331 = vmatpush.msra.mxu0 0.0
        %8332 = vmatpush.msra.mxu0 0.0
        %8333 = vmatpush.msra.mxu0 0.0
        %8334 = vmatpush.msra.mxu0 0.0
        %8335 = vmatpush.msra.mxu0 %v8283
        %8336 = vmatmul.f32.gmra.mxu0 %v8318
        %v8337 = vpop.f32.mrf.mxu0
        %v8338 = vadd.f32 0.0, %v8337
        %8339 = vdwg.mxu0
        %v8340 = vld [vmem:[#allocation8 + $0x28] sm:$0xf]
        %v8341 = vld [vmem:[#allocation8 + $0x54] sm:$0xf]
        %v8342 = vld [vmem:[#allocation8 + $0x80] sm:$0xf]
        %v8343 = vld [vmem:[#allocation8 + $0xac] sm:$0xf]
        %v8344 = vld [vmem:[#allocation8 + $0xd8] sm:$0xf]
        %v8345 = vld [vmem:[#allocation8 + $0x104] sm:$0xf]
        %v8346 = vld [vmem:[#allocation8 + $0x130] sm:$0xf]
        %v8347 = vld [vmem:[#allocation8 + $0x15c] sm:$0xf]
        %v8348 = vpack.c.bf16 %v8338, %v8338
        %v8349 = vld [vmem:[%s9 + $0x55] sm:$0x1]
        %v8351 = vperm.slane %v8349, 0
        %v8361 = vunpack.c.l.b16 %v8340
        %v8362 = vunpack.c.l.b16 %v8341
        %v8363 = vunpack.c.l.b16 %v8342
        %v8364 = vunpack.c.l.b16 %v8343
        %v8365 = vunpack.c.l.b16 %v8344
        %v8366 = vunpack.c.l.b16 %v8345
        %v8367 = vunpack.c.l.b16 %v8346
        %v8368 = vunpack.c.l.b16 %v8347
        %v8369 = vpack.c.b16 %v8362, %v8361
        %v8370 = vpack.c.b16 %v8364, %v8363
        %v8371 = vpack.c.b16 %v8366, %v8365
        %v8372 = vpack.c.b16 %v8368, %v8367
        %v8378 = vsel %vm1753, %v8348, 0
        %8380 = vmatpush.bf16.msra.mxu0 0
        %8381 = vmatpush.bf16.msra.mxu0 0
        %8382 = vmatpush.bf16.msra.mxu0 0
        %8383 = vmatpush.bf16.msra.mxu0 0
        %8384 = vmatpush.bf16.msra.mxu0 %v8372
        %8385 = vmatpush.bf16.msra.mxu0 %v8371
        %8386 = vmatpush.bf16.msra.mxu0 %v8370
        %8387 = vmatpush.bf16.msra.mxu0 %v8369
        %8388 = vmatmul.bf16.gmra.mxu0 %v8378
        %v8389 = vpop.f32.mrf.mxu0
        %v8390 = vadd.f32 %v8351, %v8389
        %v8391 = vpop.f32.mrf.mxu0
        %8392 = vdwg.mxu0
        %8393 = vst.msk [vmem:[%s509] sm:$0xf] %vm534, %v8390
        %s8394 = sand.u32 %s296, 1
        %s8395 = scalar_lea.sflag [#allocation5], %s8394
        %s8396 = sand.u32 %s296, 1
        %s8397 = smul.addr %s8396, 4
        %s8398 = scalar_lea.vmem [#allocation9], %s8397
        %p8399 = scmp.lt.s32.totalorder %s31, 1
        %s8400 = scalar_select %p8399, %s31, 1
        %s8401 = scalar_lea.vmem %s13, %s8400
        %p8402 = scmp.lt.s32.totalorder %s31, 1
        %s8403 = scalar_select %p8402, %s31, 1
        %s8404 = scalar_lea.vmem %s14, %s8403
        // Predicated region
        $region81: #{_lambda_.1} parent=67 // pred_check
          %p8405 = pneg %p306
        $region82: #{_lambda_.1} parent=67 // pred_check_branch
          %8407 = sbr.rel (%p8405) target = $region84
        $region83: #{_lambda_.1} parent=67 // pred_region
          %8409 = vsyncadd %s8395, 0
          %s8410 = smul.addr %s31, 4
          %s8411 = scalar_lea.hbm %s12, %s8410
          %s8413 = sshll.u32 %s8398, 4
          %s8414 = int_to_ptr.vmem [resolvable:$true] %s8413
          %s8415 = sshll.u32 %s8411, 4
          %s8416 = int_to_ptr.hbm [resolvable:$true] %s8415
          %8418 = dma.vmem_to_hbm [thread:$0]  %s8414, 64, %s8416, %s8395
        $region84: #{_lambda_.1} parent=67 // pred_fallthru
          _
        // Predicated region
        $region85: #{_lambda_.1} parent=67 // pred_check
          %p8419 = pneg %p332
        $region86: #{_lambda_.1} parent=67 // pred_check_branch
          %8421 = sbr.rel (%p8419) target = $region88
        $region87: #{_lambda_.1} parent=67 // pred_region
          _
        $region88: #{_lambda_.1} parent=67 // pred_fallthru
          _
        // Predicated region
        $region89: #{_lambda_.1} parent=67 // pred_check
          %p8422 = pneg %p358
        $region90: #{_lambda_.1} parent=67 // pred_check_branch
          %8424 = sbr.rel (%p8422) target = $region92
        $region91: #{_lambda_.1} parent=67 // pred_region
          _
        $region92: #{_lambda_.1} parent=67 // pred_fallthru
          _
      $region68: #{_lambda_.1} parent=5 // pred_fallthru
        _
      %p8425 = scmp.le.s32.totalorder 2, %s26
      // Predicated region
      $region93: #{_lambda_.1} parent=5 // pred_check
        %p8426 = pneg %p8425
      $region94: #{_lambda_.1} parent=5 // pred_check_branch
        %8428 = sbr.rel (%p8426) target = $region96
      $region95: #{_lambda_.1} parent=5 // pred_region
        %s8429 = ssub.s32 %s26, 2
        // Predicated region
        $region97: #{_lambda_.1} parent=95 // pred_check
          %p8430 = pneg %p312
        $region98: #{_lambda_.1} parent=95 // pred_check_branch
          %8432 = sbr.rel (%p8430) target = $region100
        $region99: #{_lambda_.1} parent=95 // pred_region
          %s8433 = sand.u32 %s297, 1
          %s8434 = scalar_lea.sflag [#allocation5], %s8433
          %s8435 = sand.u32 %s297, 1
          %s8436 = smul.addr %s8435, 4
          %s8437 = scalar_lea.vmem [#allocation9], %s8436
          %8439 = dma.done %s8434, 64
        $region100: #{_lambda_.1} parent=95 // pred_fallthru
          _
        // Predicated region
        $region101: #{_lambda_.1} parent=95 // pred_check
          %p8440 = pneg %p338
        $region102: #{_lambda_.1} parent=95 // pred_check_branch
          %8442 = sbr.rel (%p8440) target = $region104
        $region103: #{_lambda_.1} parent=95 // pred_region
          %p8443 = scmp.lt.s32.totalorder %s32, 1
          %s8444 = scalar_select %p8443, %s32, 1
          %s8445 = scalar_lea.vmem %s13, %s8444
        $region104: #{_lambda_.1} parent=95 // pred_fallthru
          _
        // Predicated region
        $region105: #{_lambda_.1} parent=95 // pred_check
          %p8446 = pneg %p364
        $region106: #{_lambda_.1} parent=95 // pred_check_branch
          %8448 = sbr.rel (%p8446) target = $region108
        $region107: #{_lambda_.1} parent=95 // pred_region
          %p8449 = scmp.lt.s32.totalorder %s32, 1
          %s8450 = scalar_select %p8449, %s32, 1
          %s8451 = scalar_lea.vmem %s14, %s8450
        $region108: #{_lambda_.1} parent=95 // pred_fallthru
          _
      $region96: #{_lambda_.1} parent=5 // pred_fallthru
        _
    $region6: #{_lambda_.1} parent=1 // loop_footer
      %s30 = sadd.s32 1, %s26
    $region7: #{_lambda_.1} parent=1 // loop_footer_branch
      %25 = sbr.rel target = $region3
    $region8: #{_lambda_.1} parent=1 // loop_exit
      _
    %8452 = vsyncpa [#allocation4], 1
    %s8453 = scalar_lea.sflag [#allocation4], 1
    %8454 = vsyncpa %s8453, 1
    %8455 = vsyncpa [#allocation7], 1
    %8456 = vsyncpa [#allocation5], 1
    %s8457 = scalar_lea.sflag [#allocation5], 1
    %8458 = vsyncpa %s8457, 1

</llo_original>
